<compile_context>
chip_gen: v6e
topology: v6e:2x2x1
jax: 0.10.0
libtpu: 0.0.40
codegen_flags: <defaults>
</compile_context>

<pallas_src>
import jax
import jax.numpy as jnp
from jax import lax
from jax.experimental import pallas as pl
from jax.experimental.pallas import tpu as pltpu


# --------------------------------------------------------------------------
# Pallas kernels
# --------------------------------------------------------------------------
def _conv_stats_kernel(p_ref, w_ref, y_ref, sum_ref, sq_ref):
    """y_T = W_T @ patches_T (lane-dense) with fused per-row sum / sumsq.

    p_ref : (K, tm)   activations (compute dtype)
    w_ref : (N, K)    folded conv-transpose weights (compute dtype)
    y_ref : (N, tm)   conv output, transposed phase layout (lane-dense store)
    sum_ref/sq_ref : (1, N, 1) per-core resident f32 accumulators
    """
    @pl.when(pl.program_id(1) == 0)
    def _():
        sum_ref[...] = jnp.zeros_like(sum_ref)
        sq_ref[...] = jnp.zeros_like(sq_ref)

    y = jnp.dot(w_ref[...], p_ref[...], preferred_element_type=jnp.float32)
    y_ref[...] = y.astype(y_ref.dtype)
    sum_ref[...] += jnp.sum(y, axis=1, keepdims=True)[None]
    sq_ref[...] += jnp.sum(y * y, axis=1, keepdims=True)[None]


def _conv_sigmoid_kernel(p_ref, w_ref, b_ref, y_ref):
    """Final layer: y_T = sigmoid(W_T @ patches_T + bias), no BN."""
    y = jnp.dot(w_ref[...], p_ref[...], preferred_element_type=jnp.float32)
    y = y + b_ref[...]
    y_ref[...] = jax.nn.sigmoid(y).astype(y_ref.dtype)


# --------------------------------------------------------------------------
# Generation-aware tiling helpers
# --------------------------------------------------------------------------
def _vmem_capacity_bytes():
    try:
        return int(pltpu.get_tpu_info().vmem_capacity_bytes)
    except Exception:
        return 64 * 1024 * 1024   # conservative (v7x-sized) fallback


def _pick_lane_tile(m, col_bytes, budget, cap=4096):
    """Largest lane tile (multiple of 128 dividing m, or m itself) in budget."""
    if m <= cap and m * col_bytes <= budget:
        return m
    best = 0
    t = 128
    top = min(m, cap)
    while t <= top:
        if m % t == 0 and t * col_bytes <= budget:
            best = t
        t += 128
    return best if best > 0 else m


def _conv_tiles(m, k, n, in_itemsize, out_itemsize):
    cap = _vmem_capacity_bytes()
    # ~45% of physical VMEM: ~57 MiB on v5e/v6e (128 MiB), ~28 MiB on v7x (64).
    limit = min(int(cap * 0.45), 96 * 1024 * 1024)
    w_bytes = 2 * n * k * in_itemsize                        # weights (2x buf)
    # bytes per lane column: double-buffered input+output blocks + f32 temps.
    col_bytes = 2 * (k * in_itemsize + n * out_itemsize) + 2 * n * 4
    budget = max(limit - w_bytes - (2 << 20), 2 << 20)
    tm = _pick_lane_tile(m, col_bytes, budget)
    need = w_bytes + tm * col_bytes + (4 << 20)
    vmem_limit = int(min(max(need, 16 << 20), int(cap * 0.9)))
    return tm, vmem_limit


# --------------------------------------------------------------------------
# Pallas wrapper
# --------------------------------------------------------------------------
def conv_phase_matmul(p_t, w_t, bias=None, with_stats=True,
                      out_dtype=jnp.float32):
    """Transposed phase-conv matmul: y_T[N, M] = W_T[N, K] @ patches_T[K, M].

    The lane axis of every HBM block is the huge M dimension (dense DMA).
    with_stats=True also returns fused per-(phase,channel) sum and sumsq
    (each (N,) f32), accumulated as per-core partials so the leading grid
    axis can be megacore-"parallel" on v7x without racing the accumulators.
    """
    k, m = p_t.shape
    n = w_t.shape[0]
    tm, vmem_limit = _conv_tiles(m, k, n, p_t.dtype.itemsize,
                                 jnp.dtype(out_dtype).itemsize)
    steps = m // tm

    if with_stats:
        split = 2 if (steps % 2 == 0 and steps >= 2) else 1
        inner = steps // split
        y, ssum, ssq = pl.pallas_call(
            _conv_stats_kernel,
            out_shape=(
                jax.ShapeDtypeStruct((n, m), out_dtype),
                jax.ShapeDtypeStruct((split, n, 1), jnp.float32),
                jax.ShapeDtypeStruct((split, n, 1), jnp.float32),
            ),
            grid=(split, inner),
            in_specs=[
                pl.BlockSpec((k, tm), lambda c, i, _s=inner: (0, c * _s + i)),
                pl.BlockSpec((n, k), lambda c, i: (0, 0)),
            ],
            out_specs=(
                pl.BlockSpec((n, tm), lambda c, i, _s=inner: (0, c * _s + i)),
                pl.BlockSpec((1, n, 1), lambda c, i: (c, 0, 0)),
                pl.BlockSpec((1, n, 1), lambda c, i: (c, 0, 0)),
            ),
            compiler_params=pltpu.CompilerParams(
                dimension_semantics=("parallel", "arbitrary"),
                vmem_limit_bytes=vmem_limit),
        )(p_t, w_t)
        return y, ssum.sum(axis=0).reshape(n), ssq.sum(axis=0).reshape(n)

    return pl.pallas_call(
        _conv_sigmoid_kernel,
        out_shape=jax.ShapeDtypeStruct((n, m), out_dtype),
        grid=(steps,),
        in_specs=[
            pl.BlockSpec((k, tm), lambda i: (0, i)),
            pl.BlockSpec((n, k), lambda i: (0, 0)),
            pl.BlockSpec((n, 1), lambda i: (0, 0)),
        ],
        out_specs=pl.BlockSpec((n, tm), lambda i: (0, i)),
        compiler_params=pltpu.CompilerParams(
            dimension_semantics=("parallel",),
            vmem_limit_bytes=vmem_limit),
    )(p_t, w_t, bias)


# --------------------------------------------------------------------------
# XLA glue: pad + 9-tap slab build, and BN+LeakyReLU+pixel-shuffle
# --------------------------------------------------------------------------
def _chw_pad_patches_t(x_chw, dtype):
    """[C, B, S, S] -> patches_T [9*C, B*S*S] for the stride-2/pad-1 matmul.

    Rows ordered (a, b, c) over the 3x3 window of the 1-padded input;
    columns ordered (batch, iy, ix).  Lane axis = B*S*S (dense writes/reads).
    """
    c, bsz, s, _ = x_chw.shape
    xp = jnp.pad(x_chw, ((0, 0), (0, 0), (1, 1), (1, 1)))
    slabs = [xp[:, :, a:a + s, b:b + s] for a in range(3) for b in range(3)]
    return jnp.concatenate(slabs, axis=0).reshape(9 * c, bsz * s * s).astype(dtype)


def _bn_leaky_shuffle(y_t, col_sum, col_sq, gamma, beta, slope, bsz, s_in,
                      eps=1e-5):
    """Training-mode BN + LeakyReLU on the transposed phase layout, then
    pixel-shuffle to [C, B, 2*S_in, 2*S_in] (CHW-major for the next patch
    build).  XLA fuses this with the following pad/slab-concat."""
    c = gamma.shape[0]
    m = y_t.shape[1]                       # = bsz * s_in * s_in
    count = 4 * m                          # output elements per channel
    ch_sum = col_sum.reshape(4, c).sum(axis=0)
    ch_sq = col_sq.reshape(4, c).sum(axis=0)
    mean = ch_sum / count
    # One-pass variance in f32; clamp guards tiny negative cancellation.
    # TODO(synk): per-tile centered sums / Welford if the batch grows large.
    var = jnp.maximum(ch_sq / count - mean * mean, 0.0)
    scale = gamma * lax.rsqrt(var + eps)
    shift = beta - mean * scale
    h = (y_t.astype(jnp.float32) * jnp.tile(scale, 4)[:, None]
         + jnp.tile(shift, 4)[:, None])
    h = jnp.where(h > 0, h, slope * h)
    h = h.reshape(2, 2, c, bsz, s_in, s_in)          # (py, px, c, b, iy, ix)
    h = jnp.transpose(h, (2, 3, 4, 0, 5, 1))         # (c, b, iy, py, ix, px)
    return h.reshape(c, bsz, 2 * s_in, 2 * s_in)


# --------------------------------------------------------------------------
# Parameter init + one-time weight folding
# --------------------------------------------------------------------------
def init_decoder_params(key, latent_dim, d, nc):
    chans = [latent_dim, d * 8, d * 4, d * 2, d, d // 2, nc]
    params = {}
    for i in range(6):
        key, kw, kb = jax.random.split(key, 3)
        cin, cout = chans[i], chans[i + 1]
        w = jax.random.normal(kw, (cin, cout, 4, 4), jnp.float32) * 0.05
        b = jax.random.normal(kb, (cout,), jnp.float32) * 0.05
        params[f"convT{i + 1}"] = (w, b)
        if i < 5:  # no BN after the last conv-transpose
            params[f"bn{i + 1}"] = (
                jnp.ones((cout,), jnp.float32),   # gamma (PyTorch default)
                jnp.zeros((cout,), jnp.float32),  # beta
            )
    return params


def _phase_weight(w):
    """[Cin, Cout, 4, 4] -> [9*Cin, 4*Cout] for the stride-2/pad-1 phase matmul.

    Patch rows ordered (a, b, ci) over a 3x3 window of the 1-padded input;
    output columns ordered (py, px, co).  Valid taps: a in {py, py+1},
    b in {px, px+1}, with ky = 3 + py - 2a, kx = 3 + px - 2b.
    """
    cin, cout = w.shape[0], w.shape[1]
    wc = jnp.zeros((3, 3, cin, 2, 2, cout), w.dtype)
    for py in range(2):
        for px in range(2):
            for a in (py, py + 1):
                for b in (px, px + 1):
                    ky = 3 + py - 2 * a
                    kx = 3 + px - 2 * b
                    wc = wc.at[a, b, :, py, px, :].set(w[:, :, ky, kx])
    return wc.reshape(9 * cin, 4 * cout)


def prepare_params(raw):
    """Fold ConvTranspose weights into matmul operands once (outside forward).

    Conv bias is dropped for layers 1-5: with training-mode BatchNorm right
    after, a per-channel constant shift cancels exactly.
    """
    prep = {}
    for i in range(1, 7):
        w, b = raw[f"convT{i}"]
        cin, cout = w.shape[0], w.shape[1]
        if i == 1:   # 1x1 input, stride 1, pad 0: columns ordered (oy, ox, co)
            w_col = jnp.transpose(w, (0, 2, 3, 1)).reshape(cin, 16 * cout)
            prep["convT1"] = (w_col.astype(jnp.float32), None)
        else:        # stride 2, pad 1: transposed phase weights
            w_t = _phase_weight(w).T                        # (4*Cout, 9*Cin)
            bias = (jnp.tile(b, 4).reshape(4 * cout, 1).astype(jnp.float32)
                    if i == 6 else None)
            prep[f"convT{i}"] = (w_t.astype(jnp.float32), bias)
        if i < 6:
            g, bt = raw[f"bn{i}"]
            prep[f"bn{i}"] = (g.astype(jnp.float32), bt.astype(jnp.float32))
    return prep


# --------------------------------------------------------------------------
# Decoder forward
# --------------------------------------------------------------------------
def decoder_forward(latent_code, params, leaky_relu=True,
                    compute_dtype=jnp.bfloat16, eps=1e-5):
    """latent_code: [B, latent_dim] -> reconstructed image [B, nc, 128, 128]."""
    slope = 0.2 if leaky_relu else 0.0  # slope 0.0 == ReLU
    bsz = latent_code.shape[0]

    # ---- layer 1 (1x1 -> 4x4) + BN + LeakyReLU: microscopic, plain XLA -----
    w1_col, _ = params["convT1"]
    gamma, beta = params["bn1"]
    c1 = gamma.shape[0]
    y1 = jnp.dot(latent_code.astype(jnp.float32), w1_col,
                 precision=lax.Precision.HIGHEST).reshape(bsz, 16, c1)
    mean = y1.mean(axis=(0, 1))
    var = y1.var(axis=(0, 1))
    h1 = (y1 - mean) * lax.rsqrt(var + eps) * gamma + beta
    h1 = jnp.where(h1 > 0, h1, slope * h1)
    x_chw = jnp.transpose(h1.reshape(bsz, 4, 4, c1), (3, 0, 1, 2))  # [C,B,4,4]
    size = 4

    # ---- layers 2..5: phase-decomposed stride-2 convT + fused BN stats -----
    for idx in range(2, 6):
        w_t, _ = params[f"convT{idx}"]
        gamma, beta = params[f"bn{idx}"]
        p_t = _chw_pad_patches_t(x_chw, compute_dtype)       # [9*Cin, B*S*S]
        y_t, s_sum, s_sq = conv_phase_matmul(
            p_t, w_t.astype(compute_dtype), with_stats=True,
            out_dtype=compute_dtype)
        x_chw = _bn_leaky_shuffle(y_t, s_sum, s_sq, gamma, beta, slope,
                                  bsz, size, eps)            # [Cout,B,2S,2S]
        size *= 2

    # ---- layer 6: stride-2 convT + bias + sigmoid (no BN) ------------------
    w_t, b_col = params["convT6"]
    nc = w_t.shape[0] // 4
    p_t = _chw_pad_patches_t(x_chw, compute_dtype)
    y_t = conv_phase_matmul(p_t, w_t.astype(compute_dtype), bias=b_col,
                            with_stats=False, out_dtype=jnp.float32)
    # epilogue: (py, px, c, b, iy, ix) -> NCHW with a single transpose pass.
    out = y_t.reshape(2, 2, nc, bsz, size, size)
    out = jnp.transpose(out, (3, 2, 4, 0, 5, 1))
    return out.reshape(bsz, nc, 2 * size, 2 * size)


# --------------------------------------------------------------------------
# Pure-JAX reference (PyTorch semantics via dilate + flipped-kernel conv)
# --------------------------------------------------------------------------
def _ref_conv_transpose(x_nhwc, w, b, stride, pad):
    k = 4
    n, h, wd, cin = x_nhwc.shape
    cout = w.shape[1]
    if stride == 2:
        z = jnp.zeros((n, 2 * h - 1, 2 * wd - 1, cin), x_nhwc.dtype)
        z = z.at[:, ::2, ::2, :].set(x_nhwc)
    else:
        z = x_nhwc
    pw = k - 1 - pad
    z = jnp.pad(z, ((0, 0), (pw, pw), (pw, pw), (0, 0)))
    o = z.shape[1] - k + 1
    cols = [z[:, ky:ky + o, kx:kx + o, :] for ky in range(k) for kx in range(k)]
    patches = jnp.concatenate(cols, axis=-1).reshape(n * o * o, 16 * cin)
    w_col = w[:, :, ::-1, ::-1].transpose(2, 3, 0, 1).reshape(16 * cin, cout)
    y = jnp.dot(patches, w_col, precision=jax.lax.Precision.HIGHEST) + b
    return y.reshape(n, o, o, cout)


def _ref_forward(latent, raw_params, leaky_relu=True, eps=1e-5):
    slope = 0.2 if leaky_relu else 0.0
    bsz, dim = latent.shape
    x = latent.reshape(bsz, 1, 1, dim)
    cfg = [(1, 0), (2, 1), (2, 1), (2, 1), (2, 1)]
    for i, (st, pd) in enumerate(cfg, start=1):
        w, b = raw_params[f"convT{i}"]
        x = _ref_conv_transpose(x, w, b, st, pd)
        g, bt = raw_params[f"bn{i}"]
        mean = x.mean(axis=(0, 1, 2))
        var = x.var(axis=(0, 1, 2))
        xn = (x - mean) * jax.lax.rsqrt(var + eps) * g + bt
        x = jnp.where(xn > 0, xn, slope * xn)
    w, b = raw_params["convT6"]
    x = jax.nn.sigmoid(_ref_conv_transpose(x, w, b, 2, 1))
    return jnp.transpose(x, (0, 3, 1, 2))


# --------------------------------------------------------------------------
if __name__ == "__main__":
    # shapes consistent with the module: cfg.in_ch = 16 (latent), d = 8, nc = 3
    LATENT_DIM = 16
    D = 8
    NC = 3
    BATCH = 2

    key = jax.random.PRNGKey(0)
    k_params, k_latent = jax.random.split(key)
    raw_params = init_decoder_params(k_params, LATENT_DIM, D, NC)
    prep_params = prepare_params(raw_params)
    latent = jax.random.normal(k_latent, (BATCH, LATENT_DIM), jnp.float32)

    fwd = jax.jit(decoder_forward,
                  static_argnames=("leaky_relu", "compute_dtype"))

    # correctness check: f32 Pallas pipeline vs pure-JAX reference
    out_f32 = jax.block_until_ready(
        fwd(latent, prep_params, leaky_relu=True, compute_dtype=jnp.float32))
    ref = jax.block_until_ready(
        jax.jit(_ref_forward, static_argnames=("leaky_relu",))(
            latent, raw_params, leaky_relu=True))
    assert out_f32.shape == (BATCH, NC, 128, 128), out_f32.shape
    assert bool(jnp.allclose(out_f32, ref, atol=2e-2, rtol=0.0)), \
        float(jnp.max(jnp.abs(out_f32 - ref)))

    # performance path: bf16 matmul operands + bf16 intermediates,
    # f32 accumulation / BN statistics.
    out = jax.block_until_ready(
        fwd(latent, prep_params, leaky_relu=True, compute_dtype=jnp.bfloat16))
    assert out.shape == (BATCH, NC, 128, 128), out.shape
    assert bool(jnp.all(jnp.isfinite(out)))
    assert bool(jnp.all((out >= 0.0) & (out <= 1.0)))  # sigmoid output range
    print("KERNEL_OK")
</pallas_src>

<mosaic_0001>
module attributes {stable_mosaic.version = 11 : i64} {
  func.func @_conv_stats_kernel(%arg0: i32, %arg1: i32, %arg2: memref<576x32xf32, #tpu.memory_space<vmem>>, %arg3: memref<128x576xf32, #tpu.memory_space<vmem>>, %arg4: memref<128x32xf32, #tpu.memory_space<vmem>>, %arg5: memref<1x128x1xf32, #tpu.memory_space<vmem>>, %arg6: memref<1x128x1xf32, #tpu.memory_space<vmem>>) attributes {dimension_semantics = [#tpu.dimension_semantics<parallel>, #tpu.dimension_semantics<arbitrary>], iteration_bounds = array<i64: 1, 1>, scalar_prefetch = 0 : i64, scratch_operands = 0 : i64, tpu.core_type = #tpu.core_type<tc>, window_params = [{transform_indices = @transform_0, window_bounds = array<i64: 576, 32>}, {pipeline_mode = #tpu.pipeline_mode<synchronous>, transform_indices = @transform_1, window_bounds = array<i64: 128, 576>}, {transform_indices = @transform_2, window_bounds = array<i64: 128, 32>}, {transform_indices = @transform_3, window_bounds = array<i64: 1, 128, 1>}, {transform_indices = @transform_4, window_bounds = array<i64: 1, 128, 1>}]} {
    %c0_i32 = arith.constant 0 : i32
    %0 = arith.cmpi eq, %arg1, %c0_i32 : i32
    %1 = arith.extui %0 : i1 to i32
    %c0_i32_0 = arith.constant 0 : i32
    %2 = arith.cmpi ne, %1, %c0_i32_0 : i32
    scf.if %2 {
      %cst_20 = arith.constant 0.000000e+00 : f32
      %20 = vector.broadcast %cst_20 : f32 to vector<1x128x1xf32>
      %c0_21 = arith.constant 0 : index
      %c0_22 = arith.constant 0 : index
      %c0_23 = arith.constant 0 : index
      %21 = vector.load %arg5[%c0_21, %c0_22, %c0_23] : memref<1x128x1xf32, #tpu.memory_space<vmem>>, vector<1x128x1xf32>
      tpu.vector_store %arg5[%c0_21, %c0_22, %c0_23], %20 {strides = array<i32>} : memref<1x128x1xf32, #tpu.memory_space<vmem>>, vector<1x128x1xf32>,
      %cst_24 = arith.constant 0.000000e+00 : f32
      %22 = vector.broadcast %cst_24 : f32 to vector<1x128x1xf32>
      %c0_25 = arith.constant 0 : index
      %c0_26 = arith.constant 0 : index
      %c0_27 = arith.constant 0 : index
      %23 = vector.load %arg6[%c0_25, %c0_26, %c0_27] : memref<1x128x1xf32, #tpu.memory_space<vmem>>, vector<1x128x1xf32>
      tpu.vector_store %arg6[%c0_25, %c0_26, %c0_27], %22 {strides = array<i32>} : memref<1x128x1xf32, #tpu.memory_space<vmem>>, vector<1x128x1xf32>,
    } else {
    }
    %c0 = arith.constant 0 : index
    %c0_1 = arith.constant 0 : index
    %3 = vector.load %arg3[%c0, %c0_1] : memref<128x576xf32, #tpu.memory_space<vmem>>, vector<128x576xf32>
    %c0_2 = arith.constant 0 : index
    %c0_3 = arith.constant 0 : index
    %4 = vector.load %arg2[%c0_2, %c0_3] : memref<576x32xf32, #tpu.memory_space<vmem>>, vector<576x32xf32>
    %cst = arith.constant dense<0.000000e+00> : vector<128x32xf32>
    %5 = tpu.matmul %3, %4, %cst {dimension_numbers = #tpu.dot_dimension_numbers<[1], [0], [0], [1], [0, 0, 1, 1], [], []>} : vector<128x576xf32>, vector<576x32xf32>, vector<128x32xf32> -> vector<128x32xf32>
    %c0_4 = arith.constant 0 : index
    %c0_5 = arith.constant 0 : index
    %6 = vector.load %arg4[%c0_4, %c0_5] : memref<128x32xf32, #tpu.memory_space<vmem>>, vector<128x32xf32>
    tpu.vector_store %arg4[%c0_4, %c0_5], %5 {strides = array<i32>} : memref<128x32xf32, #tpu.memory_space<vmem>>, vector<128x32xf32>,
    %c0_6 = arith.constant 0 : index
    %c0_7 = arith.constant 0 : index
    %c0_8 = arith.constant 0 : index
    %7 = vector.load %arg5[%c0_6, %c0_7, %c0_8] : memref<1x128x1xf32, #tpu.memory_space<vmem>>, vector<1x128x1xf32>
    %cst_9 = arith.constant dense<0.000000e+00> : vector<128xf32>
    %8 = vector.multi_reduction <add>, %5, %cst_9 [1] : vector<128x32xf32> to vector<128xf32>
    %9 = vector.shape_cast %8 : vector<128xf32> to vector<128x1xf32>
    %10 = vector.shape_cast %9 : vector<128x1xf32> to vector<1x128x1xf32>
    %11 = arith.addf %7, %10 : vector<1x128x1xf32>
    %c0_10 = arith.constant 0 : index
    %c0_11 = arith.constant 0 : index
    %c0_12 = arith.constant 0 : index
    %12 = vector.load %arg5[%c0_10, %c0_11, %c0_12] : memref<1x128x1xf32, #tpu.memory_space<vmem>>, vector<1x128x1xf32>
    tpu.vector_store %arg5[%c0_10, %c0_11, %c0_12], %11 {strides = array<i32>} : memref<1x128x1xf32, #tpu.memory_space<vmem>>, vector<1x128x1xf32>,
    %c0_13 = arith.constant 0 : index
    %c0_14 = arith.constant 0 : index
    %c0_15 = arith.constant 0 : index
    %13 = vector.load %arg6[%c0_13, %c0_14, %c0_15] : memref<1x128x1xf32, #tpu.memory_space<vmem>>, vector<1x128x1xf32>
    %14 = arith.mulf %5, %5 : vector<128x32xf32>
    %cst_16 = arith.constant dense<0.000000e+00> : vector<128xf32>
    %15 = vector.multi_reduction <add>, %14, %cst_16 [1] : vector<128x32xf32> to vector<128xf32>
    %16 = vector.shape_cast %15 : vector<128xf32> to vector<128x1xf32>
    %17 = vector.shape_cast %16 : vector<128x1xf32> to vector<1x128x1xf32>
    %18 = arith.addf %13, %17 : vector<1x128x1xf32>
    %c0_17 = arith.constant 0 : index
    %c0_18 = arith.constant 0 : index
    %c0_19 = arith.constant 0 : index
    %19 = vector.load %arg6[%c0_17, %c0_18, %c0_19] : memref<1x128x1xf32, #tpu.memory_space<vmem>>, vector<1x128x1xf32>
    tpu.vector_store %arg6[%c0_17, %c0_18, %c0_19], %18 {strides = array<i32>} : memref<1x128x1xf32, #tpu.memory_space<vmem>>, vector<1x128x1xf32>,
    return
  }
  func.func @transform_0(%arg0: i32, %arg1: i32) -> (i32, i32) {
    %c1_i32 = arith.constant 1 : i32
    %0 = arith.muli %arg0, %c1_i32 : i32
    %1 = arith.addi %0, %arg1 : i32
    %c0_i32 = arith.constant 0 : i32
    %c0_i32_0 = arith.constant 0 : i32
    return %c0_i32, %1 : i32, i32
  }
  func.func @transform_1(%arg0: i32, %arg1: i32) -> (i32, i32) {
    %c0_i32 = arith.constant 0 : i32
    %c0_i32_0 = arith.constant 0 : i32
    %c0_i32_1 = arith.constant 0 : i32
    return %c0_i32, %c0_i32_0 : i32, i32
  }
  func.func @transform_2(%arg0: i32, %arg1: i32) -> (i32, i32) {
    %c1_i32 = arith.constant 1 : i32
    %0 = arith.muli %arg0, %c1_i32 : i32
    %1 = arith.addi %0, %arg1 : i32
    %c0_i32 = arith.constant 0 : i32
    %c0_i32_0 = arith.constant 0 : i32
    return %c0_i32, %1 : i32, i32
  }
  func.func @transform_3(%arg0: i32, %arg1: i32) -> (i32, i32, i32) {
    %c0_i32 = arith.constant 0 : i32
    %c0_i32_0 = arith.constant 0 : i32
    %c0_i32_1 = arith.constant 0 : i32
    return %arg0, %c0_i32, %c0_i32_0 : i32, i32, i32
  }
  func.func @transform_4(%arg0: i32, %arg1: i32) -> (i32, i32, i32) {
    %c0_i32 = arith.constant 0 : i32
    %c0_i32_0 = arith.constant 0 : i32
    %c0_i32_1 = arith.constant 0 : i32
    return %arg0, %c0_i32, %c0_i32_0 : i32, i32, i32
  }
}

module attributes {stable_mosaic.version = 11 : i64} {
  func.func @_conv_stats_kernel(%arg0: i32, %arg1: i32, %arg2: memref<288x128xf32, #tpu.memory_space<vmem>>, %arg3: memref<64x288xf32, #tpu.memory_space<vmem>>, %arg4: memref<64x128xf32, #tpu.memory_space<vmem>>, %arg5: memref<1x64x1xf32, #tpu.memory_space<vmem>>, %arg6: memref<1x64x1xf32, #tpu.memory_space<vmem>>) attributes {dimension_semantics = [#tpu.dimension_semantics<parallel>, #tpu.dimension_semantics<arbitrary>], iteration_bounds = array<i64: 1, 1>, scalar_prefetch = 0 : i64, scratch_operands = 0 : i64, tpu.core_type = #tpu.core_type<tc>, window_params = [{transform_indices = @transform_0, window_bounds = array<i64: 288, 128>}, {pipeline_mode = #tpu.pipeline_mode<synchronous>, transform_indices = @transform_1, window_bounds = array<i64: 64, 288>}, {transform_indices = @transform_2, window_bounds = array<i64: 64, 128>}, {transform_indices = @transform_3, window_bounds = array<i64: 1, 64, 1>}, {transform_indices = @transform_4, window_bounds = array<i64: 1, 64, 1>}]} {
    %c0_i32 = arith.constant 0 : i32
    %0 = arith.cmpi eq, %arg1, %c0_i32 : i32
    %1 = arith.extui %0 : i1 to i32
    %c0_i32_0 = arith.constant 0 : i32
    %2 = arith.cmpi ne, %1, %c0_i32_0 : i32
    scf.if %2 {
      %cst_20 = arith.constant 0.000000e+00 : f32
      %20 = vector.broadcast %cst_20 : f32 to vector<1x64x1xf32>
      %c0_21 = arith.constant 0 : index
      %c0_22 = arith.constant 0 : index
      %c0_23 = arith.constant 0 : index
      %21 = vector.load %arg5[%c0_21, %c0_22, %c0_23] : memref<1x64x1xf32, #tpu.memory_space<vmem>>, vector<1x64x1xf32>
      tpu.vector_store %arg5[%c0_21, %c0_22, %c0_23], %20 {strides = array<i32>} : memref<1x64x1xf32, #tpu.memory_space<vmem>>, vector<1x64x1xf32>,
      %cst_24 = arith.constant 0.000000e+00 : f32
      %22 = vector.broadcast %cst_24 : f32 to vector<1x64x1xf32>
      %c0_25 = arith.constant 0 : index
      %c0_26 = arith.constant 0 : index
      %c0_27 = arith.constant 0 : index
      %23 = vector.load %arg6[%c0_25, %c0_26, %c0_27] : memref<1x64x1xf32, #tpu.memory_space<vmem>>, vector<1x64x1xf32>
      tpu.vector_store %arg6[%c0_25, %c0_26, %c0_27], %22 {strides = array<i32>} : memref<1x64x1xf32, #tpu.memory_space<vmem>>, vector<1x64x1xf32>,
    } else {
    }
    %c0 = arith.constant 0 : index
    %c0_1 = arith.constant 0 : index
    %3 = vector.load %arg3[%c0, %c0_1] : memref<64x288xf32, #tpu.memory_space<vmem>>, vector<64x288xf32>
    %c0_2 = arith.constant 0 : index
    %c0_3 = arith.constant 0 : index
    %4 = vector.load %arg2[%c0_2, %c0_3] : memref<288x128xf32, #tpu.memory_space<vmem>>, vector<288x128xf32>
    %cst = arith.constant dense<0.000000e+00> : vector<64x128xf32>
    %5 = tpu.matmul %3, %4, %cst {dimension_numbers = #tpu.dot_dimension_numbers<[1], [0], [0], [1], [0, 0, 1, 1], [], []>} : vector<64x288xf32>, vector<288x128xf32>, vector<64x128xf32> -> vector<64x128xf32>
    %c0_4 = arith.constant 0 : index
    %c0_5 = arith.constant 0 : index
    %6 = vector.load %arg4[%c0_4, %c0_5] : memref<64x128xf32, #tpu.memory_space<vmem>>, vector<64x128xf32>
    tpu.vector_store %arg4[%c0_4, %c0_5], %5 {strides = array<i32>} : memref<64x128xf32, #tpu.memory_space<vmem>>, vector<64x128xf32>,
    %c0_6 = arith.constant 0 : index
    %c0_7 = arith.constant 0 : index
    %c0_8 = arith.constant 0 : index
    %7 = vector.load %arg5[%c0_6, %c0_7, %c0_8] : memref<1x64x1xf32, #tpu.memory_space<vmem>>, vector<1x64x1xf32>
    %cst_9 = arith.constant dense<0.000000e+00> : vector<64xf32>
    %8 = vector.multi_reduction <add>, %5, %cst_9 [1] : vector<64x128xf32> to vector<64xf32>
    %9 = vector.shape_cast %8 : vector<64xf32> to vector<64x1xf32>
    %10 = vector.shape_cast %9 : vector<64x1xf32> to vector<1x64x1xf32>
    %11 = arith.addf %7, %10 : vector<1x64x1xf32>
    %c0_10 = arith.constant 0 : index
    %c0_11 = arith.constant 0 : index
    %c0_12 = arith.constant 0 : index
    %12 = vector.load %arg5[%c0_10, %c0_11, %c0_12] : memref<1x64x1xf32, #tpu.memory_space<vmem>>, vector<1x64x1xf32>
    tpu.vector_store %arg5[%c0_10, %c0_11, %c0_12], %11 {strides = array<i32>} : memref<1x64x1xf32, #tpu.memory_space<vmem>>, vector<1x64x1xf32>,
    %c0_13 = arith.constant 0 : index
    %c0_14 = arith.constant 0 : index
    %c0_15 = arith.constant 0 : index
    %13 = vector.load %arg6[%c0_13, %c0_14, %c0_15] : memref<1x64x1xf32, #tpu.memory_space<vmem>>, vector<1x64x1xf32>
    %14 = arith.mulf %5, %5 : vector<64x128xf32>
    %cst_16 = arith.constant dense<0.000000e+00> : vector<64xf32>
    %15 = vector.multi_reduction <add>, %14, %cst_16 [1] : vector<64x128xf32> to vector<64xf32>
    %16 = vector.shape_cast %15 : vector<64xf32> to vector<64x1xf32>
    %17 = vector.shape_cast %16 : vector<64x1xf32> to vector<1x64x1xf32>
    %18 = arith.addf %13, %17 : vector<1x64x1xf32>
    %c0_17 = arith.constant 0 : index
    %c0_18 = arith.constant 0 : index
    %c0_19 = arith.constant 0 : index
    %19 = vector.load %arg6[%c0_17, %c0_18, %c0_19] : memref<1x64x1xf32, #tpu.memory_space<vmem>>, vector<1x64x1xf32>
    tpu.vector_store %arg6[%c0_17, %c0_18, %c0_19], %18 {strides = array<i32>} : memref<1x64x1xf32, #tpu.memory_space<vmem>>, vector<1x64x1xf32>,
    return
  }
  func.func @transform_0(%arg0: i32, %arg1: i32) -> (i32, i32) {
    %c1_i32 = arith.constant 1 : i32
    %0 = arith.muli %arg0, %c1_i32 : i32
    %1 = arith.addi %0, %arg1 : i32
    %c0_i32 = arith.constant 0 : i32
    %c0_i32_0 = arith.constant 0 : i32
    return %c0_i32, %1 : i32, i32
  }
  func.func @transform_1(%arg0: i32, %arg1: i32) -> (i32, i32) {
    %c0_i32 = arith.constant 0 : i32
    %c0_i32_0 = arith.constant 0 : i32
    %c0_i32_1 = arith.constant 0 : i32
    return %c0_i32, %c0_i32_0 : i32, i32
  }
  func.func @transform_2(%arg0: i32, %arg1: i32) -> (i32, i32) {
    %c1_i32 = arith.constant 1 : i32
    %0 = arith.muli %arg0, %c1_i32 : i32
    %1 = arith.addi %0, %arg1 : i32
    %c0_i32 = arith.constant 0 : i32
    %c0_i32_0 = arith.constant 0 : i32
    return %c0_i32, %1 : i32, i32
  }
  func.func @transform_3(%arg0: i32, %arg1: i32) -> (i32, i32, i32) {
    %c0_i32 = arith.constant 0 : i32
    %c0_i32_0 = arith.constant 0 : i32
    %c0_i32_1 = arith.constant 0 : i32
    return %arg0, %c0_i32, %c0_i32_0 : i32, i32, i32
  }
  func.func @transform_4(%arg0: i32, %arg1: i32) -> (i32, i32, i32) {
    %c0_i32 = arith.constant 0 : i32
    %c0_i32_0 = arith.constant 0 : i32
    %c0_i32_1 = arith.constant 0 : i32
    return %arg0, %c0_i32, %c0_i32_0 : i32, i32, i32
  }
}

module attributes {stable_mosaic.version = 11 : i64} {
  func.func @_conv_stats_kernel(%arg0: i32, %arg1: i32, %arg2: memref<144x512xf32, #tpu.memory_space<vmem>>, %arg3: memref<32x144xf32, #tpu.memory_space<vmem>>, %arg4: memref<32x512xf32, #tpu.memory_space<vmem>>, %arg5: memref<1x32x1xf32, #tpu.memory_space<vmem>>, %arg6: memref<1x32x1xf32, #tpu.memory_space<vmem>>) attributes {dimension_semantics = [#tpu.dimension_semantics<parallel>, #tpu.dimension_semantics<arbitrary>], iteration_bounds = array<i64: 1, 1>, scalar_prefetch = 0 : i64, scratch_operands = 0 : i64, tpu.core_type = #tpu.core_type<tc>, window_params = [{transform_indices = @transform_0, window_bounds = array<i64: 144, 512>}, {pipeline_mode = #tpu.pipeline_mode<synchronous>, transform_indices = @transform_1, window_bounds = array<i64: 32, 144>}, {transform_indices = @transform_2, window_bounds = array<i64: 32, 512>}, {transform_indices = @transform_3, window_bounds = array<i64: 1, 32, 1>}, {transform_indices = @transform_4, window_bounds = array<i64: 1, 32, 1>}]} {
    %c0_i32 = arith.constant 0 : i32
    %0 = arith.cmpi eq, %arg1, %c0_i32 : i32
    %1 = arith.extui %0 : i1 to i32
    %c0_i32_0 = arith.constant 0 : i32
    %2 = arith.cmpi ne, %1, %c0_i32_0 : i32
    scf.if %2 {
      %cst_20 = arith.constant 0.000000e+00 : f32
      %20 = vector.broadcast %cst_20 : f32 to vector<1x32x1xf32>
      %c0_21 = arith.constant 0 : index
      %c0_22 = arith.constant 0 : index
      %c0_23 = arith.constant 0 : index
      %21 = vector.load %arg5[%c0_21, %c0_22, %c0_23] : memref<1x32x1xf32, #tpu.memory_space<vmem>>, vector<1x32x1xf32>
      tpu.vector_store %arg5[%c0_21, %c0_22, %c0_23], %20 {strides = array<i32>} : memref<1x32x1xf32, #tpu.memory_space<vmem>>, vector<1x32x1xf32>,
      %cst_24 = arith.constant 0.000000e+00 : f32
      %22 = vector.broadcast %cst_24 : f32 to vector<1x32x1xf32>
      %c0_25 = arith.constant 0 : index
      %c0_26 = arith.constant 0 : index
      %c0_27 = arith.constant 0 : index
      %23 = vector.load %arg6[%c0_25, %c0_26, %c0_27] : memref<1x32x1xf32, #tpu.memory_space<vmem>>, vector<1x32x1xf32>
      tpu.vector_store %arg6[%c0_25, %c0_26, %c0_27], %22 {strides = array<i32>} : memref<1x32x1xf32, #tpu.memory_space<vmem>>, vector<1x32x1xf32>,
    } else {
    }
    %c0 = arith.constant 0 : index
    %c0_1 = arith.constant 0 : index
    %3 = vector.load %arg3[%c0, %c0_1] : memref<32x144xf32, #tpu.memory_space<vmem>>, vector<32x144xf32>
    %c0_2 = arith.constant 0 : index
    %c0_3 = arith.constant 0 : index
    %4 = vector.load %arg2[%c0_2, %c0_3] : memref<144x512xf32, #tpu.memory_space<vmem>>, vector<144x512xf32>
    %cst = arith.constant dense<0.000000e+00> : vector<32x512xf32>
    %5 = tpu.matmul %3, %4, %cst {dimension_numbers = #tpu.dot_dimension_numbers<[1], [0], [0], [1], [0, 0, 1, 1], [], []>} : vector<32x144xf32>, vector<144x512xf32>, vector<32x512xf32> -> vector<32x512xf32>
    %c0_4 = arith.constant 0 : index
    %c0_5 = arith.constant 0 : index
    %6 = vector.load %arg4[%c0_4, %c0_5] : memref<32x512xf32, #tpu.memory_space<vmem>>, vector<32x512xf32>
    tpu.vector_store %arg4[%c0_4, %c0_5], %5 {strides = array<i32>} : memref<32x512xf32, #tpu.memory_space<vmem>>, vector<32x512xf32>,
    %c0_6 = arith.constant 0 : index
    %c0_7 = arith.constant 0 : index
    %c0_8 = arith.constant 0 : index
    %7 = vector.load %arg5[%c0_6, %c0_7, %c0_8] : memref<1x32x1xf32, #tpu.memory_space<vmem>>, vector<1x32x1xf32>
    %cst_9 = arith.constant dense<0.000000e+00> : vector<32xf32>
    %8 = vector.multi_reduction <add>, %5, %cst_9 [1] : vector<32x512xf32> to vector<32xf32>
    %9 = vector.shape_cast %8 : vector<32xf32> to vector<32x1xf32>
    %10 = vector.shape_cast %9 : vector<32x1xf32> to vector<1x32x1xf32>
    %11 = arith.addf %7, %10 : vector<1x32x1xf32>
    %c0_10 = arith.constant 0 : index
    %c0_11 = arith.constant 0 : index
    %c0_12 = arith.constant 0 : index
    %12 = vector.load %arg5[%c0_10, %c0_11, %c0_12] : memref<1x32x1xf32, #tpu.memory_space<vmem>>, vector<1x32x1xf32>
    tpu.vector_store %arg5[%c0_10, %c0_11, %c0_12], %11 {strides = array<i32>} : memref<1x32x1xf32, #tpu.memory_space<vmem>>, vector<1x32x1xf32>,
    %c0_13 = arith.constant 0 : index
    %c0_14 = arith.constant 0 : index
    %c0_15 = arith.constant 0 : index
    %13 = vector.load %arg6[%c0_13, %c0_14, %c0_15] : memref<1x32x1xf32, #tpu.memory_space<vmem>>, vector<1x32x1xf32>
    %14 = arith.mulf %5, %5 : vector<32x512xf32>
    %cst_16 = arith.constant dense<0.000000e+00> : vector<32xf32>
    %15 = vector.multi_reduction <add>, %14, %cst_16 [1] : vector<32x512xf32> to vector<32xf32>
    %16 = vector.shape_cast %15 : vector<32xf32> to vector<32x1xf32>
    %17 = vector.shape_cast %16 : vector<32x1xf32> to vector<1x32x1xf32>
    %18 = arith.addf %13, %17 : vector<1x32x1xf32>
    %c0_17 = arith.constant 0 : index
    %c0_18 = arith.constant 0 : index
    %c0_19 = arith.constant 0 : index
    %19 = vector.load %arg6[%c0_17, %c0_18, %c0_19] : memref<1x32x1xf32, #tpu.memory_space<vmem>>, vector<1x32x1xf32>
    tpu.vector_store %arg6[%c0_17, %c0_18, %c0_19], %18 {strides = array<i32>} : memref<1x32x1xf32, #tpu.memory_space<vmem>>, vector<1x32x1xf32>,
    return
  }
  func.func @transform_0(%arg0: i32, %arg1: i32) -> (i32, i32) {
    %c1_i32 = arith.constant 1 : i32
    %0 = arith.muli %arg0, %c1_i32 : i32
    %1 = arith.addi %0, %arg1 : i32
    %c0_i32 = arith.constant 0 : i32
    %c0_i32_0 = arith.constant 0 : i32
    return %c0_i32, %1 : i32, i32
  }
  func.func @transform_1(%arg0: i32, %arg1: i32) -> (i32, i32) {
    %c0_i32 = arith.constant 0 : i32
    %c0_i32_0 = arith.constant 0 : i32
    %c0_i32_1 = arith.constant 0 : i32
    return %c0_i32, %c0_i32_0 : i32, i32
  }
  func.func @transform_2(%arg0: i32, %arg1: i32) -> (i32, i32) {
    %c1_i32 = arith.constant 1 : i32
    %0 = arith.muli %arg0, %c1_i32 : i32
    %1 = arith.addi %0, %arg1 : i32
    %c0_i32 = arith.constant 0 : i32
    %c0_i32_0 = arith.constant 0 : i32
    return %c0_i32, %1 : i32, i32
  }
  func.func @transform_3(%arg0: i32, %arg1: i32) -> (i32, i32, i32) {
    %c0_i32 = arith.constant 0 : i32
    %c0_i32_0 = arith.constant 0 : i32
    %c0_i32_1 = arith.constant 0 : i32
    return %arg0, %c0_i32, %c0_i32_0 : i32, i32, i32
  }
  func.func @transform_4(%arg0: i32, %arg1: i32) -> (i32, i32, i32) {
    %c0_i32 = arith.constant 0 : i32
    %c0_i32_0 = arith.constant 0 : i32
    %c0_i32_1 = arith.constant 0 : i32
    return %arg0, %c0_i32, %c0_i32_0 : i32, i32, i32
  }
}

module attributes {stable_mosaic.version = 11 : i64} {
  func.func @_conv_stats_kernel(%arg0: i32, %arg1: i32, %arg2: memref<72x2048xf32, #tpu.memory_space<vmem>>, %arg3: memref<16x72xf32, #tpu.memory_space<vmem>>, %arg4: memref<16x2048xf32, #tpu.memory_space<vmem>>, %arg5: memref<1x16x1xf32, #tpu.memory_space<vmem>>, %arg6: memref<1x16x1xf32, #tpu.memory_space<vmem>>) attributes {dimension_semantics = [#tpu.dimension_semantics<parallel>, #tpu.dimension_semantics<arbitrary>], iteration_bounds = array<i64: 1, 1>, scalar_prefetch = 0 : i64, scratch_operands = 0 : i64, tpu.core_type = #tpu.core_type<tc>, window_params = [{transform_indices = @transform_0, window_bounds = array<i64: 72, 2048>}, {pipeline_mode = #tpu.pipeline_mode<synchronous>, transform_indices = @transform_1, window_bounds = array<i64: 16, 72>}, {transform_indices = @transform_2, window_bounds = array<i64: 16, 2048>}, {transform_indices = @transform_3, window_bounds = array<i64: 1, 16, 1>}, {transform_indices = @transform_4, window_bounds = array<i64: 1, 16, 1>}]} {
    %c0_i32 = arith.constant 0 : i32
    %0 = arith.cmpi eq, %arg1, %c0_i32 : i32
    %1 = arith.extui %0 : i1 to i32
    %c0_i32_0 = arith.constant 0 : i32
    %2 = arith.cmpi ne, %1, %c0_i32_0 : i32
    scf.if %2 {
      %cst_20 = arith.constant 0.000000e+00 : f32
      %20 = vector.broadcast %cst_20 : f32 to vector<1x16x1xf32>
      %c0_21 = arith.constant 0 : index
      %c0_22 = arith.constant 0 : index
      %c0_23 = arith.constant 0 : index
      %21 = vector.load %arg5[%c0_21, %c0_22, %c0_23] : memref<1x16x1xf32, #tpu.memory_space<vmem>>, vector<1x16x1xf32>
      tpu.vector_store %arg5[%c0_21, %c0_22, %c0_23], %20 {strides = array<i32>} : memref<1x16x1xf32, #tpu.memory_space<vmem>>, vector<1x16x1xf32>,
      %cst_24 = arith.constant 0.000000e+00 : f32
      %22 = vector.broadcast %cst_24 : f32 to vector<1x16x1xf32>
      %c0_25 = arith.constant 0 : index
      %c0_26 = arith.constant 0 : index
      %c0_27 = arith.constant 0 : index
      %23 = vector.load %arg6[%c0_25, %c0_26, %c0_27] : memref<1x16x1xf32, #tpu.memory_space<vmem>>, vector<1x16x1xf32>
      tpu.vector_store %arg6[%c0_25, %c0_26, %c0_27], %22 {strides = array<i32>} : memref<1x16x1xf32, #tpu.memory_space<vmem>>, vector<1x16x1xf32>,
    } else {
    }
    %c0 = arith.constant 0 : index
    %c0_1 = arith.constant 0 : index
    %3 = vector.load %arg3[%c0, %c0_1] : memref<16x72xf32, #tpu.memory_space<vmem>>, vector<16x72xf32>
    %c0_2 = arith.constant 0 : index
    %c0_3 = arith.constant 0 : index
    %4 = vector.load %arg2[%c0_2, %c0_3] : memref<72x2048xf32, #tpu.memory_space<vmem>>, vector<72x2048xf32>
    %cst = arith.constant dense<0.000000e+00> : vector<16x2048xf32>
    %5 = tpu.matmul %3, %4, %cst {dimension_numbers = #tpu.dot_dimension_numbers<[1], [0], [0], [1], [0, 0, 1, 1], [], []>} : vector<16x72xf32>, vector<72x2048xf32>, vector<16x2048xf32> -> vector<16x2048xf32>
    %c0_4 = arith.constant 0 : index
    %c0_5 = arith.constant 0 : index
    %6 = vector.load %arg4[%c0_4, %c0_5] : memref<16x2048xf32, #tpu.memory_space<vmem>>, vector<16x2048xf32>
    tpu.vector_store %arg4[%c0_4, %c0_5], %5 {strides = array<i32>} : memref<16x2048xf32, #tpu.memory_space<vmem>>, vector<16x2048xf32>,
    %c0_6 = arith.constant 0 : index
    %c0_7 = arith.constant 0 : index
    %c0_8 = arith.constant 0 : index
    %7 = vector.load %arg5[%c0_6, %c0_7, %c0_8] : memref<1x16x1xf32, #tpu.memory_space<vmem>>, vector<1x16x1xf32>
    %cst_9 = arith.constant dense<0.000000e+00> : vector<16xf32>
    %8 = vector.multi_reduction <add>, %5, %cst_9 [1] : vector<16x2048xf32> to vector<16xf32>
    %9 = vector.shape_cast %8 : vector<16xf32> to vector<16x1xf32>
    %10 = vector.shape_cast %9 : vector<16x1xf32> to vector<1x16x1xf32>
    %11 = arith.addf %7, %10 : vector<1x16x1xf32>
    %c0_10 = arith.constant 0 : index
    %c0_11 = arith.constant 0 : index
    %c0_12 = arith.constant 0 : index
    %12 = vector.load %arg5[%c0_10, %c0_11, %c0_12] : memref<1x16x1xf32, #tpu.memory_space<vmem>>, vector<1x16x1xf32>
    tpu.vector_store %arg5[%c0_10, %c0_11, %c0_12], %11 {strides = array<i32>} : memref<1x16x1xf32, #tpu.memory_space<vmem>>, vector<1x16x1xf32>,
    %c0_13 = arith.constant 0 : index
    %c0_14 = arith.constant 0 : index
    %c0_15 = arith.constant 0 : index
    %13 = vector.load %arg6[%c0_13, %c0_14, %c0_15] : memref<1x16x1xf32, #tpu.memory_space<vmem>>, vector<1x16x1xf32>
    %14 = arith.mulf %5, %5 : vector<16x2048xf32>
    %cst_16 = arith.constant dense<0.000000e+00> : vector<16xf32>
    %15 = vector.multi_reduction <add>, %14, %cst_16 [1] : vector<16x2048xf32> to vector<16xf32>
    %16 = vector.shape_cast %15 : vector<16xf32> to vector<16x1xf32>
    %17 = vector.shape_cast %16 : vector<16x1xf32> to vector<1x16x1xf32>
    %18 = arith.addf %13, %17 : vector<1x16x1xf32>
    %c0_17 = arith.constant 0 : index
    %c0_18 = arith.constant 0 : index
    %c0_19 = arith.constant 0 : index
    %19 = vector.load %arg6[%c0_17, %c0_18, %c0_19] : memref<1x16x1xf32, #tpu.memory_space<vmem>>, vector<1x16x1xf32>
    tpu.vector_store %arg6[%c0_17, %c0_18, %c0_19], %18 {strides = array<i32>} : memref<1x16x1xf32, #tpu.memory_space<vmem>>, vector<1x16x1xf32>,
    return
  }
  func.func @transform_0(%arg0: i32, %arg1: i32) -> (i32, i32) {
    %c1_i32 = arith.constant 1 : i32
    %0 = arith.muli %arg0, %c1_i32 : i32
    %1 = arith.addi %0, %arg1 : i32
    %c0_i32 = arith.constant 0 : i32
    %c0_i32_0 = arith.constant 0 : i32
    return %c0_i32, %1 : i32, i32
  }
  func.func @transform_1(%arg0: i32, %arg1: i32) -> (i32, i32) {
    %c0_i32 = arith.constant 0 : i32
    %c0_i32_0 = arith.constant 0 : i32
    %c0_i32_1 = arith.constant 0 : i32
    return %c0_i32, %c0_i32_0 : i32, i32
  }
  func.func @transform_2(%arg0: i32, %arg1: i32) -> (i32, i32) {
    %c1_i32 = arith.constant 1 : i32
    %0 = arith.muli %arg0, %c1_i32 : i32
    %1 = arith.addi %0, %arg1 : i32
    %c0_i32 = arith.constant 0 : i32
    %c0_i32_0 = arith.constant 0 : i32
    return %c0_i32, %1 : i32, i32
  }
  func.func @transform_3(%arg0: i32, %arg1: i32) -> (i32, i32, i32) {
    %c0_i32 = arith.constant 0 : i32
    %c0_i32_0 = arith.constant 0 : i32
    %c0_i32_1 = arith.constant 0 : i32
    return %arg0, %c0_i32, %c0_i32_0 : i32, i32, i32
  }
  func.func @transform_4(%arg0: i32, %arg1: i32) -> (i32, i32, i32) {
    %c0_i32 = arith.constant 0 : i32
    %c0_i32_0 = arith.constant 0 : i32
    %c0_i32_1 = arith.constant 0 : i32
    return %arg0, %c0_i32, %c0_i32_0 : i32, i32, i32
  }
}

module attributes {stable_mosaic.version = 11 : i64} {
  func.func @_conv_sigmoid_kernel(%arg0: i32, %arg1: memref<36x4096xf32, #tpu.memory_space<vmem>>, %arg2: memref<12x36xf32, #tpu.memory_space<vmem>>, %arg3: memref<12x1xf32, #tpu.memory_space<vmem>>, %arg4: memref<12x4096xf32, #tpu.memory_space<vmem>>) attributes {dimension_semantics = [#tpu.dimension_semantics<parallel>], iteration_bounds = array<i64: 2>, scalar_prefetch = 0 : i64, scratch_operands = 0 : i64, tpu.core_type = #tpu.core_type<tc>, window_params = [{transform_indices = @transform_0, window_bounds = array<i64: 36, 4096>}, {pipeline_mode = #tpu.pipeline_mode<synchronous>, transform_indices = @transform_1, window_bounds = array<i64: 12, 36>}, {pipeline_mode = #tpu.pipeline_mode<synchronous>, transform_indices = @transform_2, window_bounds = array<i64: 12, 1>}, {transform_indices = @transform_3, window_bounds = array<i64: 12, 4096>}]} {
    %c0 = arith.constant 0 : index
    %c0_0 = arith.constant 0 : index
    %0 = vector.load %arg2[%c0, %c0_0] : memref<12x36xf32, #tpu.memory_space<vmem>>, vector<12x36xf32>
    %c0_1 = arith.constant 0 : index
    %c0_2 = arith.constant 0 : index
    %1 = vector.load %arg1[%c0_1, %c0_2] : memref<36x4096xf32, #tpu.memory_space<vmem>>, vector<36x4096xf32>
    %cst = arith.constant dense<0.000000e+00> : vector<12x4096xf32>
    %2 = tpu.matmul %0, %1, %cst {dimension_numbers = #tpu.dot_dimension_numbers<[1], [0], [0], [1], [0, 0, 1, 1], [], []>} : vector<12x36xf32>, vector<36x4096xf32>, vector<12x4096xf32> -> vector<12x4096xf32>
    %c0_3 = arith.constant 0 : index
    %c0_4 = arith.constant 0 : index
    %3 = vector.load %arg3[%c0_3, %c0_4] : memref<12x1xf32, #tpu.memory_space<vmem>>, vector<12x1xf32>
    %4 = vector.broadcast %3 : vector<12x1xf32> to vector<12x4096xf32>
    %5 = arith.addf %2, %4 : vector<12x4096xf32>
    %6 = arith.negf %5 : vector<12x4096xf32>
    %7 = math.exp %6 : vector<12x4096xf32>
    %cst_5 = arith.constant 1.000000e+00 : f32
    %8 = vector.broadcast %cst_5 : f32 to vector<12x4096xf32>
    %9 = arith.addf %8, %7 : vector<12x4096xf32>
    %10 = arith.divf %8, %9 : vector<12x4096xf32>
    %c0_6 = arith.constant 0 : index
    %c0_7 = arith.constant 0 : index
    %11 = vector.load %arg4[%c0_6, %c0_7] : memref<12x4096xf32, #tpu.memory_space<vmem>>, vector<12x4096xf32>
    tpu.vector_store %arg4[%c0_6, %c0_7], %10 {strides = array<i32>} : memref<12x4096xf32, #tpu.memory_space<vmem>>, vector<12x4096xf32>,
    return
  }
  func.func @transform_0(%arg0: i32) -> (i32, i32) {
    %c0_i32 = arith.constant 0 : i32
    %c0_i32_0 = arith.constant 0 : i32
    return %c0_i32, %arg0 : i32, i32
  }
  func.func @transform_1(%arg0: i32) -> (i32, i32) {
    %c0_i32 = arith.constant 0 : i32
    %c0_i32_0 = arith.constant 0 : i32
    %c0_i32_1 = arith.constant 0 : i32
    return %c0_i32, %c0_i32_0 : i32, i32
  }
  func.func @transform_2(%arg0: i32) -> (i32, i32) {
    %c0_i32 = arith.constant 0 : i32
    %c0_i32_0 = arith.constant 0 : i32
    %c0_i32_1 = arith.constant 0 : i32
    return %c0_i32, %c0_i32_0 : i32, i32
  }
  func.func @transform_3(%arg0: i32) -> (i32, i32) {
    %c0_i32 = arith.constant 0 : i32
    %c0_i32_0 = arith.constant 0 : i32
    return %c0_i32, %arg0 : i32, i32
  }
}

</mosaic_0001>

<llo_original>
// kernel: tile.48
$region0: #{tile.48}
  #allocation0 [shape = 's32[1]{0}', space=sflag, size = 0x4, scoped, tag = 'scoped memory for tile.48']
  %s0 = inlined_call_operand.vmem [shape: f32[32], index: 0, kind: input, shape index: {}]
  %s1 = inlined_call_operand.vmem [shape: f32[4,32], index: 1, kind: output, shape index: {}]
  // Predicated region
  $region2: #{tile.48} parent=0 // pred_check
    _
  $region3: #{tile.48} parent=0 // pred_check_branch
    %3 = sbr.rel (0) target = $region5
  $region4: #{tile.48} parent=0 // pred_region
    _
  $region5: #{tile.48} parent=0 // pred_fallthru
    _
  %v4 = vld [vmem:[%s0] ss:$0 sm:$0xff]
  %5 = vst [vmem:[%s1] sm:$0xf] %v4

// kernel: tile.58
$region0: #{tile.58}
  #allocation0 [shape = 's32[1]{0}', space=sflag, size = 0x4, scoped, tag = 'scoped memory for tile.58']
  %s0 = inlined_call_operand.vmem [shape: f32[16], index: 0, kind: input, shape index: {}]
  %s1 = inlined_call_operand.vmem [shape: f32[4,16], index: 1, kind: output, shape index: {}]
  // Predicated region
  $region2: #{tile.58} parent=0 // pred_check
    _
  $region3: #{tile.58} parent=0 // pred_check_branch
    %3 = sbr.rel (0) target = $region5
  $region4: #{tile.58} parent=0 // pred_region
    _
  $region5: #{tile.58} parent=0 // pred_fallthru
    _
  %v4 = vld [vmem:[%s0] ss:$0 sm:$0xff]
  %5 = vst [vmem:[%s1] sm:$0xf] %v4

// kernel: decoder_forward.5
$region0: #{decoder_forward.5}
  #allocation0 [shape = 'u32[]', space=smem, size = 0x4, offset = 0x4, fixed_abs, tag = 'smem constant byte address 0x4 - core index']
  #allocation1 [shape = 'u32[144,128]{1,0:T(1,128)}', space=vmem, size = 0x12000, scoped, tag = 'internal scratch']
  %s0 = inlined_call_operand.vmem [shape: f32[576,32], index: 0, kind: input, shape index: {}]
  %s1 = inlined_call_operand.vmem [shape: f32[128,576], index: 1, kind: input, shape index: {}]
  %s2 = inlined_call_operand.vmem [shape: f32[128,32], index: 2, kind: output, shape index: {0}]
  %s3 = inlined_call_operand.vmem [shape: f32[1,128,1], index: 3, kind: output, shape index: {1}]
  %s4 = inlined_call_operand.vmem [shape: f32[1,128,1], index: 4, kind: output, shape index: {2}]
  %5 = xla_tuple %s2, %s3, %s4
  %s6 = sld [smem:[#allocation0]]
  $region38: #{decoder_forward.5} parent=0
    _
  %s8 = ssub.s32 1, %s6
  %s9 = scalar_select 0, %s8, %s6
  // Predicated region
  $region2: #{decoder_forward.5} parent=0 // pred_check
    _
  $region3: #{decoder_forward.5} parent=0 // pred_check_branch
    %11 = sbr.rel (0) target = $region5
  $region4: #{decoder_forward.5} parent=0 // pred_region
    %s12 = sadd.s32 0, 0
    %p13 = scmp.lt.s32.totalorder %s12, 0
    %s14 = scalar_select %p13, %s12, 0
    %s15 = smul.addr %s14, 8
    %s16 = scalar_lea.vmem %s0, %s15
    %s17 = sadd.s32 0, 0
  $region5: #{decoder_forward.5} parent=0 // pred_fallthru
    _
  // Predicated region
  $region6: #{decoder_forward.5} parent=0 // pred_check
    _
  $region7: #{decoder_forward.5} parent=0 // pred_check_branch
    %19 = sbr.rel (0) target = $region9
  $region8: #{decoder_forward.5} parent=0 // pred_region
    _
  $region9: #{decoder_forward.5} parent=0 // pred_fallthru
    _
  %s20 = sadd.s32 0, 0
  %p21 = scmp.lt.s32.totalorder %s20, 0
  %s22 = scalar_select %p21, %s20, 0
  %s23 = smul.addr %s22, 8
  %s24 = scalar_lea.vmem %s0, %s23
  %s25 = sadd.s32 0, 0
  %p26 = scmp.lt.s32.totalorder %s25, 0
  %s27 = scalar_select %p26, %s25, 0
  %s28 = smul.addr %s27, 8
  %s29 = scalar_lea.vmem %s2, %s28
  %s30 = sadd.s32 0, 0
  %p31 = scmp.lt.s32.totalorder %s30, 0
  %s32 = scalar_select %p31, %s30, 0
  %s33 = smul.addr %s32, 8
  %s34 = scalar_lea.vmem %s0, %s33
  %s35 = sadd.s32 0, 0
  %s36 = sadd.s32 0, 0
  %p37 = scmp.lt.s32.totalorder %s36, 0
  %s38 = scalar_select %p37, %s36, 0
  %s39 = smul.addr %s38, 8
  %s40 = scalar_lea.vmem %s2, %s39
  %s41 = sadd.s32 0, 0
  %p42 = scmp.eq.s32.totalorder 0, 0
  // Predicated region
  $region10: #{decoder_forward.5} parent=0 // pred_check
    %p43 = pneg %p42
  $region11: #{decoder_forward.5} parent=0 // pred_check_branch
    %45 = sbr.rel (%p43) target = $region13
  $region12: #{decoder_forward.5} parent=0 // pred_region
    %vm46 = vcmask 7168
    %47 = vst.msk [vmem:[%s3] sm:$0xff] %vm46, 0.0
    %48 = vst.msk [vmem:[%s3 + $0x8] sm:$0xff] %vm46, 0.0
    %49 = vst.msk [vmem:[%s3 + $0x10] sm:$0xff] %vm46, 0.0
    %50 = vst.msk [vmem:[%s3 + $0x18] sm:$0xff] %vm46, 0.0
    %51 = vst.msk [vmem:[%s3 + $0x20] sm:$0xff] %vm46, 0.0
    %52 = vst.msk [vmem:[%s3 + $0x28] sm:$0xff] %vm46, 0.0
    %53 = vst.msk [vmem:[%s3 + $0x30] sm:$0xff] %vm46, 0.0
    %54 = vst.msk [vmem:[%s3 + $0x38] sm:$0xff] %vm46, 0.0
    %55 = vst.msk [vmem:[%s3 + $0x40] sm:$0xff] %vm46, 0.0
    %56 = vst.msk [vmem:[%s3 + $0x48] sm:$0xff] %vm46, 0.0
    %57 = vst.msk [vmem:[%s3 + $0x50] sm:$0xff] %vm46, 0.0
    %58 = vst.msk [vmem:[%s3 + $0x58] sm:$0xff] %vm46, 0.0
    %59 = vst.msk [vmem:[%s3 + $0x60] sm:$0xff] %vm46, 0.0
    %60 = vst.msk [vmem:[%s3 + $0x68] sm:$0xff] %vm46, 0.0
    %61 = vst.msk [vmem:[%s3 + $0x70] sm:$0xff] %vm46, 0.0
    %62 = vst.msk [vmem:[%s3 + $0x78] sm:$0xff] %vm46, 0.0
    %63 = vst.msk [vmem:[%s4] sm:$0xff] %vm46, 0.0
    %64 = vst.msk [vmem:[%s4 + $0x8] sm:$0xff] %vm46, 0.0
    %65 = vst.msk [vmem:[%s4 + $0x10] sm:$0xff] %vm46, 0.0
    %66 = vst.msk [vmem:[%s4 + $0x18] sm:$0xff] %vm46, 0.0
    %67 = vst.msk [vmem:[%s4 + $0x20] sm:$0xff] %vm46, 0.0
    %68 = vst.msk [vmem:[%s4 + $0x28] sm:$0xff] %vm46, 0.0
    %69 = vst.msk [vmem:[%s4 + $0x30] sm:$0xff] %vm46, 0.0
    %70 = vst.msk [vmem:[%s4 + $0x38] sm:$0xff] %vm46, 0.0
    %71 = vst.msk [vmem:[%s4 + $0x40] sm:$0xff] %vm46, 0.0
    %72 = vst.msk [vmem:[%s4 + $0x48] sm:$0xff] %vm46, 0.0
    %73 = vst.msk [vmem:[%s4 + $0x50] sm:$0xff] %vm46, 0.0
    %74 = vst.msk [vmem:[%s4 + $0x58] sm:$0xff] %vm46, 0.0
    %75 = vst.msk [vmem:[%s4 + $0x60] sm:$0xff] %vm46, 0.0
    %76 = vst.msk [vmem:[%s4 + $0x68] sm:$0xff] %vm46, 0.0
    %77 = vst.msk [vmem:[%s4 + $0x70] sm:$0xff] %vm46, 0.0
    %78 = vst.msk [vmem:[%s4 + $0x78] sm:$0xff] %vm46, 0.0
  $region13: #{decoder_forward.5} parent=0 // pred_fallthru
    _
  %v79 = vld [vmem:[%s1] sm:$0xff]
  %v80 = vld [vmem:[%s1 + $0x8] sm:$0xff]
  %v81 = vld [vmem:[%s1 + $0x10] sm:$0xff]
  %v82 = vld [vmem:[%s1 + $0x18] sm:$0xff]
  %v83 = vld [vmem:[%s1 + $0x20] sm:$0xff]
  %v84 = vld [vmem:[%s1 + $0x28] sm:$0xff]
  %v85 = vld [vmem:[%s1 + $0x30] sm:$0xff]
  %v86 = vld [vmem:[%s1 + $0x38] sm:$0xff]
  %v87 = vld [vmem:[%s1 + $0x40] sm:$0xff]
  %v88 = vld [vmem:[%s1 + $0x48] sm:$0xff]
  %v89 = vld [vmem:[%s1 + $0x50] sm:$0xff]
  %v90 = vld [vmem:[%s1 + $0x58] sm:$0xff]
  %v91 = vld [vmem:[%s1 + $0x60] sm:$0xff]
  %v92 = vld [vmem:[%s1 + $0x68] sm:$0xff]
  %v93 = vld [vmem:[%s1 + $0x70] sm:$0xff]
  %v94 = vld [vmem:[%s1 + $0x78] sm:$0xff]
  %v95 = vld [vmem:[%s1 + $0x80] sm:$0xff]
  %v96 = vld [vmem:[%s1 + $0x88] sm:$0xff]
  %v97 = vld [vmem:[%s1 + $0x90] sm:$0xff]
  %v98 = vld [vmem:[%s1 + $0x98] sm:$0xff]
  %v99 = vld [vmem:[%s1 + $0xa0] sm:$0xff]
  %v100 = vld [vmem:[%s1 + $0xa8] sm:$0xff]
  %v101 = vld [vmem:[%s1 + $0xb0] sm:$0xff]
  %v102 = vld [vmem:[%s1 + $0xb8] sm:$0xff]
  %v103 = vld [vmem:[%s1 + $0xc0] sm:$0xff]
  %v104 = vld [vmem:[%s1 + $0xc8] sm:$0xff]
  %v105 = vld [vmem:[%s1 + $0xd0] sm:$0xff]
  %v106 = vld [vmem:[%s1 + $0xd8] sm:$0xff]
  %v107 = vld [vmem:[%s1 + $0xe0] sm:$0xff]
  %v108 = vld [vmem:[%s1 + $0xe8] sm:$0xff]
  %v109 = vld [vmem:[%s1 + $0xf0] sm:$0xff]
  %v110 = vld [vmem:[%s1 + $0xf8] sm:$0xff]
  %v111 = vld [vmem:[%s1 + $0x100] sm:$0xff]
  %v112 = vld [vmem:[%s1 + $0x108] sm:$0xff]
  %v113 = vld [vmem:[%s1 + $0x110] sm:$0xff]
  %v114 = vld [vmem:[%s1 + $0x118] sm:$0xff]
  %v115 = vld [vmem:[%s1 + $0x120] sm:$0xff]
  %v116 = vld [vmem:[%s1 + $0x128] sm:$0xff]
  %v117 = vld [vmem:[%s1 + $0x130] sm:$0xff]
  %v118 = vld [vmem:[%s1 + $0x138] sm:$0xff]
  %v119 = vld [vmem:[%s1 + $0x140] sm:$0xff]
  %v120 = vld [vmem:[%s1 + $0x148] sm:$0xff]
  %v121 = vld [vmem:[%s1 + $0x150] sm:$0xff]
  %v122 = vld [vmem:[%s1 + $0x158] sm:$0xff]
  %v123 = vld [vmem:[%s1 + $0x160] sm:$0xff]
  %v124 = vld [vmem:[%s1 + $0x168] sm:$0xff]
  %v125 = vld [vmem:[%s1 + $0x170] sm:$0xff]
  %v126 = vld [vmem:[%s1 + $0x178] sm:$0xff]
  %v127 = vld [vmem:[%s1 + $0x180] sm:$0xff]
  %v128 = vld [vmem:[%s1 + $0x188] sm:$0xff]
  %v129 = vld [vmem:[%s1 + $0x190] sm:$0xff]
  %v130 = vld [vmem:[%s1 + $0x198] sm:$0xff]
  %v131 = vld [vmem:[%s1 + $0x1a0] sm:$0xff]
  %v132 = vld [vmem:[%s1 + $0x1a8] sm:$0xff]
  %v133 = vld [vmem:[%s1 + $0x1b0] sm:$0xff]
  %v134 = vld [vmem:[%s1 + $0x1b8] sm:$0xff]
  %v135 = vld [vmem:[%s1 + $0x1c0] sm:$0xff]
  %v136 = vld [vmem:[%s1 + $0x1c8] sm:$0xff]
  %v137 = vld [vmem:[%s1 + $0x1d0] sm:$0xff]
  %v138 = vld [vmem:[%s1 + $0x1d8] sm:$0xff]
  %v139 = vld [vmem:[%s1 + $0x1e0] sm:$0xff]
  %v140 = vld [vmem:[%s1 + $0x1e8] sm:$0xff]
  %v141 = vld [vmem:[%s1 + $0x1f0] sm:$0xff]
  %v142 = vld [vmem:[%s1 + $0x1f8] sm:$0xff]
  %v143 = vld [vmem:[%s1 + $0x200] sm:$0xff]
  %v144 = vld [vmem:[%s1 + $0x208] sm:$0xff]
  %v145 = vld [vmem:[%s1 + $0x210] sm:$0xff]
  %v146 = vld [vmem:[%s1 + $0x218] sm:$0xff]
  %v147 = vld [vmem:[%s1 + $0x220] sm:$0xff]
  %v148 = vld [vmem:[%s1 + $0x228] sm:$0xff]
  %v149 = vld [vmem:[%s1 + $0x230] sm:$0xff]
  %v150 = vld [vmem:[%s1 + $0x238] sm:$0xff]
  %v151 = vld [vmem:[%s1 + $0x240] sm:$0xff]
  %v152 = vld [vmem:[%s1 + $0x248] sm:$0xff]
  %v153 = vld [vmem:[%s1 + $0x250] sm:$0xff]
  %v154 = vld [vmem:[%s1 + $0x258] sm:$0xff]
  %v155 = vld [vmem:[%s1 + $0x260] sm:$0xff]
  %v156 = vld [vmem:[%s1 + $0x268] sm:$0xff]
  %v157 = vld [vmem:[%s1 + $0x270] sm:$0xff]
  %v158 = vld [vmem:[%s1 + $0x278] sm:$0xff]
  %v159 = vld [vmem:[%s34] sm:$0xff]
  %v160 = vld [vmem:[%s34 + $0x8] sm:$0xff]
  %v161 = vld [vmem:[%s34 + $0x10] sm:$0xff]
  %v162 = vld [vmem:[%s34 + $0x18] sm:$0xff]
  %v163 = vld [vmem:[%s34 + $0x20] sm:$0xff]
  %v164 = vld [vmem:[%s34 + $0x28] sm:$0xff]
  %v165 = vld [vmem:[%s34 + $0x30] sm:$0xff]
  %v166 = vld [vmem:[%s34 + $0x38] sm:$0xff]
  %v167 = vld [vmem:[%s34 + $0x40] sm:$0xff]
  %v168 = vld [vmem:[%s34 + $0x48] sm:$0xff]
  %v169 = vld [vmem:[%s34 + $0x50] sm:$0xff]
  %v170 = vld [vmem:[%s34 + $0x58] sm:$0xff]
  %v171 = vld [vmem:[%s34 + $0x60] sm:$0xff]
  %v172 = vld [vmem:[%s34 + $0x68] sm:$0xff]
  %v173 = vld [vmem:[%s34 + $0x70] sm:$0xff]
  %v174 = vld [vmem:[%s34 + $0x78] sm:$0xff]
  %v175 = vld [vmem:[%s34 + $0x80] sm:$0xff]
  %v176 = vld [vmem:[%s34 + $0x88] sm:$0xff]
  %v177 = vld [vmem:[%s34 + $0x90] sm:$0xff]
  %v178 = vld [vmem:[%s34 + $0x98] sm:$0xff]
  %v179 = vld [vmem:[%s34 + $0xa0] sm:$0xff]
  %v180 = vld [vmem:[%s34 + $0xa8] sm:$0xff]
  %v181 = vld [vmem:[%s34 + $0xb0] sm:$0xff]
  %v182 = vld [vmem:[%s34 + $0xb8] sm:$0xff]
  %v183 = vld [vmem:[%s34 + $0xc0] sm:$0xff]
  %v184 = vld [vmem:[%s34 + $0xc8] sm:$0xff]
  %v185 = vld [vmem:[%s34 + $0xd0] sm:$0xff]
  %v186 = vld [vmem:[%s34 + $0xd8] sm:$0xff]
  %v187 = vld [vmem:[%s34 + $0xe0] sm:$0xff]
  %v188 = vld [vmem:[%s34 + $0xe8] sm:$0xff]
  %v189 = vld [vmem:[%s34 + $0xf0] sm:$0xff]
  %v190 = vld [vmem:[%s34 + $0xf8] sm:$0xff]
  %v191 = vld [vmem:[%s34 + $0x100] sm:$0xff]
  %v192 = vld [vmem:[%s34 + $0x108] sm:$0xff]
  %v193 = vld [vmem:[%s34 + $0x110] sm:$0xff]
  %v194 = vld [vmem:[%s34 + $0x118] sm:$0xff]
  %v195 = vld [vmem:[%s34 + $0x120] sm:$0xff]
  %v196 = vld [vmem:[%s34 + $0x128] sm:$0xff]
  %v197 = vld [vmem:[%s34 + $0x130] sm:$0xff]
  %v198 = vld [vmem:[%s34 + $0x138] sm:$0xff]
  %v199 = vld [vmem:[%s34 + $0x140] sm:$0xff]
  %v200 = vld [vmem:[%s34 + $0x148] sm:$0xff]
  %v201 = vld [vmem:[%s34 + $0x150] sm:$0xff]
  %v202 = vld [vmem:[%s34 + $0x158] sm:$0xff]
  %v203 = vld [vmem:[%s34 + $0x160] sm:$0xff]
  %v204 = vld [vmem:[%s34 + $0x168] sm:$0xff]
  %v205 = vld [vmem:[%s34 + $0x170] sm:$0xff]
  %v206 = vld [vmem:[%s34 + $0x178] sm:$0xff]
  %v207 = vld [vmem:[%s34 + $0x180] sm:$0xff]
  %v208 = vld [vmem:[%s34 + $0x188] sm:$0xff]
  %v209 = vld [vmem:[%s34 + $0x190] sm:$0xff]
  %v210 = vld [vmem:[%s34 + $0x198] sm:$0xff]
  %v211 = vld [vmem:[%s34 + $0x1a0] sm:$0xff]
  %v212 = vld [vmem:[%s34 + $0x1a8] sm:$0xff]
  %v213 = vld [vmem:[%s34 + $0x1b0] sm:$0xff]
  %v214 = vld [vmem:[%s34 + $0x1b8] sm:$0xff]
  %v215 = vld [vmem:[%s34 + $0x1c0] sm:$0xff]
  %v216 = vld [vmem:[%s34 + $0x1c8] sm:$0xff]
  %v217 = vld [vmem:[%s34 + $0x1d0] sm:$0xff]
  %v218 = vld [vmem:[%s34 + $0x1d8] sm:$0xff]
  %v219 = vld [vmem:[%s34 + $0x1e0] sm:$0xff]
  %v220 = vld [vmem:[%s34 + $0x1e8] sm:$0xff]
  %v221 = vld [vmem:[%s34 + $0x1f0] sm:$0xff]
  %v222 = vld [vmem:[%s34 + $0x1f8] sm:$0xff]
  %v223 = vld [vmem:[%s34 + $0x200] sm:$0xff]
  %v224 = vld [vmem:[%s34 + $0x208] sm:$0xff]
  %v225 = vld [vmem:[%s34 + $0x210] sm:$0xff]
  %v226 = vld [vmem:[%s34 + $0x218] sm:$0xff]
  %v227 = vld [vmem:[%s34 + $0x220] sm:$0xff]
  %v228 = vld [vmem:[%s34 + $0x228] sm:$0xff]
  %v229 = vld [vmem:[%s34 + $0x230] sm:$0xff]
  %v230 = vld [vmem:[%s34 + $0x238] sm:$0xff]
  %vm231 = vcmask 523264
  %v233 = vsel %vm231, %v83, 0
  %v236 = vsel %vm231, %v88, 0
  %v239 = vsel %vm231, %v93, 0
  %v242 = vsel %vm231, %v98, 0
  %v245 = vsel %vm231, %v103, 0
  %v248 = vsel %vm231, %v108, 0
  %v251 = vsel %vm231, %v113, 0
  %v254 = vsel %vm231, %v118, 0
  %v257 = vsel %vm231, %v123, 0
  %v260 = vsel %vm231, %v128, 0
  %v263 = vsel %vm231, %v133, 0
  %v266 = vsel %vm231, %v138, 0
  %v269 = vsel %vm231, %v143, 0
  %v272 = vsel %vm231, %v148, 0
  %v275 = vsel %vm231, %v153, 0
  %v278 = vsel %vm231, %v158, 0
  %280 = vmatprep.subr.mxu0 0.0
  %281 = vmatpush1.msra.mxu0 %v174
  %282 = vmatprep.subr.mxu0 0.0
  %283 = vmatpush1.msra.mxu0 %v173
  %284 = vmatprep.subr.mxu0 0.0
  %285 = vmatpush1.msra.mxu0 %v172
  %286 = vmatprep.subr.mxu0 0.0
  %287 = vmatpush1.msra.mxu0 %v171
  %288 = vmatprep.subr.mxu0 0.0
  %289 = vmatpush1.msra.mxu0 %v170
  %290 = vmatprep.subr.mxu0 0.0
  %291 = vmatpush1.msra.mxu0 %v169
  %292 = vmatprep.subr.mxu0 0.0
  %293 = vmatpush1.msra.mxu0 %v168
  %294 = vmatprep.subr.mxu0 0.0
  %295 = vmatpush1.msra.mxu0 %v167
  %296 = vmatprep.subr.mxu0 0.0
  %297 = vmatpush1.msra.mxu0 %v166
  %298 = vmatprep.subr.mxu0 0.0
  %299 = vmatpush1.msra.mxu0 %v165
  %300 = vmatprep.subr.mxu0 0.0
  %301 = vmatpush1.msra.mxu0 %v164
  %302 = vmatprep.subr.mxu0 0.0
  %303 = vmatpush1.msra.mxu0 %v163
  %304 = vmatprep.subr.mxu0 0.0
  %305 = vmatpush1.msra.mxu0 %v162
  %306 = vmatprep.subr.mxu0 0.0
  %307 = vmatpush1.msra.mxu0 %v161
  %308 = vmatprep.subr.mxu0 0.0
  %309 = vmatpush1.msra.mxu0 %v160
  %310 = vmatprep.subr.mxu0 0.0
  %311 = vmatpush1.msra.mxu0 %v159
  %312 = vmatprep.subr.mxu0 0.0
  %313 = vmatpush2.msra.mxu0 %v190
  %314 = vmatprep.subr.mxu0 0.0
  %315 = vmatpush2.msra.mxu0 %v189
  %316 = vmatprep.subr.mxu0 0.0
  %317 = vmatpush2.msra.mxu0 %v188
  %318 = vmatprep.subr.mxu0 0.0
  %319 = vmatpush2.msra.mxu0 %v187
  %320 = vmatprep.subr.mxu0 0.0
  %321 = vmatpush2.msra.mxu0 %v186
  %322 = vmatprep.subr.mxu0 0.0
  %323 = vmatpush2.msra.mxu0 %v185
  %324 = vmatprep.subr.mxu0 0.0
  %325 = vmatpush2.msra.mxu0 %v184
  %326 = vmatprep.subr.mxu0 0.0
  %327 = vmatpush2.msra.mxu0 %v183
  %328 = vmatprep.subr.mxu0 0.0
  %329 = vmatpush2.msra.mxu0 %v182
  %330 = vmatprep.subr.mxu0 0.0
  %331 = vmatpush2.msra.mxu0 %v181
  %332 = vmatprep.subr.mxu0 0.0
  %333 = vmatpush2.msra.mxu0 %v180
  %334 = vmatprep.subr.mxu0 0.0
  %335 = vmatpush2.msra.mxu0 %v179
  %336 = vmatprep.subr.mxu0 0.0
  %337 = vmatpush2.msra.mxu0 %v178
  %338 = vmatprep.subr.mxu0 0.0
  %339 = vmatpush2.msra.mxu0 %v177
  %340 = vmatprep.subr.mxu0 0.0
  %341 = vmatpush2.msra.mxu0 %v176
  %342 = vmatprep.subr.mxu0 0.0
  %343 = vmatpush2.msra.mxu0 %v175
  %344 = vmatprep.mubr.f32.mxu0 %v80
  %345 = vmatmul.mubr.f32.gmra.mxu0 %v79
  %v346 = vpop.f32.mrf.mxu0
  %v347 = vadd.f32 0.0, %v346
  %v348 = vpop.f32.mrf.mxu0
  %349 = vmatprep.mubr.f32.mxu0 %v85
  %350 = vmatmul.mubr.f32.gmra.mxu0 %v84
  %v351 = vpop.f32.mrf.mxu0
  %v352 = vadd.f32 0.0, %v351
  %v353 = vpop.f32.mrf.mxu0
  %354 = vmatprep.mubr.f32.mxu0 %v90
  %355 = vmatmul.mubr.f32.gmra.mxu0 %v89
  %v356 = vpop.f32.mrf.mxu0
  %v357 = vadd.f32 0.0, %v356
  %v358 = vpop.f32.mrf.mxu0
  %359 = vmatprep.mubr.f32.mxu0 %v95
  %360 = vmatmul.mubr.f32.gmra.mxu0 %v94
  %v361 = vpop.f32.mrf.mxu0
  %v362 = vadd.f32 0.0, %v361
  %v363 = vpop.f32.mrf.mxu0
  %364 = vmatprep.mubr.f32.mxu0 %v100
  %365 = vmatmul.mubr.f32.gmra.mxu0 %v99
  %v366 = vpop.f32.mrf.mxu0
  %v367 = vadd.f32 0.0, %v366
  %v368 = vpop.f32.mrf.mxu0
  %369 = vmatprep.mubr.f32.mxu0 %v105
  %370 = vmatmul.mubr.f32.gmra.mxu0 %v104
  %v371 = vpop.f32.mrf.mxu0
  %v372 = vadd.f32 0.0, %v371
  %v373 = vpop.f32.mrf.mxu0
  %374 = vmatprep.mubr.f32.mxu0 %v110
  %375 = vmatmul.mubr.f32.gmra.mxu0 %v109
  %v376 = vpop.f32.mrf.mxu0
  %v377 = vadd.f32 0.0, %v376
  %v378 = vpop.f32.mrf.mxu0
  %379 = vmatprep.mubr.f32.mxu0 %v115
  %380 = vmatmul.mubr.f32.gmra.mxu0 %v114
  %v381 = vpop.f32.mrf.mxu0
  %v382 = vadd.f32 0.0, %v381
  %v383 = vpop.f32.mrf.mxu0
  %384 = vmatprep.mubr.f32.mxu0 %v120
  %385 = vmatmul.mubr.f32.gmra.mxu0 %v119
  %v386 = vpop.f32.mrf.mxu0
  %v387 = vadd.f32 0.0, %v386
  %v388 = vpop.f32.mrf.mxu0
  %389 = vmatprep.mubr.f32.mxu0 %v125
  %390 = vmatmul.mubr.f32.gmra.mxu0 %v124
  %v391 = vpop.f32.mrf.mxu0
  %v392 = vadd.f32 0.0, %v391
  %v393 = vpop.f32.mrf.mxu0
  %394 = vmatprep.mubr.f32.mxu0 %v130
  %395 = vmatmul.mubr.f32.gmra.mxu0 %v129
  %v396 = vpop.f32.mrf.mxu0
  %v397 = vadd.f32 0.0, %v396
  %v398 = vpop.f32.mrf.mxu0
  %399 = vmatprep.mubr.f32.mxu0 %v135
  %400 = vmatmul.mubr.f32.gmra.mxu0 %v134
  %v401 = vpop.f32.mrf.mxu0
  %v402 = vadd.f32 0.0, %v401
  %v403 = vpop.f32.mrf.mxu0
  %404 = vmatprep.mubr.f32.mxu0 %v140
  %405 = vmatmul.mubr.f32.gmra.mxu0 %v139
  %v406 = vpop.f32.mrf.mxu0
  %v407 = vadd.f32 0.0, %v406
  %v408 = vpop.f32.mrf.mxu0
  %409 = vmatprep.mubr.f32.mxu0 %v145
  %410 = vmatmul.mubr.f32.gmra.mxu0 %v144
  %v411 = vpop.f32.mrf.mxu0
  %v412 = vadd.f32 0.0, %v411
  %v413 = vpop.f32.mrf.mxu0
  %414 = vmatprep.mubr.f32.mxu0 %v150
  %415 = vmatmul.mubr.f32.gmra.mxu0 %v149
  %v416 = vpop.f32.mrf.mxu0
  %v417 = vadd.f32 0.0, %v416
  %v418 = vpop.f32.mrf.mxu0
  %419 = vmatprep.mubr.f32.mxu0 %v155
  %420 = vmatmul.mubr.f32.gmra.mxu0 %v154
  %v421 = vpop.f32.mrf.mxu0
  %v422 = vadd.f32 0.0, %v421
  %v423 = vpop.f32.mrf.mxu0
  %424 = vdwg.mxu0
  %425 = vmatprep.subr.mxu0 0.0
  %426 = vmatpush1.msra.mxu0 %v206
  %427 = vmatprep.subr.mxu0 0.0
  %428 = vmatpush1.msra.mxu0 %v205
  %429 = vmatprep.subr.mxu0 0.0
  %430 = vmatpush1.msra.mxu0 %v204
  %431 = vmatprep.subr.mxu0 0.0
  %432 = vmatpush1.msra.mxu0 %v203
  %433 = vmatprep.subr.mxu0 0.0
  %434 = vmatpush1.msra.mxu0 %v202
  %435 = vmatprep.subr.mxu0 0.0
  %436 = vmatpush1.msra.mxu0 %v201
  %437 = vmatprep.subr.mxu0 0.0
  %438 = vmatpush1.msra.mxu0 %v200
  %439 = vmatprep.subr.mxu0 0.0
  %440 = vmatpush1.msra.mxu0 %v199
  %441 = vmatprep.subr.mxu0 0.0
  %442 = vmatpush1.msra.mxu0 %v198
  %443 = vmatprep.subr.mxu0 0.0
  %444 = vmatpush1.msra.mxu0 %v197
  %445 = vmatprep.subr.mxu0 0.0
  %446 = vmatpush1.msra.mxu0 %v196
  %447 = vmatprep.subr.mxu0 0.0
  %448 = vmatpush1.msra.mxu0 %v195
  %449 = vmatprep.subr.mxu0 0.0
  %450 = vmatpush1.msra.mxu0 %v194
  %451 = vmatprep.subr.mxu0 0.0
  %452 = vmatpush1.msra.mxu0 %v193
  %453 = vmatprep.subr.mxu0 0.0
  %454 = vmatpush1.msra.mxu0 %v192
  %455 = vmatprep.subr.mxu0 0.0
  %456 = vmatpush1.msra.mxu0 %v191
  %457 = vmatprep.subr.mxu0 0.0
  %458 = vmatpush2.msra.mxu0 %v222
  %459 = vmatprep.subr.mxu0 0.0
  %460 = vmatpush2.msra.mxu0 %v221
  %461 = vmatprep.subr.mxu0 0.0
  %462 = vmatpush2.msra.mxu0 %v220
  %463 = vmatprep.subr.mxu0 0.0
  %464 = vmatpush2.msra.mxu0 %v219
  %465 = vmatprep.subr.mxu0 0.0
  %466 = vmatpush2.msra.mxu0 %v218
  %467 = vmatprep.subr.mxu0 0.0
  %468 = vmatpush2.msra.mxu0 %v217
  %469 = vmatprep.subr.mxu0 0.0
  %470 = vmatpush2.msra.mxu0 %v216
  %471 = vmatprep.subr.mxu0 0.0
  %472 = vmatpush2.msra.mxu0 %v215
  %473 = vmatprep.subr.mxu0 0.0
  %474 = vmatpush2.msra.mxu0 %v214
  %475 = vmatprep.subr.mxu0 0.0
  %476 = vmatpush2.msra.mxu0 %v213
  %477 = vmatprep.subr.mxu0 0.0
  %478 = vmatpush2.msra.mxu0 %v212
  %479 = vmatprep.subr.mxu0 0.0
  %480 = vmatpush2.msra.mxu0 %v211
  %481 = vmatprep.subr.mxu0 0.0
  %482 = vmatpush2.msra.mxu0 %v210
  %483 = vmatprep.subr.mxu0 0.0
  %484 = vmatpush2.msra.mxu0 %v209
  %485 = vmatprep.subr.mxu0 0.0
  %486 = vmatpush2.msra.mxu0 %v208
  %487 = vmatprep.subr.mxu0 0.0
  %488 = vmatpush2.msra.mxu0 %v207
  %489 = vmatprep.mubr.f32.mxu0 %v82
  %490 = vmatmul.mubr.f32.gmra.mxu0 %v81
  %v491 = vpop.f32.mrf.mxu0
  %v492 = vadd.f32 %v347, %v491
  %v493 = vpop.f32.mrf.mxu0
  %494 = vmatprep.mubr.f32.mxu0 %v87
  %495 = vmatmul.mubr.f32.gmra.mxu0 %v86
  %v496 = vpop.f32.mrf.mxu0
  %v497 = vadd.f32 %v352, %v496
  %v498 = vpop.f32.mrf.mxu0
  %499 = vmatprep.mubr.f32.mxu0 %v92
  %500 = vmatmul.mubr.f32.gmra.mxu0 %v91
  %v501 = vpop.f32.mrf.mxu0
  %v502 = vadd.f32 %v357, %v501
  %v503 = vpop.f32.mrf.mxu0
  %504 = vmatprep.mubr.f32.mxu0 %v97
  %505 = vmatmul.mubr.f32.gmra.mxu0 %v96
  %v506 = vpop.f32.mrf.mxu0
  %v507 = vadd.f32 %v362, %v506
  %v508 = vpop.f32.mrf.mxu0
  %509 = vmatprep.mubr.f32.mxu0 %v102
  %510 = vmatmul.mubr.f32.gmra.mxu0 %v101
  %v511 = vpop.f32.mrf.mxu0
  %v512 = vadd.f32 %v367, %v511
  %v513 = vpop.f32.mrf.mxu0
  %514 = vmatprep.mubr.f32.mxu0 %v107
  %515 = vmatmul.mubr.f32.gmra.mxu0 %v106
  %v516 = vpop.f32.mrf.mxu0
  %v517 = vadd.f32 %v372, %v516
  %v518 = vpop.f32.mrf.mxu0
  %519 = vmatprep.mubr.f32.mxu0 %v112
  %520 = vmatmul.mubr.f32.gmra.mxu0 %v111
  %v521 = vpop.f32.mrf.mxu0
  %v522 = vadd.f32 %v377, %v521
  %v523 = vpop.f32.mrf.mxu0
  %524 = vmatprep.mubr.f32.mxu0 %v117
  %525 = vmatmul.mubr.f32.gmra.mxu0 %v116
  %v526 = vpop.f32.mrf.mxu0
  %v527 = vadd.f32 %v382, %v526
  %v528 = vpop.f32.mrf.mxu0
  %529 = vmatprep.mubr.f32.mxu0 %v122
  %530 = vmatmul.mubr.f32.gmra.mxu0 %v121
  %v531 = vpop.f32.mrf.mxu0
  %v532 = vadd.f32 %v387, %v531
  %v533 = vpop.f32.mrf.mxu0
  %534 = vmatprep.mubr.f32.mxu0 %v127
  %535 = vmatmul.mubr.f32.gmra.mxu0 %v126
  %v536 = vpop.f32.mrf.mxu0
  %v537 = vadd.f32 %v392, %v536
  %v538 = vpop.f32.mrf.mxu0
  %539 = vmatprep.mubr.f32.mxu0 %v132
  %540 = vmatmul.mubr.f32.gmra.mxu0 %v131
  %v541 = vpop.f32.mrf.mxu0
  %v542 = vadd.f32 %v397, %v541
  %v543 = vpop.f32.mrf.mxu0
  %544 = vmatprep.mubr.f32.mxu0 %v137
  %545 = vmatmul.mubr.f32.gmra.mxu0 %v136
  %v546 = vpop.f32.mrf.mxu0
  %v547 = vadd.f32 %v402, %v546
  %v548 = vpop.f32.mrf.mxu0
  %549 = vmatprep.mubr.f32.mxu0 %v142
  %550 = vmatmul.mubr.f32.gmra.mxu0 %v141
  %v551 = vpop.f32.mrf.mxu0
  %v552 = vadd.f32 %v407, %v551
  %v553 = vpop.f32.mrf.mxu0
  %554 = vmatprep.mubr.f32.mxu0 %v147
  %555 = vmatmul.mubr.f32.gmra.mxu0 %v146
  %v556 = vpop.f32.mrf.mxu0
  %v557 = vadd.f32 %v412, %v556
  %v558 = vpop.f32.mrf.mxu0
  %559 = vmatprep.mubr.f32.mxu0 %v152
  %560 = vmatmul.mubr.f32.gmra.mxu0 %v151
  %v561 = vpop.f32.mrf.mxu0
  %v562 = vadd.f32 %v417, %v561
  %v563 = vpop.f32.mrf.mxu0
  %564 = vmatprep.mubr.f32.mxu0 %v157
  %565 = vmatmul.mubr.f32.gmra.mxu0 %v156
  %v566 = vpop.f32.mrf.mxu0
  %v567 = vadd.f32 %v422, %v566
  %v568 = vpop.f32.mrf.mxu0
  %569 = vdwg.mxu0
  %570 = vmatprep.subr.mxu0 0.0
  %571 = vmatpush1.msra.mxu0 0.0
  %572 = vmatprep.subr.mxu0 0.0
  %573 = vmatpush1.msra.mxu0 0.0
  %574 = vmatprep.subr.mxu0 0.0
  %575 = vmatpush1.msra.mxu0 0.0
  %576 = vmatprep.subr.mxu0 0.0
  %577 = vmatpush1.msra.mxu0 0.0
  %578 = vmatprep.subr.mxu0 0.0
  %579 = vmatpush1.msra.mxu0 0.0
  %580 = vmatprep.subr.mxu0 0.0
  %581 = vmatpush1.msra.mxu0 0.0
  %582 = vmatprep.subr.mxu0 0.0
  %583 = vmatpush1.msra.mxu0 0.0
  %584 = vmatprep.subr.mxu0 0.0
  %585 = vmatpush1.msra.mxu0 0.0
  %586 = vmatprep.subr.mxu0 0.0
  %587 = vmatpush1.msra.mxu0 %v230
  %588 = vmatprep.subr.mxu0 0.0
  %589 = vmatpush1.msra.mxu0 %v229
  %590 = vmatprep.subr.mxu0 0.0
  %591 = vmatpush1.msra.mxu0 %v228
  %592 = vmatprep.subr.mxu0 0.0
  %593 = vmatpush1.msra.mxu0 %v227
  %594 = vmatprep.subr.mxu0 0.0
  %595 = vmatpush1.msra.mxu0 %v226
  %596 = vmatprep.subr.mxu0 0.0
  %597 = vmatpush1.msra.mxu0 %v225
  %598 = vmatprep.subr.mxu0 0.0
  %599 = vmatpush1.msra.mxu0 %v224
  %600 = vmatprep.subr.mxu0 0.0
  %601 = vmatpush1.msra.mxu0 %v223
  %602 = vmatprep.subr.mxu0 0.0
  %603 = vmatpush2.msra.mxu0 0.0
  %604 = vmatprep.subr.mxu0 0.0
  %605 = vmatpush2.msra.mxu0 0.0
  %606 = vmatprep.subr.mxu0 0.0
  %607 = vmatpush2.msra.mxu0 0.0
  %608 = vmatprep.subr.mxu0 0.0
  %609 = vmatpush2.msra.mxu0 0.0
  %610 = vmatprep.subr.mxu0 0.0
  %611 = vmatpush2.msra.mxu0 0.0
  %612 = vmatprep.subr.mxu0 0.0
  %613 = vmatpush2.msra.mxu0 0.0
  %614 = vmatprep.subr.mxu0 0.0
  %615 = vmatpush2.msra.mxu0 0.0
  %616 = vmatprep.subr.mxu0 0.0
  %617 = vmatpush2.msra.mxu0 0.0
  %618 = vmatprep.subr.mxu0 0.0
  %619 = vmatpush2.msra.mxu0 0.0
  %620 = vmatprep.subr.mxu0 0.0
  %621 = vmatpush2.msra.mxu0 0.0
  %622 = vmatprep.subr.mxu0 0.0
  %623 = vmatpush2.msra.mxu0 0.0
  %624 = vmatprep.subr.mxu0 0.0
  %625 = vmatpush2.msra.mxu0 0.0
  %626 = vmatprep.subr.mxu0 0.0
  %627 = vmatpush2.msra.mxu0 0.0
  %628 = vmatprep.subr.mxu0 0.0
  %629 = vmatpush2.msra.mxu0 0.0
  %630 = vmatprep.subr.mxu0 0.0
  %631 = vmatpush2.msra.mxu0 0.0
  %632 = vmatprep.subr.mxu0 0.0
  %633 = vmatpush2.msra.mxu0 0.0
  %634 = vmatprep.mubr.f32.mxu0 0.0
  %635 = vmatmul.mubr.f32.gmra.mxu0 %v233
  %v636 = vpop.f32.mrf.mxu0
  %v637 = vadd.f32 %v492, %v636
  %v638 = vpop.f32.mrf.mxu0
  %639 = vmatprep.mubr.f32.mxu0 0.0
  %640 = vmatmul.mubr.f32.gmra.mxu0 %v236
  %v641 = vpop.f32.mrf.mxu0
  %v642 = vadd.f32 %v497, %v641
  %v643 = vpop.f32.mrf.mxu0
  %644 = vmatprep.mubr.f32.mxu0 0.0
  %645 = vmatmul.mubr.f32.gmra.mxu0 %v239
  %v646 = vpop.f32.mrf.mxu0
  %v647 = vadd.f32 %v502, %v646
  %v648 = vpop.f32.mrf.mxu0
  %649 = vmatprep.mubr.f32.mxu0 0.0
  %650 = vmatmul.mubr.f32.gmra.mxu0 %v242
  %v651 = vpop.f32.mrf.mxu0
  %v652 = vadd.f32 %v507, %v651
  %v653 = vpop.f32.mrf.mxu0
  %654 = vmatprep.mubr.f32.mxu0 0.0
  %655 = vmatmul.mubr.f32.gmra.mxu0 %v245
  %v656 = vpop.f32.mrf.mxu0
  %v657 = vadd.f32 %v512, %v656
  %v658 = vpop.f32.mrf.mxu0
  %659 = vmatprep.mubr.f32.mxu0 0.0
  %660 = vmatmul.mubr.f32.gmra.mxu0 %v248
  %v661 = vpop.f32.mrf.mxu0
  %v662 = vadd.f32 %v517, %v661
  %v663 = vpop.f32.mrf.mxu0
  %664 = vmatprep.mubr.f32.mxu0 0.0
  %665 = vmatmul.mubr.f32.gmra.mxu0 %v251
  %v666 = vpop.f32.mrf.mxu0
  %v667 = vadd.f32 %v522, %v666
  %v668 = vpop.f32.mrf.mxu0
  %669 = vmatprep.mubr.f32.mxu0 0.0
  %670 = vmatmul.mubr.f32.gmra.mxu0 %v254
  %v671 = vpop.f32.mrf.mxu0
  %v672 = vadd.f32 %v527, %v671
  %v673 = vpop.f32.mrf.mxu0
  %674 = vmatprep.mubr.f32.mxu0 0.0
  %675 = vmatmul.mubr.f32.gmra.mxu0 %v257
  %v676 = vpop.f32.mrf.mxu0
  %v677 = vadd.f32 %v532, %v676
  %v678 = vpop.f32.mrf.mxu0
  %679 = vmatprep.mubr.f32.mxu0 0.0
  %680 = vmatmul.mubr.f32.gmra.mxu0 %v260
  %v681 = vpop.f32.mrf.mxu0
  %v682 = vadd.f32 %v537, %v681
  %v683 = vpop.f32.mrf.mxu0
  %684 = vmatprep.mubr.f32.mxu0 0.0
  %685 = vmatmul.mubr.f32.gmra.mxu0 %v263
  %v686 = vpop.f32.mrf.mxu0
  %v687 = vadd.f32 %v542, %v686
  %v688 = vpop.f32.mrf.mxu0
  %689 = vmatprep.mubr.f32.mxu0 0.0
  %690 = vmatmul.mubr.f32.gmra.mxu0 %v266
  %v691 = vpop.f32.mrf.mxu0
  %v692 = vadd.f32 %v547, %v691
  %v693 = vpop.f32.mrf.mxu0
  %694 = vmatprep.mubr.f32.mxu0 0.0
  %695 = vmatmul.mubr.f32.gmra.mxu0 %v269
  %v696 = vpop.f32.mrf.mxu0
  %v697 = vadd.f32 %v552, %v696
  %v698 = vpop.f32.mrf.mxu0
  %699 = vmatprep.mubr.f32.mxu0 0.0
  %700 = vmatmul.mubr.f32.gmra.mxu0 %v272
  %v701 = vpop.f32.mrf.mxu0
  %v702 = vadd.f32 %v557, %v701
  %v703 = vpop.f32.mrf.mxu0
  %704 = vmatprep.mubr.f32.mxu0 0.0
  %705 = vmatmul.mubr.f32.gmra.mxu0 %v275
  %v706 = vpop.f32.mrf.mxu0
  %v707 = vadd.f32 %v562, %v706
  %v708 = vpop.f32.mrf.mxu0
  %709 = vmatprep.mubr.f32.mxu0 0.0
  %710 = vmatmul.mubr.f32.gmra.mxu0 %v278
  %v711 = vpop.f32.mrf.mxu0
  %v712 = vadd.f32 %v567, %v711
  %v713 = vpop.f32.mrf.mxu0
  %714 = vdwg.mxu0
  %vm715 = vcmask 261120
  %716 = vst.msk [vmem:[%s40] sm:$0xff] %vm715, %v637
  %717 = vst.msk [vmem:[%s40 + $0x8] sm:$0xff] %vm715, %v642
  %718 = vst.msk [vmem:[%s40 + $0x10] sm:$0xff] %vm715, %v647
  %719 = vst.msk [vmem:[%s40 + $0x18] sm:$0xff] %vm715, %v652
  %720 = vst.msk [vmem:[%s40 + $0x20] sm:$0xff] %vm715, %v657
  %721 = vst.msk [vmem:[%s40 + $0x28] sm:$0xff] %vm715, %v662
  %722 = vst.msk [vmem:[%s40 + $0x30] sm:$0xff] %vm715, %v667
  %723 = vst.msk [vmem:[%s40 + $0x38] sm:$0xff] %vm715, %v672
  %724 = vst.msk [vmem:[%s40 + $0x40] sm:$0xff] %vm715, %v677
  %725 = vst.msk [vmem:[%s40 + $0x48] sm:$0xff] %vm715, %v682
  %726 = vst.msk [vmem:[%s40 + $0x50] sm:$0xff] %vm715, %v687
  %727 = vst.msk [vmem:[%s40 + $0x58] sm:$0xff] %vm715, %v692
  %728 = vst.msk [vmem:[%s40 + $0x60] sm:$0xff] %vm715, %v697
  %729 = vst.msk [vmem:[%s40 + $0x68] sm:$0xff] %vm715, %v702
  %730 = vst.msk [vmem:[%s40 + $0x70] sm:$0xff] %vm715, %v707
  %731 = vst.msk [vmem:[%s40 + $0x78] sm:$0xff] %vm715, %v712
  %v732 = vld [vmem:[%s3] sm:$0xff]
  %v733 = vld [vmem:[%s3 + $0x8] sm:$0xff]
  %v734 = vld [vmem:[%s3 + $0x10] sm:$0xff]
  %v735 = vld [vmem:[%s3 + $0x18] sm:$0xff]
  %v736 = vld [vmem:[%s3 + $0x20] sm:$0xff]
  %v737 = vld [vmem:[%s3 + $0x28] sm:$0xff]
  %v738 = vld [vmem:[%s3 + $0x30] sm:$0xff]
  %v739 = vld [vmem:[%s3 + $0x38] sm:$0xff]
  %v740 = vld [vmem:[%s3 + $0x40] sm:$0xff]
  %v741 = vld [vmem:[%s3 + $0x48] sm:$0xff]
  %v742 = vld [vmem:[%s3 + $0x50] sm:$0xff]
  %v743 = vld [vmem:[%s3 + $0x58] sm:$0xff]
  %v744 = vld [vmem:[%s3 + $0x60] sm:$0xff]
  %v745 = vld [vmem:[%s3 + $0x68] sm:$0xff]
  %v746 = vld [vmem:[%s3 + $0x70] sm:$0xff]
  %v747 = vld [vmem:[%s3 + $0x78] sm:$0xff]
  %v748 = vsel %vm715, %v637, 0.0
  %749 = vadd.xlane.f32.xlu0 %v748
  %v750 = vpop.xlane.xlu0 %749
  %v751 = vsel %vm715, %v642, 0.0
  %752 = vadd.xlane.f32.xlu0 %v751
  %v753 = vpop.xlane.xlu0 %752
  %v754 = vsel %vm715, %v647, 0.0
  %755 = vadd.xlane.f32.xlu0 %v754
  %v756 = vpop.xlane.xlu0 %755
  %v757 = vsel %vm715, %v652, 0.0
  %758 = vadd.xlane.f32.xlu0 %v757
  %v759 = vpop.xlane.xlu0 %758
  %v760 = vsel %vm715, %v657, 0.0
  %761 = vadd.xlane.f32.xlu0 %v760
  %v762 = vpop.xlane.xlu0 %761
  %v763 = vsel %vm715, %v662, 0.0
  %764 = vadd.xlane.f32.xlu0 %v763
  %v765 = vpop.xlane.xlu0 %764
  %v766 = vsel %vm715, %v667, 0.0
  %767 = vadd.xlane.f32.xlu0 %v766
  %v768 = vpop.xlane.xlu0 %767
  %v769 = vsel %vm715, %v672, 0.0
  %770 = vadd.xlane.f32.xlu0 %v769
  %v771 = vpop.xlane.xlu0 %770
  %v772 = vsel %vm715, %v677, 0.0
  %773 = vadd.xlane.f32.xlu0 %v772
  %v774 = vpop.xlane.xlu0 %773
  %v775 = vsel %vm715, %v682, 0.0
  %776 = vadd.xlane.f32.xlu0 %v775
  %v777 = vpop.xlane.xlu0 %776
  %v778 = vsel %vm715, %v687, 0.0
  %779 = vadd.xlane.f32.xlu0 %v778
  %v780 = vpop.xlane.xlu0 %779
  %v781 = vsel %vm715, %v692, 0.0
  %782 = vadd.xlane.f32.xlu0 %v781
  %v783 = vpop.xlane.xlu0 %782
  %v784 = vsel %vm715, %v697, 0.0
  %785 = vadd.xlane.f32.xlu0 %v784
  %v786 = vpop.xlane.xlu0 %785
  %v787 = vsel %vm715, %v702, 0.0
  %788 = vadd.xlane.f32.xlu0 %v787
  %v789 = vpop.xlane.xlu0 %788
  %v790 = vsel %vm715, %v707, 0.0
  %791 = vadd.xlane.f32.xlu0 %v790
  %v792 = vpop.xlane.xlu0 %791
  %v793 = vsel %vm715, %v712, 0.0
  %794 = vadd.xlane.f32.xlu0 %v793
  %v795 = vpop.xlane.xlu0 %794
  %v796 = vadd.f32 %v732, %v750
  %v797 = vadd.f32 %v733, %v753
  %v798 = vadd.f32 %v734, %v756
  %v799 = vadd.f32 %v735, %v759
  %v800 = vadd.f32 %v736, %v762
  %v801 = vadd.f32 %v737, %v765
  %v802 = vadd.f32 %v738, %v768
  %v803 = vadd.f32 %v739, %v771
  %v804 = vadd.f32 %v740, %v774
  %v805 = vadd.f32 %v741, %v777
  %v806 = vadd.f32 %v742, %v780
  %v807 = vadd.f32 %v743, %v783
  %v808 = vadd.f32 %v744, %v786
  %v809 = vadd.f32 %v745, %v789
  %v810 = vadd.f32 %v746, %v792
  %v811 = vadd.f32 %v747, %v795
  %vm812 = vcmask 7168
  %813 = vst.msk [vmem:[%s3] sm:$0xff] %vm812, %v796
  %814 = vst.msk [vmem:[%s3 + $0x8] sm:$0xff] %vm812, %v797
  %815 = vst.msk [vmem:[%s3 + $0x10] sm:$0xff] %vm812, %v798
  %816 = vst.msk [vmem:[%s3 + $0x18] sm:$0xff] %vm812, %v799
  %817 = vst.msk [vmem:[%s3 + $0x20] sm:$0xff] %vm812, %v800
  %818 = vst.msk [vmem:[%s3 + $0x28] sm:$0xff] %vm812, %v801
  %819 = vst.msk [vmem:[%s3 + $0x30] sm:$0xff] %vm812, %v802
  %820 = vst.msk [vmem:[%s3 + $0x38] sm:$0xff] %vm812, %v803
  %821 = vst.msk [vmem:[%s3 + $0x40] sm:$0xff] %vm812, %v804
  %822 = vst.msk [vmem:[%s3 + $0x48] sm:$0xff] %vm812, %v805
  %823 = vst.msk [vmem:[%s3 + $0x50] sm:$0xff] %vm812, %v806
  %824 = vst.msk [vmem:[%s3 + $0x58] sm:$0xff] %vm812, %v807
  %825 = vst.msk [vmem:[%s3 + $0x60] sm:$0xff] %vm812, %v808
  %826 = vst.msk [vmem:[%s3 + $0x68] sm:$0xff] %vm812, %v809
  %827 = vst.msk [vmem:[%s3 + $0x70] sm:$0xff] %vm812, %v810
  %828 = vst.msk [vmem:[%s3 + $0x78] sm:$0xff] %vm812, %v811
  %v829 = vld [vmem:[%s4] sm:$0xff]
  %v830 = vld [vmem:[%s4 + $0x8] sm:$0xff]
  %v831 = vld [vmem:[%s4 + $0x10] sm:$0xff]
  %v832 = vld [vmem:[%s4 + $0x18] sm:$0xff]
  %v833 = vld [vmem:[%s4 + $0x20] sm:$0xff]
  %v834 = vld [vmem:[%s4 + $0x28] sm:$0xff]
  %v835 = vld [vmem:[%s4 + $0x30] sm:$0xff]
  %v836 = vld [vmem:[%s4 + $0x38] sm:$0xff]
  %v837 = vld [vmem:[%s4 + $0x40] sm:$0xff]
  %v838 = vld [vmem:[%s4 + $0x48] sm:$0xff]
  %v839 = vld [vmem:[%s4 + $0x50] sm:$0xff]
  %v840 = vld [vmem:[%s4 + $0x58] sm:$0xff]
  %v841 = vld [vmem:[%s4 + $0x60] sm:$0xff]
  %v842 = vld [vmem:[%s4 + $0x68] sm:$0xff]
  %v843 = vld [vmem:[%s4 + $0x70] sm:$0xff]
  %v844 = vld [vmem:[%s4 + $0x78] sm:$0xff]
  %v845 = vmul.f32 %v637, %v637
  %v846 = vmul.f32 %v642, %v642
  %v847 = vmul.f32 %v647, %v647
  %v848 = vmul.f32 %v652, %v652
  %v849 = vmul.f32 %v657, %v657
  %v850 = vmul.f32 %v662, %v662
  %v851 = vmul.f32 %v667, %v667
  %v852 = vmul.f32 %v672, %v672
  %v853 = vmul.f32 %v677, %v677
  %v854 = vmul.f32 %v682, %v682
  %v855 = vmul.f32 %v687, %v687
  %v856 = vmul.f32 %v692, %v692
  %v857 = vmul.f32 %v697, %v697
  %v858 = vmul.f32 %v702, %v702
  %v859 = vmul.f32 %v707, %v707
  %v860 = vmul.f32 %v712, %v712
  %v861 = vsel %vm715, %v845, 0.0
  %862 = vadd.xlane.f32.xlu0 %v861
  %v863 = vpop.xlane.xlu0 %862
  %v864 = vsel %vm715, %v846, 0.0
  %865 = vadd.xlane.f32.xlu0 %v864
  %v866 = vpop.xlane.xlu0 %865
  %v867 = vsel %vm715, %v847, 0.0
  %868 = vadd.xlane.f32.xlu0 %v867
  %v869 = vpop.xlane.xlu0 %868
  %v870 = vsel %vm715, %v848, 0.0
  %871 = vadd.xlane.f32.xlu0 %v870
  %v872 = vpop.xlane.xlu0 %871
  %v873 = vsel %vm715, %v849, 0.0
  %874 = vadd.xlane.f32.xlu0 %v873
  %v875 = vpop.xlane.xlu0 %874
  %v876 = vsel %vm715, %v850, 0.0
  %877 = vadd.xlane.f32.xlu0 %v876
  %v878 = vpop.xlane.xlu0 %877
  %v879 = vsel %vm715, %v851, 0.0
  %880 = vadd.xlane.f32.xlu0 %v879
  %v881 = vpop.xlane.xlu0 %880
  %v882 = vsel %vm715, %v852, 0.0
  %883 = vadd.xlane.f32.xlu0 %v882
  %v884 = vpop.xlane.xlu0 %883
  %v885 = vsel %vm715, %v853, 0.0
  %886 = vadd.xlane.f32.xlu0 %v885
  %v887 = vpop.xlane.xlu0 %886
  %v888 = vsel %vm715, %v854, 0.0
  %889 = vadd.xlane.f32.xlu0 %v888
  %v890 = vpop.xlane.xlu0 %889
  %v891 = vsel %vm715, %v855, 0.0
  %892 = vadd.xlane.f32.xlu0 %v891
  %v893 = vpop.xlane.xlu0 %892
  %v894 = vsel %vm715, %v856, 0.0
  %895 = vadd.xlane.f32.xlu0 %v894
  %v896 = vpop.xlane.xlu0 %895
  %v897 = vsel %vm715, %v857, 0.0
  %898 = vadd.xlane.f32.xlu0 %v897
  %v899 = vpop.xlane.xlu0 %898
  %v900 = vsel %vm715, %v858, 0.0
  %901 = vadd.xlane.f32.xlu0 %v900
  %v902 = vpop.xlane.xlu0 %901
  %v903 = vsel %vm715, %v859, 0.0
  %904 = vadd.xlane.f32.xlu0 %v903
  %v905 = vpop.xlane.xlu0 %904
  %v906 = vsel %vm715, %v860, 0.0
  %907 = vadd.xlane.f32.xlu0 %v906
  %v908 = vpop.xlane.xlu0 %907
  %v909 = vadd.f32 %v829, %v863
  %v910 = vadd.f32 %v830, %v866
  %v911 = vadd.f32 %v831, %v869
  %v912 = vadd.f32 %v832, %v872
  %v913 = vadd.f32 %v833, %v875
  %v914 = vadd.f32 %v834, %v878
  %v915 = vadd.f32 %v835, %v881
  %v916 = vadd.f32 %v836, %v884
  %v917 = vadd.f32 %v837, %v887
  %v918 = vadd.f32 %v838, %v890
  %v919 = vadd.f32 %v839, %v893
  %v920 = vadd.f32 %v840, %v896
  %v921 = vadd.f32 %v841, %v899
  %v922 = vadd.f32 %v842, %v902
  %v923 = vadd.f32 %v843, %v905
  %v924 = vadd.f32 %v844, %v908
  %925 = vst.msk [vmem:[%s4] sm:$0xff] %vm812, %v909
  %926 = vst.msk [vmem:[%s4 + $0x8] sm:$0xff] %vm812, %v910
  %927 = vst.msk [vmem:[%s4 + $0x10] sm:$0xff] %vm812, %v911
  %928 = vst.msk [vmem:[%s4 + $0x18] sm:$0xff] %vm812, %v912
  %929 = vst.msk [vmem:[%s4 + $0x20] sm:$0xff] %vm812, %v913
  %930 = vst.msk [vmem:[%s4 + $0x28] sm:$0xff] %vm812, %v914
  %931 = vst.msk [vmem:[%s4 + $0x30] sm:$0xff] %vm812, %v915
  %932 = vst.msk [vmem:[%s4 + $0x38] sm:$0xff] %vm812, %v916
  %933 = vst.msk [vmem:[%s4 + $0x40] sm:$0xff] %vm812, %v917
  %934 = vst.msk [vmem:[%s4 + $0x48] sm:$0xff] %vm812, %v918
  %935 = vst.msk [vmem:[%s4 + $0x50] sm:$0xff] %vm812, %v919
  %936 = vst.msk [vmem:[%s4 + $0x58] sm:$0xff] %vm812, %v920
  %937 = vst.msk [vmem:[%s4 + $0x60] sm:$0xff] %vm812, %v921
  %938 = vst.msk [vmem:[%s4 + $0x68] sm:$0xff] %vm812, %v922
  %939 = vst.msk [vmem:[%s4 + $0x70] sm:$0xff] %vm812, %v923
  %940 = vst.msk [vmem:[%s4 + $0x78] sm:$0xff] %vm812, %v924
  %s941 = sadd.s32 0, 0
  %p942 = scmp.lt.s32.totalorder %s941, 0
  %s943 = scalar_select %p942, %s941, 0
  %s944 = smul.addr %s943, 8
  %s945 = scalar_lea.vmem %s2, %s944
  // Predicated region
  $region14: #{decoder_forward.5} parent=0 // pred_check
    _
  $region15: #{decoder_forward.5} parent=0 // pred_check_branch
    %947 = sbr.rel (0) target = $region17
  $region16: #{decoder_forward.5} parent=0 // pred_region
    %s948 = sadd.s32 0, 0
  $region17: #{decoder_forward.5} parent=0 // pred_fallthru
    _
  // Predicated region
  $region18: #{decoder_forward.5} parent=0 // pred_check
    _
  $region19: #{decoder_forward.5} parent=0 // pred_check_branch
    %950 = sbr.rel (0) target = $region21
  $region20: #{decoder_forward.5} parent=0 // pred_region
    _
  $region21: #{decoder_forward.5} parent=0 // pred_fallthru
    _
  // Predicated region
  $region22: #{decoder_forward.5} parent=0 // pred_check
    _
  $region23: #{decoder_forward.5} parent=0 // pred_check_branch
    %952 = sbr.rel (0) target = $region25
  $region24: #{decoder_forward.5} parent=0 // pred_region
    _
  $region25: #{decoder_forward.5} parent=0 // pred_fallthru
    _
  // Predicated region
  $region26: #{decoder_forward.5} parent=0 // pred_check
    _
  $region27: #{decoder_forward.5} parent=0 // pred_check_branch
    %954 = sbr.rel (0) target = $region29
  $region28: #{decoder_forward.5} parent=0 // pred_region
    %s955 = sadd.s32 0, 0
    %p956 = scmp.lt.s32.totalorder %s955, 0
    %s957 = scalar_select %p956, %s955, 0
    %s958 = smul.addr %s957, 8
    %s959 = scalar_lea.vmem %s2, %s958
  $region29: #{decoder_forward.5} parent=0 // pred_fallthru
    _
  // Predicated region
  $region30: #{decoder_forward.5} parent=0 // pred_check
    _
  $region31: #{decoder_forward.5} parent=0 // pred_check_branch
    %961 = sbr.rel (0) target = $region33
  $region32: #{decoder_forward.5} parent=0 // pred_region
    _
  $region33: #{decoder_forward.5} parent=0 // pred_fallthru
    _
  // Predicated region
  $region34: #{decoder_forward.5} parent=0 // pred_check
    _
  $region35: #{decoder_forward.5} parent=0 // pred_check_branch
    %963 = sbr.rel (0) target = $region37
  $region36: #{decoder_forward.5} parent=0 // pred_region
    _
  $region37: #{decoder_forward.5} parent=0 // pred_fallthru
    _

// kernel: decoder_forward.6
$region0: #{decoder_forward.6}
  #allocation0 [shape = 'u32[]', space=smem, size = 0x4, offset = 0x4, fixed_abs, tag = 'smem constant byte address 0x4 - core index']
  #allocation1 [shape = 'u32[144,128]{1,0:T(1,128)}', space=vmem, size = 0x12000, scoped, tag = 'internal scratch']
  %s0 = inlined_call_operand.vmem [shape: f32[288,128], index: 0, kind: input, shape index: {}]
  %s1 = inlined_call_operand.vmem [shape: f32[64,288], index: 1, kind: input, shape index: {}]
  %s2 = inlined_call_operand.vmem [shape: f32[64,128], index: 2, kind: output, shape index: {0}]
  %s3 = inlined_call_operand.vmem [shape: f32[1,64,1], index: 3, kind: output, shape index: {1}]
  %s4 = inlined_call_operand.vmem [shape: f32[1,64,1], index: 4, kind: output, shape index: {2}]
  %5 = xla_tuple %s2, %s3, %s4
  %s6 = sld [smem:[#allocation0]]
  $region38: #{decoder_forward.6} parent=0
    _
  %s8 = ssub.s32 1, %s6
  %s9 = scalar_select 0, %s8, %s6
  // Predicated region
  $region2: #{decoder_forward.6} parent=0 // pred_check
    _
  $region3: #{decoder_forward.6} parent=0 // pred_check_branch
    %11 = sbr.rel (0) target = $region5
  $region4: #{decoder_forward.6} parent=0 // pred_region
    %s12 = sadd.s32 0, 0
    %p13 = scmp.lt.s32.totalorder %s12, 0
    %s14 = scalar_select %p13, %s12, 0
    %s15 = smul.addr %s14, 8
    %s16 = scalar_lea.vmem %s0, %s15
    %s17 = sadd.s32 0, 0
  $region5: #{decoder_forward.6} parent=0 // pred_fallthru
    _
  // Predicated region
  $region6: #{decoder_forward.6} parent=0 // pred_check
    _
  $region7: #{decoder_forward.6} parent=0 // pred_check_branch
    %19 = sbr.rel (0) target = $region9
  $region8: #{decoder_forward.6} parent=0 // pred_region
    _
  $region9: #{decoder_forward.6} parent=0 // pred_fallthru
    _
  %s20 = sadd.s32 0, 0
  %p21 = scmp.lt.s32.totalorder %s20, 0
  %s22 = scalar_select %p21, %s20, 0
  %s23 = smul.addr %s22, 8
  %s24 = scalar_lea.vmem %s0, %s23
  %s25 = sadd.s32 0, 0
  %p26 = scmp.lt.s32.totalorder %s25, 0
  %s27 = scalar_select %p26, %s25, 0
  %s28 = smul.addr %s27, 8
  %s29 = scalar_lea.vmem %s2, %s28
  %s30 = sadd.s32 0, 0
  %p31 = scmp.lt.s32.totalorder %s30, 0
  %s32 = scalar_select %p31, %s30, 0
  %s33 = smul.addr %s32, 8
  %s34 = scalar_lea.vmem %s0, %s33
  %s35 = sadd.s32 0, 0
  %s36 = sadd.s32 0, 0
  %p37 = scmp.lt.s32.totalorder %s36, 0
  %s38 = scalar_select %p37, %s36, 0
  %s39 = smul.addr %s38, 8
  %s40 = scalar_lea.vmem %s2, %s39
  %s41 = sadd.s32 0, 0
  %p42 = scmp.eq.s32.totalorder 0, 0
  // Predicated region
  $region10: #{decoder_forward.6} parent=0 // pred_check
    %p43 = pneg %p42
  $region11: #{decoder_forward.6} parent=0 // pred_check_branch
    %45 = sbr.rel (%p43) target = $region13
  $region12: #{decoder_forward.6} parent=0 // pred_region
    %vm46 = vcmask 7168
    %47 = vst.msk [vmem:[%s3] sm:$0xff] %vm46, 0.0
    %48 = vst.msk [vmem:[%s3 + $0x8] sm:$0xff] %vm46, 0.0
    %49 = vst.msk [vmem:[%s3 + $0x10] sm:$0xff] %vm46, 0.0
    %50 = vst.msk [vmem:[%s3 + $0x18] sm:$0xff] %vm46, 0.0
    %51 = vst.msk [vmem:[%s3 + $0x20] sm:$0xff] %vm46, 0.0
    %52 = vst.msk [vmem:[%s3 + $0x28] sm:$0xff] %vm46, 0.0
    %53 = vst.msk [vmem:[%s3 + $0x30] sm:$0xff] %vm46, 0.0
    %54 = vst.msk [vmem:[%s3 + $0x38] sm:$0xff] %vm46, 0.0
    %55 = vst.msk [vmem:[%s4] sm:$0xff] %vm46, 0.0
    %56 = vst.msk [vmem:[%s4 + $0x8] sm:$0xff] %vm46, 0.0
    %57 = vst.msk [vmem:[%s4 + $0x10] sm:$0xff] %vm46, 0.0
    %58 = vst.msk [vmem:[%s4 + $0x18] sm:$0xff] %vm46, 0.0
    %59 = vst.msk [vmem:[%s4 + $0x20] sm:$0xff] %vm46, 0.0
    %60 = vst.msk [vmem:[%s4 + $0x28] sm:$0xff] %vm46, 0.0
    %61 = vst.msk [vmem:[%s4 + $0x30] sm:$0xff] %vm46, 0.0
    %62 = vst.msk [vmem:[%s4 + $0x38] sm:$0xff] %vm46, 0.0
  $region13: #{decoder_forward.6} parent=0 // pred_fallthru
    _
  %v63 = vld [vmem:[%s1] sm:$0xff]
  %v64 = vld [vmem:[%s1 + $0x8] sm:$0xff]
  %v65 = vld [vmem:[%s1 + $0x10] sm:$0xff]
  %v66 = vld [vmem:[%s1 + $0x18] sm:$0xff]
  %v67 = vld [vmem:[%s1 + $0x20] sm:$0xff]
  %v68 = vld [vmem:[%s1 + $0x28] sm:$0xff]
  %v69 = vld [vmem:[%s1 + $0x30] sm:$0xff]
  %v70 = vld [vmem:[%s1 + $0x38] sm:$0xff]
  %v71 = vld [vmem:[%s1 + $0x40] sm:$0xff]
  %v72 = vld [vmem:[%s1 + $0x48] sm:$0xff]
  %v73 = vld [vmem:[%s1 + $0x50] sm:$0xff]
  %v74 = vld [vmem:[%s1 + $0x58] sm:$0xff]
  %v75 = vld [vmem:[%s1 + $0x60] sm:$0xff]
  %v76 = vld [vmem:[%s1 + $0x68] sm:$0xff]
  %v77 = vld [vmem:[%s1 + $0x70] sm:$0xff]
  %v78 = vld [vmem:[%s1 + $0x78] sm:$0xff]
  %v79 = vld [vmem:[%s1 + $0x80] sm:$0xff]
  %v80 = vld [vmem:[%s1 + $0x88] sm:$0xff]
  %v81 = vld [vmem:[%s1 + $0x90] sm:$0xff]
  %v82 = vld [vmem:[%s1 + $0x98] sm:$0xff]
  %v83 = vld [vmem:[%s1 + $0xa0] sm:$0xff]
  %v84 = vld [vmem:[%s1 + $0xa8] sm:$0xff]
  %v85 = vld [vmem:[%s1 + $0xb0] sm:$0xff]
  %v86 = vld [vmem:[%s1 + $0xb8] sm:$0xff]
  %v87 = vld [vmem:[%s34] sm:$0xff]
  %v88 = vld [vmem:[%s34 + $0x8] sm:$0xff]
  %v89 = vld [vmem:[%s34 + $0x10] sm:$0xff]
  %v90 = vld [vmem:[%s34 + $0x18] sm:$0xff]
  %v91 = vld [vmem:[%s34 + $0x20] sm:$0xff]
  %v92 = vld [vmem:[%s34 + $0x28] sm:$0xff]
  %v93 = vld [vmem:[%s34 + $0x30] sm:$0xff]
  %v94 = vld [vmem:[%s34 + $0x38] sm:$0xff]
  %v95 = vld [vmem:[%s34 + $0x40] sm:$0xff]
  %v96 = vld [vmem:[%s34 + $0x48] sm:$0xff]
  %v97 = vld [vmem:[%s34 + $0x50] sm:$0xff]
  %v98 = vld [vmem:[%s34 + $0x58] sm:$0xff]
  %v99 = vld [vmem:[%s34 + $0x60] sm:$0xff]
  %v100 = vld [vmem:[%s34 + $0x68] sm:$0xff]
  %v101 = vld [vmem:[%s34 + $0x70] sm:$0xff]
  %v102 = vld [vmem:[%s34 + $0x78] sm:$0xff]
  %v103 = vld [vmem:[%s34 + $0x80] sm:$0xff]
  %v104 = vld [vmem:[%s34 + $0x88] sm:$0xff]
  %v105 = vld [vmem:[%s34 + $0x90] sm:$0xff]
  %v106 = vld [vmem:[%s34 + $0x98] sm:$0xff]
  %v107 = vld [vmem:[%s34 + $0xa0] sm:$0xff]
  %v108 = vld [vmem:[%s34 + $0xa8] sm:$0xff]
  %v109 = vld [vmem:[%s34 + $0xb0] sm:$0xff]
  %v110 = vld [vmem:[%s34 + $0xb8] sm:$0xff]
  %v111 = vld [vmem:[%s34 + $0xc0] sm:$0xff]
  %v112 = vld [vmem:[%s34 + $0xc8] sm:$0xff]
  %v113 = vld [vmem:[%s34 + $0xd0] sm:$0xff]
  %v114 = vld [vmem:[%s34 + $0xd8] sm:$0xff]
  %v115 = vld [vmem:[%s34 + $0xe0] sm:$0xff]
  %v116 = vld [vmem:[%s34 + $0xe8] sm:$0xff]
  %v117 = vld [vmem:[%s34 + $0xf0] sm:$0xff]
  %v118 = vld [vmem:[%s34 + $0xf8] sm:$0xff]
  %v119 = vld [vmem:[%s34 + $0x100] sm:$0xff]
  %v120 = vld [vmem:[%s34 + $0x108] sm:$0xff]
  %v121 = vld [vmem:[%s34 + $0x110] sm:$0xff]
  %v122 = vld [vmem:[%s34 + $0x118] sm:$0xff]
  %vm123 = vcmask 261120
  %v125 = vsel %vm123, %v65, 0
  %v128 = vsel %vm123, %v68, 0
  %v131 = vsel %vm123, %v71, 0
  %v134 = vsel %vm123, %v74, 0
  %v137 = vsel %vm123, %v77, 0
  %v140 = vsel %vm123, %v80, 0
  %v143 = vsel %vm123, %v83, 0
  %v146 = vsel %vm123, %v86, 0
  %148 = vmatprep.subr.mxu0 0.0
  %149 = vmatpush1.msra.mxu0 %v102
  %150 = vmatprep.subr.mxu0 0.0
  %151 = vmatpush1.msra.mxu0 %v101
  %152 = vmatprep.subr.mxu0 0.0
  %153 = vmatpush1.msra.mxu0 %v100
  %154 = vmatprep.subr.mxu0 0.0
  %155 = vmatpush1.msra.mxu0 %v99
  %156 = vmatprep.subr.mxu0 0.0
  %157 = vmatpush1.msra.mxu0 %v98
  %158 = vmatprep.subr.mxu0 0.0
  %159 = vmatpush1.msra.mxu0 %v97
  %160 = vmatprep.subr.mxu0 0.0
  %161 = vmatpush1.msra.mxu0 %v96
  %162 = vmatprep.subr.mxu0 0.0
  %163 = vmatpush1.msra.mxu0 %v95
  %164 = vmatprep.subr.mxu0 0.0
  %165 = vmatpush1.msra.mxu0 %v94
  %166 = vmatprep.subr.mxu0 0.0
  %167 = vmatpush1.msra.mxu0 %v93
  %168 = vmatprep.subr.mxu0 0.0
  %169 = vmatpush1.msra.mxu0 %v92
  %170 = vmatprep.subr.mxu0 0.0
  %171 = vmatpush1.msra.mxu0 %v91
  %172 = vmatprep.subr.mxu0 0.0
  %173 = vmatpush1.msra.mxu0 %v90
  %174 = vmatprep.subr.mxu0 0.0
  %175 = vmatpush1.msra.mxu0 %v89
  %176 = vmatprep.subr.mxu0 0.0
  %177 = vmatpush1.msra.mxu0 %v88
  %178 = vmatprep.subr.mxu0 0.0
  %179 = vmatpush1.msra.mxu0 %v87
  %180 = vmatprep.subr.mxu0 0.0
  %181 = vmatpush2.msra.mxu0 %v118
  %182 = vmatprep.subr.mxu0 0.0
  %183 = vmatpush2.msra.mxu0 %v117
  %184 = vmatprep.subr.mxu0 0.0
  %185 = vmatpush2.msra.mxu0 %v116
  %186 = vmatprep.subr.mxu0 0.0
  %187 = vmatpush2.msra.mxu0 %v115
  %188 = vmatprep.subr.mxu0 0.0
  %189 = vmatpush2.msra.mxu0 %v114
  %190 = vmatprep.subr.mxu0 0.0
  %191 = vmatpush2.msra.mxu0 %v113
  %192 = vmatprep.subr.mxu0 0.0
  %193 = vmatpush2.msra.mxu0 %v112
  %194 = vmatprep.subr.mxu0 0.0
  %195 = vmatpush2.msra.mxu0 %v111
  %196 = vmatprep.subr.mxu0 0.0
  %197 = vmatpush2.msra.mxu0 %v110
  %198 = vmatprep.subr.mxu0 0.0
  %199 = vmatpush2.msra.mxu0 %v109
  %200 = vmatprep.subr.mxu0 0.0
  %201 = vmatpush2.msra.mxu0 %v108
  %202 = vmatprep.subr.mxu0 0.0
  %203 = vmatpush2.msra.mxu0 %v107
  %204 = vmatprep.subr.mxu0 0.0
  %205 = vmatpush2.msra.mxu0 %v106
  %206 = vmatprep.subr.mxu0 0.0
  %207 = vmatpush2.msra.mxu0 %v105
  %208 = vmatprep.subr.mxu0 0.0
  %209 = vmatpush2.msra.mxu0 %v104
  %210 = vmatprep.subr.mxu0 0.0
  %211 = vmatpush2.msra.mxu0 %v103
  %212 = vmatprep.mubr.f32.mxu0 %v64
  %213 = vmatmul.mubr.f32.gmra.mxu0 %v63
  %v214 = vpop.f32.mrf.mxu0
  %v215 = vadd.f32 0.0, %v214
  %v216 = vpop.f32.mrf.mxu0
  %217 = vmatprep.mubr.f32.mxu0 %v67
  %218 = vmatmul.mubr.f32.gmra.mxu0 %v66
  %v219 = vpop.f32.mrf.mxu0
  %v220 = vadd.f32 0.0, %v219
  %v221 = vpop.f32.mrf.mxu0
  %222 = vmatprep.mubr.f32.mxu0 %v70
  %223 = vmatmul.mubr.f32.gmra.mxu0 %v69
  %v224 = vpop.f32.mrf.mxu0
  %v225 = vadd.f32 0.0, %v224
  %v226 = vpop.f32.mrf.mxu0
  %227 = vmatprep.mubr.f32.mxu0 %v73
  %228 = vmatmul.mubr.f32.gmra.mxu0 %v72
  %v229 = vpop.f32.mrf.mxu0
  %v230 = vadd.f32 0.0, %v229
  %v231 = vpop.f32.mrf.mxu0
  %232 = vmatprep.mubr.f32.mxu0 %v76
  %233 = vmatmul.mubr.f32.gmra.mxu0 %v75
  %v234 = vpop.f32.mrf.mxu0
  %v235 = vadd.f32 0.0, %v234
  %v236 = vpop.f32.mrf.mxu0
  %237 = vmatprep.mubr.f32.mxu0 %v79
  %238 = vmatmul.mubr.f32.gmra.mxu0 %v78
  %v239 = vpop.f32.mrf.mxu0
  %v240 = vadd.f32 0.0, %v239
  %v241 = vpop.f32.mrf.mxu0
  %242 = vmatprep.mubr.f32.mxu0 %v82
  %243 = vmatmul.mubr.f32.gmra.mxu0 %v81
  %v244 = vpop.f32.mrf.mxu0
  %v245 = vadd.f32 0.0, %v244
  %v246 = vpop.f32.mrf.mxu0
  %247 = vmatprep.mubr.f32.mxu0 %v85
  %248 = vmatmul.mubr.f32.gmra.mxu0 %v84
  %v249 = vpop.f32.mrf.mxu0
  %v250 = vadd.f32 0.0, %v249
  %v251 = vpop.f32.mrf.mxu0
  %252 = vdwg.mxu0
  %253 = vmatprep.subr.mxu0 0.0
  %254 = vmatpush1.msra.mxu0 0.0
  %255 = vmatprep.subr.mxu0 0.0
  %256 = vmatpush1.msra.mxu0 0.0
  %257 = vmatprep.subr.mxu0 0.0
  %258 = vmatpush1.msra.mxu0 0.0
  %259 = vmatprep.subr.mxu0 0.0
  %260 = vmatpush1.msra.mxu0 0.0
  %261 = vmatprep.subr.mxu0 0.0
  %262 = vmatpush1.msra.mxu0 0.0
  %263 = vmatprep.subr.mxu0 0.0
  %264 = vmatpush1.msra.mxu0 0.0
  %265 = vmatprep.subr.mxu0 0.0
  %266 = vmatpush1.msra.mxu0 0.0
  %267 = vmatprep.subr.mxu0 0.0
  %268 = vmatpush1.msra.mxu0 0.0
  %269 = vmatprep.subr.mxu0 0.0
  %270 = vmatpush1.msra.mxu0 0.0
  %271 = vmatprep.subr.mxu0 0.0
  %272 = vmatpush1.msra.mxu0 0.0
  %273 = vmatprep.subr.mxu0 0.0
  %274 = vmatpush1.msra.mxu0 0.0
  %275 = vmatprep.subr.mxu0 0.0
  %276 = vmatpush1.msra.mxu0 0.0
  %277 = vmatprep.subr.mxu0 0.0
  %278 = vmatpush1.msra.mxu0 %v122
  %279 = vmatprep.subr.mxu0 0.0
  %280 = vmatpush1.msra.mxu0 %v121
  %281 = vmatprep.subr.mxu0 0.0
  %282 = vmatpush1.msra.mxu0 %v120
  %283 = vmatprep.subr.mxu0 0.0
  %284 = vmatpush1.msra.mxu0 %v119
  %285 = vmatprep.subr.mxu0 0.0
  %286 = vmatpush2.msra.mxu0 0.0
  %287 = vmatprep.subr.mxu0 0.0
  %288 = vmatpush2.msra.mxu0 0.0
  %289 = vmatprep.subr.mxu0 0.0
  %290 = vmatpush2.msra.mxu0 0.0
  %291 = vmatprep.subr.mxu0 0.0
  %292 = vmatpush2.msra.mxu0 0.0
  %293 = vmatprep.subr.mxu0 0.0
  %294 = vmatpush2.msra.mxu0 0.0
  %295 = vmatprep.subr.mxu0 0.0
  %296 = vmatpush2.msra.mxu0 0.0
  %297 = vmatprep.subr.mxu0 0.0
  %298 = vmatpush2.msra.mxu0 0.0
  %299 = vmatprep.subr.mxu0 0.0
  %300 = vmatpush2.msra.mxu0 0.0
  %301 = vmatprep.subr.mxu0 0.0
  %302 = vmatpush2.msra.mxu0 0.0
  %303 = vmatprep.subr.mxu0 0.0
  %304 = vmatpush2.msra.mxu0 0.0
  %305 = vmatprep.subr.mxu0 0.0
  %306 = vmatpush2.msra.mxu0 0.0
  %307 = vmatprep.subr.mxu0 0.0
  %308 = vmatpush2.msra.mxu0 0.0
  %309 = vmatprep.subr.mxu0 0.0
  %310 = vmatpush2.msra.mxu0 0.0
  %311 = vmatprep.subr.mxu0 0.0
  %312 = vmatpush2.msra.mxu0 0.0
  %313 = vmatprep.subr.mxu0 0.0
  %314 = vmatpush2.msra.mxu0 0.0
  %315 = vmatprep.subr.mxu0 0.0
  %316 = vmatpush2.msra.mxu0 0.0
  %317 = vmatprep.mubr.f32.mxu0 0.0
  %318 = vmatmul.mubr.f32.gmra.mxu0 %v125
  %v319 = vpop.f32.mrf.mxu0
  %v320 = vadd.f32 %v215, %v319
  %v321 = vpop.f32.mrf.mxu0
  %322 = vmatprep.mubr.f32.mxu0 0.0
  %323 = vmatmul.mubr.f32.gmra.mxu0 %v128
  %v324 = vpop.f32.mrf.mxu0
  %v325 = vadd.f32 %v220, %v324
  %v326 = vpop.f32.mrf.mxu0
  %327 = vmatprep.mubr.f32.mxu0 0.0
  %328 = vmatmul.mubr.f32.gmra.mxu0 %v131
  %v329 = vpop.f32.mrf.mxu0
  %v330 = vadd.f32 %v225, %v329
  %v331 = vpop.f32.mrf.mxu0
  %332 = vmatprep.mubr.f32.mxu0 0.0
  %333 = vmatmul.mubr.f32.gmra.mxu0 %v134
  %v334 = vpop.f32.mrf.mxu0
  %v335 = vadd.f32 %v230, %v334
  %v336 = vpop.f32.mrf.mxu0
  %337 = vmatprep.mubr.f32.mxu0 0.0
  %338 = vmatmul.mubr.f32.gmra.mxu0 %v137
  %v339 = vpop.f32.mrf.mxu0
  %v340 = vadd.f32 %v235, %v339
  %v341 = vpop.f32.mrf.mxu0
  %342 = vmatprep.mubr.f32.mxu0 0.0
  %343 = vmatmul.mubr.f32.gmra.mxu0 %v140
  %v344 = vpop.f32.mrf.mxu0
  %v345 = vadd.f32 %v240, %v344
  %v346 = vpop.f32.mrf.mxu0
  %347 = vmatprep.mubr.f32.mxu0 0.0
  %348 = vmatmul.mubr.f32.gmra.mxu0 %v143
  %v349 = vpop.f32.mrf.mxu0
  %v350 = vadd.f32 %v245, %v349
  %v351 = vpop.f32.mrf.mxu0
  %352 = vmatprep.mubr.f32.mxu0 0.0
  %353 = vmatmul.mubr.f32.gmra.mxu0 %v146
  %v354 = vpop.f32.mrf.mxu0
  %v355 = vadd.f32 %v250, %v354
  %v356 = vpop.f32.mrf.mxu0
  %357 = vdwg.mxu0
  %358 = vst [vmem:[%s40] sm:$0xff] %v320
  %359 = vst [vmem:[%s40 + $0x8] sm:$0xff] %v325
  %360 = vst [vmem:[%s40 + $0x10] sm:$0xff] %v330
  %361 = vst [vmem:[%s40 + $0x18] sm:$0xff] %v335
  %362 = vst [vmem:[%s40 + $0x20] sm:$0xff] %v340
  %363 = vst [vmem:[%s40 + $0x28] sm:$0xff] %v345
  %364 = vst [vmem:[%s40 + $0x30] sm:$0xff] %v350
  %365 = vst [vmem:[%s40 + $0x38] sm:$0xff] %v355
  %v366 = vld [vmem:[%s3] sm:$0xff]
  %v367 = vld [vmem:[%s3 + $0x8] sm:$0xff]
  %v368 = vld [vmem:[%s3 + $0x10] sm:$0xff]
  %v369 = vld [vmem:[%s3 + $0x18] sm:$0xff]
  %v370 = vld [vmem:[%s3 + $0x20] sm:$0xff]
  %v371 = vld [vmem:[%s3 + $0x28] sm:$0xff]
  %v372 = vld [vmem:[%s3 + $0x30] sm:$0xff]
  %v373 = vld [vmem:[%s3 + $0x38] sm:$0xff]
  %374 = vadd.xlane.f32.xlu0 %v320
  %v375 = vpop.xlane.xlu0 %374
  %376 = vadd.xlane.f32.xlu0 %v325
  %v377 = vpop.xlane.xlu0 %376
  %378 = vadd.xlane.f32.xlu0 %v330
  %v379 = vpop.xlane.xlu0 %378
  %380 = vadd.xlane.f32.xlu0 %v335
  %v381 = vpop.xlane.xlu0 %380
  %382 = vadd.xlane.f32.xlu0 %v340
  %v383 = vpop.xlane.xlu0 %382
  %384 = vadd.xlane.f32.xlu0 %v345
  %v385 = vpop.xlane.xlu0 %384
  %386 = vadd.xlane.f32.xlu0 %v350
  %v387 = vpop.xlane.xlu0 %386
  %388 = vadd.xlane.f32.xlu0 %v355
  %v389 = vpop.xlane.xlu0 %388
  %v390 = vadd.f32 %v366, %v375
  %v391 = vadd.f32 %v367, %v377
  %v392 = vadd.f32 %v368, %v379
  %v393 = vadd.f32 %v369, %v381
  %v394 = vadd.f32 %v370, %v383
  %v395 = vadd.f32 %v371, %v385
  %v396 = vadd.f32 %v372, %v387
  %v397 = vadd.f32 %v373, %v389
  %vm398 = vcmask 7168
  %399 = vst.msk [vmem:[%s3] sm:$0xff] %vm398, %v390
  %400 = vst.msk [vmem:[%s3 + $0x8] sm:$0xff] %vm398, %v391
  %401 = vst.msk [vmem:[%s3 + $0x10] sm:$0xff] %vm398, %v392
  %402 = vst.msk [vmem:[%s3 + $0x18] sm:$0xff] %vm398, %v393
  %403 = vst.msk [vmem:[%s3 + $0x20] sm:$0xff] %vm398, %v394
  %404 = vst.msk [vmem:[%s3 + $0x28] sm:$0xff] %vm398, %v395
  %405 = vst.msk [vmem:[%s3 + $0x30] sm:$0xff] %vm398, %v396
  %406 = vst.msk [vmem:[%s3 + $0x38] sm:$0xff] %vm398, %v397
  %v407 = vld [vmem:[%s4] sm:$0xff]
  %v408 = vld [vmem:[%s4 + $0x8] sm:$0xff]
  %v409 = vld [vmem:[%s4 + $0x10] sm:$0xff]
  %v410 = vld [vmem:[%s4 + $0x18] sm:$0xff]
  %v411 = vld [vmem:[%s4 + $0x20] sm:$0xff]
  %v412 = vld [vmem:[%s4 + $0x28] sm:$0xff]
  %v413 = vld [vmem:[%s4 + $0x30] sm:$0xff]
  %v414 = vld [vmem:[%s4 + $0x38] sm:$0xff]
  %v415 = vmul.f32 %v320, %v320
  %v416 = vmul.f32 %v325, %v325
  %v417 = vmul.f32 %v330, %v330
  %v418 = vmul.f32 %v335, %v335
  %v419 = vmul.f32 %v340, %v340
  %v420 = vmul.f32 %v345, %v345
  %v421 = vmul.f32 %v350, %v350
  %v422 = vmul.f32 %v355, %v355
  %423 = vadd.xlane.f32.xlu0 %v415
  %v424 = vpop.xlane.xlu0 %423
  %425 = vadd.xlane.f32.xlu0 %v416
  %v426 = vpop.xlane.xlu0 %425
  %427 = vadd.xlane.f32.xlu0 %v417
  %v428 = vpop.xlane.xlu0 %427
  %429 = vadd.xlane.f32.xlu0 %v418
  %v430 = vpop.xlane.xlu0 %429
  %431 = vadd.xlane.f32.xlu0 %v419
  %v432 = vpop.xlane.xlu0 %431
  %433 = vadd.xlane.f32.xlu0 %v420
  %v434 = vpop.xlane.xlu0 %433
  %435 = vadd.xlane.f32.xlu0 %v421
  %v436 = vpop.xlane.xlu0 %435
  %437 = vadd.xlane.f32.xlu0 %v422
  %v438 = vpop.xlane.xlu0 %437
  %v439 = vadd.f32 %v407, %v424
  %v440 = vadd.f32 %v408, %v426
  %v441 = vadd.f32 %v409, %v428
  %v442 = vadd.f32 %v410, %v430
  %v443 = vadd.f32 %v411, %v432
  %v444 = vadd.f32 %v412, %v434
  %v445 = vadd.f32 %v413, %v436
  %v446 = vadd.f32 %v414, %v438
  %447 = vst.msk [vmem:[%s4] sm:$0xff] %vm398, %v439
  %448 = vst.msk [vmem:[%s4 + $0x8] sm:$0xff] %vm398, %v440
  %449 = vst.msk [vmem:[%s4 + $0x10] sm:$0xff] %vm398, %v441
  %450 = vst.msk [vmem:[%s4 + $0x18] sm:$0xff] %vm398, %v442
  %451 = vst.msk [vmem:[%s4 + $0x20] sm:$0xff] %vm398, %v443
  %452 = vst.msk [vmem:[%s4 + $0x28] sm:$0xff] %vm398, %v444
  %453 = vst.msk [vmem:[%s4 + $0x30] sm:$0xff] %vm398, %v445
  %454 = vst.msk [vmem:[%s4 + $0x38] sm:$0xff] %vm398, %v446
  %s455 = sadd.s32 0, 0
  %p456 = scmp.lt.s32.totalorder %s455, 0
  %s457 = scalar_select %p456, %s455, 0
  %s458 = smul.addr %s457, 8
  %s459 = scalar_lea.vmem %s2, %s458
  // Predicated region
  $region14: #{decoder_forward.6} parent=0 // pred_check
    _
  $region15: #{decoder_forward.6} parent=0 // pred_check_branch
    %461 = sbr.rel (0) target = $region17
  $region16: #{decoder_forward.6} parent=0 // pred_region
    %s462 = sadd.s32 0, 0
  $region17: #{decoder_forward.6} parent=0 // pred_fallthru
    _
  // Predicated region
  $region18: #{decoder_forward.6} parent=0 // pred_check
    _
  $region19: #{decoder_forward.6} parent=0 // pred_check_branch
    %464 = sbr.rel (0) target = $region21
  $region20: #{decoder_forward.6} parent=0 // pred_region
    _
  $region21: #{decoder_forward.6} parent=0 // pred_fallthru
    _
  // Predicated region
  $region22: #{decoder_forward.6} parent=0 // pred_check
    _
  $region23: #{decoder_forward.6} parent=0 // pred_check_branch
    %466 = sbr.rel (0) target = $region25
  $region24: #{decoder_forward.6} parent=0 // pred_region
    _
  $region25: #{decoder_forward.6} parent=0 // pred_fallthru
    _
  // Predicated region
  $region26: #{decoder_forward.6} parent=0 // pred_check
    _
  $region27: #{decoder_forward.6} parent=0 // pred_check_branch
    %468 = sbr.rel (0) target = $region29
  $region28: #{decoder_forward.6} parent=0 // pred_region
    %s469 = sadd.s32 0, 0
    %p470 = scmp.lt.s32.totalorder %s469, 0
    %s471 = scalar_select %p470, %s469, 0
    %s472 = smul.addr %s471, 8
    %s473 = scalar_lea.vmem %s2, %s472
  $region29: #{decoder_forward.6} parent=0 // pred_fallthru
    _
  // Predicated region
  $region30: #{decoder_forward.6} parent=0 // pred_check
    _
  $region31: #{decoder_forward.6} parent=0 // pred_check_branch
    %475 = sbr.rel (0) target = $region33
  $region32: #{decoder_forward.6} parent=0 // pred_region
    _
  $region33: #{decoder_forward.6} parent=0 // pred_fallthru
    _
  // Predicated region
  $region34: #{decoder_forward.6} parent=0 // pred_check
    _
  $region35: #{decoder_forward.6} parent=0 // pred_check_branch
    %477 = sbr.rel (0) target = $region37
  $region36: #{decoder_forward.6} parent=0 // pred_region
    _
  $region37: #{decoder_forward.6} parent=0 // pred_fallthru
    _

// kernel: tile.68
$region0: #{tile.68}
  #allocation0 [shape = 's32[1]{0}', space=sflag, size = 0x4, scoped, tag = 'scoped memory for tile.68']
  %s0 = inlined_call_operand.vmem [shape: f32[8], index: 0, kind: input, shape index: {}]
  %s1 = inlined_call_operand.vmem [shape: f32[4,8], index: 1, kind: output, shape index: {}]
  // Predicated region
  $region2: #{tile.68} parent=0 // pred_check
    _
  $region3: #{tile.68} parent=0 // pred_check_branch
    %3 = sbr.rel (0) target = $region5
  $region4: #{tile.68} parent=0 // pred_region
    _
  $region5: #{tile.68} parent=0 // pred_fallthru
    _
  %v4 = vld [vmem:[%s0] ss:$0 sm:$0xff]
  %5 = vst [vmem:[%s1] sm:$0xf] %v4

// kernel: decoder_forward.7
$region0: #{decoder_forward.7}
  #allocation0 [shape = 'u32[]', space=smem, size = 0x4, offset = 0x4, fixed_abs, tag = 'smem constant byte address 0x4 - core index']
  #allocation1 [shape = 'u32[144,128]{1,0:T(1,128)}', space=vmem, size = 0x12000, scoped, tag = 'internal scratch']
  %s0 = inlined_call_operand.vmem [shape: f32[144,512], index: 0, kind: input, shape index: {}]
  %s1 = inlined_call_operand.vmem [shape: f32[32,144], index: 1, kind: input, shape index: {}]
  %s2 = inlined_call_operand.vmem [shape: f32[32,512], index: 2, kind: output, shape index: {0}]
  %s3 = inlined_call_operand.vmem [shape: f32[1,32,1], index: 3, kind: output, shape index: {1}]
  %s4 = inlined_call_operand.vmem [shape: f32[1,32,1], index: 4, kind: output, shape index: {2}]
  %5 = xla_tuple %s2, %s3, %s4
  %s6 = sld [smem:[#allocation0]]
  $region38: #{decoder_forward.7} parent=0
    _
  %s8 = ssub.s32 1, %s6
  %s9 = scalar_select 0, %s8, %s6
  // Predicated region
  $region2: #{decoder_forward.7} parent=0 // pred_check
    _
  $region3: #{decoder_forward.7} parent=0 // pred_check_branch
    %11 = sbr.rel (0) target = $region5
  $region4: #{decoder_forward.7} parent=0 // pred_region
    %s12 = sadd.s32 0, 0
    %s13 = smul.u32 4, %s12
    %p14 = scmp.lt.s32.totalorder %s13, 3
    %s15 = scalar_select %p14, %s13, 3
    %s16 = smul.addr %s15, 8
    %s17 = scalar_lea.vmem %s0, %s16
    %s18 = sadd.s32 0, 0
    %s19 = smul.u32 4, %s18
  $region5: #{decoder_forward.7} parent=0 // pred_fallthru
    _
  // Predicated region
  $region6: #{decoder_forward.7} parent=0 // pred_check
    _
  $region7: #{decoder_forward.7} parent=0 // pred_check_branch
    %21 = sbr.rel (0) target = $region9
  $region8: #{decoder_forward.7} parent=0 // pred_region
    _
  $region9: #{decoder_forward.7} parent=0 // pred_fallthru
    _
  %s22 = sadd.s32 0, 0
  %s23 = smul.u32 4, %s22
  %p24 = scmp.lt.s32.totalorder %s23, 3
  %s25 = scalar_select %p24, %s23, 3
  %s26 = smul.addr %s25, 8
  %s27 = scalar_lea.vmem %s0, %s26
  %s28 = sadd.s32 0, 0
  %s29 = smul.u32 4, %s28
  %p30 = scmp.lt.s32.totalorder %s29, 3
  %s31 = scalar_select %p30, %s29, 3
  %s32 = smul.addr %s31, 8
  %s33 = scalar_lea.vmem %s2, %s32
  %s34 = sadd.s32 0, 0
  %s35 = smul.u32 4, %s34
  %p36 = scmp.lt.s32.totalorder %s35, 3
  %s37 = scalar_select %p36, %s35, 3
  %s38 = smul.addr %s37, 8
  %s39 = scalar_lea.vmem %s0, %s38
  %s40 = sadd.s32 0, 0
  %s41 = smul.u32 4, %s40
  %s42 = sadd.s32 0, 0
  %s43 = smul.u32 4, %s42
  %p44 = scmp.lt.s32.totalorder %s43, 3
  %s45 = scalar_select %p44, %s43, 3
  %s46 = smul.addr %s45, 8
  %s47 = scalar_lea.vmem %s2, %s46
  %s48 = sadd.s32 0, 0
  %s49 = smul.u32 4, %s48
  %p50 = scmp.eq.s32.totalorder 0, 0
  // Predicated region
  $region10: #{decoder_forward.7} parent=0 // pred_check
    %p51 = pneg %p50
  $region11: #{decoder_forward.7} parent=0 // pred_check_branch
    %53 = sbr.rel (%p51) target = $region13
  $region12: #{decoder_forward.7} parent=0 // pred_region
    %vm54 = vcmask 7168
    %55 = vst.msk [vmem:[%s3] sm:$0xff] %vm54, 0.0
    %56 = vst.msk [vmem:[%s3 + $0x8] sm:$0xff] %vm54, 0.0
    %57 = vst.msk [vmem:[%s3 + $0x10] sm:$0xff] %vm54, 0.0
    %58 = vst.msk [vmem:[%s3 + $0x18] sm:$0xff] %vm54, 0.0
    %59 = vst.msk [vmem:[%s4] sm:$0xff] %vm54, 0.0
    %60 = vst.msk [vmem:[%s4 + $0x8] sm:$0xff] %vm54, 0.0
    %61 = vst.msk [vmem:[%s4 + $0x10] sm:$0xff] %vm54, 0.0
    %62 = vst.msk [vmem:[%s4 + $0x18] sm:$0xff] %vm54, 0.0
  $region13: #{decoder_forward.7} parent=0 // pred_fallthru
    _
  %v63 = vld [vmem:[%s1] sm:$0xff]
  %v64 = vld [vmem:[%s1 + $0x8] sm:$0xff]
  %v65 = vld [vmem:[%s1 + $0x10] sm:$0xff]
  %v66 = vld [vmem:[%s1 + $0x18] sm:$0xff]
  %v67 = vld [vmem:[%s1 + $0x20] sm:$0xff]
  %v68 = vld [vmem:[%s1 + $0x28] sm:$0xff]
  %v69 = vld [vmem:[%s1 + $0x30] sm:$0xff]
  %v70 = vld [vmem:[%s1 + $0x38] sm:$0xff]
  %v71 = vld [vmem:[%s39] sm:$0xff]
  %v72 = vld [vmem:[%s39 + $0x8] sm:$0xff]
  %v73 = vld [vmem:[%s39 + $0x10] sm:$0xff]
  %v74 = vld [vmem:[%s39 + $0x18] sm:$0xff]
  %v75 = vld [vmem:[%s39 + $0x20] sm:$0xff]
  %v76 = vld [vmem:[%s39 + $0x28] sm:$0xff]
  %v77 = vld [vmem:[%s39 + $0x30] sm:$0xff]
  %v78 = vld [vmem:[%s39 + $0x38] sm:$0xff]
  %v79 = vld [vmem:[%s39 + $0x40] sm:$0xff]
  %v80 = vld [vmem:[%s39 + $0x48] sm:$0xff]
  %v81 = vld [vmem:[%s39 + $0x50] sm:$0xff]
  %v82 = vld [vmem:[%s39 + $0x58] sm:$0xff]
  %v83 = vld [vmem:[%s39 + $0x60] sm:$0xff]
  %v84 = vld [vmem:[%s39 + $0x68] sm:$0xff]
  %v85 = vld [vmem:[%s39 + $0x70] sm:$0xff]
  %v86 = vld [vmem:[%s39 + $0x78] sm:$0xff]
  %v87 = vld [vmem:[%s39 + $0x80] sm:$0xff]
  %v88 = vld [vmem:[%s39 + $0x88] sm:$0xff]
  %v89 = vld [vmem:[%s39 + $0x90] sm:$0xff]
  %v90 = vld [vmem:[%s39 + $0x98] sm:$0xff]
  %v91 = vld [vmem:[%s39 + $0xa0] sm:$0xff]
  %v92 = vld [vmem:[%s39 + $0xa8] sm:$0xff]
  %v93 = vld [vmem:[%s39 + $0xb0] sm:$0xff]
  %v94 = vld [vmem:[%s39 + $0xb8] sm:$0xff]
  %v95 = vld [vmem:[%s39 + $0xc0] sm:$0xff]
  %v96 = vld [vmem:[%s39 + $0xc8] sm:$0xff]
  %v97 = vld [vmem:[%s39 + $0xd0] sm:$0xff]
  %v98 = vld [vmem:[%s39 + $0xd8] sm:$0xff]
  %v99 = vld [vmem:[%s39 + $0xe0] sm:$0xff]
  %v100 = vld [vmem:[%s39 + $0xe8] sm:$0xff]
  %v101 = vld [vmem:[%s39 + $0xf0] sm:$0xff]
  %v102 = vld [vmem:[%s39 + $0xf8] sm:$0xff]
  %v103 = vld [vmem:[%s39 + $0x100] sm:$0xff]
  %v104 = vld [vmem:[%s39 + $0x108] sm:$0xff]
  %v105 = vld [vmem:[%s39 + $0x110] sm:$0xff]
  %v106 = vld [vmem:[%s39 + $0x118] sm:$0xff]
  %v107 = vld [vmem:[%s39 + $0x120] sm:$0xff]
  %v108 = vld [vmem:[%s39 + $0x128] sm:$0xff]
  %v109 = vld [vmem:[%s39 + $0x130] sm:$0xff]
  %v110 = vld [vmem:[%s39 + $0x138] sm:$0xff]
  %v111 = vld [vmem:[%s39 + $0x140] sm:$0xff]
  %v112 = vld [vmem:[%s39 + $0x148] sm:$0xff]
  %v113 = vld [vmem:[%s39 + $0x150] sm:$0xff]
  %v114 = vld [vmem:[%s39 + $0x158] sm:$0xff]
  %v115 = vld [vmem:[%s39 + $0x160] sm:$0xff]
  %v116 = vld [vmem:[%s39 + $0x168] sm:$0xff]
  %v117 = vld [vmem:[%s39 + $0x170] sm:$0xff]
  %v118 = vld [vmem:[%s39 + $0x178] sm:$0xff]
  %v119 = vld [vmem:[%s39 + $0x180] sm:$0xff]
  %v120 = vld [vmem:[%s39 + $0x188] sm:$0xff]
  %v121 = vld [vmem:[%s39 + $0x190] sm:$0xff]
  %v122 = vld [vmem:[%s39 + $0x198] sm:$0xff]
  %v123 = vld [vmem:[%s39 + $0x1a0] sm:$0xff]
  %v124 = vld [vmem:[%s39 + $0x1a8] sm:$0xff]
  %v125 = vld [vmem:[%s39 + $0x1b0] sm:$0xff]
  %v126 = vld [vmem:[%s39 + $0x1b8] sm:$0xff]
  %v127 = vld [vmem:[%s39 + $0x1c0] sm:$0xff]
  %v128 = vld [vmem:[%s39 + $0x1c8] sm:$0xff]
  %v129 = vld [vmem:[%s39 + $0x1d0] sm:$0xff]
  %v130 = vld [vmem:[%s39 + $0x1d8] sm:$0xff]
  %v131 = vld [vmem:[%s39 + $0x1e0] sm:$0xff]
  %v132 = vld [vmem:[%s39 + $0x1e8] sm:$0xff]
  %v133 = vld [vmem:[%s39 + $0x1f0] sm:$0xff]
  %v134 = vld [vmem:[%s39 + $0x1f8] sm:$0xff]
  %v135 = vld [vmem:[%s39 + $0x200] sm:$0xff]
  %v136 = vld [vmem:[%s39 + $0x208] sm:$0xff]
  %v137 = vld [vmem:[%s39 + $0x210] sm:$0xff]
  %v138 = vld [vmem:[%s39 + $0x218] sm:$0xff]
  %v139 = vld [vmem:[%s39 + $0x220] sm:$0xff]
  %v140 = vld [vmem:[%s39 + $0x228] sm:$0xff]
  %v141 = vld [vmem:[%s39 + $0x230] sm:$0xff]
  %v142 = vld [vmem:[%s39 + $0x238] sm:$0xff]
  %vm143 = vcmask 130048
  %v145 = vsel %vm143, %v64, 0
  %v148 = vsel %vm143, %v66, 0
  %v151 = vsel %vm143, %v68, 0
  %v154 = vsel %vm143, %v70, 0
  %156 = vmatprep.subr.mxu0 %v132
  %157 = vmatpush1.msra.mxu0 %v131
  %158 = vmatprep.subr.mxu0 %v128
  %159 = vmatpush1.msra.mxu0 %v127
  %160 = vmatprep.subr.mxu0 %v124
  %161 = vmatpush1.msra.mxu0 %v123
  %162 = vmatprep.subr.mxu0 %v120
  %163 = vmatpush1.msra.mxu0 %v119
  %164 = vmatprep.subr.mxu0 %v116
  %165 = vmatpush1.msra.mxu0 %v115
  %166 = vmatprep.subr.mxu0 %v112
  %167 = vmatpush1.msra.mxu0 %v111
  %168 = vmatprep.subr.mxu0 %v108
  %169 = vmatpush1.msra.mxu0 %v107
  %170 = vmatprep.subr.mxu0 %v104
  %171 = vmatpush1.msra.mxu0 %v103
  %172 = vmatprep.subr.mxu0 %v100
  %173 = vmatpush1.msra.mxu0 %v99
  %174 = vmatprep.subr.mxu0 %v96
  %175 = vmatpush1.msra.mxu0 %v95
  %176 = vmatprep.subr.mxu0 %v92
  %177 = vmatpush1.msra.mxu0 %v91
  %178 = vmatprep.subr.mxu0 %v88
  %179 = vmatpush1.msra.mxu0 %v87
  %180 = vmatprep.subr.mxu0 %v84
  %181 = vmatpush1.msra.mxu0 %v83
  %182 = vmatprep.subr.mxu0 %v80
  %183 = vmatpush1.msra.mxu0 %v79
  %184 = vmatprep.subr.mxu0 %v76
  %185 = vmatpush1.msra.mxu0 %v75
  %186 = vmatprep.subr.mxu0 %v72
  %187 = vmatpush1.msra.mxu0 %v71
  %188 = vmatprep.subr.mxu0 0.0
  %189 = vmatpush2.msra.mxu0 0.0
  %190 = vmatprep.subr.mxu0 0.0
  %191 = vmatpush2.msra.mxu0 0.0
  %192 = vmatprep.subr.mxu0 0.0
  %193 = vmatpush2.msra.mxu0 0.0
  %194 = vmatprep.subr.mxu0 0.0
  %195 = vmatpush2.msra.mxu0 0.0
  %196 = vmatprep.subr.mxu0 0.0
  %197 = vmatpush2.msra.mxu0 0.0
  %198 = vmatprep.subr.mxu0 0.0
  %199 = vmatpush2.msra.mxu0 0.0
  %200 = vmatprep.subr.mxu0 0.0
  %201 = vmatpush2.msra.mxu0 0.0
  %202 = vmatprep.subr.mxu0 0.0
  %203 = vmatpush2.msra.mxu0 0.0
  %204 = vmatprep.subr.mxu0 0.0
  %205 = vmatpush2.msra.mxu0 0.0
  %206 = vmatprep.subr.mxu0 0.0
  %207 = vmatpush2.msra.mxu0 0.0
  %208 = vmatprep.subr.mxu0 0.0
  %209 = vmatpush2.msra.mxu0 0.0
  %210 = vmatprep.subr.mxu0 0.0
  %211 = vmatpush2.msra.mxu0 0.0
  %212 = vmatprep.subr.mxu0 0.0
  %213 = vmatpush2.msra.mxu0 0.0
  %214 = vmatprep.subr.mxu0 0.0
  %215 = vmatpush2.msra.mxu0 0.0
  %216 = vmatprep.subr.mxu0 %v140
  %217 = vmatpush2.msra.mxu0 %v139
  %218 = vmatprep.subr.mxu0 %v136
  %219 = vmatpush2.msra.mxu0 %v135
  %220 = vmatprep.mubr.f32.mxu0 %v145
  %221 = vmatmul.mubr.f32.gmra.mxu0 %v63
  %v222 = vpop.f32.mrf.mxu0
  %v223 = vadd.f32 0.0, %v222
  %v224 = vpop.f32.mrf.mxu0
  %v225 = vadd.f32 0.0, %v224
  %226 = vmatprep.mubr.f32.mxu0 %v148
  %227 = vmatmul.mubr.f32.gmra.mxu0 %v65
  %v228 = vpop.f32.mrf.mxu0
  %v229 = vadd.f32 0.0, %v228
  %v230 = vpop.f32.mrf.mxu0
  %v231 = vadd.f32 0.0, %v230
  %232 = vmatprep.mubr.f32.mxu0 %v151
  %233 = vmatmul.mubr.f32.gmra.mxu0 %v67
  %v234 = vpop.f32.mrf.mxu0
  %v235 = vadd.f32 0.0, %v234
  %v236 = vpop.f32.mrf.mxu0
  %v237 = vadd.f32 0.0, %v236
  %238 = vmatprep.mubr.f32.mxu0 %v154
  %239 = vmatmul.mubr.f32.gmra.mxu0 %v69
  %v240 = vpop.f32.mrf.mxu0
  %v241 = vadd.f32 0.0, %v240
  %v242 = vpop.f32.mrf.mxu0
  %v243 = vadd.f32 0.0, %v242
  %244 = vdwg.mxu0
  %245 = vmatprep.subr.mxu0 %v134
  %246 = vmatpush1.msra.mxu0 %v133
  %247 = vmatprep.subr.mxu0 %v130
  %248 = vmatpush1.msra.mxu0 %v129
  %249 = vmatprep.subr.mxu0 %v126
  %250 = vmatpush1.msra.mxu0 %v125
  %251 = vmatprep.subr.mxu0 %v122
  %252 = vmatpush1.msra.mxu0 %v121
  %253 = vmatprep.subr.mxu0 %v118
  %254 = vmatpush1.msra.mxu0 %v117
  %255 = vmatprep.subr.mxu0 %v114
  %256 = vmatpush1.msra.mxu0 %v113
  %257 = vmatprep.subr.mxu0 %v110
  %258 = vmatpush1.msra.mxu0 %v109
  %259 = vmatprep.subr.mxu0 %v106
  %260 = vmatpush1.msra.mxu0 %v105
  %261 = vmatprep.subr.mxu0 %v102
  %262 = vmatpush1.msra.mxu0 %v101
  %263 = vmatprep.subr.mxu0 %v98
  %264 = vmatpush1.msra.mxu0 %v97
  %265 = vmatprep.subr.mxu0 %v94
  %266 = vmatpush1.msra.mxu0 %v93
  %267 = vmatprep.subr.mxu0 %v90
  %268 = vmatpush1.msra.mxu0 %v89
  %269 = vmatprep.subr.mxu0 %v86
  %270 = vmatpush1.msra.mxu0 %v85
  %271 = vmatprep.subr.mxu0 %v82
  %272 = vmatpush1.msra.mxu0 %v81
  %273 = vmatprep.subr.mxu0 %v78
  %274 = vmatpush1.msra.mxu0 %v77
  %275 = vmatprep.subr.mxu0 %v74
  %276 = vmatpush1.msra.mxu0 %v73
  %277 = vmatprep.subr.mxu0 0.0
  %278 = vmatpush2.msra.mxu0 0.0
  %279 = vmatprep.subr.mxu0 0.0
  %280 = vmatpush2.msra.mxu0 0.0
  %281 = vmatprep.subr.mxu0 0.0
  %282 = vmatpush2.msra.mxu0 0.0
  %283 = vmatprep.subr.mxu0 0.0
  %284 = vmatpush2.msra.mxu0 0.0
  %285 = vmatprep.subr.mxu0 0.0
  %286 = vmatpush2.msra.mxu0 0.0
  %287 = vmatprep.subr.mxu0 0.0
  %288 = vmatpush2.msra.mxu0 0.0
  %289 = vmatprep.subr.mxu0 0.0
  %290 = vmatpush2.msra.mxu0 0.0
  %291 = vmatprep.subr.mxu0 0.0
  %292 = vmatpush2.msra.mxu0 0.0
  %293 = vmatprep.subr.mxu0 0.0
  %294 = vmatpush2.msra.mxu0 0.0
  %295 = vmatprep.subr.mxu0 0.0
  %296 = vmatpush2.msra.mxu0 0.0
  %297 = vmatprep.subr.mxu0 0.0
  %298 = vmatpush2.msra.mxu0 0.0
  %299 = vmatprep.subr.mxu0 0.0
  %300 = vmatpush2.msra.mxu0 0.0
  %301 = vmatprep.subr.mxu0 0.0
  %302 = vmatpush2.msra.mxu0 0.0
  %303 = vmatprep.subr.mxu0 0.0
  %304 = vmatpush2.msra.mxu0 0.0
  %305 = vmatprep.subr.mxu0 %v142
  %306 = vmatpush2.msra.mxu0 %v141
  %307 = vmatprep.subr.mxu0 %v138
  %308 = vmatpush2.msra.mxu0 %v137
  %309 = vmatprep.mubr.f32.mxu0 %v145
  %310 = vmatmul.mubr.f32.gmra.mxu0 %v63
  %v311 = vpop.f32.mrf.mxu0
  %v312 = vadd.f32 0.0, %v311
  %v313 = vpop.f32.mrf.mxu0
  %v314 = vadd.f32 0.0, %v313
  %315 = vmatprep.mubr.f32.mxu0 %v148
  %316 = vmatmul.mubr.f32.gmra.mxu0 %v65
  %v317 = vpop.f32.mrf.mxu0
  %v318 = vadd.f32 0.0, %v317
  %v319 = vpop.f32.mrf.mxu0
  %v320 = vadd.f32 0.0, %v319
  %321 = vmatprep.mubr.f32.mxu0 %v151
  %322 = vmatmul.mubr.f32.gmra.mxu0 %v67
  %v323 = vpop.f32.mrf.mxu0
  %v324 = vadd.f32 0.0, %v323
  %v325 = vpop.f32.mrf.mxu0
  %v326 = vadd.f32 0.0, %v325
  %327 = vmatprep.mubr.f32.mxu0 %v154
  %328 = vmatmul.mubr.f32.gmra.mxu0 %v69
  %v329 = vpop.f32.mrf.mxu0
  %v330 = vadd.f32 0.0, %v329
  %v331 = vpop.f32.mrf.mxu0
  %v332 = vadd.f32 0.0, %v331
  %333 = vdwg.mxu0
  %334 = vst [vmem:[%s47] sm:$0xff] %v223
  %335 = vst [vmem:[%s47 + $0x8] sm:$0xff] %v225
  %336 = vst [vmem:[%s47 + $0x10] sm:$0xff] %v312
  %337 = vst [vmem:[%s47 + $0x18] sm:$0xff] %v314
  %338 = vst [vmem:[%s47 + $0x20] sm:$0xff] %v229
  %339 = vst [vmem:[%s47 + $0x28] sm:$0xff] %v231
  %340 = vst [vmem:[%s47 + $0x30] sm:$0xff] %v318
  %341 = vst [vmem:[%s47 + $0x38] sm:$0xff] %v320
  %342 = vst [vmem:[%s47 + $0x40] sm:$0xff] %v235
  %343 = vst [vmem:[%s47 + $0x48] sm:$0xff] %v237
  %344 = vst [vmem:[%s47 + $0x50] sm:$0xff] %v324
  %345 = vst [vmem:[%s47 + $0x58] sm:$0xff] %v326
  %346 = vst [vmem:[%s47 + $0x60] sm:$0xff] %v241
  %347 = vst [vmem:[%s47 + $0x68] sm:$0xff] %v243
  %348 = vst [vmem:[%s47 + $0x70] sm:$0xff] %v330
  %349 = vst [vmem:[%s47 + $0x78] sm:$0xff] %v332
  %v350 = vld [vmem:[%s3] sm:$0xff]
  %v351 = vld [vmem:[%s3 + $0x8] sm:$0xff]
  %v352 = vld [vmem:[%s3 + $0x10] sm:$0xff]
  %v353 = vld [vmem:[%s3 + $0x18] sm:$0xff]
  %v354 = vadd.f32 %v223, %v225
  %v355 = vadd.f32 %v354, %v312
  %v356 = vadd.f32 %v355, %v314
  %357 = vadd.xlane.f32.xlu0 %v356
  %v358 = vpop.xlane.xlu0 %357
  %v359 = vadd.f32 %v229, %v231
  %v360 = vadd.f32 %v359, %v318
  %v361 = vadd.f32 %v360, %v320
  %362 = vadd.xlane.f32.xlu0 %v361
  %v363 = vpop.xlane.xlu0 %362
  %v364 = vadd.f32 %v235, %v237
  %v365 = vadd.f32 %v364, %v324
  %v366 = vadd.f32 %v365, %v326
  %367 = vadd.xlane.f32.xlu0 %v366
  %v368 = vpop.xlane.xlu0 %367
  %v369 = vadd.f32 %v241, %v243
  %v370 = vadd.f32 %v369, %v330
  %v371 = vadd.f32 %v370, %v332
  %372 = vadd.xlane.f32.xlu0 %v371
  %v373 = vpop.xlane.xlu0 %372
  %v374 = vadd.f32 %v350, %v358
  %v375 = vadd.f32 %v351, %v363
  %v376 = vadd.f32 %v352, %v368
  %v377 = vadd.f32 %v353, %v373
  %vm378 = vcmask 7168
  %379 = vst.msk [vmem:[%s3] sm:$0xff] %vm378, %v374
  %380 = vst.msk [vmem:[%s3 + $0x8] sm:$0xff] %vm378, %v375
  %381 = vst.msk [vmem:[%s3 + $0x10] sm:$0xff] %vm378, %v376
  %382 = vst.msk [vmem:[%s3 + $0x18] sm:$0xff] %vm378, %v377
  %v383 = vld [vmem:[%s4] sm:$0xff]
  %v384 = vld [vmem:[%s4 + $0x8] sm:$0xff]
  %v385 = vld [vmem:[%s4 + $0x10] sm:$0xff]
  %v386 = vld [vmem:[%s4 + $0x18] sm:$0xff]
  %v387 = vmul.f32 %v223, %v223
  %v388 = vmul.f32 %v225, %v225
  %v389 = vmul.f32 %v312, %v312
  %v390 = vmul.f32 %v314, %v314
  %v391 = vmul.f32 %v229, %v229
  %v392 = vmul.f32 %v231, %v231
  %v393 = vmul.f32 %v318, %v318
  %v394 = vmul.f32 %v320, %v320
  %v395 = vmul.f32 %v235, %v235
  %v396 = vmul.f32 %v237, %v237
  %v397 = vmul.f32 %v324, %v324
  %v398 = vmul.f32 %v326, %v326
  %v399 = vmul.f32 %v241, %v241
  %v400 = vmul.f32 %v243, %v243
  %v401 = vmul.f32 %v330, %v330
  %v402 = vmul.f32 %v332, %v332
  %v403 = vadd.f32 %v387, %v388
  %v404 = vadd.f32 %v403, %v389
  %v405 = vadd.f32 %v404, %v390
  %406 = vadd.xlane.f32.xlu0 %v405
  %v407 = vpop.xlane.xlu0 %406
  %v408 = vadd.f32 %v391, %v392
  %v409 = vadd.f32 %v408, %v393
  %v410 = vadd.f32 %v409, %v394
  %411 = vadd.xlane.f32.xlu0 %v410
  %v412 = vpop.xlane.xlu0 %411
  %v413 = vadd.f32 %v395, %v396
  %v414 = vadd.f32 %v413, %v397
  %v415 = vadd.f32 %v414, %v398
  %416 = vadd.xlane.f32.xlu0 %v415
  %v417 = vpop.xlane.xlu0 %416
  %v418 = vadd.f32 %v399, %v400
  %v419 = vadd.f32 %v418, %v401
  %v420 = vadd.f32 %v419, %v402
  %421 = vadd.xlane.f32.xlu0 %v420
  %v422 = vpop.xlane.xlu0 %421
  %v423 = vadd.f32 %v383, %v407
  %v424 = vadd.f32 %v384, %v412
  %v425 = vadd.f32 %v385, %v417
  %v426 = vadd.f32 %v386, %v422
  %427 = vst.msk [vmem:[%s4] sm:$0xff] %vm378, %v423
  %428 = vst.msk [vmem:[%s4 + $0x8] sm:$0xff] %vm378, %v424
  %429 = vst.msk [vmem:[%s4 + $0x10] sm:$0xff] %vm378, %v425
  %430 = vst.msk [vmem:[%s4 + $0x18] sm:$0xff] %vm378, %v426
  %s431 = sadd.s32 0, 0
  %s432 = smul.u32 4, %s431
  %p433 = scmp.lt.s32.totalorder %s432, 3
  %s434 = scalar_select %p433, %s432, 3
  %s435 = smul.addr %s434, 8
  %s436 = scalar_lea.vmem %s2, %s435
  // Predicated region
  $region14: #{decoder_forward.7} parent=0 // pred_check
    _
  $region15: #{decoder_forward.7} parent=0 // pred_check_branch
    %438 = sbr.rel (0) target = $region17
  $region16: #{decoder_forward.7} parent=0 // pred_region
    %s439 = sadd.s32 0, 0
    %s440 = smul.u32 4, %s439
  $region17: #{decoder_forward.7} parent=0 // pred_fallthru
    _
  // Predicated region
  $region18: #{decoder_forward.7} parent=0 // pred_check
    _
  $region19: #{decoder_forward.7} parent=0 // pred_check_branch
    %442 = sbr.rel (0) target = $region21
  $region20: #{decoder_forward.7} parent=0 // pred_region
    _
  $region21: #{decoder_forward.7} parent=0 // pred_fallthru
    _
  // Predicated region
  $region22: #{decoder_forward.7} parent=0 // pred_check
    _
  $region23: #{decoder_forward.7} parent=0 // pred_check_branch
    %444 = sbr.rel (0) target = $region25
  $region24: #{decoder_forward.7} parent=0 // pred_region
    _
  $region25: #{decoder_forward.7} parent=0 // pred_fallthru
    _
  // Predicated region
  $region26: #{decoder_forward.7} parent=0 // pred_check
    _
  $region27: #{decoder_forward.7} parent=0 // pred_check_branch
    %446 = sbr.rel (0) target = $region29
  $region28: #{decoder_forward.7} parent=0 // pred_region
    %s447 = sadd.s32 0, 0
    %s448 = smul.u32 4, %s447
    %p449 = scmp.lt.s32.totalorder %s448, 3
    %s450 = scalar_select %p449, %s448, 3
    %s451 = smul.addr %s450, 8
    %s452 = scalar_lea.vmem %s2, %s451
  $region29: #{decoder_forward.7} parent=0 // pred_fallthru
    _
  // Predicated region
  $region30: #{decoder_forward.7} parent=0 // pred_check
    _
  $region31: #{decoder_forward.7} parent=0 // pred_check_branch
    %454 = sbr.rel (0) target = $region33
  $region32: #{decoder_forward.7} parent=0 // pred_region
    _
  $region33: #{decoder_forward.7} parent=0 // pred_fallthru
    _
  // Predicated region
  $region34: #{decoder_forward.7} parent=0 // pred_check
    _
  $region35: #{decoder_forward.7} parent=0 // pred_check_branch
    %456 = sbr.rel (0) target = $region37
  $region36: #{decoder_forward.7} parent=0 // pred_region
    _
  $region37: #{decoder_forward.7} parent=0 // pred_fallthru
    _

// kernel: tile.78
$region0: #{tile.78}
  #allocation0 [shape = 's32[1]{0}', space=sflag, size = 0x4, scoped, tag = 'scoped memory for tile.78']
  %s0 = inlined_call_operand.vmem [shape: f32[4], index: 0, kind: input, shape index: {}]
  %s1 = inlined_call_operand.vmem [shape: f32[4,4], index: 1, kind: output, shape index: {}]
  // Predicated region
  $region2: #{tile.78} parent=0 // pred_check
    _
  $region3: #{tile.78} parent=0 // pred_check_branch
    %3 = sbr.rel (0) target = $region5
  $region4: #{tile.78} parent=0 // pred_region
    _
  $region5: #{tile.78} parent=0 // pred_fallthru
    _
  %v4 = vld [vmem:[%s0] ss:$0 sm:$0xff]
  %5 = vst [vmem:[%s1] sm:$0xf] %v4

// kernel: decoder_forward.8
$region0: #{decoder_forward.8}
  #allocation0 [shape = 'u32[]', space=smem, size = 0x4, offset = 0x4, fixed_abs, tag = 'smem constant byte address 0x4 - core index']
  #allocation1 [shape = 'u32[144,128]{1,0:T(1,128)}', space=vmem, size = 0x12000, scoped, tag = 'internal scratch']
  %s0 = inlined_call_operand.vmem [shape: f32[72,2048], index: 0, kind: input, shape index: {}]
  %s1 = inlined_call_operand.vmem [shape: f32[16,72], index: 1, kind: input, shape index: {}]
  %s2 = inlined_call_operand.vmem [shape: f32[16,2048], index: 2, kind: output, shape index: {0}]
  %s3 = inlined_call_operand.vmem [shape: f32[1,16,1], index: 3, kind: output, shape index: {1}]
  %s4 = inlined_call_operand.vmem [shape: f32[1,16,1], index: 4, kind: output, shape index: {2}]
  %5 = xla_tuple %s2, %s3, %s4
  %s6 = sld [smem:[#allocation0]]
  $region38: #{decoder_forward.8} parent=0
    _
  %s8 = ssub.s32 1, %s6
  %s9 = scalar_select 0, %s8, %s6
  // Predicated region
  $region2: #{decoder_forward.8} parent=0 // pred_check
    _
  $region3: #{decoder_forward.8} parent=0 // pred_check_branch
    %11 = sbr.rel (0) target = $region5
  $region4: #{decoder_forward.8} parent=0 // pred_region
    %s12 = sadd.s32 0, 0
    %s13 = smul.u32 16, %s12
    %p14 = scmp.lt.s32.totalorder %s13, 15
    %s15 = scalar_select %p14, %s13, 15
    %s16 = smul.addr %s15, 8
    %s17 = scalar_lea.vmem %s0, %s16
    %s18 = sadd.s32 0, 0
    %s19 = smul.u32 16, %s18
  $region5: #{decoder_forward.8} parent=0 // pred_fallthru
    _
  // Predicated region
  $region6: #{decoder_forward.8} parent=0 // pred_check
    _
  $region7: #{decoder_forward.8} parent=0 // pred_check_branch
    %21 = sbr.rel (0) target = $region9
  $region8: #{decoder_forward.8} parent=0 // pred_region
    _
  $region9: #{decoder_forward.8} parent=0 // pred_fallthru
    _
  %s22 = sadd.s32 0, 0
  %s23 = smul.u32 16, %s22
  %p24 = scmp.lt.s32.totalorder %s23, 15
  %s25 = scalar_select %p24, %s23, 15
  %s26 = smul.addr %s25, 8
  %s27 = scalar_lea.vmem %s0, %s26
  %s28 = sadd.s32 0, 0
  %s29 = smul.u32 16, %s28
  %p30 = scmp.lt.s32.totalorder %s29, 15
  %s31 = scalar_select %p30, %s29, 15
  %s32 = smul.addr %s31, 8
  %s33 = scalar_lea.vmem %s2, %s32
  %s34 = sadd.s32 0, 0
  %s35 = smul.u32 16, %s34
  %p36 = scmp.lt.s32.totalorder %s35, 15
  %s37 = scalar_select %p36, %s35, 15
  %s38 = smul.addr %s37, 8
  %s39 = scalar_lea.vmem %s0, %s38
  %s40 = sadd.s32 0, 0
  %s41 = smul.u32 16, %s40
  %s42 = sadd.s32 0, 0
  %s43 = smul.u32 16, %s42
  %p44 = scmp.lt.s32.totalorder %s43, 15
  %s45 = scalar_select %p44, %s43, 15
  %s46 = smul.addr %s45, 8
  %s47 = scalar_lea.vmem %s2, %s46
  %s48 = sadd.s32 0, 0
  %s49 = smul.u32 16, %s48
  %p50 = scmp.eq.s32.totalorder 0, 0
  // Predicated region
  $region10: #{decoder_forward.8} parent=0 // pred_check
    %p51 = pneg %p50
  $region11: #{decoder_forward.8} parent=0 // pred_check_branch
    %53 = sbr.rel (%p51) target = $region13
  $region12: #{decoder_forward.8} parent=0 // pred_region
    %vm54 = vcmask 7168
    %55 = vst.msk [vmem:[%s3] sm:$0xff] %vm54, 0.0
    %56 = vst.msk [vmem:[%s3 + $0x8] sm:$0xff] %vm54, 0.0
    %57 = vst.msk [vmem:[%s4] sm:$0xff] %vm54, 0.0
    %58 = vst.msk [vmem:[%s4 + $0x8] sm:$0xff] %vm54, 0.0
  $region13: #{decoder_forward.8} parent=0 // pred_fallthru
    _
  %v59 = vld [vmem:[%s1] sm:$0xff]
  %v60 = vld [vmem:[%s1 + $0x8] sm:$0xff]
  %v61 = vld [vmem:[%s39] sm:$0xff]
  %v62 = vld [vmem:[%s39 + $0x8] sm:$0xff]
  %v63 = vld [vmem:[%s39 + $0x10] sm:$0xff]
  %v64 = vld [vmem:[%s39 + $0x18] sm:$0xff]
  %v65 = vld [vmem:[%s39 + $0x20] sm:$0xff]
  %v66 = vld [vmem:[%s39 + $0x28] sm:$0xff]
  %v67 = vld [vmem:[%s39 + $0x30] sm:$0xff]
  %v68 = vld [vmem:[%s39 + $0x38] sm:$0xff]
  %v69 = vld [vmem:[%s39 + $0x40] sm:$0xff]
  %v70 = vld [vmem:[%s39 + $0x48] sm:$0xff]
  %v71 = vld [vmem:[%s39 + $0x50] sm:$0xff]
  %v72 = vld [vmem:[%s39 + $0x58] sm:$0xff]
  %v73 = vld [vmem:[%s39 + $0x60] sm:$0xff]
  %v74 = vld [vmem:[%s39 + $0x68] sm:$0xff]
  %v75 = vld [vmem:[%s39 + $0x70] sm:$0xff]
  %v76 = vld [vmem:[%s39 + $0x78] sm:$0xff]
  %v77 = vld [vmem:[%s39 + $0x80] sm:$0xff]
  %v78 = vld [vmem:[%s39 + $0x88] sm:$0xff]
  %v79 = vld [vmem:[%s39 + $0x90] sm:$0xff]
  %v80 = vld [vmem:[%s39 + $0x98] sm:$0xff]
  %v81 = vld [vmem:[%s39 + $0xa0] sm:$0xff]
  %v82 = vld [vmem:[%s39 + $0xa8] sm:$0xff]
  %v83 = vld [vmem:[%s39 + $0xb0] sm:$0xff]
  %v84 = vld [vmem:[%s39 + $0xb8] sm:$0xff]
  %v85 = vld [vmem:[%s39 + $0xc0] sm:$0xff]
  %v86 = vld [vmem:[%s39 + $0xc8] sm:$0xff]
  %v87 = vld [vmem:[%s39 + $0xd0] sm:$0xff]
  %v88 = vld [vmem:[%s39 + $0xd8] sm:$0xff]
  %v89 = vld [vmem:[%s39 + $0xe0] sm:$0xff]
  %v90 = vld [vmem:[%s39 + $0xe8] sm:$0xff]
  %v91 = vld [vmem:[%s39 + $0xf0] sm:$0xff]
  %v92 = vld [vmem:[%s39 + $0xf8] sm:$0xff]
  %v93 = vld [vmem:[%s39 + $0x100] sm:$0xff]
  %v94 = vld [vmem:[%s39 + $0x108] sm:$0xff]
  %v95 = vld [vmem:[%s39 + $0x110] sm:$0xff]
  %v96 = vld [vmem:[%s39 + $0x118] sm:$0xff]
  %v97 = vld [vmem:[%s39 + $0x120] sm:$0xff]
  %v98 = vld [vmem:[%s39 + $0x128] sm:$0xff]
  %v99 = vld [vmem:[%s39 + $0x130] sm:$0xff]
  %v100 = vld [vmem:[%s39 + $0x138] sm:$0xff]
  %v101 = vld [vmem:[%s39 + $0x140] sm:$0xff]
  %v102 = vld [vmem:[%s39 + $0x148] sm:$0xff]
  %v103 = vld [vmem:[%s39 + $0x150] sm:$0xff]
  %v104 = vld [vmem:[%s39 + $0x158] sm:$0xff]
  %v105 = vld [vmem:[%s39 + $0x160] sm:$0xff]
  %v106 = vld [vmem:[%s39 + $0x168] sm:$0xff]
  %v107 = vld [vmem:[%s39 + $0x170] sm:$0xff]
  %v108 = vld [vmem:[%s39 + $0x178] sm:$0xff]
  %v109 = vld [vmem:[%s39 + $0x180] sm:$0xff]
  %v110 = vld [vmem:[%s39 + $0x188] sm:$0xff]
  %v111 = vld [vmem:[%s39 + $0x190] sm:$0xff]
  %v112 = vld [vmem:[%s39 + $0x198] sm:$0xff]
  %v113 = vld [vmem:[%s39 + $0x1a0] sm:$0xff]
  %v114 = vld [vmem:[%s39 + $0x1a8] sm:$0xff]
  %v115 = vld [vmem:[%s39 + $0x1b0] sm:$0xff]
  %v116 = vld [vmem:[%s39 + $0x1b8] sm:$0xff]
  %v117 = vld [vmem:[%s39 + $0x1c0] sm:$0xff]
  %v118 = vld [vmem:[%s39 + $0x1c8] sm:$0xff]
  %v119 = vld [vmem:[%s39 + $0x1d0] sm:$0xff]
  %v120 = vld [vmem:[%s39 + $0x1d8] sm:$0xff]
  %v121 = vld [vmem:[%s39 + $0x1e0] sm:$0xff]
  %v122 = vld [vmem:[%s39 + $0x1e8] sm:$0xff]
  %v123 = vld [vmem:[%s39 + $0x1f0] sm:$0xff]
  %v124 = vld [vmem:[%s39 + $0x1f8] sm:$0xff]
  %v125 = vld [vmem:[%s39 + $0x200] sm:$0xff]
  %v126 = vld [vmem:[%s39 + $0x208] sm:$0xff]
  %v127 = vld [vmem:[%s39 + $0x210] sm:$0xff]
  %v128 = vld [vmem:[%s39 + $0x218] sm:$0xff]
  %v129 = vld [vmem:[%s39 + $0x220] sm:$0xff]
  %v130 = vld [vmem:[%s39 + $0x228] sm:$0xff]
  %v131 = vld [vmem:[%s39 + $0x230] sm:$0xff]
  %v132 = vld [vmem:[%s39 + $0x238] sm:$0xff]
  %v133 = vld [vmem:[%s39 + $0x240] sm:$0xff]
  %v134 = vld [vmem:[%s39 + $0x248] sm:$0xff]
  %v135 = vld [vmem:[%s39 + $0x250] sm:$0xff]
  %v136 = vld [vmem:[%s39 + $0x258] sm:$0xff]
  %v137 = vld [vmem:[%s39 + $0x260] sm:$0xff]
  %v138 = vld [vmem:[%s39 + $0x268] sm:$0xff]
  %v139 = vld [vmem:[%s39 + $0x270] sm:$0xff]
  %v140 = vld [vmem:[%s39 + $0x278] sm:$0xff]
  %v141 = vld [vmem:[%s39 + $0x280] sm:$0xff]
  %v142 = vld [vmem:[%s39 + $0x288] sm:$0xff]
  %v143 = vld [vmem:[%s39 + $0x290] sm:$0xff]
  %v144 = vld [vmem:[%s39 + $0x298] sm:$0xff]
  %v145 = vld [vmem:[%s39 + $0x2a0] sm:$0xff]
  %v146 = vld [vmem:[%s39 + $0x2a8] sm:$0xff]
  %v147 = vld [vmem:[%s39 + $0x2b0] sm:$0xff]
  %v148 = vld [vmem:[%s39 + $0x2b8] sm:$0xff]
  %v149 = vld [vmem:[%s39 + $0x2c0] sm:$0xff]
  %v150 = vld [vmem:[%s39 + $0x2c8] sm:$0xff]
  %v151 = vld [vmem:[%s39 + $0x2d0] sm:$0xff]
  %v152 = vld [vmem:[%s39 + $0x2d8] sm:$0xff]
  %v153 = vld [vmem:[%s39 + $0x2e0] sm:$0xff]
  %v154 = vld [vmem:[%s39 + $0x2e8] sm:$0xff]
  %v155 = vld [vmem:[%s39 + $0x2f0] sm:$0xff]
  %v156 = vld [vmem:[%s39 + $0x2f8] sm:$0xff]
  %v157 = vld [vmem:[%s39 + $0x300] sm:$0xff]
  %v158 = vld [vmem:[%s39 + $0x308] sm:$0xff]
  %v159 = vld [vmem:[%s39 + $0x310] sm:$0xff]
  %v160 = vld [vmem:[%s39 + $0x318] sm:$0xff]
  %v161 = vld [vmem:[%s39 + $0x320] sm:$0xff]
  %v162 = vld [vmem:[%s39 + $0x328] sm:$0xff]
  %v163 = vld [vmem:[%s39 + $0x330] sm:$0xff]
  %v164 = vld [vmem:[%s39 + $0x338] sm:$0xff]
  %v165 = vld [vmem:[%s39 + $0x340] sm:$0xff]
  %v166 = vld [vmem:[%s39 + $0x348] sm:$0xff]
  %v167 = vld [vmem:[%s39 + $0x350] sm:$0xff]
  %v168 = vld [vmem:[%s39 + $0x358] sm:$0xff]
  %v169 = vld [vmem:[%s39 + $0x360] sm:$0xff]
  %v170 = vld [vmem:[%s39 + $0x368] sm:$0xff]
  %v171 = vld [vmem:[%s39 + $0x370] sm:$0xff]
  %v172 = vld [vmem:[%s39 + $0x378] sm:$0xff]
  %v173 = vld [vmem:[%s39 + $0x380] sm:$0xff]
  %v174 = vld [vmem:[%s39 + $0x388] sm:$0xff]
  %v175 = vld [vmem:[%s39 + $0x390] sm:$0xff]
  %v176 = vld [vmem:[%s39 + $0x398] sm:$0xff]
  %v177 = vld [vmem:[%s39 + $0x3a0] sm:$0xff]
  %v178 = vld [vmem:[%s39 + $0x3a8] sm:$0xff]
  %v179 = vld [vmem:[%s39 + $0x3b0] sm:$0xff]
  %v180 = vld [vmem:[%s39 + $0x3b8] sm:$0xff]
  %v181 = vld [vmem:[%s39 + $0x3c0] sm:$0xff]
  %v182 = vld [vmem:[%s39 + $0x3c8] sm:$0xff]
  %v183 = vld [vmem:[%s39 + $0x3d0] sm:$0xff]
  %v184 = vld [vmem:[%s39 + $0x3d8] sm:$0xff]
  %v185 = vld [vmem:[%s39 + $0x3e0] sm:$0xff]
  %v186 = vld [vmem:[%s39 + $0x3e8] sm:$0xff]
  %v187 = vld [vmem:[%s39 + $0x3f0] sm:$0xff]
  %v188 = vld [vmem:[%s39 + $0x3f8] sm:$0xff]
  %v189 = vld [vmem:[%s39 + $0x400] sm:$0xff]
  %v190 = vld [vmem:[%s39 + $0x408] sm:$0xff]
  %v191 = vld [vmem:[%s39 + $0x410] sm:$0xff]
  %v192 = vld [vmem:[%s39 + $0x418] sm:$0xff]
  %v193 = vld [vmem:[%s39 + $0x420] sm:$0xff]
  %v194 = vld [vmem:[%s39 + $0x428] sm:$0xff]
  %v195 = vld [vmem:[%s39 + $0x430] sm:$0xff]
  %v196 = vld [vmem:[%s39 + $0x438] sm:$0xff]
  %v197 = vld [vmem:[%s39 + $0x440] sm:$0xff]
  %v198 = vld [vmem:[%s39 + $0x448] sm:$0xff]
  %v199 = vld [vmem:[%s39 + $0x450] sm:$0xff]
  %v200 = vld [vmem:[%s39 + $0x458] sm:$0xff]
  %v201 = vld [vmem:[%s39 + $0x460] sm:$0xff]
  %v202 = vld [vmem:[%s39 + $0x468] sm:$0xff]
  %v203 = vld [vmem:[%s39 + $0x470] sm:$0xff]
  %v204 = vld [vmem:[%s39 + $0x478] sm:$0xff]
  %vm205 = vcmask 588800
  %v207 = vsel %vm205, %v59, 0
  %v210 = vsel %vm205, %v60, 0
  %212 = vmatprep.subr.mxu0 0.0
  %213 = vmatpush1.msra.mxu0 0.0
  %214 = vmatprep.subr.mxu0 0.0
  %215 = vmatpush1.msra.mxu0 0.0
  %216 = vmatprep.subr.mxu0 0.0
  %217 = vmatpush1.msra.mxu0 0.0
  %218 = vmatprep.subr.mxu0 0.0
  %219 = vmatpush1.msra.mxu0 0.0
  %220 = vmatprep.subr.mxu0 0.0
  %221 = vmatpush1.msra.mxu0 0.0
  %222 = vmatprep.subr.mxu0 0.0
  %223 = vmatpush1.msra.mxu0 0.0
  %224 = vmatprep.subr.mxu0 0.0
  %225 = vmatpush1.msra.mxu0 0.0
  %226 = vmatprep.subr.mxu0 %v190
  %227 = vmatpush1.msra.mxu0 %v189
  %228 = vmatprep.subr.mxu0 %v174
  %229 = vmatpush1.msra.mxu0 %v173
  %230 = vmatprep.subr.mxu0 %v158
  %231 = vmatpush1.msra.mxu0 %v157
  %232 = vmatprep.subr.mxu0 %v142
  %233 = vmatpush1.msra.mxu0 %v141
  %234 = vmatprep.subr.mxu0 %v126
  %235 = vmatpush1.msra.mxu0 %v125
  %236 = vmatprep.subr.mxu0 %v110
  %237 = vmatpush1.msra.mxu0 %v109
  %238 = vmatprep.subr.mxu0 %v94
  %239 = vmatpush1.msra.mxu0 %v93
  %240 = vmatprep.subr.mxu0 %v78
  %241 = vmatpush1.msra.mxu0 %v77
  %242 = vmatprep.subr.mxu0 %v62
  %243 = vmatpush1.msra.mxu0 %v61
  %244 = vmatprep.subr.mxu0 0.0
  %245 = vmatpush2.msra.mxu0 0.0
  %246 = vmatprep.subr.mxu0 0.0
  %247 = vmatpush2.msra.mxu0 0.0
  %248 = vmatprep.subr.mxu0 0.0
  %249 = vmatpush2.msra.mxu0 0.0
  %250 = vmatprep.subr.mxu0 0.0
  %251 = vmatpush2.msra.mxu0 0.0
  %252 = vmatprep.subr.mxu0 0.0
  %253 = vmatpush2.msra.mxu0 0.0
  %254 = vmatprep.subr.mxu0 0.0
  %255 = vmatpush2.msra.mxu0 0.0
  %256 = vmatprep.subr.mxu0 0.0
  %257 = vmatpush2.msra.mxu0 0.0
  %258 = vmatprep.subr.mxu0 0.0
  %259 = vmatpush2.msra.mxu0 0.0
  %260 = vmatprep.subr.mxu0 0.0
  %261 = vmatpush2.msra.mxu0 0.0
  %262 = vmatprep.subr.mxu0 0.0
  %263 = vmatpush2.msra.mxu0 0.0
  %264 = vmatprep.subr.mxu0 0.0
  %265 = vmatpush2.msra.mxu0 0.0
  %266 = vmatprep.subr.mxu0 0.0
  %267 = vmatpush2.msra.mxu0 0.0
  %268 = vmatprep.subr.mxu0 0.0
  %269 = vmatpush2.msra.mxu0 0.0
  %270 = vmatprep.subr.mxu0 0.0
  %271 = vmatpush2.msra.mxu0 0.0
  %272 = vmatprep.subr.mxu0 0.0
  %273 = vmatpush2.msra.mxu0 0.0
  %274 = vmatprep.subr.mxu0 0.0
  %275 = vmatpush2.msra.mxu0 0.0
  %276 = vmatprep.mubr.f32.mxu0 0.0
  %277 = vmatmul.mubr.f32.gmra.mxu0 %v207
  %v278 = vpop.f32.mrf.mxu0
  %v279 = vadd.f32 0.0, %v278
  %v280 = vpop.f32.mrf.mxu0
  %v281 = vadd.f32 0.0, %v280
  %282 = vmatprep.mubr.f32.mxu0 0.0
  %283 = vmatmul.mubr.f32.gmra.mxu0 %v210
  %v284 = vpop.f32.mrf.mxu0
  %v285 = vadd.f32 0.0, %v284
  %v286 = vpop.f32.mrf.mxu0
  %v287 = vadd.f32 0.0, %v286
  %288 = vdwg.mxu0
  %289 = vmatprep.subr.mxu0 0.0
  %290 = vmatpush1.msra.mxu0 0.0
  %291 = vmatprep.subr.mxu0 0.0
  %292 = vmatpush1.msra.mxu0 0.0
  %293 = vmatprep.subr.mxu0 0.0
  %294 = vmatpush1.msra.mxu0 0.0
  %295 = vmatprep.subr.mxu0 0.0
  %296 = vmatpush1.msra.mxu0 0.0
  %297 = vmatprep.subr.mxu0 0.0
  %298 = vmatpush1.msra.mxu0 0.0
  %299 = vmatprep.subr.mxu0 0.0
  %300 = vmatpush1.msra.mxu0 0.0
  %301 = vmatprep.subr.mxu0 0.0
  %302 = vmatpush1.msra.mxu0 0.0
  %303 = vmatprep.subr.mxu0 %v192
  %304 = vmatpush1.msra.mxu0 %v191
  %305 = vmatprep.subr.mxu0 %v176
  %306 = vmatpush1.msra.mxu0 %v175
  %307 = vmatprep.subr.mxu0 %v160
  %308 = vmatpush1.msra.mxu0 %v159
  %309 = vmatprep.subr.mxu0 %v144
  %310 = vmatpush1.msra.mxu0 %v143
  %311 = vmatprep.subr.mxu0 %v128
  %312 = vmatpush1.msra.mxu0 %v127
  %313 = vmatprep.subr.mxu0 %v112
  %314 = vmatpush1.msra.mxu0 %v111
  %315 = vmatprep.subr.mxu0 %v96
  %316 = vmatpush1.msra.mxu0 %v95
  %317 = vmatprep.subr.mxu0 %v80
  %318 = vmatpush1.msra.mxu0 %v79
  %319 = vmatprep.subr.mxu0 %v64
  %320 = vmatpush1.msra.mxu0 %v63
  %321 = vmatprep.subr.mxu0 0.0
  %322 = vmatpush2.msra.mxu0 0.0
  %323 = vmatprep.subr.mxu0 0.0
  %324 = vmatpush2.msra.mxu0 0.0
  %325 = vmatprep.subr.mxu0 0.0
  %326 = vmatpush2.msra.mxu0 0.0
  %327 = vmatprep.subr.mxu0 0.0
  %328 = vmatpush2.msra.mxu0 0.0
  %329 = vmatprep.subr.mxu0 0.0
  %330 = vmatpush2.msra.mxu0 0.0
  %331 = vmatprep.subr.mxu0 0.0
  %332 = vmatpush2.msra.mxu0 0.0
  %333 = vmatprep.subr.mxu0 0.0
  %334 = vmatpush2.msra.mxu0 0.0
  %335 = vmatprep.subr.mxu0 0.0
  %336 = vmatpush2.msra.mxu0 0.0
  %337 = vmatprep.subr.mxu0 0.0
  %338 = vmatpush2.msra.mxu0 0.0
  %339 = vmatprep.subr.mxu0 0.0
  %340 = vmatpush2.msra.mxu0 0.0
  %341 = vmatprep.subr.mxu0 0.0
  %342 = vmatpush2.msra.mxu0 0.0
  %343 = vmatprep.subr.mxu0 0.0
  %344 = vmatpush2.msra.mxu0 0.0
  %345 = vmatprep.subr.mxu0 0.0
  %346 = vmatpush2.msra.mxu0 0.0
  %347 = vmatprep.subr.mxu0 0.0
  %348 = vmatpush2.msra.mxu0 0.0
  %349 = vmatprep.subr.mxu0 0.0
  %350 = vmatpush2.msra.mxu0 0.0
  %351 = vmatprep.subr.mxu0 0.0
  %352 = vmatpush2.msra.mxu0 0.0
  %353 = vmatprep.mubr.f32.mxu0 0.0
  %354 = vmatmul.mubr.f32.gmra.mxu0 %v207
  %v355 = vpop.f32.mrf.mxu0
  %v356 = vadd.f32 0.0, %v355
  %v357 = vpop.f32.mrf.mxu0
  %v358 = vadd.f32 0.0, %v357
  %359 = vmatprep.mubr.f32.mxu0 0.0
  %360 = vmatmul.mubr.f32.gmra.mxu0 %v210
  %v361 = vpop.f32.mrf.mxu0
  %v362 = vadd.f32 0.0, %v361
  %v363 = vpop.f32.mrf.mxu0
  %v364 = vadd.f32 0.0, %v363
  %365 = vdwg.mxu0
  %366 = vmatprep.subr.mxu0 0.0
  %367 = vmatpush1.msra.mxu0 0.0
  %368 = vmatprep.subr.mxu0 0.0
  %369 = vmatpush1.msra.mxu0 0.0
  %370 = vmatprep.subr.mxu0 0.0
  %371 = vmatpush1.msra.mxu0 0.0
  %372 = vmatprep.subr.mxu0 0.0
  %373 = vmatpush1.msra.mxu0 0.0
  %374 = vmatprep.subr.mxu0 0.0
  %375 = vmatpush1.msra.mxu0 0.0
  %376 = vmatprep.subr.mxu0 0.0
  %377 = vmatpush1.msra.mxu0 0.0
  %378 = vmatprep.subr.mxu0 0.0
  %379 = vmatpush1.msra.mxu0 0.0
  %380 = vmatprep.subr.mxu0 %v194
  %381 = vmatpush1.msra.mxu0 %v193
  %382 = vmatprep.subr.mxu0 %v178
  %383 = vmatpush1.msra.mxu0 %v177
  %384 = vmatprep.subr.mxu0 %v162
  %385 = vmatpush1.msra.mxu0 %v161
  %386 = vmatprep.subr.mxu0 %v146
  %387 = vmatpush1.msra.mxu0 %v145
  %388 = vmatprep.subr.mxu0 %v130
  %389 = vmatpush1.msra.mxu0 %v129
  %390 = vmatprep.subr.mxu0 %v114
  %391 = vmatpush1.msra.mxu0 %v113
  %392 = vmatprep.subr.mxu0 %v98
  %393 = vmatpush1.msra.mxu0 %v97
  %394 = vmatprep.subr.mxu0 %v82
  %395 = vmatpush1.msra.mxu0 %v81
  %396 = vmatprep.subr.mxu0 %v66
  %397 = vmatpush1.msra.mxu0 %v65
  %398 = vmatprep.subr.mxu0 0.0
  %399 = vmatpush2.msra.mxu0 0.0
  %400 = vmatprep.subr.mxu0 0.0
  %401 = vmatpush2.msra.mxu0 0.0
  %402 = vmatprep.subr.mxu0 0.0
  %403 = vmatpush2.msra.mxu0 0.0
  %404 = vmatprep.subr.mxu0 0.0
  %405 = vmatpush2.msra.mxu0 0.0
  %406 = vmatprep.subr.mxu0 0.0
  %407 = vmatpush2.msra.mxu0 0.0
  %408 = vmatprep.subr.mxu0 0.0
  %409 = vmatpush2.msra.mxu0 0.0
  %410 = vmatprep.subr.mxu0 0.0
  %411 = vmatpush2.msra.mxu0 0.0
  %412 = vmatprep.subr.mxu0 0.0
  %413 = vmatpush2.msra.mxu0 0.0
  %414 = vmatprep.subr.mxu0 0.0
  %415 = vmatpush2.msra.mxu0 0.0
  %416 = vmatprep.subr.mxu0 0.0
  %417 = vmatpush2.msra.mxu0 0.0
  %418 = vmatprep.subr.mxu0 0.0
  %419 = vmatpush2.msra.mxu0 0.0
  %420 = vmatprep.subr.mxu0 0.0
  %421 = vmatpush2.msra.mxu0 0.0
  %422 = vmatprep.subr.mxu0 0.0
  %423 = vmatpush2.msra.mxu0 0.0
  %424 = vmatprep.subr.mxu0 0.0
  %425 = vmatpush2.msra.mxu0 0.0
  %426 = vmatprep.subr.mxu0 0.0
  %427 = vmatpush2.msra.mxu0 0.0
  %428 = vmatprep.subr.mxu0 0.0
  %429 = vmatpush2.msra.mxu0 0.0
  %430 = vmatprep.mubr.f32.mxu0 0.0
  %431 = vmatmul.mubr.f32.gmra.mxu0 %v207
  %v432 = vpop.f32.mrf.mxu0
  %v433 = vadd.f32 0.0, %v432
  %v434 = vpop.f32.mrf.mxu0
  %v435 = vadd.f32 0.0, %v434
  %436 = vmatprep.mubr.f32.mxu0 0.0
  %437 = vmatmul.mubr.f32.gmra.mxu0 %v210
  %v438 = vpop.f32.mrf.mxu0
  %v439 = vadd.f32 0.0, %v438
  %v440 = vpop.f32.mrf.mxu0
  %v441 = vadd.f32 0.0, %v440
  %442 = vdwg.mxu0
  %443 = vmatprep.subr.mxu0 0.0
  %444 = vmatpush1.msra.mxu0 0.0
  %445 = vmatprep.subr.mxu0 0.0
  %446 = vmatpush1.msra.mxu0 0.0
  %447 = vmatprep.subr.mxu0 0.0
  %448 = vmatpush1.msra.mxu0 0.0
  %449 = vmatprep.subr.mxu0 0.0
  %450 = vmatpush1.msra.mxu0 0.0
  %451 = vmatprep.subr.mxu0 0.0
  %452 = vmatpush1.msra.mxu0 0.0
  %453 = vmatprep.subr.mxu0 0.0
  %454 = vmatpush1.msra.mxu0 0.0
  %455 = vmatprep.subr.mxu0 0.0
  %456 = vmatpush1.msra.mxu0 0.0
  %457 = vmatprep.subr.mxu0 %v196
  %458 = vmatpush1.msra.mxu0 %v195
  %459 = vmatprep.subr.mxu0 %v180
  %460 = vmatpush1.msra.mxu0 %v179
  %461 = vmatprep.subr.mxu0 %v164
  %462 = vmatpush1.msra.mxu0 %v163
  %463 = vmatprep.subr.mxu0 %v148
  %464 = vmatpush1.msra.mxu0 %v147
  %465 = vmatprep.subr.mxu0 %v132
  %466 = vmatpush1.msra.mxu0 %v131
  %467 = vmatprep.subr.mxu0 %v116
  %468 = vmatpush1.msra.mxu0 %v115
  %469 = vmatprep.subr.mxu0 %v100
  %470 = vmatpush1.msra.mxu0 %v99
  %471 = vmatprep.subr.mxu0 %v84
  %472 = vmatpush1.msra.mxu0 %v83
  %473 = vmatprep.subr.mxu0 %v68
  %474 = vmatpush1.msra.mxu0 %v67
  %475 = vmatprep.subr.mxu0 0.0
  %476 = vmatpush2.msra.mxu0 0.0
  %477 = vmatprep.subr.mxu0 0.0
  %478 = vmatpush2.msra.mxu0 0.0
  %479 = vmatprep.subr.mxu0 0.0
  %480 = vmatpush2.msra.mxu0 0.0
  %481 = vmatprep.subr.mxu0 0.0
  %482 = vmatpush2.msra.mxu0 0.0
  %483 = vmatprep.subr.mxu0 0.0
  %484 = vmatpush2.msra.mxu0 0.0
  %485 = vmatprep.subr.mxu0 0.0
  %486 = vmatpush2.msra.mxu0 0.0
  %487 = vmatprep.subr.mxu0 0.0
  %488 = vmatpush2.msra.mxu0 0.0
  %489 = vmatprep.subr.mxu0 0.0
  %490 = vmatpush2.msra.mxu0 0.0
  %491 = vmatprep.subr.mxu0 0.0
  %492 = vmatpush2.msra.mxu0 0.0
  %493 = vmatprep.subr.mxu0 0.0
  %494 = vmatpush2.msra.mxu0 0.0
  %495 = vmatprep.subr.mxu0 0.0
  %496 = vmatpush2.msra.mxu0 0.0
  %497 = vmatprep.subr.mxu0 0.0
  %498 = vmatpush2.msra.mxu0 0.0
  %499 = vmatprep.subr.mxu0 0.0
  %500 = vmatpush2.msra.mxu0 0.0
  %501 = vmatprep.subr.mxu0 0.0
  %502 = vmatpush2.msra.mxu0 0.0
  %503 = vmatprep.subr.mxu0 0.0
  %504 = vmatpush2.msra.mxu0 0.0
  %505 = vmatprep.subr.mxu0 0.0
  %506 = vmatpush2.msra.mxu0 0.0
  %507 = vmatprep.mubr.f32.mxu0 0.0
  %508 = vmatmul.mubr.f32.gmra.mxu0 %v207
  %v509 = vpop.f32.mrf.mxu0
  %v510 = vadd.f32 0.0, %v509
  %v511 = vpop.f32.mrf.mxu0
  %v512 = vadd.f32 0.0, %v511
  %513 = vmatprep.mubr.f32.mxu0 0.0
  %514 = vmatmul.mubr.f32.gmra.mxu0 %v210
  %v515 = vpop.f32.mrf.mxu0
  %v516 = vadd.f32 0.0, %v515
  %v517 = vpop.f32.mrf.mxu0
  %v518 = vadd.f32 0.0, %v517
  %519 = vdwg.mxu0
  %520 = vmatprep.subr.mxu0 0.0
  %521 = vmatpush1.msra.mxu0 0.0
  %522 = vmatprep.subr.mxu0 0.0
  %523 = vmatpush1.msra.mxu0 0.0
  %524 = vmatprep.subr.mxu0 0.0
  %525 = vmatpush1.msra.mxu0 0.0
  %526 = vmatprep.subr.mxu0 0.0
  %527 = vmatpush1.msra.mxu0 0.0
  %528 = vmatprep.subr.mxu0 0.0
  %529 = vmatpush1.msra.mxu0 0.0
  %530 = vmatprep.subr.mxu0 0.0
  %531 = vmatpush1.msra.mxu0 0.0
  %532 = vmatprep.subr.mxu0 0.0
  %533 = vmatpush1.msra.mxu0 0.0
  %534 = vmatprep.subr.mxu0 %v198
  %535 = vmatpush1.msra.mxu0 %v197
  %536 = vmatprep.subr.mxu0 %v182
  %537 = vmatpush1.msra.mxu0 %v181
  %538 = vmatprep.subr.mxu0 %v166
  %539 = vmatpush1.msra.mxu0 %v165
  %540 = vmatprep.subr.mxu0 %v150
  %541 = vmatpush1.msra.mxu0 %v149
  %542 = vmatprep.subr.mxu0 %v134
  %543 = vmatpush1.msra.mxu0 %v133
  %544 = vmatprep.subr.mxu0 %v118
  %545 = vmatpush1.msra.mxu0 %v117
  %546 = vmatprep.subr.mxu0 %v102
  %547 = vmatpush1.msra.mxu0 %v101
  %548 = vmatprep.subr.mxu0 %v86
  %549 = vmatpush1.msra.mxu0 %v85
  %550 = vmatprep.subr.mxu0 %v70
  %551 = vmatpush1.msra.mxu0 %v69
  %552 = vmatprep.subr.mxu0 0.0
  %553 = vmatpush2.msra.mxu0 0.0
  %554 = vmatprep.subr.mxu0 0.0
  %555 = vmatpush2.msra.mxu0 0.0
  %556 = vmatprep.subr.mxu0 0.0
  %557 = vmatpush2.msra.mxu0 0.0
  %558 = vmatprep.subr.mxu0 0.0
  %559 = vmatpush2.msra.mxu0 0.0
  %560 = vmatprep.subr.mxu0 0.0
  %561 = vmatpush2.msra.mxu0 0.0
  %562 = vmatprep.subr.mxu0 0.0
  %563 = vmatpush2.msra.mxu0 0.0
  %564 = vmatprep.subr.mxu0 0.0
  %565 = vmatpush2.msra.mxu0 0.0
  %566 = vmatprep.subr.mxu0 0.0
  %567 = vmatpush2.msra.mxu0 0.0
  %568 = vmatprep.subr.mxu0 0.0
  %569 = vmatpush2.msra.mxu0 0.0
  %570 = vmatprep.subr.mxu0 0.0
  %571 = vmatpush2.msra.mxu0 0.0
  %572 = vmatprep.subr.mxu0 0.0
  %573 = vmatpush2.msra.mxu0 0.0
  %574 = vmatprep.subr.mxu0 0.0
  %575 = vmatpush2.msra.mxu0 0.0
  %576 = vmatprep.subr.mxu0 0.0
  %577 = vmatpush2.msra.mxu0 0.0
  %578 = vmatprep.subr.mxu0 0.0
  %579 = vmatpush2.msra.mxu0 0.0
  %580 = vmatprep.subr.mxu0 0.0
  %581 = vmatpush2.msra.mxu0 0.0
  %582 = vmatprep.subr.mxu0 0.0
  %583 = vmatpush2.msra.mxu0 0.0
  %584 = vmatprep.mubr.f32.mxu0 0.0
  %585 = vmatmul.mubr.f32.gmra.mxu0 %v207
  %v586 = vpop.f32.mrf.mxu0
  %v587 = vadd.f32 0.0, %v586
  %v588 = vpop.f32.mrf.mxu0
  %v589 = vadd.f32 0.0, %v588
  %590 = vmatprep.mubr.f32.mxu0 0.0
  %591 = vmatmul.mubr.f32.gmra.mxu0 %v210
  %v592 = vpop.f32.mrf.mxu0
  %v593 = vadd.f32 0.0, %v592
  %v594 = vpop.f32.mrf.mxu0
  %v595 = vadd.f32 0.0, %v594
  %596 = vdwg.mxu0
  %597 = vmatprep.subr.mxu0 0.0
  %598 = vmatpush1.msra.mxu0 0.0
  %599 = vmatprep.subr.mxu0 0.0
  %600 = vmatpush1.msra.mxu0 0.0
  %601 = vmatprep.subr.mxu0 0.0
  %602 = vmatpush1.msra.mxu0 0.0
  %603 = vmatprep.subr.mxu0 0.0
  %604 = vmatpush1.msra.mxu0 0.0
  %605 = vmatprep.subr.mxu0 0.0
  %606 = vmatpush1.msra.mxu0 0.0
  %607 = vmatprep.subr.mxu0 0.0
  %608 = vmatpush1.msra.mxu0 0.0
  %609 = vmatprep.subr.mxu0 0.0
  %610 = vmatpush1.msra.mxu0 0.0
  %611 = vmatprep.subr.mxu0 %v200
  %612 = vmatpush1.msra.mxu0 %v199
  %613 = vmatprep.subr.mxu0 %v184
  %614 = vmatpush1.msra.mxu0 %v183
  %615 = vmatprep.subr.mxu0 %v168
  %616 = vmatpush1.msra.mxu0 %v167
  %617 = vmatprep.subr.mxu0 %v152
  %618 = vmatpush1.msra.mxu0 %v151
  %619 = vmatprep.subr.mxu0 %v136
  %620 = vmatpush1.msra.mxu0 %v135
  %621 = vmatprep.subr.mxu0 %v120
  %622 = vmatpush1.msra.mxu0 %v119
  %623 = vmatprep.subr.mxu0 %v104
  %624 = vmatpush1.msra.mxu0 %v103
  %625 = vmatprep.subr.mxu0 %v88
  %626 = vmatpush1.msra.mxu0 %v87
  %627 = vmatprep.subr.mxu0 %v72
  %628 = vmatpush1.msra.mxu0 %v71
  %629 = vmatprep.subr.mxu0 0.0
  %630 = vmatpush2.msra.mxu0 0.0
  %631 = vmatprep.subr.mxu0 0.0
  %632 = vmatpush2.msra.mxu0 0.0
  %633 = vmatprep.subr.mxu0 0.0
  %634 = vmatpush2.msra.mxu0 0.0
  %635 = vmatprep.subr.mxu0 0.0
  %636 = vmatpush2.msra.mxu0 0.0
  %637 = vmatprep.subr.mxu0 0.0
  %638 = vmatpush2.msra.mxu0 0.0
  %639 = vmatprep.subr.mxu0 0.0
  %640 = vmatpush2.msra.mxu0 0.0
  %641 = vmatprep.subr.mxu0 0.0
  %642 = vmatpush2.msra.mxu0 0.0
  %643 = vmatprep.subr.mxu0 0.0
  %644 = vmatpush2.msra.mxu0 0.0
  %645 = vmatprep.subr.mxu0 0.0
  %646 = vmatpush2.msra.mxu0 0.0
  %647 = vmatprep.subr.mxu0 0.0
  %648 = vmatpush2.msra.mxu0 0.0
  %649 = vmatprep.subr.mxu0 0.0
  %650 = vmatpush2.msra.mxu0 0.0
  %651 = vmatprep.subr.mxu0 0.0
  %652 = vmatpush2.msra.mxu0 0.0
  %653 = vmatprep.subr.mxu0 0.0
  %654 = vmatpush2.msra.mxu0 0.0
  %655 = vmatprep.subr.mxu0 0.0
  %656 = vmatpush2.msra.mxu0 0.0
  %657 = vmatprep.subr.mxu0 0.0
  %658 = vmatpush2.msra.mxu0 0.0
  %659 = vmatprep.subr.mxu0 0.0
  %660 = vmatpush2.msra.mxu0 0.0
  %661 = vmatprep.mubr.f32.mxu0 0.0
  %662 = vmatmul.mubr.f32.gmra.mxu0 %v207
  %v663 = vpop.f32.mrf.mxu0
  %v664 = vadd.f32 0.0, %v663
  %v665 = vpop.f32.mrf.mxu0
  %v666 = vadd.f32 0.0, %v665
  %667 = vmatprep.mubr.f32.mxu0 0.0
  %668 = vmatmul.mubr.f32.gmra.mxu0 %v210
  %v669 = vpop.f32.mrf.mxu0
  %v670 = vadd.f32 0.0, %v669
  %v671 = vpop.f32.mrf.mxu0
  %v672 = vadd.f32 0.0, %v671
  %673 = vdwg.mxu0
  %674 = vmatprep.subr.mxu0 0.0
  %675 = vmatpush1.msra.mxu0 0.0
  %676 = vmatprep.subr.mxu0 0.0
  %677 = vmatpush1.msra.mxu0 0.0
  %678 = vmatprep.subr.mxu0 0.0
  %679 = vmatpush1.msra.mxu0 0.0
  %680 = vmatprep.subr.mxu0 0.0
  %681 = vmatpush1.msra.mxu0 0.0
  %682 = vmatprep.subr.mxu0 0.0
  %683 = vmatpush1.msra.mxu0 0.0
  %684 = vmatprep.subr.mxu0 0.0
  %685 = vmatpush1.msra.mxu0 0.0
  %686 = vmatprep.subr.mxu0 0.0
  %687 = vmatpush1.msra.mxu0 0.0
  %688 = vmatprep.subr.mxu0 %v202
  %689 = vmatpush1.msra.mxu0 %v201
  %690 = vmatprep.subr.mxu0 %v186
  %691 = vmatpush1.msra.mxu0 %v185
  %692 = vmatprep.subr.mxu0 %v170
  %693 = vmatpush1.msra.mxu0 %v169
  %694 = vmatprep.subr.mxu0 %v154
  %695 = vmatpush1.msra.mxu0 %v153
  %696 = vmatprep.subr.mxu0 %v138
  %697 = vmatpush1.msra.mxu0 %v137
  %698 = vmatprep.subr.mxu0 %v122
  %699 = vmatpush1.msra.mxu0 %v121
  %700 = vmatprep.subr.mxu0 %v106
  %701 = vmatpush1.msra.mxu0 %v105
  %702 = vmatprep.subr.mxu0 %v90
  %703 = vmatpush1.msra.mxu0 %v89
  %704 = vmatprep.subr.mxu0 %v74
  %705 = vmatpush1.msra.mxu0 %v73
  %706 = vmatprep.subr.mxu0 0.0
  %707 = vmatpush2.msra.mxu0 0.0
  %708 = vmatprep.subr.mxu0 0.0
  %709 = vmatpush2.msra.mxu0 0.0
  %710 = vmatprep.subr.mxu0 0.0
  %711 = vmatpush2.msra.mxu0 0.0
  %712 = vmatprep.subr.mxu0 0.0
  %713 = vmatpush2.msra.mxu0 0.0
  %714 = vmatprep.subr.mxu0 0.0
  %715 = vmatpush2.msra.mxu0 0.0
  %716 = vmatprep.subr.mxu0 0.0
  %717 = vmatpush2.msra.mxu0 0.0
  %718 = vmatprep.subr.mxu0 0.0
  %719 = vmatpush2.msra.mxu0 0.0
  %720 = vmatprep.subr.mxu0 0.0
  %721 = vmatpush2.msra.mxu0 0.0
  %722 = vmatprep.subr.mxu0 0.0
  %723 = vmatpush2.msra.mxu0 0.0
  %724 = vmatprep.subr.mxu0 0.0
  %725 = vmatpush2.msra.mxu0 0.0
  %726 = vmatprep.subr.mxu0 0.0
  %727 = vmatpush2.msra.mxu0 0.0
  %728 = vmatprep.subr.mxu0 0.0
  %729 = vmatpush2.msra.mxu0 0.0
  %730 = vmatprep.subr.mxu0 0.0
  %731 = vmatpush2.msra.mxu0 0.0
  %732 = vmatprep.subr.mxu0 0.0
  %733 = vmatpush2.msra.mxu0 0.0
  %734 = vmatprep.subr.mxu0 0.0
  %735 = vmatpush2.msra.mxu0 0.0
  %736 = vmatprep.subr.mxu0 0.0
  %737 = vmatpush2.msra.mxu0 0.0
  %738 = vmatprep.mubr.f32.mxu0 0.0
  %739 = vmatmul.mubr.f32.gmra.mxu0 %v207
  %v740 = vpop.f32.mrf.mxu0
  %v741 = vadd.f32 0.0, %v740
  %v742 = vpop.f32.mrf.mxu0
  %v743 = vadd.f32 0.0, %v742
  %744 = vmatprep.mubr.f32.mxu0 0.0
  %745 = vmatmul.mubr.f32.gmra.mxu0 %v210
  %v746 = vpop.f32.mrf.mxu0
  %v747 = vadd.f32 0.0, %v746
  %v748 = vpop.f32.mrf.mxu0
  %v749 = vadd.f32 0.0, %v748
  %750 = vdwg.mxu0
  %751 = vmatprep.subr.mxu0 0.0
  %752 = vmatpush1.msra.mxu0 0.0
  %753 = vmatprep.subr.mxu0 0.0
  %754 = vmatpush1.msra.mxu0 0.0
  %755 = vmatprep.subr.mxu0 0.0
  %756 = vmatpush1.msra.mxu0 0.0
  %757 = vmatprep.subr.mxu0 0.0
  %758 = vmatpush1.msra.mxu0 0.0
  %759 = vmatprep.subr.mxu0 0.0
  %760 = vmatpush1.msra.mxu0 0.0
  %761 = vmatprep.subr.mxu0 0.0
  %762 = vmatpush1.msra.mxu0 0.0
  %763 = vmatprep.subr.mxu0 0.0
  %764 = vmatpush1.msra.mxu0 0.0
  %765 = vmatprep.subr.mxu0 %v204
  %766 = vmatpush1.msra.mxu0 %v203
  %767 = vmatprep.subr.mxu0 %v188
  %768 = vmatpush1.msra.mxu0 %v187
  %769 = vmatprep.subr.mxu0 %v172
  %770 = vmatpush1.msra.mxu0 %v171
  %771 = vmatprep.subr.mxu0 %v156
  %772 = vmatpush1.msra.mxu0 %v155
  %773 = vmatprep.subr.mxu0 %v140
  %774 = vmatpush1.msra.mxu0 %v139
  %775 = vmatprep.subr.mxu0 %v124
  %776 = vmatpush1.msra.mxu0 %v123
  %777 = vmatprep.subr.mxu0 %v108
  %778 = vmatpush1.msra.mxu0 %v107
  %779 = vmatprep.subr.mxu0 %v92
  %780 = vmatpush1.msra.mxu0 %v91
  %781 = vmatprep.subr.mxu0 %v76
  %782 = vmatpush1.msra.mxu0 %v75
  %783 = vmatprep.subr.mxu0 0.0
  %784 = vmatpush2.msra.mxu0 0.0
  %785 = vmatprep.subr.mxu0 0.0
  %786 = vmatpush2.msra.mxu0 0.0
  %787 = vmatprep.subr.mxu0 0.0
  %788 = vmatpush2.msra.mxu0 0.0
  %789 = vmatprep.subr.mxu0 0.0
  %790 = vmatpush2.msra.mxu0 0.0
  %791 = vmatprep.subr.mxu0 0.0
  %792 = vmatpush2.msra.mxu0 0.0
  %793 = vmatprep.subr.mxu0 0.0
  %794 = vmatpush2.msra.mxu0 0.0
  %795 = vmatprep.subr.mxu0 0.0
  %796 = vmatpush2.msra.mxu0 0.0
  %797 = vmatprep.subr.mxu0 0.0
  %798 = vmatpush2.msra.mxu0 0.0
  %799 = vmatprep.subr.mxu0 0.0
  %800 = vmatpush2.msra.mxu0 0.0
  %801 = vmatprep.subr.mxu0 0.0
  %802 = vmatpush2.msra.mxu0 0.0
  %803 = vmatprep.subr.mxu0 0.0
  %804 = vmatpush2.msra.mxu0 0.0
  %805 = vmatprep.subr.mxu0 0.0
  %806 = vmatpush2.msra.mxu0 0.0
  %807 = vmatprep.subr.mxu0 0.0
  %808 = vmatpush2.msra.mxu0 0.0
  %809 = vmatprep.subr.mxu0 0.0
  %810 = vmatpush2.msra.mxu0 0.0
  %811 = vmatprep.subr.mxu0 0.0
  %812 = vmatpush2.msra.mxu0 0.0
  %813 = vmatprep.subr.mxu0 0.0
  %814 = vmatpush2.msra.mxu0 0.0
  %815 = vmatprep.mubr.f32.mxu0 0.0
  %816 = vmatmul.mubr.f32.gmra.mxu0 %v207
  %v817 = vpop.f32.mrf.mxu0
  %v818 = vadd.f32 0.0, %v817
  %v819 = vpop.f32.mrf.mxu0
  %v820 = vadd.f32 0.0, %v819
  %821 = vmatprep.mubr.f32.mxu0 0.0
  %822 = vmatmul.mubr.f32.gmra.mxu0 %v210
  %v823 = vpop.f32.mrf.mxu0
  %v824 = vadd.f32 0.0, %v823
  %v825 = vpop.f32.mrf.mxu0
  %v826 = vadd.f32 0.0, %v825
  %827 = vdwg.mxu0
  %828 = vst [vmem:[%s47] sm:$0xff] %v279
  %829 = vst [vmem:[%s47 + $0x8] sm:$0xff] %v281
  %830 = vst [vmem:[%s47 + $0x10] sm:$0xff] %v356
  %831 = vst [vmem:[%s47 + $0x18] sm:$0xff] %v358
  %832 = vst [vmem:[%s47 + $0x20] sm:$0xff] %v433
  %833 = vst [vmem:[%s47 + $0x28] sm:$0xff] %v435
  %834 = vst [vmem:[%s47 + $0x30] sm:$0xff] %v510
  %835 = vst [vmem:[%s47 + $0x38] sm:$0xff] %v512
  %836 = vst [vmem:[%s47 + $0x40] sm:$0xff] %v587
  %837 = vst [vmem:[%s47 + $0x48] sm:$0xff] %v589
  %838 = vst [vmem:[%s47 + $0x50] sm:$0xff] %v664
  %839 = vst [vmem:[%s47 + $0x58] sm:$0xff] %v666
  %840 = vst [vmem:[%s47 + $0x60] sm:$0xff] %v741
  %841 = vst [vmem:[%s47 + $0x68] sm:$0xff] %v743
  %842 = vst [vmem:[%s47 + $0x70] sm:$0xff] %v818
  %843 = vst [vmem:[%s47 + $0x78] sm:$0xff] %v820
  %844 = vst [vmem:[%s47 + $0x80] sm:$0xff] %v285
  %845 = vst [vmem:[%s47 + $0x88] sm:$0xff] %v287
  %846 = vst [vmem:[%s47 + $0x90] sm:$0xff] %v362
  %847 = vst [vmem:[%s47 + $0x98] sm:$0xff] %v364
  %848 = vst [vmem:[%s47 + $0xa0] sm:$0xff] %v439
  %849 = vst [vmem:[%s47 + $0xa8] sm:$0xff] %v441
  %850 = vst [vmem:[%s47 + $0xb0] sm:$0xff] %v516
  %851 = vst [vmem:[%s47 + $0xb8] sm:$0xff] %v518
  %852 = vst [vmem:[%s47 + $0xc0] sm:$0xff] %v593
  %853 = vst [vmem:[%s47 + $0xc8] sm:$0xff] %v595
  %854 = vst [vmem:[%s47 + $0xd0] sm:$0xff] %v670
  %855 = vst [vmem:[%s47 + $0xd8] sm:$0xff] %v672
  %856 = vst [vmem:[%s47 + $0xe0] sm:$0xff] %v747
  %857 = vst [vmem:[%s47 + $0xe8] sm:$0xff] %v749
  %858 = vst [vmem:[%s47 + $0xf0] sm:$0xff] %v824
  %859 = vst [vmem:[%s47 + $0xf8] sm:$0xff] %v826
  %v860 = vld [vmem:[%s3] sm:$0xff]
  %v861 = vld [vmem:[%s3 + $0x8] sm:$0xff]
  %v862 = vadd.f32 %v279, %v281
  %v863 = vadd.f32 %v862, %v356
  %v864 = vadd.f32 %v863, %v358
  %v865 = vadd.f32 %v864, %v433
  %v866 = vadd.f32 %v865, %v435
  %v867 = vadd.f32 %v866, %v510
  %v868 = vadd.f32 %v867, %v512
  %v869 = vadd.f32 %v868, %v587
  %v870 = vadd.f32 %v869, %v589
  %v871 = vadd.f32 %v870, %v664
  %v872 = vadd.f32 %v871, %v666
  %v873 = vadd.f32 %v872, %v741
  %v874 = vadd.f32 %v873, %v743
  %v875 = vadd.f32 %v874, %v818
  %v876 = vadd.f32 %v875, %v820
  %877 = vadd.xlane.f32.xlu0 %v876
  %v878 = vpop.xlane.xlu0 %877
  %v879 = vadd.f32 %v285, %v287
  %v880 = vadd.f32 %v879, %v362
  %v881 = vadd.f32 %v880, %v364
  %v882 = vadd.f32 %v881, %v439
  %v883 = vadd.f32 %v882, %v441
  %v884 = vadd.f32 %v883, %v516
  %v885 = vadd.f32 %v884, %v518
  %v886 = vadd.f32 %v885, %v593
  %v887 = vadd.f32 %v886, %v595
  %v888 = vadd.f32 %v887, %v670
  %v889 = vadd.f32 %v888, %v672
  %v890 = vadd.f32 %v889, %v747
  %v891 = vadd.f32 %v890, %v749
  %v892 = vadd.f32 %v891, %v824
  %v893 = vadd.f32 %v892, %v826
  %894 = vadd.xlane.f32.xlu0 %v893
  %v895 = vpop.xlane.xlu0 %894
  %v896 = vadd.f32 %v860, %v878
  %v897 = vadd.f32 %v861, %v895
  %vm898 = vcmask 7168
  %899 = vst.msk [vmem:[%s3] sm:$0xff] %vm898, %v896
  %900 = vst.msk [vmem:[%s3 + $0x8] sm:$0xff] %vm898, %v897
  %v901 = vld [vmem:[%s4] sm:$0xff]
  %v902 = vld [vmem:[%s4 + $0x8] sm:$0xff]
  %v903 = vmul.f32 %v279, %v279
  %v904 = vmul.f32 %v281, %v281
  %v905 = vmul.f32 %v356, %v356
  %v906 = vmul.f32 %v358, %v358
  %v907 = vmul.f32 %v433, %v433
  %v908 = vmul.f32 %v435, %v435
  %v909 = vmul.f32 %v510, %v510
  %v910 = vmul.f32 %v512, %v512
  %v911 = vmul.f32 %v587, %v587
  %v912 = vmul.f32 %v589, %v589
  %v913 = vmul.f32 %v664, %v664
  %v914 = vmul.f32 %v666, %v666
  %v915 = vmul.f32 %v741, %v741
  %v916 = vmul.f32 %v743, %v743
  %v917 = vmul.f32 %v818, %v818
  %v918 = vmul.f32 %v820, %v820
  %v919 = vmul.f32 %v285, %v285
  %v920 = vmul.f32 %v287, %v287
  %v921 = vmul.f32 %v362, %v362
  %v922 = vmul.f32 %v364, %v364
  %v923 = vmul.f32 %v439, %v439
  %v924 = vmul.f32 %v441, %v441
  %v925 = vmul.f32 %v516, %v516
  %v926 = vmul.f32 %v518, %v518
  %v927 = vmul.f32 %v593, %v593
  %v928 = vmul.f32 %v595, %v595
  %v929 = vmul.f32 %v670, %v670
  %v930 = vmul.f32 %v672, %v672
  %v931 = vmul.f32 %v747, %v747
  %v932 = vmul.f32 %v749, %v749
  %v933 = vmul.f32 %v824, %v824
  %v934 = vmul.f32 %v826, %v826
  %v935 = vadd.f32 %v903, %v904
  %v936 = vadd.f32 %v935, %v905
  %v937 = vadd.f32 %v936, %v906
  %v938 = vadd.f32 %v937, %v907
  %v939 = vadd.f32 %v938, %v908
  %v940 = vadd.f32 %v939, %v909
  %v941 = vadd.f32 %v940, %v910
  %v942 = vadd.f32 %v941, %v911
  %v943 = vadd.f32 %v942, %v912
  %v944 = vadd.f32 %v943, %v913
  %v945 = vadd.f32 %v944, %v914
  %v946 = vadd.f32 %v945, %v915
  %v947 = vadd.f32 %v946, %v916
  %v948 = vadd.f32 %v947, %v917
  %v949 = vadd.f32 %v948, %v918
  %950 = vadd.xlane.f32.xlu0 %v949
  %v951 = vpop.xlane.xlu0 %950
  %v952 = vadd.f32 %v919, %v920
  %v953 = vadd.f32 %v952, %v921
  %v954 = vadd.f32 %v953, %v922
  %v955 = vadd.f32 %v954, %v923
  %v956 = vadd.f32 %v955, %v924
  %v957 = vadd.f32 %v956, %v925
  %v958 = vadd.f32 %v957, %v926
  %v959 = vadd.f32 %v958, %v927
  %v960 = vadd.f32 %v959, %v928
  %v961 = vadd.f32 %v960, %v929
  %v962 = vadd.f32 %v961, %v930
  %v963 = vadd.f32 %v962, %v931
  %v964 = vadd.f32 %v963, %v932
  %v965 = vadd.f32 %v964, %v933
  %v966 = vadd.f32 %v965, %v934
  %967 = vadd.xlane.f32.xlu0 %v966
  %v968 = vpop.xlane.xlu0 %967
  %v969 = vadd.f32 %v901, %v951
  %v970 = vadd.f32 %v902, %v968
  %971 = vst.msk [vmem:[%s4] sm:$0xff] %vm898, %v969
  %972 = vst.msk [vmem:[%s4 + $0x8] sm:$0xff] %vm898, %v970
  %s973 = sadd.s32 0, 0
  %s974 = smul.u32 16, %s973
  %p975 = scmp.lt.s32.totalorder %s974, 15
  %s976 = scalar_select %p975, %s974, 15
  %s977 = smul.addr %s976, 8
  %s978 = scalar_lea.vmem %s2, %s977
  // Predicated region
  $region14: #{decoder_forward.8} parent=0 // pred_check
    _
  $region15: #{decoder_forward.8} parent=0 // pred_check_branch
    %980 = sbr.rel (0) target = $region17
  $region16: #{decoder_forward.8} parent=0 // pred_region
    %s981 = sadd.s32 0, 0
    %s982 = smul.u32 16, %s981
  $region17: #{decoder_forward.8} parent=0 // pred_fallthru
    _
  // Predicated region
  $region18: #{decoder_forward.8} parent=0 // pred_check
    _
  $region19: #{decoder_forward.8} parent=0 // pred_check_branch
    %984 = sbr.rel (0) target = $region21
  $region20: #{decoder_forward.8} parent=0 // pred_region
    _
  $region21: #{decoder_forward.8} parent=0 // pred_fallthru
    _
  // Predicated region
  $region22: #{decoder_forward.8} parent=0 // pred_check
    _
  $region23: #{decoder_forward.8} parent=0 // pred_check_branch
    %986 = sbr.rel (0) target = $region25
  $region24: #{decoder_forward.8} parent=0 // pred_region
    _
  $region25: #{decoder_forward.8} parent=0 // pred_fallthru
    _
  // Predicated region
  $region26: #{decoder_forward.8} parent=0 // pred_check
    _
  $region27: #{decoder_forward.8} parent=0 // pred_check_branch
    %988 = sbr.rel (0) target = $region29
  $region28: #{decoder_forward.8} parent=0 // pred_region
    %s989 = sadd.s32 0, 0
    %s990 = smul.u32 16, %s989
    %p991 = scmp.lt.s32.totalorder %s990, 15
    %s992 = scalar_select %p991, %s990, 15
    %s993 = smul.addr %s992, 8
    %s994 = scalar_lea.vmem %s2, %s993
  $region29: #{decoder_forward.8} parent=0 // pred_fallthru
    _
  // Predicated region
  $region30: #{decoder_forward.8} parent=0 // pred_check
    _
  $region31: #{decoder_forward.8} parent=0 // pred_check_branch
    %996 = sbr.rel (0) target = $region33
  $region32: #{decoder_forward.8} parent=0 // pred_region
    _
  $region33: #{decoder_forward.8} parent=0 // pred_fallthru
    _
  // Predicated region
  $region34: #{decoder_forward.8} parent=0 // pred_check
    _
  $region35: #{decoder_forward.8} parent=0 // pred_check_branch
    %998 = sbr.rel (0) target = $region37
  $region36: #{decoder_forward.8} parent=0 // pred_region
    _
  $region37: #{decoder_forward.8} parent=0 // pred_fallthru
    _

// kernel: decoder_forward.9
$region0: #{decoder_forward.9}
  #allocation0 [shape = 'u32[]', space=smem, size = 0x4, offset = 0x4, fixed_abs, tag = 'smem constant byte address 0x4 - core index']
  #allocation1 [shape = 'u32[144,128]{1,0:T(1,128)}', space=vmem, size = 0x12000, scoped, tag = 'internal scratch']
  %s0 = inlined_call_operand.vmem [shape: f32[36,8192], index: 0, kind: input, shape index: {}]
  %s1 = inlined_call_operand.vmem [shape: f32[12,36], index: 1, kind: input, shape index: {}]
  %s2 = inlined_call_operand.vmem [shape: f32[12,1], index: 2, kind: input, shape index: {}]
  %s3 = inlined_call_operand.vmem [shape: f32[12,8192], index: 3, kind: output, shape index: {}]
  %s4 = sld [smem:[#allocation0]]
  $region87: #{decoder_forward.9} parent=0
    _
  %s6 = ssub.s32 1, %s4
  %s7 = scalar_select 0, %s6, %s4
  $region1: #{decoder_forward.9} parent=0
    #allocation2 [shape = 'u8[1310720]{0}', space=vmem, size = 0x140000, scoped, tag = 'input window, operand 0']
    #allocation3 [shape = 'u8[524288]{0}', space=vmem, size = 0x80000, scoped, tag = 'output window, operand 0']
    loop: start=0, step=1, limit=4
    $region2: #{decoder_forward.9} parent=1 // loop_pre_header
      _
    $region3: #{decoder_forward.9} parent=1 // loop_header
      %s9 = sphi 0, %s13
      %p10 = scmp.ge.s32.totalorder %s9, 4
      %s19 = sphi 0, %s21
      %s22 = sphi 0, %s19
      %s23 = sphi 0, %s22
      %s39 = sphi 0, %s23
      %s43 = sphi 0, %s43
      %s45 = sphi 0, %s43
      %s46 = sphi 0, %s45
      %s60 = sphi 0, %s46
      %s64 = sphi 0, %s64
      %s66 = sphi 0, %s64
      %s67 = sphi 0, %s66
      %s81 = sphi 0, %s67
      %s87 = sphi 0, %s89
      %s90 = sphi 0, %s87
      %s91 = sphi 0, %s90
      %s107 = sphi 0, %s91
    $region4: #{decoder_forward.9} parent=1 // loop_header_branch
      %12 = sbr.rel (%p10) target = $region8
    $region5: #{decoder_forward.9} parent=1 // loop_body
      %s14 = ssub.s32 %s9, 1
      %s15 = ssub.s32 %s9, 2
      %s16 = sadd.s32 %s9, 1
      %s17 = ssub.s32 %s9, %s16
      %p18 = scmp.eq.s32.totalorder %s17, 0
      %s20 = sadd.s32 %s19, 1
      %s21 = scalar_select %p18, %s19, %s20
      %p24 = pneg %p18
      %p25 = scmp.eq.s32.totalorder %s9, 1
      %p26 = por %p24, %p25
      %p27 = scmp.ne.s32.totalorder %s19, %s22
      %p28 = scmp.eq.s32.totalorder %s9, 0
      %p29 = por %p27, %p28
      %p30 = scmp.ne.s32.totalorder %s19, %s22
      %p31 = scmp.eq.s32.totalorder %s14, 1
      %p32 = por %p30, %p31
      %p33 = scmp.ne.s32.totalorder %s22, %s23
      %p34 = scmp.eq.s32.totalorder %s14, 0
      %p35 = por %p33, %p34
      %p36 = scmp.ne.s32.totalorder %s22, %s23
      %p37 = scmp.eq.s32.totalorder %s15, 1
      %p38 = por %p36, %p37
      %p40 = scmp.ne.s32.totalorder %s23, %s39
      %p41 = scmp.eq.s32.totalorder %s15, 0
      %p42 = por %p40, %p41
      %s44 = sadd.s32 %s43, 1
      %p47 = scmp.eq.s32.totalorder %s9, 1
      %p48 = scmp.ne.s32.totalorder %s43, %s45
      %p49 = scmp.eq.s32.totalorder %s9, 0
      %p50 = por %p48, %p49
      %p51 = scmp.ne.s32.totalorder %s43, %s45
      %p52 = scmp.eq.s32.totalorder %s14, 1
      %p53 = por %p51, %p52
      %p54 = scmp.ne.s32.totalorder %s45, %s46
      %p55 = scmp.eq.s32.totalorder %s14, 0
      %p56 = por %p54, %p55
      %p57 = scmp.ne.s32.totalorder %s45, %s46
      %p58 = scmp.eq.s32.totalorder %s15, 1
      %p59 = por %p57, %p58
      %p61 = scmp.ne.s32.totalorder %s46, %s60
      %p62 = scmp.eq.s32.totalorder %s15, 0
      %p63 = por %p61, %p62
      %s65 = sadd.s32 %s64, 1
      %p68 = scmp.eq.s32.totalorder %s9, 1
      %p69 = scmp.ne.s32.totalorder %s64, %s66
      %p70 = scmp.eq.s32.totalorder %s9, 0
      %p71 = por %p69, %p70
      %p72 = scmp.ne.s32.totalorder %s64, %s66
      %p73 = scmp.eq.s32.totalorder %s14, 1
      %p74 = por %p72, %p73
      %p75 = scmp.ne.s32.totalorder %s66, %s67
      %p76 = scmp.eq.s32.totalorder %s14, 0
      %p77 = por %p75, %p76
      %p78 = scmp.ne.s32.totalorder %s66, %s67
      %p79 = scmp.eq.s32.totalorder %s15, 1
      %p80 = por %p78, %p79
      %p82 = scmp.ne.s32.totalorder %s67, %s81
      %p83 = scmp.eq.s32.totalorder %s15, 0
      %p84 = por %p82, %p83
      %s85 = ssub.s32 %s9, %s16
      %p86 = scmp.eq.s32.totalorder %s85, 0
      %s88 = sadd.s32 %s87, 1
      %s89 = scalar_select %p86, %s87, %s88
      %p92 = pneg %p86
      %p93 = scmp.eq.s32.totalorder %s9, 1
      %p94 = por %p92, %p93
      %p95 = scmp.ne.s32.totalorder %s87, %s90
      %p96 = scmp.eq.s32.totalorder %s9, 0
      %p97 = por %p95, %p96
      %p98 = scmp.ne.s32.totalorder %s87, %s90
      %p99 = scmp.eq.s32.totalorder %s14, 1
      %p100 = por %p98, %p99
      %p101 = scmp.ne.s32.totalorder %s90, %s91
      %p102 = scmp.eq.s32.totalorder %s14, 0
      %p103 = por %p101, %p102
      %p104 = scmp.ne.s32.totalorder %s90, %s91
      %p105 = scmp.eq.s32.totalorder %s15, 1
      %p106 = por %p104, %p105
      %p108 = scmp.ne.s32.totalorder %s91, %s107
      %p109 = scmp.eq.s32.totalorder %s15, 0
      %p110 = por %p108, %p109
      %p111 = scmp.le.s32.totalorder 1, %s9
      %p112 = scmp.lt.s32.totalorder %s9, 3
      %p113 = pnand %p111, %p112
      %p114 = pneg %p113
      // Predicated region
      $region9: #{decoder_forward.9} parent=5 // pred_check
        _
      $region10: #{decoder_forward.9} parent=5 // pred_check_branch
        %116 = sbr.rel (%p113) target = $region12
      $region11: #{decoder_forward.9} parent=5 // pred_region
        %s117 = ssub.s32 %s9, 1
        // Predicated region
        $region13: #{decoder_forward.9} parent=11 // pred_check
          %p118 = pneg %p56
        $region14: #{decoder_forward.9} parent=11 // pred_check_branch
          %120 = sbr.rel (%p118) target = $region16
        $region15: #{decoder_forward.9} parent=11 // pred_region
          _
        $region16: #{decoder_forward.9} parent=11 // pred_fallthru
          _
        // Predicated region
        $region17: #{decoder_forward.9} parent=11 // pred_check
          %p121 = pneg %p77
        $region18: #{decoder_forward.9} parent=11 // pred_check_branch
          %123 = sbr.rel (%p121) target = $region20
        $region19: #{decoder_forward.9} parent=11 // pred_region
          _
        $region20: #{decoder_forward.9} parent=11 // pred_fallthru
          _
      $region12: #{decoder_forward.9} parent=5 // pred_fallthru
        _
      %p124 = scmp.lt.s32.totalorder %s9, 2
      // Predicated region
      $region21: #{decoder_forward.9} parent=5 // pred_check
        %p125 = pneg %p124
      $region22: #{decoder_forward.9} parent=5 // pred_check_branch
        %127 = sbr.rel (%p125) target = $region24
      $region23: #{decoder_forward.9} parent=5 // pred_region
        // Predicated region
        $region25: #{decoder_forward.9} parent=23 // pred_check
          %p128 = pneg %p29
        $region26: #{decoder_forward.9} parent=23 // pred_check_branch
          %130 = sbr.rel (%p128) target = $region28
        $region27: #{decoder_forward.9} parent=23 // pred_region
          %s131 = sand.u32 %s19, 1
          %s132 = sand.u32 %s19, 1
          %s133 = smul.addr %s132, 1280
          %s134 = scalar_lea.vmem [#allocation2], %s133
          %s135 = smul.u32 32, %s9
          %s136 = smul.addr %s135, 8
          %s137 = scalar_lea.vmem %s0, %s136
          // Predicated region
          $region29: #{decoder_forward.9} parent=27 // pred_check
            _
          $region30: #{decoder_forward.9} parent=27 // pred_check_branch
            %139 = sbr.rel (0) target = $region32
          $region31: #{decoder_forward.9} parent=27 // pred_region
            // Predicated region
            $region33: #{decoder_forward.9} parent=31 // pred_check
              _
            $region34: #{decoder_forward.9} parent=31 // pred_check_branch
              %141 = sbr.rel (0) target = $region36
            $region35: #{decoder_forward.9} parent=31 // pred_region
              loop: start=0, step=1, limit=1
              $region37: #{decoder_forward.9} parent=35 // loop_pre_header
                _
              $region38: #{decoder_forward.9} parent=35 // loop_header
                %s143 = sphi 0, %s147
                %p144 = scmp.ge.s32.totalorder %s143, 1
                %s148 = sphi %s137, %s137
                %s149 = sphi %s134, %s134
              $region39: #{decoder_forward.9} parent=35 // loop_header_branch
                %146 = sbr.rel (%p144) target = $region43
              $region40: #{decoder_forward.9} parent=35 // loop_body
                %v150 = vld [vmem:[%s148] sm:$0xff]
                %151 = vst [vmem:[%s149] sm:$0xff] %v150
                %v152 = vld [vmem:[%s148 + $0x8] sm:$0xff]
                %153 = vst [vmem:[%s149 + $0x8] sm:$0xff] %v152
                %v154 = vld [vmem:[%s148 + $0x10] sm:$0xff]
                %155 = vst [vmem:[%s149 + $0x10] sm:$0xff] %v154
                %v156 = vld [vmem:[%s148 + $0x18] sm:$0xff]
                %157 = vst [vmem:[%s149 + $0x18] sm:$0xff] %v156
                %v158 = vld [vmem:[%s148 + $0x20] sm:$0xff]
                %159 = vst [vmem:[%s149 + $0x20] sm:$0xff] %v158
                %v160 = vld [vmem:[%s148 + $0x28] sm:$0xff]
                %161 = vst [vmem:[%s149 + $0x28] sm:$0xff] %v160
                %v162 = vld [vmem:[%s148 + $0x30] sm:$0xff]
                %163 = vst [vmem:[%s149 + $0x30] sm:$0xff] %v162
                %v164 = vld [vmem:[%s148 + $0x38] sm:$0xff]
                %165 = vst [vmem:[%s149 + $0x38] sm:$0xff] %v164
                %v166 = vld [vmem:[%s148 + $0x40] sm:$0xff]
                %167 = vst [vmem:[%s149 + $0x40] sm:$0xff] %v166
                %v168 = vld [vmem:[%s148 + $0x48] sm:$0xff]
                %169 = vst [vmem:[%s149 + $0x48] sm:$0xff] %v168
                %v170 = vld [vmem:[%s148 + $0x50] sm:$0xff]
                %171 = vst [vmem:[%s149 + $0x50] sm:$0xff] %v170
                %v172 = vld [vmem:[%s148 + $0x58] sm:$0xff]
                %173 = vst [vmem:[%s149 + $0x58] sm:$0xff] %v172
                %v174 = vld [vmem:[%s148 + $0x60] sm:$0xff]
                %175 = vst [vmem:[%s149 + $0x60] sm:$0xff] %v174
                %v176 = vld [vmem:[%s148 + $0x68] sm:$0xff]
                %177 = vst [vmem:[%s149 + $0x68] sm:$0xff] %v176
                %v178 = vld [vmem:[%s148 + $0x70] sm:$0xff]
                %179 = vst [vmem:[%s149 + $0x70] sm:$0xff] %v178
                %v180 = vld [vmem:[%s148 + $0x78] sm:$0xff]
                %181 = vst [vmem:[%s149 + $0x78] sm:$0xff] %v180
                %v182 = vld [vmem:[%s148 + $0x80] sm:$0xff]
                %183 = vst [vmem:[%s149 + $0x80] sm:$0xff] %v182
                %v184 = vld [vmem:[%s148 + $0x88] sm:$0xff]
                %185 = vst [vmem:[%s149 + $0x88] sm:$0xff] %v184
                %v186 = vld [vmem:[%s148 + $0x90] sm:$0xff]
                %187 = vst [vmem:[%s149 + $0x90] sm:$0xff] %v186
                %v188 = vld [vmem:[%s148 + $0x98] sm:$0xff]
                %189 = vst [vmem:[%s149 + $0x98] sm:$0xff] %v188
                %v190 = vld [vmem:[%s148 + $0xa0] sm:$0xff]
                %191 = vst [vmem:[%s149 + $0xa0] sm:$0xff] %v190
                %v192 = vld [vmem:[%s148 + $0xa8] sm:$0xff]
                %193 = vst [vmem:[%s149 + $0xa8] sm:$0xff] %v192
                %v194 = vld [vmem:[%s148 + $0xb0] sm:$0xff]
                %195 = vst [vmem:[%s149 + $0xb0] sm:$0xff] %v194
                %v196 = vld [vmem:[%s148 + $0xb8] sm:$0xff]
                %197 = vst [vmem:[%s149 + $0xb8] sm:$0xff] %v196
                %v198 = vld [vmem:[%s148 + $0xc0] sm:$0xff]
                %199 = vst [vmem:[%s149 + $0xc0] sm:$0xff] %v198
                %v200 = vld [vmem:[%s148 + $0xc8] sm:$0xff]
                %201 = vst [vmem:[%s149 + $0xc8] sm:$0xff] %v200
                %v202 = vld [vmem:[%s148 + $0xd0] sm:$0xff]
                %203 = vst [vmem:[%s149 + $0xd0] sm:$0xff] %v202
                %v204 = vld [vmem:[%s148 + $0xd8] sm:$0xff]
                %205 = vst [vmem:[%s149 + $0xd8] sm:$0xff] %v204
                %v206 = vld [vmem:[%s148 + $0xe0] sm:$0xff]
                %207 = vst [vmem:[%s149 + $0xe0] sm:$0xff] %v206
                %v208 = vld [vmem:[%s148 + $0xe8] sm:$0xff]
                %209 = vst [vmem:[%s149 + $0xe8] sm:$0xff] %v208
                %v210 = vld [vmem:[%s148 + $0xf0] sm:$0xff]
                %211 = vst [vmem:[%s149 + $0xf0] sm:$0xff] %v210
                %v212 = vld [vmem:[%s148 + $0xf8] sm:$0xff]
                %213 = vst [vmem:[%s149 + $0xf8] sm:$0xff] %v212
                %v214 = vld [vmem:[%s148 + $0x200] sm:$0xff]
                %215 = vst [vmem:[%s149 + $0x100] sm:$0xff] %v214
                %v216 = vld [vmem:[%s148 + $0x208] sm:$0xff]
                %217 = vst [vmem:[%s149 + $0x108] sm:$0xff] %v216
                %v218 = vld [vmem:[%s148 + $0x210] sm:$0xff]
                %219 = vst [vmem:[%s149 + $0x110] sm:$0xff] %v218
                %v220 = vld [vmem:[%s148 + $0x218] sm:$0xff]
                %221 = vst [vmem:[%s149 + $0x118] sm:$0xff] %v220
                %v222 = vld [vmem:[%s148 + $0x220] sm:$0xff]
                %223 = vst [vmem:[%s149 + $0x120] sm:$0xff] %v222
                %v224 = vld [vmem:[%s148 + $0x228] sm:$0xff]
                %225 = vst [vmem:[%s149 + $0x128] sm:$0xff] %v224
                %v226 = vld [vmem:[%s148 + $0x230] sm:$0xff]
                %227 = vst [vmem:[%s149 + $0x130] sm:$0xff] %v226
                %v228 = vld [vmem:[%s148 + $0x238] sm:$0xff]
                %229 = vst [vmem:[%s149 + $0x138] sm:$0xff] %v228
                %v230 = vld [vmem:[%s148 + $0x240] sm:$0xff]
                %231 = vst [vmem:[%s149 + $0x140] sm:$0xff] %v230
                %v232 = vld [vmem:[%s148 + $0x248] sm:$0xff]
                %233 = vst [vmem:[%s149 + $0x148] sm:$0xff] %v232
                %v234 = vld [vmem:[%s148 + $0x250] sm:$0xff]
                %235 = vst [vmem:[%s149 + $0x150] sm:$0xff] %v234
                %v236 = vld [vmem:[%s148 + $0x258] sm:$0xff]
                %237 = vst [vmem:[%s149 + $0x158] sm:$0xff] %v236
                %v238 = vld [vmem:[%s148 + $0x260] sm:$0xff]
                %239 = vst [vmem:[%s149 + $0x160] sm:$0xff] %v238
                %v240 = vld [vmem:[%s148 + $0x268] sm:$0xff]
                %241 = vst [vmem:[%s149 + $0x168] sm:$0xff] %v240
                %v242 = vld [vmem:[%s148 + $0x270] sm:$0xff]
                %243 = vst [vmem:[%s149 + $0x170] sm:$0xff] %v242
                %v244 = vld [vmem:[%s148 + $0x278] sm:$0xff]
                %245 = vst [vmem:[%s149 + $0x178] sm:$0xff] %v244
                %v246 = vld [vmem:[%s148 + $0x280] sm:$0xff]
                %247 = vst [vmem:[%s149 + $0x180] sm:$0xff] %v246
                %v248 = vld [vmem:[%s148 + $0x288] sm:$0xff]
                %249 = vst [vmem:[%s149 + $0x188] sm:$0xff] %v248
                %v250 = vld [vmem:[%s148 + $0x290] sm:$0xff]
                %251 = vst [vmem:[%s149 + $0x190] sm:$0xff] %v250
                %v252 = vld [vmem:[%s148 + $0x298] sm:$0xff]
                %253 = vst [vmem:[%s149 + $0x198] sm:$0xff] %v252
                %v254 = vld [vmem:[%s148 + $0x2a0] sm:$0xff]
                %255 = vst [vmem:[%s149 + $0x1a0] sm:$0xff] %v254
                %v256 = vld [vmem:[%s148 + $0x2a8] sm:$0xff]
                %257 = vst [vmem:[%s149 + $0x1a8] sm:$0xff] %v256
                %v258 = vld [vmem:[%s148 + $0x2b0] sm:$0xff]
                %259 = vst [vmem:[%s149 + $0x1b0] sm:$0xff] %v258
                %v260 = vld [vmem:[%s148 + $0x2b8] sm:$0xff]
                %261 = vst [vmem:[%s149 + $0x1b8] sm:$0xff] %v260
                %v262 = vld [vmem:[%s148 + $0x2c0] sm:$0xff]
                %263 = vst [vmem:[%s149 + $0x1c0] sm:$0xff] %v262
                %v264 = vld [vmem:[%s148 + $0x2c8] sm:$0xff]
                %265 = vst [vmem:[%s149 + $0x1c8] sm:$0xff] %v264
                %v266 = vld [vmem:[%s148 + $0x2d0] sm:$0xff]
                %267 = vst [vmem:[%s149 + $0x1d0] sm:$0xff] %v266
                %v268 = vld [vmem:[%s148 + $0x2d8] sm:$0xff]
                %269 = vst [vmem:[%s149 + $0x1d8] sm:$0xff] %v268
                %v270 = vld [vmem:[%s148 + $0x2e0] sm:$0xff]
                %271 = vst [vmem:[%s149 + $0x1e0] sm:$0xff] %v270
                %v272 = vld [vmem:[%s148 + $0x2e8] sm:$0xff]
                %273 = vst [vmem:[%s149 + $0x1e8] sm:$0xff] %v272
                %v274 = vld [vmem:[%s148 + $0x2f0] sm:$0xff]
                %275 = vst [vmem:[%s149 + $0x1f0] sm:$0xff] %v274
                %v276 = vld [vmem:[%s148 + $0x2f8] sm:$0xff]
                %277 = vst [vmem:[%s149 + $0x1f8] sm:$0xff] %v276
                %v278 = vld [vmem:[%s148 + $0x400] sm:$0xff]
                %279 = vst [vmem:[%s149 + $0x200] sm:$0xff] %v278
                %v280 = vld [vmem:[%s148 + $0x408] sm:$0xff]
                %281 = vst [vmem:[%s149 + $0x208] sm:$0xff] %v280
                %v282 = vld [vmem:[%s148 + $0x410] sm:$0xff]
                %283 = vst [vmem:[%s149 + $0x210] sm:$0xff] %v282
                %v284 = vld [vmem:[%s148 + $0x418] sm:$0xff]
                %285 = vst [vmem:[%s149 + $0x218] sm:$0xff] %v284
                %v286 = vld [vmem:[%s148 + $0x420] sm:$0xff]
                %287 = vst [vmem:[%s149 + $0x220] sm:$0xff] %v286
                %v288 = vld [vmem:[%s148 + $0x428] sm:$0xff]
                %289 = vst [vmem:[%s149 + $0x228] sm:$0xff] %v288
                %v290 = vld [vmem:[%s148 + $0x430] sm:$0xff]
                %291 = vst [vmem:[%s149 + $0x230] sm:$0xff] %v290
                %v292 = vld [vmem:[%s148 + $0x438] sm:$0xff]
                %293 = vst [vmem:[%s149 + $0x238] sm:$0xff] %v292
                %v294 = vld [vmem:[%s148 + $0x440] sm:$0xff]
                %295 = vst [vmem:[%s149 + $0x240] sm:$0xff] %v294
                %v296 = vld [vmem:[%s148 + $0x448] sm:$0xff]
                %297 = vst [vmem:[%s149 + $0x248] sm:$0xff] %v296
                %v298 = vld [vmem:[%s148 + $0x450] sm:$0xff]
                %299 = vst [vmem:[%s149 + $0x250] sm:$0xff] %v298
                %v300 = vld [vmem:[%s148 + $0x458] sm:$0xff]
                %301 = vst [vmem:[%s149 + $0x258] sm:$0xff] %v300
                %v302 = vld [vmem:[%s148 + $0x460] sm:$0xff]
                %303 = vst [vmem:[%s149 + $0x260] sm:$0xff] %v302
                %v304 = vld [vmem:[%s148 + $0x468] sm:$0xff]
                %305 = vst [vmem:[%s149 + $0x268] sm:$0xff] %v304
                %v306 = vld [vmem:[%s148 + $0x470] sm:$0xff]
                %307 = vst [vmem:[%s149 + $0x270] sm:$0xff] %v306
                %v308 = vld [vmem:[%s148 + $0x478] sm:$0xff]
                %309 = vst [vmem:[%s149 + $0x278] sm:$0xff] %v308
                %v310 = vld [vmem:[%s148 + $0x480] sm:$0xff]
                %311 = vst [vmem:[%s149 + $0x280] sm:$0xff] %v310
                %v312 = vld [vmem:[%s148 + $0x488] sm:$0xff]
                %313 = vst [vmem:[%s149 + $0x288] sm:$0xff] %v312
                %v314 = vld [vmem:[%s148 + $0x490] sm:$0xff]
                %315 = vst [vmem:[%s149 + $0x290] sm:$0xff] %v314
                %v316 = vld [vmem:[%s148 + $0x498] sm:$0xff]
                %317 = vst [vmem:[%s149 + $0x298] sm:$0xff] %v316
                %v318 = vld [vmem:[%s148 + $0x4a0] sm:$0xff]
                %319 = vst [vmem:[%s149 + $0x2a0] sm:$0xff] %v318
                %v320 = vld [vmem:[%s148 + $0x4a8] sm:$0xff]
                %321 = vst [vmem:[%s149 + $0x2a8] sm:$0xff] %v320
                %v322 = vld [vmem:[%s148 + $0x4b0] sm:$0xff]
                %323 = vst [vmem:[%s149 + $0x2b0] sm:$0xff] %v322
                %v324 = vld [vmem:[%s148 + $0x4b8] sm:$0xff]
                %325 = vst [vmem:[%s149 + $0x2b8] sm:$0xff] %v324
                %v326 = vld [vmem:[%s148 + $0x4c0] sm:$0xff]
                %327 = vst [vmem:[%s149 + $0x2c0] sm:$0xff] %v326
                %v328 = vld [vmem:[%s148 + $0x4c8] sm:$0xff]
                %329 = vst [vmem:[%s149 + $0x2c8] sm:$0xff] %v328
                %v330 = vld [vmem:[%s148 + $0x4d0] sm:$0xff]
                %331 = vst [vmem:[%s149 + $0x2d0] sm:$0xff] %v330
                %v332 = vld [vmem:[%s148 + $0x4d8] sm:$0xff]
                %333 = vst [vmem:[%s149 + $0x2d8] sm:$0xff] %v332
                %v334 = vld [vmem:[%s148 + $0x4e0] sm:$0xff]
                %335 = vst [vmem:[%s149 + $0x2e0] sm:$0xff] %v334
                %v336 = vld [vmem:[%s148 + $0x4e8] sm:$0xff]
                %337 = vst [vmem:[%s149 + $0x2e8] sm:$0xff] %v336
                %v338 = vld [vmem:[%s148 + $0x4f0] sm:$0xff]
                %339 = vst [vmem:[%s149 + $0x2f0] sm:$0xff] %v338
                %v340 = vld [vmem:[%s148 + $0x4f8] sm:$0xff]
                %341 = vst [vmem:[%s149 + $0x2f8] sm:$0xff] %v340
                %v342 = vld [vmem:[%s148 + $0x600] sm:$0xff]
                %343 = vst [vmem:[%s149 + $0x300] sm:$0xff] %v342
                %v344 = vld [vmem:[%s148 + $0x608] sm:$0xff]
                %345 = vst [vmem:[%s149 + $0x308] sm:$0xff] %v344
                %v346 = vld [vmem:[%s148 + $0x610] sm:$0xff]
                %347 = vst [vmem:[%s149 + $0x310] sm:$0xff] %v346
                %v348 = vld [vmem:[%s148 + $0x618] sm:$0xff]
                %349 = vst [vmem:[%s149 + $0x318] sm:$0xff] %v348
                %v350 = vld [vmem:[%s148 + $0x620] sm:$0xff]
                %351 = vst [vmem:[%s149 + $0x320] sm:$0xff] %v350
                %v352 = vld [vmem:[%s148 + $0x628] sm:$0xff]
                %353 = vst [vmem:[%s149 + $0x328] sm:$0xff] %v352
                %v354 = vld [vmem:[%s148 + $0x630] sm:$0xff]
                %355 = vst [vmem:[%s149 + $0x330] sm:$0xff] %v354
                %v356 = vld [vmem:[%s148 + $0x638] sm:$0xff]
                %357 = vst [vmem:[%s149 + $0x338] sm:$0xff] %v356
                %v358 = vld [vmem:[%s148 + $0x640] sm:$0xff]
                %359 = vst [vmem:[%s149 + $0x340] sm:$0xff] %v358
                %v360 = vld [vmem:[%s148 + $0x648] sm:$0xff]
                %361 = vst [vmem:[%s149 + $0x348] sm:$0xff] %v360
                %v362 = vld [vmem:[%s148 + $0x650] sm:$0xff]
                %363 = vst [vmem:[%s149 + $0x350] sm:$0xff] %v362
                %v364 = vld [vmem:[%s148 + $0x658] sm:$0xff]
                %365 = vst [vmem:[%s149 + $0x358] sm:$0xff] %v364
                %v366 = vld [vmem:[%s148 + $0x660] sm:$0xff]
                %367 = vst [vmem:[%s149 + $0x360] sm:$0xff] %v366
                %v368 = vld [vmem:[%s148 + $0x668] sm:$0xff]
                %369 = vst [vmem:[%s149 + $0x368] sm:$0xff] %v368
                %v370 = vld [vmem:[%s148 + $0x670] sm:$0xff]
                %371 = vst [vmem:[%s149 + $0x370] sm:$0xff] %v370
                %v372 = vld [vmem:[%s148 + $0x678] sm:$0xff]
                %373 = vst [vmem:[%s149 + $0x378] sm:$0xff] %v372
                %v374 = vld [vmem:[%s148 + $0x680] sm:$0xff]
                %375 = vst [vmem:[%s149 + $0x380] sm:$0xff] %v374
                %v376 = vld [vmem:[%s148 + $0x688] sm:$0xff]
                %377 = vst [vmem:[%s149 + $0x388] sm:$0xff] %v376
                %v378 = vld [vmem:[%s148 + $0x690] sm:$0xff]
                %379 = vst [vmem:[%s149 + $0x390] sm:$0xff] %v378
                %v380 = vld [vmem:[%s148 + $0x698] sm:$0xff]
                %381 = vst [vmem:[%s149 + $0x398] sm:$0xff] %v380
                %v382 = vld [vmem:[%s148 + $0x6a0] sm:$0xff]
                %383 = vst [vmem:[%s149 + $0x3a0] sm:$0xff] %v382
                %v384 = vld [vmem:[%s148 + $0x6a8] sm:$0xff]
                %385 = vst [vmem:[%s149 + $0x3a8] sm:$0xff] %v384
                %v386 = vld [vmem:[%s148 + $0x6b0] sm:$0xff]
                %387 = vst [vmem:[%s149 + $0x3b0] sm:$0xff] %v386
                %v388 = vld [vmem:[%s148 + $0x6b8] sm:$0xff]
                %389 = vst [vmem:[%s149 + $0x3b8] sm:$0xff] %v388
                %v390 = vld [vmem:[%s148 + $0x6c0] sm:$0xff]
                %391 = vst [vmem:[%s149 + $0x3c0] sm:$0xff] %v390
                %v392 = vld [vmem:[%s148 + $0x6c8] sm:$0xff]
                %393 = vst [vmem:[%s149 + $0x3c8] sm:$0xff] %v392
                %v394 = vld [vmem:[%s148 + $0x6d0] sm:$0xff]
                %395 = vst [vmem:[%s149 + $0x3d0] sm:$0xff] %v394
                %v396 = vld [vmem:[%s148 + $0x6d8] sm:$0xff]
                %397 = vst [vmem:[%s149 + $0x3d8] sm:$0xff] %v396
                %v398 = vld [vmem:[%s148 + $0x6e0] sm:$0xff]
                %399 = vst [vmem:[%s149 + $0x3e0] sm:$0xff] %v398
                %v400 = vld [vmem:[%s148 + $0x6e8] sm:$0xff]
                %401 = vst [vmem:[%s149 + $0x3e8] sm:$0xff] %v400
                %v402 = vld [vmem:[%s148 + $0x6f0] sm:$0xff]
                %403 = vst [vmem:[%s149 + $0x3f0] sm:$0xff] %v402
                %v404 = vld [vmem:[%s148 + $0x6f8] sm:$0xff]
                %405 = vst [vmem:[%s149 + $0x3f8] sm:$0xff] %v404
                %v406 = vld [vmem:[%s148 + $0x800] sm:$0xff]
                %407 = vst [vmem:[%s149 + $0x400] sm:$0xff] %v406
                %v408 = vld [vmem:[%s148 + $0x808] sm:$0xff]
                %409 = vst [vmem:[%s149 + $0x408] sm:$0xff] %v408
                %v410 = vld [vmem:[%s148 + $0x810] sm:$0xff]
                %411 = vst [vmem:[%s149 + $0x410] sm:$0xff] %v410
                %v412 = vld [vmem:[%s148 + $0x818] sm:$0xff]
                %413 = vst [vmem:[%s149 + $0x418] sm:$0xff] %v412
                %v414 = vld [vmem:[%s148 + $0x820] sm:$0xff]
                %415 = vst [vmem:[%s149 + $0x420] sm:$0xff] %v414
                %v416 = vld [vmem:[%s148 + $0x828] sm:$0xff]
                %417 = vst [vmem:[%s149 + $0x428] sm:$0xff] %v416
                %v418 = vld [vmem:[%s148 + $0x830] sm:$0xff]
                %419 = vst [vmem:[%s149 + $0x430] sm:$0xff] %v418
                %v420 = vld [vmem:[%s148 + $0x838] sm:$0xff]
                %421 = vst [vmem:[%s149 + $0x438] sm:$0xff] %v420
                %v422 = vld [vmem:[%s148 + $0x840] sm:$0xff]
                %423 = vst [vmem:[%s149 + $0x440] sm:$0xff] %v422
                %v424 = vld [vmem:[%s148 + $0x848] sm:$0xff]
                %425 = vst [vmem:[%s149 + $0x448] sm:$0xff] %v424
                %v426 = vld [vmem:[%s148 + $0x850] sm:$0xff]
                %427 = vst [vmem:[%s149 + $0x450] sm:$0xff] %v426
                %v428 = vld [vmem:[%s148 + $0x858] sm:$0xff]
                %429 = vst [vmem:[%s149 + $0x458] sm:$0xff] %v428
                %v430 = vld [vmem:[%s148 + $0x860] sm:$0xff]
                %431 = vst [vmem:[%s149 + $0x460] sm:$0xff] %v430
                %v432 = vld [vmem:[%s148 + $0x868] sm:$0xff]
                %433 = vst [vmem:[%s149 + $0x468] sm:$0xff] %v432
                %v434 = vld [vmem:[%s148 + $0x870] sm:$0xff]
                %435 = vst [vmem:[%s149 + $0x470] sm:$0xff] %v434
                %v436 = vld [vmem:[%s148 + $0x878] sm:$0xff]
                %437 = vst [vmem:[%s149 + $0x478] sm:$0xff] %v436
                %v438 = vld [vmem:[%s148 + $0x880] sm:$0xff]
                %439 = vst [vmem:[%s149 + $0x480] sm:$0xff] %v438
                %v440 = vld [vmem:[%s148 + $0x888] sm:$0xff]
                %441 = vst [vmem:[%s149 + $0x488] sm:$0xff] %v440
                %v442 = vld [vmem:[%s148 + $0x890] sm:$0xff]
                %443 = vst [vmem:[%s149 + $0x490] sm:$0xff] %v442
                %v444 = vld [vmem:[%s148 + $0x898] sm:$0xff]
                %445 = vst [vmem:[%s149 + $0x498] sm:$0xff] %v444
                %v446 = vld [vmem:[%s148 + $0x8a0] sm:$0xff]
                %447 = vst [vmem:[%s149 + $0x4a0] sm:$0xff] %v446
                %v448 = vld [vmem:[%s148 + $0x8a8] sm:$0xff]
                %449 = vst [vmem:[%s149 + $0x4a8] sm:$0xff] %v448
                %v450 = vld [vmem:[%s148 + $0x8b0] sm:$0xff]
                %451 = vst [vmem:[%s149 + $0x4b0] sm:$0xff] %v450
                %v452 = vld [vmem:[%s148 + $0x8b8] sm:$0xff]
                %453 = vst [vmem:[%s149 + $0x4b8] sm:$0xff] %v452
                %v454 = vld [vmem:[%s148 + $0x8c0] sm:$0xff]
                %455 = vst [vmem:[%s149 + $0x4c0] sm:$0xff] %v454
                %v456 = vld [vmem:[%s148 + $0x8c8] sm:$0xff]
                %457 = vst [vmem:[%s149 + $0x4c8] sm:$0xff] %v456
                %v458 = vld [vmem:[%s148 + $0x8d0] sm:$0xff]
                %459 = vst [vmem:[%s149 + $0x4d0] sm:$0xff] %v458
                %v460 = vld [vmem:[%s148 + $0x8d8] sm:$0xff]
                %461 = vst [vmem:[%s149 + $0x4d8] sm:$0xff] %v460
                %v462 = vld [vmem:[%s148 + $0x8e0] sm:$0xff]
                %463 = vst [vmem:[%s149 + $0x4e0] sm:$0xff] %v462
                %v464 = vld [vmem:[%s148 + $0x8e8] sm:$0xff]
                %465 = vst [vmem:[%s149 + $0x4e8] sm:$0xff] %v464
                %v466 = vld [vmem:[%s148 + $0x8f0] sm:$0xff]
                %467 = vst [vmem:[%s149 + $0x4f0] sm:$0xff] %v466
                %v468 = vld [vmem:[%s148 + $0x8f8] sm:$0xff]
                %469 = vst [vmem:[%s149 + $0x4f8] sm:$0xff] %v468
              $region41: #{decoder_forward.9} parent=35 // loop_footer
                %s147 = sadd.s32 1, %s143
              $region42: #{decoder_forward.9} parent=35 // loop_footer_branch
                %142 = sbr.rel target = $region38
              $region43: #{decoder_forward.9} parent=35 // loop_exit
                _
            $region36: #{decoder_forward.9} parent=31 // pred_fallthru
              _
            // Predicated region
            $region44: #{decoder_forward.9} parent=31 // pred_check
              _
            $region45: #{decoder_forward.9} parent=31 // pred_check_branch
              %471 = sbr.rel target = $region47
            $region46: #{decoder_forward.9} parent=31 // pred_region
              _
            $region47: #{decoder_forward.9} parent=31 // pred_fallthru
              _
          $region32: #{decoder_forward.9} parent=27 // pred_fallthru
            _
          %472 = vnop
        $region28: #{decoder_forward.9} parent=23 // pred_fallthru
          _
      $region24: #{decoder_forward.9} parent=5 // pred_fallthru
        _
      %p473 = scmp.le.s32.totalorder 1, %s9
      %p474 = scmp.lt.s32.totalorder %s9, 3
      %p475 = pnand %p473, %p474
      %p476 = pneg %p475
      // Predicated region
      $region48: #{decoder_forward.9} parent=5 // pred_check
        _
      $region49: #{decoder_forward.9} parent=5 // pred_check_branch
        %478 = sbr.rel (%p475) target = $region51
      $region50: #{decoder_forward.9} parent=5 // pred_region
        %s479 = ssub.s32 %s9, 1
        %s480 = sand.u32 %s22, 1
        %s481 = sand.u32 %s22, 1
        %s482 = smul.addr %s481, 1280
        %s483 = scalar_lea.vmem [#allocation2], %s482
        // Predicated region
        $region52: #{decoder_forward.9} parent=50 // pred_check
          %p484 = pneg %p35
        $region53: #{decoder_forward.9} parent=50 // pred_check_branch
          %486 = sbr.rel (%p484) target = $region55
        $region54: #{decoder_forward.9} parent=50 // pred_region
          _
        $region55: #{decoder_forward.9} parent=50 // pred_fallthru
          _
        %s487 = sand.u32 %s22, 1
        %s488 = sand.u32 %s22, 1
        %s489 = smul.addr %s488, 1280
        %s490 = scalar_lea.vmem [#allocation2], %s489
        %p491 = pneg %p35
        %p492 = pneg %p32
        %p493 = pneg %p56
        %p494 = pneg %p53
        %p495 = pneg %p77
        %p496 = pneg %p74
        %p497 = pneg %p103
        %p498 = pneg %p100
        %s499 = sand.u32 %s90, 1
        %s500 = sand.u32 %s90, 1
        %s501 = smul.addr %s500, 512
        %s502 = scalar_lea.vmem [#allocation3], %s501
        %s503 = smul.u32 32, %s14
        %s504 = smul.u32 32, %s14
        %v505 = vld [vmem:[%s1] sm:$0xff]
        %v506 = vld [vmem:[%s1 + $0x8] sm:$0xf]
        %v507 = vld [vmem:[%s483] sm:$0xff]
        %v508 = vld [vmem:[%s483 + $0x8] sm:$0xff]
        %v509 = vld [vmem:[%s483 + $0x10] sm:$0xff]
        %v510 = vld [vmem:[%s483 + $0x18] sm:$0xff]
        %v511 = vld [vmem:[%s483 + $0x20] sm:$0xff]
        %v512 = vld [vmem:[%s483 + $0x28] sm:$0xff]
        %v513 = vld [vmem:[%s483 + $0x30] sm:$0xff]
        %v514 = vld [vmem:[%s483 + $0x38] sm:$0xff]
        %v515 = vld [vmem:[%s483 + $0x40] sm:$0xff]
        %v516 = vld [vmem:[%s483 + $0x48] sm:$0xff]
        %v517 = vld [vmem:[%s483 + $0x50] sm:$0xff]
        %v518 = vld [vmem:[%s483 + $0x58] sm:$0xff]
        %v519 = vld [vmem:[%s483 + $0x60] sm:$0xff]
        %v520 = vld [vmem:[%s483 + $0x68] sm:$0xff]
        %v521 = vld [vmem:[%s483 + $0x70] sm:$0xff]
        %v522 = vld [vmem:[%s483 + $0x78] sm:$0xff]
        %v523 = vld [vmem:[%s483 + $0x80] sm:$0xff]
        %v524 = vld [vmem:[%s483 + $0x88] sm:$0xff]
        %v525 = vld [vmem:[%s483 + $0x90] sm:$0xff]
        %v526 = vld [vmem:[%s483 + $0x98] sm:$0xff]
        %v527 = vld [vmem:[%s483 + $0xa0] sm:$0xff]
        %v528 = vld [vmem:[%s483 + $0xa8] sm:$0xff]
        %v529 = vld [vmem:[%s483 + $0xb0] sm:$0xff]
        %v530 = vld [vmem:[%s483 + $0xb8] sm:$0xff]
        %v531 = vld [vmem:[%s483 + $0xc0] sm:$0xff]
        %v532 = vld [vmem:[%s483 + $0xc8] sm:$0xff]
        %v533 = vld [vmem:[%s483 + $0xd0] sm:$0xff]
        %v534 = vld [vmem:[%s483 + $0xd8] sm:$0xff]
        %v535 = vld [vmem:[%s483 + $0xe0] sm:$0xff]
        %v536 = vld [vmem:[%s483 + $0xe8] sm:$0xff]
        %v537 = vld [vmem:[%s483 + $0xf0] sm:$0xff]
        %v538 = vld [vmem:[%s483 + $0xf8] sm:$0xff]
        %v539 = vld [vmem:[%s483 + $0x100] sm:$0xff]
        %v540 = vld [vmem:[%s483 + $0x108] sm:$0xff]
        %v541 = vld [vmem:[%s483 + $0x110] sm:$0xff]
        %v542 = vld [vmem:[%s483 + $0x118] sm:$0xff]
        %v543 = vld [vmem:[%s483 + $0x120] sm:$0xff]
        %v544 = vld [vmem:[%s483 + $0x128] sm:$0xff]
        %v545 = vld [vmem:[%s483 + $0x130] sm:$0xff]
        %v546 = vld [vmem:[%s483 + $0x138] sm:$0xff]
        %v547 = vld [vmem:[%s483 + $0x140] sm:$0xff]
        %v548 = vld [vmem:[%s483 + $0x148] sm:$0xff]
        %v549 = vld [vmem:[%s483 + $0x150] sm:$0xff]
        %v550 = vld [vmem:[%s483 + $0x158] sm:$0xff]
        %v551 = vld [vmem:[%s483 + $0x160] sm:$0xff]
        %v552 = vld [vmem:[%s483 + $0x168] sm:$0xff]
        %v553 = vld [vmem:[%s483 + $0x170] sm:$0xff]
        %v554 = vld [vmem:[%s483 + $0x178] sm:$0xff]
        %v555 = vld [vmem:[%s483 + $0x180] sm:$0xff]
        %v556 = vld [vmem:[%s483 + $0x188] sm:$0xff]
        %v557 = vld [vmem:[%s483 + $0x190] sm:$0xff]
        %v558 = vld [vmem:[%s483 + $0x198] sm:$0xff]
        %v559 = vld [vmem:[%s483 + $0x1a0] sm:$0xff]
        %v560 = vld [vmem:[%s483 + $0x1a8] sm:$0xff]
        %v561 = vld [vmem:[%s483 + $0x1b0] sm:$0xff]
        %v562 = vld [vmem:[%s483 + $0x1b8] sm:$0xff]
        %v563 = vld [vmem:[%s483 + $0x1c0] sm:$0xff]
        %v564 = vld [vmem:[%s483 + $0x1c8] sm:$0xff]
        %v565 = vld [vmem:[%s483 + $0x1d0] sm:$0xff]
        %v566 = vld [vmem:[%s483 + $0x1d8] sm:$0xff]
        %v567 = vld [vmem:[%s483 + $0x1e0] sm:$0xff]
        %v568 = vld [vmem:[%s483 + $0x1e8] sm:$0xff]
        %v569 = vld [vmem:[%s483 + $0x1f0] sm:$0xff]
        %v570 = vld [vmem:[%s483 + $0x1f8] sm:$0xff]
        %v571 = vld [vmem:[%s483 + $0x200] sm:$0xff]
        %v572 = vld [vmem:[%s483 + $0x208] sm:$0xff]
        %v573 = vld [vmem:[%s483 + $0x210] sm:$0xff]
        %v574 = vld [vmem:[%s483 + $0x218] sm:$0xff]
        %v575 = vld [vmem:[%s483 + $0x220] sm:$0xff]
        %v576 = vld [vmem:[%s483 + $0x228] sm:$0xff]
        %v577 = vld [vmem:[%s483 + $0x230] sm:$0xff]
        %v578 = vld [vmem:[%s483 + $0x238] sm:$0xff]
        %v579 = vld [vmem:[%s483 + $0x240] sm:$0xff]
        %v580 = vld [vmem:[%s483 + $0x248] sm:$0xff]
        %v581 = vld [vmem:[%s483 + $0x250] sm:$0xff]
        %v582 = vld [vmem:[%s483 + $0x258] sm:$0xff]
        %v583 = vld [vmem:[%s483 + $0x260] sm:$0xff]
        %v584 = vld [vmem:[%s483 + $0x268] sm:$0xff]
        %v585 = vld [vmem:[%s483 + $0x270] sm:$0xff]
        %v586 = vld [vmem:[%s483 + $0x278] sm:$0xff]
        %v587 = vld [vmem:[%s483 + $0x280] sm:$0xff]
        %v588 = vld [vmem:[%s483 + $0x288] sm:$0xff]
        %v589 = vld [vmem:[%s483 + $0x290] sm:$0xff]
        %v590 = vld [vmem:[%s483 + $0x298] sm:$0xff]
        %v591 = vld [vmem:[%s483 + $0x2a0] sm:$0xff]
        %v592 = vld [vmem:[%s483 + $0x2a8] sm:$0xff]
        %v593 = vld [vmem:[%s483 + $0x2b0] sm:$0xff]
        %v594 = vld [vmem:[%s483 + $0x2b8] sm:$0xff]
        %v595 = vld [vmem:[%s483 + $0x2c0] sm:$0xff]
        %v596 = vld [vmem:[%s483 + $0x2c8] sm:$0xff]
        %v597 = vld [vmem:[%s483 + $0x2d0] sm:$0xff]
        %v598 = vld [vmem:[%s483 + $0x2d8] sm:$0xff]
        %v599 = vld [vmem:[%s483 + $0x2e0] sm:$0xff]
        %v600 = vld [vmem:[%s483 + $0x2e8] sm:$0xff]
        %v601 = vld [vmem:[%s483 + $0x2f0] sm:$0xff]
        %v602 = vld [vmem:[%s483 + $0x2f8] sm:$0xff]
        %v603 = vld [vmem:[%s483 + $0x300] sm:$0xff]
        %v604 = vld [vmem:[%s483 + $0x308] sm:$0xff]
        %v605 = vld [vmem:[%s483 + $0x310] sm:$0xff]
        %v606 = vld [vmem:[%s483 + $0x318] sm:$0xff]
        %v607 = vld [vmem:[%s483 + $0x320] sm:$0xff]
        %v608 = vld [vmem:[%s483 + $0x328] sm:$0xff]
        %v609 = vld [vmem:[%s483 + $0x330] sm:$0xff]
        %v610 = vld [vmem:[%s483 + $0x338] sm:$0xff]
        %v611 = vld [vmem:[%s483 + $0x340] sm:$0xff]
        %v612 = vld [vmem:[%s483 + $0x348] sm:$0xff]
        %v613 = vld [vmem:[%s483 + $0x350] sm:$0xff]
        %v614 = vld [vmem:[%s483 + $0x358] sm:$0xff]
        %v615 = vld [vmem:[%s483 + $0x360] sm:$0xff]
        %v616 = vld [vmem:[%s483 + $0x368] sm:$0xff]
        %v617 = vld [vmem:[%s483 + $0x370] sm:$0xff]
        %v618 = vld [vmem:[%s483 + $0x378] sm:$0xff]
        %v619 = vld [vmem:[%s483 + $0x380] sm:$0xff]
        %v620 = vld [vmem:[%s483 + $0x388] sm:$0xff]
        %v621 = vld [vmem:[%s483 + $0x390] sm:$0xff]
        %v622 = vld [vmem:[%s483 + $0x398] sm:$0xff]
        %v623 = vld [vmem:[%s483 + $0x3a0] sm:$0xff]
        %v624 = vld [vmem:[%s483 + $0x3a8] sm:$0xff]
        %v625 = vld [vmem:[%s483 + $0x3b0] sm:$0xff]
        %v626 = vld [vmem:[%s483 + $0x3b8] sm:$0xff]
        %v627 = vld [vmem:[%s483 + $0x3c0] sm:$0xff]
        %v628 = vld [vmem:[%s483 + $0x3c8] sm:$0xff]
        %v629 = vld [vmem:[%s483 + $0x3d0] sm:$0xff]
        %v630 = vld [vmem:[%s483 + $0x3d8] sm:$0xff]
        %v631 = vld [vmem:[%s483 + $0x3e0] sm:$0xff]
        %v632 = vld [vmem:[%s483 + $0x3e8] sm:$0xff]
        %v633 = vld [vmem:[%s483 + $0x3f0] sm:$0xff]
        %v634 = vld [vmem:[%s483 + $0x3f8] sm:$0xff]
        %v635 = vld [vmem:[%s483 + $0x400] sm:$0xf]
        %v636 = vld [vmem:[%s483 + $0x408] sm:$0xf]
        %v637 = vld [vmem:[%s483 + $0x410] sm:$0xf]
        %v638 = vld [vmem:[%s483 + $0x418] sm:$0xf]
        %v639 = vld [vmem:[%s483 + $0x420] sm:$0xf]
        %v640 = vld [vmem:[%s483 + $0x428] sm:$0xf]
        %v641 = vld [vmem:[%s483 + $0x430] sm:$0xf]
        %v642 = vld [vmem:[%s483 + $0x438] sm:$0xf]
        %v643 = vld [vmem:[%s483 + $0x440] sm:$0xf]
        %v644 = vld [vmem:[%s483 + $0x448] sm:$0xf]
        %v645 = vld [vmem:[%s483 + $0x450] sm:$0xf]
        %v646 = vld [vmem:[%s483 + $0x458] sm:$0xf]
        %v647 = vld [vmem:[%s483 + $0x460] sm:$0xf]
        %v648 = vld [vmem:[%s483 + $0x468] sm:$0xf]
        %v649 = vld [vmem:[%s483 + $0x470] sm:$0xf]
        %v650 = vld [vmem:[%s483 + $0x478] sm:$0xf]
        %v651 = vld [vmem:[%s483 + $0x480] sm:$0xf]
        %v652 = vld [vmem:[%s483 + $0x488] sm:$0xf]
        %v653 = vld [vmem:[%s483 + $0x490] sm:$0xf]
        %v654 = vld [vmem:[%s483 + $0x498] sm:$0xf]
        %v655 = vld [vmem:[%s483 + $0x4a0] sm:$0xf]
        %v656 = vld [vmem:[%s483 + $0x4a8] sm:$0xf]
        %v657 = vld [vmem:[%s483 + $0x4b0] sm:$0xf]
        %v658 = vld [vmem:[%s483 + $0x4b8] sm:$0xf]
        %v659 = vld [vmem:[%s483 + $0x4c0] sm:$0xf]
        %v660 = vld [vmem:[%s483 + $0x4c8] sm:$0xf]
        %v661 = vld [vmem:[%s483 + $0x4d0] sm:$0xf]
        %v662 = vld [vmem:[%s483 + $0x4d8] sm:$0xf]
        %v663 = vld [vmem:[%s483 + $0x4e0] sm:$0xf]
        %v664 = vld [vmem:[%s483 + $0x4e8] sm:$0xf]
        %v665 = vld [vmem:[%s483 + $0x4f0] sm:$0xf]
        %v666 = vld [vmem:[%s483 + $0x4f8] sm:$0xf]
        %v667 = vld [vmem:[%s2] sm:$0xff]
        %v668 = vld [vmem:[%s2 + $0x8] sm:$0xf]
        %670 = vset.pattern.permute.xlu0 0
        %671 = vperm.xlu0 %670, %v667
        %v672 = vpop.permute.xlu0 %671
        %675 = vset.pattern.permute.xlu0 0
        %676 = vperm.xlu0 %675, %v668
        %v677 = vpop.permute.xlu0 %676
        %vm679 = vcmask 293888
        %v681 = vsel %vm679, %v505, 0
        %v684 = vsel %vm679, %v506, 0
        %vm686 = vcmask 1043456
        %v688 = vsel %vm686, %v635, 0
        %v691 = vsel %vm686, %v636, 0
        %v694 = vsel %vm686, %v637, 0
        %v697 = vsel %vm686, %v638, 0
        %v700 = vsel %vm686, %v639, 0
        %v703 = vsel %vm686, %v640, 0
        %v706 = vsel %vm686, %v641, 0
        %v709 = vsel %vm686, %v642, 0
        %v712 = vsel %vm686, %v643, 0
        %v715 = vsel %vm686, %v644, 0
        %v718 = vsel %vm686, %v645, 0
        %v721 = vsel %vm686, %v646, 0
        %v724 = vsel %vm686, %v647, 0
        %v727 = vsel %vm686, %v648, 0
        %v730 = vsel %vm686, %v649, 0
        %v733 = vsel %vm686, %v650, 0
        %v736 = vsel %vm686, %v651, 0
        %v739 = vsel %vm686, %v652, 0
        %v742 = vsel %vm686, %v653, 0
        %v745 = vsel %vm686, %v654, 0
        %v748 = vsel %vm686, %v655, 0
        %v751 = vsel %vm686, %v656, 0
        %v754 = vsel %vm686, %v657, 0
        %v757 = vsel %vm686, %v658, 0
        %v760 = vsel %vm686, %v659, 0
        %v763 = vsel %vm686, %v660, 0
        %v766 = vsel %vm686, %v661, 0
        %v769 = vsel %vm686, %v662, 0
        %v772 = vsel %vm686, %v663, 0
        %v775 = vsel %vm686, %v664, 0
        %v778 = vsel %vm686, %v665, 0
        %v781 = vsel %vm686, %v666, 0
        %783 = vmatprep.subr.mxu0 0.0
        %784 = vmatpush1.msra.mxu0 0.0
        %785 = vmatprep.subr.mxu0 0.0
        %786 = vmatpush1.msra.mxu0 0.0
        %787 = vmatprep.subr.mxu0 0.0
        %788 = vmatpush1.msra.mxu0 0.0
        %789 = vmatprep.subr.mxu0 0.0
        %790 = vmatpush1.msra.mxu0 0.0
        %791 = vmatprep.subr.mxu0 0.0
        %792 = vmatpush1.msra.mxu0 0.0
        %793 = vmatprep.subr.mxu0 0.0
        %794 = vmatpush1.msra.mxu0 0.0
        %795 = vmatprep.subr.mxu0 0.0
        %796 = vmatpush1.msra.mxu0 0.0
        %797 = vmatprep.subr.mxu0 0.0
        %798 = vmatpush1.msra.mxu0 0.0
        %799 = vmatprep.subr.mxu0 0.0
        %800 = vmatpush1.msra.mxu0 0.0
        %801 = vmatprep.subr.mxu0 0.0
        %802 = vmatpush1.msra.mxu0 0.0
        %803 = vmatprep.subr.mxu0 0.0
        %804 = vmatpush1.msra.mxu0 0.0
        %805 = vmatprep.subr.mxu0 %v691
        %806 = vmatpush1.msra.mxu0 %v688
        %807 = vmatprep.subr.mxu0 %v604
        %808 = vmatpush1.msra.mxu0 %v603
        %809 = vmatprep.subr.mxu0 %v572
        %810 = vmatpush1.msra.mxu0 %v571
        %811 = vmatprep.subr.mxu0 %v540
        %812 = vmatpush1.msra.mxu0 %v539
        %813 = vmatprep.subr.mxu0 %v508
        %814 = vmatpush1.msra.mxu0 %v507
        %815 = vmatprep.subr.mxu0 0.0
        %816 = vmatpush2.msra.mxu0 0.0
        %817 = vmatprep.subr.mxu0 0.0
        %818 = vmatpush2.msra.mxu0 0.0
        %819 = vmatprep.subr.mxu0 0.0
        %820 = vmatpush2.msra.mxu0 0.0
        %821 = vmatprep.subr.mxu0 0.0
        %822 = vmatpush2.msra.mxu0 0.0
        %823 = vmatprep.subr.mxu0 0.0
        %824 = vmatpush2.msra.mxu0 0.0
        %825 = vmatprep.subr.mxu0 0.0
        %826 = vmatpush2.msra.mxu0 0.0
        %827 = vmatprep.subr.mxu0 0.0
        %828 = vmatpush2.msra.mxu0 0.0
        %829 = vmatprep.subr.mxu0 0.0
        %830 = vmatpush2.msra.mxu0 0.0
        %831 = vmatprep.subr.mxu0 0.0
        %832 = vmatpush2.msra.mxu0 0.0
        %833 = vmatprep.subr.mxu0 0.0
        %834 = vmatpush2.msra.mxu0 0.0
        %835 = vmatprep.subr.mxu0 0.0
        %836 = vmatpush2.msra.mxu0 0.0
        %837 = vmatprep.subr.mxu0 0.0
        %838 = vmatpush2.msra.mxu0 0.0
        %839 = vmatprep.subr.mxu0 0.0
        %840 = vmatpush2.msra.mxu0 0.0
        %841 = vmatprep.subr.mxu0 0.0
        %842 = vmatpush2.msra.mxu0 0.0
        %843 = vmatprep.subr.mxu0 0.0
        %844 = vmatpush2.msra.mxu0 0.0
        %845 = vmatprep.subr.mxu0 0.0
        %846 = vmatpush2.msra.mxu0 0.0
        %847 = vmatprep.mubr.f32.mxu0 0.0
        %848 = vmatmul.mubr.f32.gmra.mxu0 %v681
        %v849 = vpop.f32.mrf.mxu0
        %v850 = vadd.f32 %v672, %v849
        %v851 = vpop.f32.mrf.mxu0
        %v852 = vadd.f32 %v672, %v851
        %853 = vmatprep.mubr.f32.mxu0 0.0
        %854 = vmatmul.mubr.f32.gmra.mxu0 %v684
        %v855 = vpop.f32.mrf.mxu0
        %v856 = vadd.f32 %v677, %v855
        %v857 = vpop.f32.mrf.mxu0
        %v858 = vadd.f32 %v677, %v857
        %859 = vdwg.mxu0
        %860 = vmatprep.subr.mxu0 0.0
        %861 = vmatpush1.msra.mxu0 0.0
        %862 = vmatprep.subr.mxu0 0.0
        %863 = vmatpush1.msra.mxu0 0.0
        %864 = vmatprep.subr.mxu0 0.0
        %865 = vmatpush1.msra.mxu0 0.0
        %866 = vmatprep.subr.mxu0 0.0
        %867 = vmatpush1.msra.mxu0 0.0
        %868 = vmatprep.subr.mxu0 0.0
        %869 = vmatpush1.msra.mxu0 0.0
        %870 = vmatprep.subr.mxu0 0.0
        %871 = vmatpush1.msra.mxu0 0.0
        %872 = vmatprep.subr.mxu0 0.0
        %873 = vmatpush1.msra.mxu0 0.0
        %874 = vmatprep.subr.mxu0 0.0
        %875 = vmatpush1.msra.mxu0 0.0
        %876 = vmatprep.subr.mxu0 0.0
        %877 = vmatpush1.msra.mxu0 0.0
        %878 = vmatprep.subr.mxu0 0.0
        %879 = vmatpush1.msra.mxu0 0.0
        %880 = vmatprep.subr.mxu0 0.0
        %881 = vmatpush1.msra.mxu0 0.0
        %882 = vmatprep.subr.mxu0 %v697
        %883 = vmatpush1.msra.mxu0 %v694
        %884 = vmatprep.subr.mxu0 %v606
        %885 = vmatpush1.msra.mxu0 %v605
        %886 = vmatprep.subr.mxu0 %v574
        %887 = vmatpush1.msra.mxu0 %v573
        %888 = vmatprep.subr.mxu0 %v542
        %889 = vmatpush1.msra.mxu0 %v541
        %890 = vmatprep.subr.mxu0 %v510
        %891 = vmatpush1.msra.mxu0 %v509
        %892 = vmatprep.subr.mxu0 0.0
        %893 = vmatpush2.msra.mxu0 0.0
        %894 = vmatprep.subr.mxu0 0.0
        %895 = vmatpush2.msra.mxu0 0.0
        %896 = vmatprep.subr.mxu0 0.0
        %897 = vmatpush2.msra.mxu0 0.0
        %898 = vmatprep.subr.mxu0 0.0
        %899 = vmatpush2.msra.mxu0 0.0
        %900 = vmatprep.subr.mxu0 0.0
        %901 = vmatpush2.msra.mxu0 0.0
        %902 = vmatprep.subr.mxu0 0.0
        %903 = vmatpush2.msra.mxu0 0.0
        %904 = vmatprep.subr.mxu0 0.0
        %905 = vmatpush2.msra.mxu0 0.0
        %906 = vmatprep.subr.mxu0 0.0
        %907 = vmatpush2.msra.mxu0 0.0
        %908 = vmatprep.subr.mxu0 0.0
        %909 = vmatpush2.msra.mxu0 0.0
        %910 = vmatprep.subr.mxu0 0.0
        %911 = vmatpush2.msra.mxu0 0.0
        %912 = vmatprep.subr.mxu0 0.0
        %913 = vmatpush2.msra.mxu0 0.0
        %914 = vmatprep.subr.mxu0 0.0
        %915 = vmatpush2.msra.mxu0 0.0
        %916 = vmatprep.subr.mxu0 0.0
        %917 = vmatpush2.msra.mxu0 0.0
        %918 = vmatprep.subr.mxu0 0.0
        %919 = vmatpush2.msra.mxu0 0.0
        %920 = vmatprep.subr.mxu0 0.0
        %921 = vmatpush2.msra.mxu0 0.0
        %922 = vmatprep.subr.mxu0 0.0
        %923 = vmatpush2.msra.mxu0 0.0
        %924 = vmatprep.mubr.f32.mxu0 0.0
        %925 = vmatmul.mubr.f32.gmra.mxu0 %v681
        %v926 = vpop.f32.mrf.mxu0
        %v927 = vadd.f32 %v672, %v926
        %v928 = vpop.f32.mrf.mxu0
        %v929 = vadd.f32 %v672, %v928
        %930 = vmatprep.mubr.f32.mxu0 0.0
        %931 = vmatmul.mubr.f32.gmra.mxu0 %v684
        %v932 = vpop.f32.mrf.mxu0
        %v933 = vadd.f32 %v677, %v932
        %v934 = vpop.f32.mrf.mxu0
        %v935 = vadd.f32 %v677, %v934
        %936 = vdwg.mxu0
        %937 = vmatprep.subr.mxu0 0.0
        %938 = vmatpush1.msra.mxu0 0.0
        %939 = vmatprep.subr.mxu0 0.0
        %940 = vmatpush1.msra.mxu0 0.0
        %941 = vmatprep.subr.mxu0 0.0
        %942 = vmatpush1.msra.mxu0 0.0
        %943 = vmatprep.subr.mxu0 0.0
        %944 = vmatpush1.msra.mxu0 0.0
        %945 = vmatprep.subr.mxu0 0.0
        %946 = vmatpush1.msra.mxu0 0.0
        %947 = vmatprep.subr.mxu0 0.0
        %948 = vmatpush1.msra.mxu0 0.0
        %949 = vmatprep.subr.mxu0 0.0
        %950 = vmatpush1.msra.mxu0 0.0
        %951 = vmatprep.subr.mxu0 0.0
        %952 = vmatpush1.msra.mxu0 0.0
        %953 = vmatprep.subr.mxu0 0.0
        %954 = vmatpush1.msra.mxu0 0.0
        %955 = vmatprep.subr.mxu0 0.0
        %956 = vmatpush1.msra.mxu0 0.0
        %957 = vmatprep.subr.mxu0 0.0
        %958 = vmatpush1.msra.mxu0 0.0
        %959 = vmatprep.subr.mxu0 %v703
        %960 = vmatpush1.msra.mxu0 %v700
        %961 = vmatprep.subr.mxu0 %v608
        %962 = vmatpush1.msra.mxu0 %v607
        %963 = vmatprep.subr.mxu0 %v576
        %964 = vmatpush1.msra.mxu0 %v575
        %965 = vmatprep.subr.mxu0 %v544
        %966 = vmatpush1.msra.mxu0 %v543
        %967 = vmatprep.subr.mxu0 %v512
        %968 = vmatpush1.msra.mxu0 %v511
        %969 = vmatprep.subr.mxu0 0.0
        %970 = vmatpush2.msra.mxu0 0.0
        %971 = vmatprep.subr.mxu0 0.0
        %972 = vmatpush2.msra.mxu0 0.0
        %973 = vmatprep.subr.mxu0 0.0
        %974 = vmatpush2.msra.mxu0 0.0
        %975 = vmatprep.subr.mxu0 0.0
        %976 = vmatpush2.msra.mxu0 0.0
        %977 = vmatprep.subr.mxu0 0.0
        %978 = vmatpush2.msra.mxu0 0.0
        %979 = vmatprep.subr.mxu0 0.0
        %980 = vmatpush2.msra.mxu0 0.0
        %981 = vmatprep.subr.mxu0 0.0
        %982 = vmatpush2.msra.mxu0 0.0
        %983 = vmatprep.subr.mxu0 0.0
        %984 = vmatpush2.msra.mxu0 0.0
        %985 = vmatprep.subr.mxu0 0.0
        %986 = vmatpush2.msra.mxu0 0.0
        %987 = vmatprep.subr.mxu0 0.0
        %988 = vmatpush2.msra.mxu0 0.0
        %989 = vmatprep.subr.mxu0 0.0
        %990 = vmatpush2.msra.mxu0 0.0
        %991 = vmatprep.subr.mxu0 0.0
        %992 = vmatpush2.msra.mxu0 0.0
        %993 = vmatprep.subr.mxu0 0.0
        %994 = vmatpush2.msra.mxu0 0.0
        %995 = vmatprep.subr.mxu0 0.0
        %996 = vmatpush2.msra.mxu0 0.0
        %997 = vmatprep.subr.mxu0 0.0
        %998 = vmatpush2.msra.mxu0 0.0
        %999 = vmatprep.subr.mxu0 0.0
        %1000 = vmatpush2.msra.mxu0 0.0
        %1001 = vmatprep.mubr.f32.mxu0 0.0
        %1002 = vmatmul.mubr.f32.gmra.mxu0 %v681
        %v1003 = vpop.f32.mrf.mxu0
        %v1004 = vadd.f32 %v672, %v1003
        %v1005 = vpop.f32.mrf.mxu0
        %v1006 = vadd.f32 %v672, %v1005
        %1007 = vmatprep.mubr.f32.mxu0 0.0
        %1008 = vmatmul.mubr.f32.gmra.mxu0 %v684
        %v1009 = vpop.f32.mrf.mxu0
        %v1010 = vadd.f32 %v677, %v1009
        %v1011 = vpop.f32.mrf.mxu0
        %v1012 = vadd.f32 %v677, %v1011
        %1013 = vdwg.mxu0
        %1014 = vmatprep.subr.mxu0 0.0
        %1015 = vmatpush1.msra.mxu0 0.0
        %1016 = vmatprep.subr.mxu0 0.0
        %1017 = vmatpush1.msra.mxu0 0.0
        %1018 = vmatprep.subr.mxu0 0.0
        %1019 = vmatpush1.msra.mxu0 0.0
        %1020 = vmatprep.subr.mxu0 0.0
        %1021 = vmatpush1.msra.mxu0 0.0
        %1022 = vmatprep.subr.mxu0 0.0
        %1023 = vmatpush1.msra.mxu0 0.0
        %1024 = vmatprep.subr.mxu0 0.0
        %1025 = vmatpush1.msra.mxu0 0.0
        %1026 = vmatprep.subr.mxu0 0.0
        %1027 = vmatpush1.msra.mxu0 0.0
        %1028 = vmatprep.subr.mxu0 0.0
        %1029 = vmatpush1.msra.mxu0 0.0
        %1030 = vmatprep.subr.mxu0 0.0
        %1031 = vmatpush1.msra.mxu0 0.0
        %1032 = vmatprep.subr.mxu0 0.0
        %1033 = vmatpush1.msra.mxu0 0.0
        %1034 = vmatprep.subr.mxu0 0.0
        %1035 = vmatpush1.msra.mxu0 0.0
        %1036 = vmatprep.subr.mxu0 %v709
        %1037 = vmatpush1.msra.mxu0 %v706
        %1038 = vmatprep.subr.mxu0 %v610
        %1039 = vmatpush1.msra.mxu0 %v609
        %1040 = vmatprep.subr.mxu0 %v578
        %1041 = vmatpush1.msra.mxu0 %v577
        %1042 = vmatprep.subr.mxu0 %v546
        %1043 = vmatpush1.msra.mxu0 %v545
        %1044 = vmatprep.subr.mxu0 %v514
        %1045 = vmatpush1.msra.mxu0 %v513
        %1046 = vmatprep.subr.mxu0 0.0
        %1047 = vmatpush2.msra.mxu0 0.0
        %1048 = vmatprep.subr.mxu0 0.0
        %1049 = vmatpush2.msra.mxu0 0.0
        %1050 = vmatprep.subr.mxu0 0.0
        %1051 = vmatpush2.msra.mxu0 0.0
        %1052 = vmatprep.subr.mxu0 0.0
        %1053 = vmatpush2.msra.mxu0 0.0
        %1054 = vmatprep.subr.mxu0 0.0
        %1055 = vmatpush2.msra.mxu0 0.0
        %1056 = vmatprep.subr.mxu0 0.0
        %1057 = vmatpush2.msra.mxu0 0.0
        %1058 = vmatprep.subr.mxu0 0.0
        %1059 = vmatpush2.msra.mxu0 0.0
        %1060 = vmatprep.subr.mxu0 0.0
        %1061 = vmatpush2.msra.mxu0 0.0
        %1062 = vmatprep.subr.mxu0 0.0
        %1063 = vmatpush2.msra.mxu0 0.0
        %1064 = vmatprep.subr.mxu0 0.0
        %1065 = vmatpush2.msra.mxu0 0.0
        %1066 = vmatprep.subr.mxu0 0.0
        %1067 = vmatpush2.msra.mxu0 0.0
        %1068 = vmatprep.subr.mxu0 0.0
        %1069 = vmatpush2.msra.mxu0 0.0
        %1070 = vmatprep.subr.mxu0 0.0
        %1071 = vmatpush2.msra.mxu0 0.0
        %1072 = vmatprep.subr.mxu0 0.0
        %1073 = vmatpush2.msra.mxu0 0.0
        %1074 = vmatprep.subr.mxu0 0.0
        %1075 = vmatpush2.msra.mxu0 0.0
        %1076 = vmatprep.subr.mxu0 0.0
        %1077 = vmatpush2.msra.mxu0 0.0
        %1078 = vmatprep.mubr.f32.mxu0 0.0
        %1079 = vmatmul.mubr.f32.gmra.mxu0 %v681
        %v1080 = vpop.f32.mrf.mxu0
        %v1081 = vadd.f32 %v672, %v1080
        %v1082 = vpop.f32.mrf.mxu0
        %v1083 = vadd.f32 %v672, %v1082
        %1084 = vmatprep.mubr.f32.mxu0 0.0
        %1085 = vmatmul.mubr.f32.gmra.mxu0 %v684
        %v1086 = vpop.f32.mrf.mxu0
        %v1087 = vadd.f32 %v677, %v1086
        %v1088 = vpop.f32.mrf.mxu0
        %v1089 = vadd.f32 %v677, %v1088
        %1090 = vdwg.mxu0
        %1091 = vmatprep.subr.mxu0 0.0
        %1092 = vmatpush1.msra.mxu0 0.0
        %1093 = vmatprep.subr.mxu0 0.0
        %1094 = vmatpush1.msra.mxu0 0.0
        %1095 = vmatprep.subr.mxu0 0.0
        %1096 = vmatpush1.msra.mxu0 0.0
        %1097 = vmatprep.subr.mxu0 0.0
        %1098 = vmatpush1.msra.mxu0 0.0
        %1099 = vmatprep.subr.mxu0 0.0
        %1100 = vmatpush1.msra.mxu0 0.0
        %1101 = vmatprep.subr.mxu0 0.0
        %1102 = vmatpush1.msra.mxu0 0.0
        %1103 = vmatprep.subr.mxu0 0.0
        %1104 = vmatpush1.msra.mxu0 0.0
        %1105 = vmatprep.subr.mxu0 0.0
        %1106 = vmatpush1.msra.mxu0 0.0
        %1107 = vmatprep.subr.mxu0 0.0
        %1108 = vmatpush1.msra.mxu0 0.0
        %1109 = vmatprep.subr.mxu0 0.0
        %1110 = vmatpush1.msra.mxu0 0.0
        %1111 = vmatprep.subr.mxu0 0.0
        %1112 = vmatpush1.msra.mxu0 0.0
        %1113 = vmatprep.subr.mxu0 %v715
        %1114 = vmatpush1.msra.mxu0 %v712
        %1115 = vmatprep.subr.mxu0 %v612
        %1116 = vmatpush1.msra.mxu0 %v611
        %1117 = vmatprep.subr.mxu0 %v580
        %1118 = vmatpush1.msra.mxu0 %v579
        %1119 = vmatprep.subr.mxu0 %v548
        %1120 = vmatpush1.msra.mxu0 %v547
        %1121 = vmatprep.subr.mxu0 %v516
        %1122 = vmatpush1.msra.mxu0 %v515
        %1123 = vmatprep.subr.mxu0 0.0
        %1124 = vmatpush2.msra.mxu0 0.0
        %1125 = vmatprep.subr.mxu0 0.0
        %1126 = vmatpush2.msra.mxu0 0.0
        %1127 = vmatprep.subr.mxu0 0.0
        %1128 = vmatpush2.msra.mxu0 0.0
        %1129 = vmatprep.subr.mxu0 0.0
        %1130 = vmatpush2.msra.mxu0 0.0
        %1131 = vmatprep.subr.mxu0 0.0
        %1132 = vmatpush2.msra.mxu0 0.0
        %1133 = vmatprep.subr.mxu0 0.0
        %1134 = vmatpush2.msra.mxu0 0.0
        %1135 = vmatprep.subr.mxu0 0.0
        %1136 = vmatpush2.msra.mxu0 0.0
        %1137 = vmatprep.subr.mxu0 0.0
        %1138 = vmatpush2.msra.mxu0 0.0
        %1139 = vmatprep.subr.mxu0 0.0
        %1140 = vmatpush2.msra.mxu0 0.0
        %1141 = vmatprep.subr.mxu0 0.0
        %1142 = vmatpush2.msra.mxu0 0.0
        %1143 = vmatprep.subr.mxu0 0.0
        %1144 = vmatpush2.msra.mxu0 0.0
        %1145 = vmatprep.subr.mxu0 0.0
        %1146 = vmatpush2.msra.mxu0 0.0
        %1147 = vmatprep.subr.mxu0 0.0
        %1148 = vmatpush2.msra.mxu0 0.0
        %1149 = vmatprep.subr.mxu0 0.0
        %1150 = vmatpush2.msra.mxu0 0.0
        %1151 = vmatprep.subr.mxu0 0.0
        %1152 = vmatpush2.msra.mxu0 0.0
        %1153 = vmatprep.subr.mxu0 0.0
        %1154 = vmatpush2.msra.mxu0 0.0
        %1155 = vmatprep.mubr.f32.mxu0 0.0
        %1156 = vmatmul.mubr.f32.gmra.mxu0 %v681
        %v1157 = vpop.f32.mrf.mxu0
        %v1158 = vadd.f32 %v672, %v1157
        %v1159 = vpop.f32.mrf.mxu0
        %v1160 = vadd.f32 %v672, %v1159
        %1161 = vmatprep.mubr.f32.mxu0 0.0
        %1162 = vmatmul.mubr.f32.gmra.mxu0 %v684
        %v1163 = vpop.f32.mrf.mxu0
        %v1164 = vadd.f32 %v677, %v1163
        %v1165 = vpop.f32.mrf.mxu0
        %v1166 = vadd.f32 %v677, %v1165
        %1167 = vdwg.mxu0
        %1168 = vmatprep.subr.mxu0 0.0
        %1169 = vmatpush1.msra.mxu0 0.0
        %1170 = vmatprep.subr.mxu0 0.0
        %1171 = vmatpush1.msra.mxu0 0.0
        %1172 = vmatprep.subr.mxu0 0.0
        %1173 = vmatpush1.msra.mxu0 0.0
        %1174 = vmatprep.subr.mxu0 0.0
        %1175 = vmatpush1.msra.mxu0 0.0
        %1176 = vmatprep.subr.mxu0 0.0
        %1177 = vmatpush1.msra.mxu0 0.0
        %1178 = vmatprep.subr.mxu0 0.0
        %1179 = vmatpush1.msra.mxu0 0.0
        %1180 = vmatprep.subr.mxu0 0.0
        %1181 = vmatpush1.msra.mxu0 0.0
        %1182 = vmatprep.subr.mxu0 0.0
        %1183 = vmatpush1.msra.mxu0 0.0
        %1184 = vmatprep.subr.mxu0 0.0
        %1185 = vmatpush1.msra.mxu0 0.0
        %1186 = vmatprep.subr.mxu0 0.0
        %1187 = vmatpush1.msra.mxu0 0.0
        %1188 = vmatprep.subr.mxu0 0.0
        %1189 = vmatpush1.msra.mxu0 0.0
        %1190 = vmatprep.subr.mxu0 %v721
        %1191 = vmatpush1.msra.mxu0 %v718
        %1192 = vmatprep.subr.mxu0 %v614
        %1193 = vmatpush1.msra.mxu0 %v613
        %1194 = vmatprep.subr.mxu0 %v582
        %1195 = vmatpush1.msra.mxu0 %v581
        %1196 = vmatprep.subr.mxu0 %v550
        %1197 = vmatpush1.msra.mxu0 %v549
        %1198 = vmatprep.subr.mxu0 %v518
        %1199 = vmatpush1.msra.mxu0 %v517
        %1200 = vmatprep.subr.mxu0 0.0
        %1201 = vmatpush2.msra.mxu0 0.0
        %1202 = vmatprep.subr.mxu0 0.0
        %1203 = vmatpush2.msra.mxu0 0.0
        %1204 = vmatprep.subr.mxu0 0.0
        %1205 = vmatpush2.msra.mxu0 0.0
        %1206 = vmatprep.subr.mxu0 0.0
        %1207 = vmatpush2.msra.mxu0 0.0
        %1208 = vmatprep.subr.mxu0 0.0
        %1209 = vmatpush2.msra.mxu0 0.0
        %1210 = vmatprep.subr.mxu0 0.0
        %1211 = vmatpush2.msra.mxu0 0.0
        %1212 = vmatprep.subr.mxu0 0.0
        %1213 = vmatpush2.msra.mxu0 0.0
        %1214 = vmatprep.subr.mxu0 0.0
        %1215 = vmatpush2.msra.mxu0 0.0
        %1216 = vmatprep.subr.mxu0 0.0
        %1217 = vmatpush2.msra.mxu0 0.0
        %1218 = vmatprep.subr.mxu0 0.0
        %1219 = vmatpush2.msra.mxu0 0.0
        %1220 = vmatprep.subr.mxu0 0.0
        %1221 = vmatpush2.msra.mxu0 0.0
        %1222 = vmatprep.subr.mxu0 0.0
        %1223 = vmatpush2.msra.mxu0 0.0
        %1224 = vmatprep.subr.mxu0 0.0
        %1225 = vmatpush2.msra.mxu0 0.0
        %1226 = vmatprep.subr.mxu0 0.0
        %1227 = vmatpush2.msra.mxu0 0.0
        %1228 = vmatprep.subr.mxu0 0.0
        %1229 = vmatpush2.msra.mxu0 0.0
        %1230 = vmatprep.subr.mxu0 0.0
        %1231 = vmatpush2.msra.mxu0 0.0
        %1232 = vmatprep.mubr.f32.mxu0 0.0
        %1233 = vmatmul.mubr.f32.gmra.mxu0 %v681
        %v1234 = vpop.f32.mrf.mxu0
        %v1235 = vadd.f32 %v672, %v1234
        %v1236 = vpop.f32.mrf.mxu0
        %v1237 = vadd.f32 %v672, %v1236
        %1238 = vmatprep.mubr.f32.mxu0 0.0
        %1239 = vmatmul.mubr.f32.gmra.mxu0 %v684
        %v1240 = vpop.f32.mrf.mxu0
        %v1241 = vadd.f32 %v677, %v1240
        %v1242 = vpop.f32.mrf.mxu0
        %v1243 = vadd.f32 %v677, %v1242
        %1244 = vdwg.mxu0
        %1245 = vmatprep.subr.mxu0 0.0
        %1246 = vmatpush1.msra.mxu0 0.0
        %1247 = vmatprep.subr.mxu0 0.0
        %1248 = vmatpush1.msra.mxu0 0.0
        %1249 = vmatprep.subr.mxu0 0.0
        %1250 = vmatpush1.msra.mxu0 0.0
        %1251 = vmatprep.subr.mxu0 0.0
        %1252 = vmatpush1.msra.mxu0 0.0
        %1253 = vmatprep.subr.mxu0 0.0
        %1254 = vmatpush1.msra.mxu0 0.0
        %1255 = vmatprep.subr.mxu0 0.0
        %1256 = vmatpush1.msra.mxu0 0.0
        %1257 = vmatprep.subr.mxu0 0.0
        %1258 = vmatpush1.msra.mxu0 0.0
        %1259 = vmatprep.subr.mxu0 0.0
        %1260 = vmatpush1.msra.mxu0 0.0
        %1261 = vmatprep.subr.mxu0 0.0
        %1262 = vmatpush1.msra.mxu0 0.0
        %1263 = vmatprep.subr.mxu0 0.0
        %1264 = vmatpush1.msra.mxu0 0.0
        %1265 = vmatprep.subr.mxu0 0.0
        %1266 = vmatpush1.msra.mxu0 0.0
        %1267 = vmatprep.subr.mxu0 %v727
        %1268 = vmatpush1.msra.mxu0 %v724
        %1269 = vmatprep.subr.mxu0 %v616
        %1270 = vmatpush1.msra.mxu0 %v615
        %1271 = vmatprep.subr.mxu0 %v584
        %1272 = vmatpush1.msra.mxu0 %v583
        %1273 = vmatprep.subr.mxu0 %v552
        %1274 = vmatpush1.msra.mxu0 %v551
        %1275 = vmatprep.subr.mxu0 %v520
        %1276 = vmatpush1.msra.mxu0 %v519
        %1277 = vmatprep.subr.mxu0 0.0
        %1278 = vmatpush2.msra.mxu0 0.0
        %1279 = vmatprep.subr.mxu0 0.0
        %1280 = vmatpush2.msra.mxu0 0.0
        %1281 = vmatprep.subr.mxu0 0.0
        %1282 = vmatpush2.msra.mxu0 0.0
        %1283 = vmatprep.subr.mxu0 0.0
        %1284 = vmatpush2.msra.mxu0 0.0
        %1285 = vmatprep.subr.mxu0 0.0
        %1286 = vmatpush2.msra.mxu0 0.0
        %1287 = vmatprep.subr.mxu0 0.0
        %1288 = vmatpush2.msra.mxu0 0.0
        %1289 = vmatprep.subr.mxu0 0.0
        %1290 = vmatpush2.msra.mxu0 0.0
        %1291 = vmatprep.subr.mxu0 0.0
        %1292 = vmatpush2.msra.mxu0 0.0
        %1293 = vmatprep.subr.mxu0 0.0
        %1294 = vmatpush2.msra.mxu0 0.0
        %1295 = vmatprep.subr.mxu0 0.0
        %1296 = vmatpush2.msra.mxu0 0.0
        %1297 = vmatprep.subr.mxu0 0.0
        %1298 = vmatpush2.msra.mxu0 0.0
        %1299 = vmatprep.subr.mxu0 0.0
        %1300 = vmatpush2.msra.mxu0 0.0
        %1301 = vmatprep.subr.mxu0 0.0
        %1302 = vmatpush2.msra.mxu0 0.0
        %1303 = vmatprep.subr.mxu0 0.0
        %1304 = vmatpush2.msra.mxu0 0.0
        %1305 = vmatprep.subr.mxu0 0.0
        %1306 = vmatpush2.msra.mxu0 0.0
        %1307 = vmatprep.subr.mxu0 0.0
        %1308 = vmatpush2.msra.mxu0 0.0
        %1309 = vmatprep.mubr.f32.mxu0 0.0
        %1310 = vmatmul.mubr.f32.gmra.mxu0 %v681
        %v1311 = vpop.f32.mrf.mxu0
        %v1312 = vadd.f32 %v672, %v1311
        %v1313 = vpop.f32.mrf.mxu0
        %v1314 = vadd.f32 %v672, %v1313
        %1315 = vmatprep.mubr.f32.mxu0 0.0
        %1316 = vmatmul.mubr.f32.gmra.mxu0 %v684
        %v1317 = vpop.f32.mrf.mxu0
        %v1318 = vadd.f32 %v677, %v1317
        %v1319 = vpop.f32.mrf.mxu0
        %v1320 = vadd.f32 %v677, %v1319
        %1321 = vdwg.mxu0
        %1322 = vmatprep.subr.mxu0 0.0
        %1323 = vmatpush1.msra.mxu0 0.0
        %1324 = vmatprep.subr.mxu0 0.0
        %1325 = vmatpush1.msra.mxu0 0.0
        %1326 = vmatprep.subr.mxu0 0.0
        %1327 = vmatpush1.msra.mxu0 0.0
        %1328 = vmatprep.subr.mxu0 0.0
        %1329 = vmatpush1.msra.mxu0 0.0
        %1330 = vmatprep.subr.mxu0 0.0
        %1331 = vmatpush1.msra.mxu0 0.0
        %1332 = vmatprep.subr.mxu0 0.0
        %1333 = vmatpush1.msra.mxu0 0.0
        %1334 = vmatprep.subr.mxu0 0.0
        %1335 = vmatpush1.msra.mxu0 0.0
        %1336 = vmatprep.subr.mxu0 0.0
        %1337 = vmatpush1.msra.mxu0 0.0
        %1338 = vmatprep.subr.mxu0 0.0
        %1339 = vmatpush1.msra.mxu0 0.0
        %1340 = vmatprep.subr.mxu0 0.0
        %1341 = vmatpush1.msra.mxu0 0.0
        %1342 = vmatprep.subr.mxu0 0.0
        %1343 = vmatpush1.msra.mxu0 0.0
        %1344 = vmatprep.subr.mxu0 %v733
        %1345 = vmatpush1.msra.mxu0 %v730
        %1346 = vmatprep.subr.mxu0 %v618
        %1347 = vmatpush1.msra.mxu0 %v617
        %1348 = vmatprep.subr.mxu0 %v586
        %1349 = vmatpush1.msra.mxu0 %v585
        %1350 = vmatprep.subr.mxu0 %v554
        %1351 = vmatpush1.msra.mxu0 %v553
        %1352 = vmatprep.subr.mxu0 %v522
        %1353 = vmatpush1.msra.mxu0 %v521
        %1354 = vmatprep.subr.mxu0 0.0
        %1355 = vmatpush2.msra.mxu0 0.0
        %1356 = vmatprep.subr.mxu0 0.0
        %1357 = vmatpush2.msra.mxu0 0.0
        %1358 = vmatprep.subr.mxu0 0.0
        %1359 = vmatpush2.msra.mxu0 0.0
        %1360 = vmatprep.subr.mxu0 0.0
        %1361 = vmatpush2.msra.mxu0 0.0
        %1362 = vmatprep.subr.mxu0 0.0
        %1363 = vmatpush2.msra.mxu0 0.0
        %1364 = vmatprep.subr.mxu0 0.0
        %1365 = vmatpush2.msra.mxu0 0.0
        %1366 = vmatprep.subr.mxu0 0.0
        %1367 = vmatpush2.msra.mxu0 0.0
        %1368 = vmatprep.subr.mxu0 0.0
        %1369 = vmatpush2.msra.mxu0 0.0
        %1370 = vmatprep.subr.mxu0 0.0
        %1371 = vmatpush2.msra.mxu0 0.0
        %1372 = vmatprep.subr.mxu0 0.0
        %1373 = vmatpush2.msra.mxu0 0.0
        %1374 = vmatprep.subr.mxu0 0.0
        %1375 = vmatpush2.msra.mxu0 0.0
        %1376 = vmatprep.subr.mxu0 0.0
        %1377 = vmatpush2.msra.mxu0 0.0
        %1378 = vmatprep.subr.mxu0 0.0
        %1379 = vmatpush2.msra.mxu0 0.0
        %1380 = vmatprep.subr.mxu0 0.0
        %1381 = vmatpush2.msra.mxu0 0.0
        %1382 = vmatprep.subr.mxu0 0.0
        %1383 = vmatpush2.msra.mxu0 0.0
        %1384 = vmatprep.subr.mxu0 0.0
        %1385 = vmatpush2.msra.mxu0 0.0
        %1386 = vmatprep.mubr.f32.mxu0 0.0
        %1387 = vmatmul.mubr.f32.gmra.mxu0 %v681
        %v1388 = vpop.f32.mrf.mxu0
        %v1389 = vadd.f32 %v672, %v1388
        %v1390 = vpop.f32.mrf.mxu0
        %v1391 = vadd.f32 %v672, %v1390
        %1392 = vmatprep.mubr.f32.mxu0 0.0
        %1393 = vmatmul.mubr.f32.gmra.mxu0 %v684
        %v1394 = vpop.f32.mrf.mxu0
        %v1395 = vadd.f32 %v677, %v1394
        %v1396 = vpop.f32.mrf.mxu0
        %v1397 = vadd.f32 %v677, %v1396
        %1398 = vdwg.mxu0
        %1399 = vmatprep.subr.mxu0 0.0
        %1400 = vmatpush1.msra.mxu0 0.0
        %1401 = vmatprep.subr.mxu0 0.0
        %1402 = vmatpush1.msra.mxu0 0.0
        %1403 = vmatprep.subr.mxu0 0.0
        %1404 = vmatpush1.msra.mxu0 0.0
        %1405 = vmatprep.subr.mxu0 0.0
        %1406 = vmatpush1.msra.mxu0 0.0
        %1407 = vmatprep.subr.mxu0 0.0
        %1408 = vmatpush1.msra.mxu0 0.0
        %1409 = vmatprep.subr.mxu0 0.0
        %1410 = vmatpush1.msra.mxu0 0.0
        %1411 = vmatprep.subr.mxu0 0.0
        %1412 = vmatpush1.msra.mxu0 0.0
        %1413 = vmatprep.subr.mxu0 0.0
        %1414 = vmatpush1.msra.mxu0 0.0
        %1415 = vmatprep.subr.mxu0 0.0
        %1416 = vmatpush1.msra.mxu0 0.0
        %1417 = vmatprep.subr.mxu0 0.0
        %1418 = vmatpush1.msra.mxu0 0.0
        %1419 = vmatprep.subr.mxu0 0.0
        %1420 = vmatpush1.msra.mxu0 0.0
        %1421 = vmatprep.subr.mxu0 %v739
        %1422 = vmatpush1.msra.mxu0 %v736
        %1423 = vmatprep.subr.mxu0 %v620
        %1424 = vmatpush1.msra.mxu0 %v619
        %1425 = vmatprep.subr.mxu0 %v588
        %1426 = vmatpush1.msra.mxu0 %v587
        %1427 = vmatprep.subr.mxu0 %v556
        %1428 = vmatpush1.msra.mxu0 %v555
        %1429 = vmatprep.subr.mxu0 %v524
        %1430 = vmatpush1.msra.mxu0 %v523
        %1431 = vmatprep.subr.mxu0 0.0
        %1432 = vmatpush2.msra.mxu0 0.0
        %1433 = vmatprep.subr.mxu0 0.0
        %1434 = vmatpush2.msra.mxu0 0.0
        %1435 = vmatprep.subr.mxu0 0.0
        %1436 = vmatpush2.msra.mxu0 0.0
        %1437 = vmatprep.subr.mxu0 0.0
        %1438 = vmatpush2.msra.mxu0 0.0
        %1439 = vmatprep.subr.mxu0 0.0
        %1440 = vmatpush2.msra.mxu0 0.0
        %1441 = vmatprep.subr.mxu0 0.0
        %1442 = vmatpush2.msra.mxu0 0.0
        %1443 = vmatprep.subr.mxu0 0.0
        %1444 = vmatpush2.msra.mxu0 0.0
        %1445 = vmatprep.subr.mxu0 0.0
        %1446 = vmatpush2.msra.mxu0 0.0
        %1447 = vmatprep.subr.mxu0 0.0
        %1448 = vmatpush2.msra.mxu0 0.0
        %1449 = vmatprep.subr.mxu0 0.0
        %1450 = vmatpush2.msra.mxu0 0.0
        %1451 = vmatprep.subr.mxu0 0.0
        %1452 = vmatpush2.msra.mxu0 0.0
        %1453 = vmatprep.subr.mxu0 0.0
        %1454 = vmatpush2.msra.mxu0 0.0
        %1455 = vmatprep.subr.mxu0 0.0
        %1456 = vmatpush2.msra.mxu0 0.0
        %1457 = vmatprep.subr.mxu0 0.0
        %1458 = vmatpush2.msra.mxu0 0.0
        %1459 = vmatprep.subr.mxu0 0.0
        %1460 = vmatpush2.msra.mxu0 0.0
        %1461 = vmatprep.subr.mxu0 0.0
        %1462 = vmatpush2.msra.mxu0 0.0
        %1463 = vmatprep.mubr.f32.mxu0 0.0
        %1464 = vmatmul.mubr.f32.gmra.mxu0 %v681
        %v1465 = vpop.f32.mrf.mxu0
        %v1466 = vadd.f32 %v672, %v1465
        %v1467 = vpop.f32.mrf.mxu0
        %v1468 = vadd.f32 %v672, %v1467
        %1469 = vmatprep.mubr.f32.mxu0 0.0
        %1470 = vmatmul.mubr.f32.gmra.mxu0 %v684
        %v1471 = vpop.f32.mrf.mxu0
        %v1472 = vadd.f32 %v677, %v1471
        %v1473 = vpop.f32.mrf.mxu0
        %v1474 = vadd.f32 %v677, %v1473
        %1475 = vdwg.mxu0
        %1476 = vmatprep.subr.mxu0 0.0
        %1477 = vmatpush1.msra.mxu0 0.0
        %1478 = vmatprep.subr.mxu0 0.0
        %1479 = vmatpush1.msra.mxu0 0.0
        %1480 = vmatprep.subr.mxu0 0.0
        %1481 = vmatpush1.msra.mxu0 0.0
        %1482 = vmatprep.subr.mxu0 0.0
        %1483 = vmatpush1.msra.mxu0 0.0
        %1484 = vmatprep.subr.mxu0 0.0
        %1485 = vmatpush1.msra.mxu0 0.0
        %1486 = vmatprep.subr.mxu0 0.0
        %1487 = vmatpush1.msra.mxu0 0.0
        %1488 = vmatprep.subr.mxu0 0.0
        %1489 = vmatpush1.msra.mxu0 0.0
        %1490 = vmatprep.subr.mxu0 0.0
        %1491 = vmatpush1.msra.mxu0 0.0
        %1492 = vmatprep.subr.mxu0 0.0
        %1493 = vmatpush1.msra.mxu0 0.0
        %1494 = vmatprep.subr.mxu0 0.0
        %1495 = vmatpush1.msra.mxu0 0.0
        %1496 = vmatprep.subr.mxu0 0.0
        %1497 = vmatpush1.msra.mxu0 0.0
        %1498 = vmatprep.subr.mxu0 %v745
        %1499 = vmatpush1.msra.mxu0 %v742
        %1500 = vmatprep.subr.mxu0 %v622
        %1501 = vmatpush1.msra.mxu0 %v621
        %1502 = vmatprep.subr.mxu0 %v590
        %1503 = vmatpush1.msra.mxu0 %v589
        %1504 = vmatprep.subr.mxu0 %v558
        %1505 = vmatpush1.msra.mxu0 %v557
        %1506 = vmatprep.subr.mxu0 %v526
        %1507 = vmatpush1.msra.mxu0 %v525
        %1508 = vmatprep.subr.mxu0 0.0
        %1509 = vmatpush2.msra.mxu0 0.0
        %1510 = vmatprep.subr.mxu0 0.0
        %1511 = vmatpush2.msra.mxu0 0.0
        %1512 = vmatprep.subr.mxu0 0.0
        %1513 = vmatpush2.msra.mxu0 0.0
        %1514 = vmatprep.subr.mxu0 0.0
        %1515 = vmatpush2.msra.mxu0 0.0
        %1516 = vmatprep.subr.mxu0 0.0
        %1517 = vmatpush2.msra.mxu0 0.0
        %1518 = vmatprep.subr.mxu0 0.0
        %1519 = vmatpush2.msra.mxu0 0.0
        %1520 = vmatprep.subr.mxu0 0.0
        %1521 = vmatpush2.msra.mxu0 0.0
        %1522 = vmatprep.subr.mxu0 0.0
        %1523 = vmatpush2.msra.mxu0 0.0
        %1524 = vmatprep.subr.mxu0 0.0
        %1525 = vmatpush2.msra.mxu0 0.0
        %1526 = vmatprep.subr.mxu0 0.0
        %1527 = vmatpush2.msra.mxu0 0.0
        %1528 = vmatprep.subr.mxu0 0.0
        %1529 = vmatpush2.msra.mxu0 0.0
        %1530 = vmatprep.subr.mxu0 0.0
        %1531 = vmatpush2.msra.mxu0 0.0
        %1532 = vmatprep.subr.mxu0 0.0
        %1533 = vmatpush2.msra.mxu0 0.0
        %1534 = vmatprep.subr.mxu0 0.0
        %1535 = vmatpush2.msra.mxu0 0.0
        %1536 = vmatprep.subr.mxu0 0.0
        %1537 = vmatpush2.msra.mxu0 0.0
        %1538 = vmatprep.subr.mxu0 0.0
        %1539 = vmatpush2.msra.mxu0 0.0
        %1540 = vmatprep.mubr.f32.mxu0 0.0
        %1541 = vmatmul.mubr.f32.gmra.mxu0 %v681
        %v1542 = vpop.f32.mrf.mxu0
        %v1543 = vadd.f32 %v672, %v1542
        %v1544 = vpop.f32.mrf.mxu0
        %v1545 = vadd.f32 %v672, %v1544
        %1546 = vmatprep.mubr.f32.mxu0 0.0
        %1547 = vmatmul.mubr.f32.gmra.mxu0 %v684
        %v1548 = vpop.f32.mrf.mxu0
        %v1549 = vadd.f32 %v677, %v1548
        %v1550 = vpop.f32.mrf.mxu0
        %v1551 = vadd.f32 %v677, %v1550
        %1552 = vdwg.mxu0
        %1553 = vmatprep.subr.mxu0 0.0
        %1554 = vmatpush1.msra.mxu0 0.0
        %1555 = vmatprep.subr.mxu0 0.0
        %1556 = vmatpush1.msra.mxu0 0.0
        %1557 = vmatprep.subr.mxu0 0.0
        %1558 = vmatpush1.msra.mxu0 0.0
        %1559 = vmatprep.subr.mxu0 0.0
        %1560 = vmatpush1.msra.mxu0 0.0
        %1561 = vmatprep.subr.mxu0 0.0
        %1562 = vmatpush1.msra.mxu0 0.0
        %1563 = vmatprep.subr.mxu0 0.0
        %1564 = vmatpush1.msra.mxu0 0.0
        %1565 = vmatprep.subr.mxu0 0.0
        %1566 = vmatpush1.msra.mxu0 0.0
        %1567 = vmatprep.subr.mxu0 0.0
        %1568 = vmatpush1.msra.mxu0 0.0
        %1569 = vmatprep.subr.mxu0 0.0
        %1570 = vmatpush1.msra.mxu0 0.0
        %1571 = vmatprep.subr.mxu0 0.0
        %1572 = vmatpush1.msra.mxu0 0.0
        %1573 = vmatprep.subr.mxu0 0.0
        %1574 = vmatpush1.msra.mxu0 0.0
        %1575 = vmatprep.subr.mxu0 %v751
        %1576 = vmatpush1.msra.mxu0 %v748
        %1577 = vmatprep.subr.mxu0 %v624
        %1578 = vmatpush1.msra.mxu0 %v623
        %1579 = vmatprep.subr.mxu0 %v592
        %1580 = vmatpush1.msra.mxu0 %v591
        %1581 = vmatprep.subr.mxu0 %v560
        %1582 = vmatpush1.msra.mxu0 %v559
        %1583 = vmatprep.subr.mxu0 %v528
        %1584 = vmatpush1.msra.mxu0 %v527
        %1585 = vmatprep.subr.mxu0 0.0
        %1586 = vmatpush2.msra.mxu0 0.0
        %1587 = vmatprep.subr.mxu0 0.0
        %1588 = vmatpush2.msra.mxu0 0.0
        %1589 = vmatprep.subr.mxu0 0.0
        %1590 = vmatpush2.msra.mxu0 0.0
        %1591 = vmatprep.subr.mxu0 0.0
        %1592 = vmatpush2.msra.mxu0 0.0
        %1593 = vmatprep.subr.mxu0 0.0
        %1594 = vmatpush2.msra.mxu0 0.0
        %1595 = vmatprep.subr.mxu0 0.0
        %1596 = vmatpush2.msra.mxu0 0.0
        %1597 = vmatprep.subr.mxu0 0.0
        %1598 = vmatpush2.msra.mxu0 0.0
        %1599 = vmatprep.subr.mxu0 0.0
        %1600 = vmatpush2.msra.mxu0 0.0
        %1601 = vmatprep.subr.mxu0 0.0
        %1602 = vmatpush2.msra.mxu0 0.0
        %1603 = vmatprep.subr.mxu0 0.0
        %1604 = vmatpush2.msra.mxu0 0.0
        %1605 = vmatprep.subr.mxu0 0.0
        %1606 = vmatpush2.msra.mxu0 0.0
        %1607 = vmatprep.subr.mxu0 0.0
        %1608 = vmatpush2.msra.mxu0 0.0
        %1609 = vmatprep.subr.mxu0 0.0
        %1610 = vmatpush2.msra.mxu0 0.0
        %1611 = vmatprep.subr.mxu0 0.0
        %1612 = vmatpush2.msra.mxu0 0.0
        %1613 = vmatprep.subr.mxu0 0.0
        %1614 = vmatpush2.msra.mxu0 0.0
        %1615 = vmatprep.subr.mxu0 0.0
        %1616 = vmatpush2.msra.mxu0 0.0
        %1617 = vmatprep.mubr.f32.mxu0 0.0
        %1618 = vmatmul.mubr.f32.gmra.mxu0 %v681
        %v1619 = vpop.f32.mrf.mxu0
        %v1620 = vadd.f32 %v672, %v1619
        %v1621 = vpop.f32.mrf.mxu0
        %v1622 = vadd.f32 %v672, %v1621
        %1623 = vmatprep.mubr.f32.mxu0 0.0
        %1624 = vmatmul.mubr.f32.gmra.mxu0 %v684
        %v1625 = vpop.f32.mrf.mxu0
        %v1626 = vadd.f32 %v677, %v1625
        %v1627 = vpop.f32.mrf.mxu0
        %v1628 = vadd.f32 %v677, %v1627
        %1629 = vdwg.mxu0
        %1630 = vmatprep.subr.mxu0 0.0
        %1631 = vmatpush1.msra.mxu0 0.0
        %1632 = vmatprep.subr.mxu0 0.0
        %1633 = vmatpush1.msra.mxu0 0.0
        %1634 = vmatprep.subr.mxu0 0.0
        %1635 = vmatpush1.msra.mxu0 0.0
        %1636 = vmatprep.subr.mxu0 0.0
        %1637 = vmatpush1.msra.mxu0 0.0
        %1638 = vmatprep.subr.mxu0 0.0
        %1639 = vmatpush1.msra.mxu0 0.0
        %1640 = vmatprep.subr.mxu0 0.0
        %1641 = vmatpush1.msra.mxu0 0.0
        %1642 = vmatprep.subr.mxu0 0.0
        %1643 = vmatpush1.msra.mxu0 0.0
        %1644 = vmatprep.subr.mxu0 0.0
        %1645 = vmatpush1.msra.mxu0 0.0
        %1646 = vmatprep.subr.mxu0 0.0
        %1647 = vmatpush1.msra.mxu0 0.0
        %1648 = vmatprep.subr.mxu0 0.0
        %1649 = vmatpush1.msra.mxu0 0.0
        %1650 = vmatprep.subr.mxu0 0.0
        %1651 = vmatpush1.msra.mxu0 0.0
        %1652 = vmatprep.subr.mxu0 %v757
        %1653 = vmatpush1.msra.mxu0 %v754
        %1654 = vmatprep.subr.mxu0 %v626
        %1655 = vmatpush1.msra.mxu0 %v625
        %1656 = vmatprep.subr.mxu0 %v594
        %1657 = vmatpush1.msra.mxu0 %v593
        %1658 = vmatprep.subr.mxu0 %v562
        %1659 = vmatpush1.msra.mxu0 %v561
        %1660 = vmatprep.subr.mxu0 %v530
        %1661 = vmatpush1.msra.mxu0 %v529
        %1662 = vmatprep.subr.mxu0 0.0
        %1663 = vmatpush2.msra.mxu0 0.0
        %1664 = vmatprep.subr.mxu0 0.0
        %1665 = vmatpush2.msra.mxu0 0.0
        %1666 = vmatprep.subr.mxu0 0.0
        %1667 = vmatpush2.msra.mxu0 0.0
        %1668 = vmatprep.subr.mxu0 0.0
        %1669 = vmatpush2.msra.mxu0 0.0
        %1670 = vmatprep.subr.mxu0 0.0
        %1671 = vmatpush2.msra.mxu0 0.0
        %1672 = vmatprep.subr.mxu0 0.0
        %1673 = vmatpush2.msra.mxu0 0.0
        %1674 = vmatprep.subr.mxu0 0.0
        %1675 = vmatpush2.msra.mxu0 0.0
        %1676 = vmatprep.subr.mxu0 0.0
        %1677 = vmatpush2.msra.mxu0 0.0
        %1678 = vmatprep.subr.mxu0 0.0
        %1679 = vmatpush2.msra.mxu0 0.0
        %1680 = vmatprep.subr.mxu0 0.0
        %1681 = vmatpush2.msra.mxu0 0.0
        %1682 = vmatprep.subr.mxu0 0.0
        %1683 = vmatpush2.msra.mxu0 0.0
        %1684 = vmatprep.subr.mxu0 0.0
        %1685 = vmatpush2.msra.mxu0 0.0
        %1686 = vmatprep.subr.mxu0 0.0
        %1687 = vmatpush2.msra.mxu0 0.0
        %1688 = vmatprep.subr.mxu0 0.0
        %1689 = vmatpush2.msra.mxu0 0.0
        %1690 = vmatprep.subr.mxu0 0.0
        %1691 = vmatpush2.msra.mxu0 0.0
        %1692 = vmatprep.subr.mxu0 0.0
        %1693 = vmatpush2.msra.mxu0 0.0
        %1694 = vmatprep.mubr.f32.mxu0 0.0
        %1695 = vmatmul.mubr.f32.gmra.mxu0 %v681
        %v1696 = vpop.f32.mrf.mxu0
        %v1697 = vadd.f32 %v672, %v1696
        %v1698 = vpop.f32.mrf.mxu0
        %v1699 = vadd.f32 %v672, %v1698
        %1700 = vmatprep.mubr.f32.mxu0 0.0
        %1701 = vmatmul.mubr.f32.gmra.mxu0 %v684
        %v1702 = vpop.f32.mrf.mxu0
        %v1703 = vadd.f32 %v677, %v1702
        %v1704 = vpop.f32.mrf.mxu0
        %v1705 = vadd.f32 %v677, %v1704
        %1706 = vdwg.mxu0
        %1707 = vmatprep.subr.mxu0 0.0
        %1708 = vmatpush1.msra.mxu0 0.0
        %1709 = vmatprep.subr.mxu0 0.0
        %1710 = vmatpush1.msra.mxu0 0.0
        %1711 = vmatprep.subr.mxu0 0.0
        %1712 = vmatpush1.msra.mxu0 0.0
        %1713 = vmatprep.subr.mxu0 0.0
        %1714 = vmatpush1.msra.mxu0 0.0
        %1715 = vmatprep.subr.mxu0 0.0
        %1716 = vmatpush1.msra.mxu0 0.0
        %1717 = vmatprep.subr.mxu0 0.0
        %1718 = vmatpush1.msra.mxu0 0.0
        %1719 = vmatprep.subr.mxu0 0.0
        %1720 = vmatpush1.msra.mxu0 0.0
        %1721 = vmatprep.subr.mxu0 0.0
        %1722 = vmatpush1.msra.mxu0 0.0
        %1723 = vmatprep.subr.mxu0 0.0
        %1724 = vmatpush1.msra.mxu0 0.0
        %1725 = vmatprep.subr.mxu0 0.0
        %1726 = vmatpush1.msra.mxu0 0.0
        %1727 = vmatprep.subr.mxu0 0.0
        %1728 = vmatpush1.msra.mxu0 0.0
        %1729 = vmatprep.subr.mxu0 %v763
        %1730 = vmatpush1.msra.mxu0 %v760
        %1731 = vmatprep.subr.mxu0 %v628
        %1732 = vmatpush1.msra.mxu0 %v627
        %1733 = vmatprep.subr.mxu0 %v596
        %1734 = vmatpush1.msra.mxu0 %v595
        %1735 = vmatprep.subr.mxu0 %v564
        %1736 = vmatpush1.msra.mxu0 %v563
        %1737 = vmatprep.subr.mxu0 %v532
        %1738 = vmatpush1.msra.mxu0 %v531
        %1739 = vmatprep.subr.mxu0 0.0
        %1740 = vmatpush2.msra.mxu0 0.0
        %1741 = vmatprep.subr.mxu0 0.0
        %1742 = vmatpush2.msra.mxu0 0.0
        %1743 = vmatprep.subr.mxu0 0.0
        %1744 = vmatpush2.msra.mxu0 0.0
        %1745 = vmatprep.subr.mxu0 0.0
        %1746 = vmatpush2.msra.mxu0 0.0
        %1747 = vmatprep.subr.mxu0 0.0
        %1748 = vmatpush2.msra.mxu0 0.0
        %1749 = vmatprep.subr.mxu0 0.0
        %1750 = vmatpush2.msra.mxu0 0.0
        %1751 = vmatprep.subr.mxu0 0.0
        %1752 = vmatpush2.msra.mxu0 0.0
        %1753 = vmatprep.subr.mxu0 0.0
        %1754 = vmatpush2.msra.mxu0 0.0
        %1755 = vmatprep.subr.mxu0 0.0
        %1756 = vmatpush2.msra.mxu0 0.0
        %1757 = vmatprep.subr.mxu0 0.0
        %1758 = vmatpush2.msra.mxu0 0.0
        %1759 = vmatprep.subr.mxu0 0.0
        %1760 = vmatpush2.msra.mxu0 0.0
        %1761 = vmatprep.subr.mxu0 0.0
        %1762 = vmatpush2.msra.mxu0 0.0
        %1763 = vmatprep.subr.mxu0 0.0
        %1764 = vmatpush2.msra.mxu0 0.0
        %1765 = vmatprep.subr.mxu0 0.0
        %1766 = vmatpush2.msra.mxu0 0.0
        %1767 = vmatprep.subr.mxu0 0.0
        %1768 = vmatpush2.msra.mxu0 0.0
        %1769 = vmatprep.subr.mxu0 0.0
        %1770 = vmatpush2.msra.mxu0 0.0
        %1771 = vmatprep.mubr.f32.mxu0 0.0
        %1772 = vmatmul.mubr.f32.gmra.mxu0 %v681
        %v1773 = vpop.f32.mrf.mxu0
        %v1774 = vadd.f32 %v672, %v1773
        %v1775 = vpop.f32.mrf.mxu0
        %v1776 = vadd.f32 %v672, %v1775
        %1777 = vmatprep.mubr.f32.mxu0 0.0
        %1778 = vmatmul.mubr.f32.gmra.mxu0 %v684
        %v1779 = vpop.f32.mrf.mxu0
        %v1780 = vadd.f32 %v677, %v1779
        %v1781 = vpop.f32.mrf.mxu0
        %v1782 = vadd.f32 %v677, %v1781
        %1783 = vdwg.mxu0
        %1784 = vmatprep.subr.mxu0 0.0
        %1785 = vmatpush1.msra.mxu0 0.0
        %1786 = vmatprep.subr.mxu0 0.0
        %1787 = vmatpush1.msra.mxu0 0.0
        %1788 = vmatprep.subr.mxu0 0.0
        %1789 = vmatpush1.msra.mxu0 0.0
        %1790 = vmatprep.subr.mxu0 0.0
        %1791 = vmatpush1.msra.mxu0 0.0
        %1792 = vmatprep.subr.mxu0 0.0
        %1793 = vmatpush1.msra.mxu0 0.0
        %1794 = vmatprep.subr.mxu0 0.0
        %1795 = vmatpush1.msra.mxu0 0.0
        %1796 = vmatprep.subr.mxu0 0.0
        %1797 = vmatpush1.msra.mxu0 0.0
        %1798 = vmatprep.subr.mxu0 0.0
        %1799 = vmatpush1.msra.mxu0 0.0
        %1800 = vmatprep.subr.mxu0 0.0
        %1801 = vmatpush1.msra.mxu0 0.0
        %1802 = vmatprep.subr.mxu0 0.0
        %1803 = vmatpush1.msra.mxu0 0.0
        %1804 = vmatprep.subr.mxu0 0.0
        %1805 = vmatpush1.msra.mxu0 0.0
        %1806 = vmatprep.subr.mxu0 %v769
        %1807 = vmatpush1.msra.mxu0 %v766
        %1808 = vmatprep.subr.mxu0 %v630
        %1809 = vmatpush1.msra.mxu0 %v629
        %1810 = vmatprep.subr.mxu0 %v598
        %1811 = vmatpush1.msra.mxu0 %v597
        %1812 = vmatprep.subr.mxu0 %v566
        %1813 = vmatpush1.msra.mxu0 %v565
        %1814 = vmatprep.subr.mxu0 %v534
        %1815 = vmatpush1.msra.mxu0 %v533
        %1816 = vmatprep.subr.mxu0 0.0
        %1817 = vmatpush2.msra.mxu0 0.0
        %1818 = vmatprep.subr.mxu0 0.0
        %1819 = vmatpush2.msra.mxu0 0.0
        %1820 = vmatprep.subr.mxu0 0.0
        %1821 = vmatpush2.msra.mxu0 0.0
        %1822 = vmatprep.subr.mxu0 0.0
        %1823 = vmatpush2.msra.mxu0 0.0
        %1824 = vmatprep.subr.mxu0 0.0
        %1825 = vmatpush2.msra.mxu0 0.0
        %1826 = vmatprep.subr.mxu0 0.0
        %1827 = vmatpush2.msra.mxu0 0.0
        %1828 = vmatprep.subr.mxu0 0.0
        %1829 = vmatpush2.msra.mxu0 0.0
        %1830 = vmatprep.subr.mxu0 0.0
        %1831 = vmatpush2.msra.mxu0 0.0
        %1832 = vmatprep.subr.mxu0 0.0
        %1833 = vmatpush2.msra.mxu0 0.0
        %1834 = vmatprep.subr.mxu0 0.0
        %1835 = vmatpush2.msra.mxu0 0.0
        %1836 = vmatprep.subr.mxu0 0.0
        %1837 = vmatpush2.msra.mxu0 0.0
        %1838 = vmatprep.subr.mxu0 0.0
        %1839 = vmatpush2.msra.mxu0 0.0
        %1840 = vmatprep.subr.mxu0 0.0
        %1841 = vmatpush2.msra.mxu0 0.0
        %1842 = vmatprep.subr.mxu0 0.0
        %1843 = vmatpush2.msra.mxu0 0.0
        %1844 = vmatprep.subr.mxu0 0.0
        %1845 = vmatpush2.msra.mxu0 0.0
        %1846 = vmatprep.subr.mxu0 0.0
        %1847 = vmatpush2.msra.mxu0 0.0
        %1848 = vmatprep.mubr.f32.mxu0 0.0
        %1849 = vmatmul.mubr.f32.gmra.mxu0 %v681
        %v1850 = vpop.f32.mrf.mxu0
        %v1851 = vadd.f32 %v672, %v1850
        %v1852 = vpop.f32.mrf.mxu0
        %v1853 = vadd.f32 %v672, %v1852
        %1854 = vmatprep.mubr.f32.mxu0 0.0
        %1855 = vmatmul.mubr.f32.gmra.mxu0 %v684
        %v1856 = vpop.f32.mrf.mxu0
        %v1857 = vadd.f32 %v677, %v1856
        %v1858 = vpop.f32.mrf.mxu0
        %v1859 = vadd.f32 %v677, %v1858
        %1860 = vdwg.mxu0
        %1861 = vmatprep.subr.mxu0 0.0
        %1862 = vmatpush1.msra.mxu0 0.0
        %1863 = vmatprep.subr.mxu0 0.0
        %1864 = vmatpush1.msra.mxu0 0.0
        %1865 = vmatprep.subr.mxu0 0.0
        %1866 = vmatpush1.msra.mxu0 0.0
        %1867 = vmatprep.subr.mxu0 0.0
        %1868 = vmatpush1.msra.mxu0 0.0
        %1869 = vmatprep.subr.mxu0 0.0
        %1870 = vmatpush1.msra.mxu0 0.0
        %1871 = vmatprep.subr.mxu0 0.0
        %1872 = vmatpush1.msra.mxu0 0.0
        %1873 = vmatprep.subr.mxu0 0.0
        %1874 = vmatpush1.msra.mxu0 0.0
        %1875 = vmatprep.subr.mxu0 0.0
        %1876 = vmatpush1.msra.mxu0 0.0
        %1877 = vmatprep.subr.mxu0 0.0
        %1878 = vmatpush1.msra.mxu0 0.0
        %1879 = vmatprep.subr.mxu0 0.0
        %1880 = vmatpush1.msra.mxu0 0.0
        %1881 = vmatprep.subr.mxu0 0.0
        %1882 = vmatpush1.msra.mxu0 0.0
        %1883 = vmatprep.subr.mxu0 %v775
        %1884 = vmatpush1.msra.mxu0 %v772
        %1885 = vmatprep.subr.mxu0 %v632
        %1886 = vmatpush1.msra.mxu0 %v631
        %1887 = vmatprep.subr.mxu0 %v600
        %1888 = vmatpush1.msra.mxu0 %v599
        %1889 = vmatprep.subr.mxu0 %v568
        %1890 = vmatpush1.msra.mxu0 %v567
        %1891 = vmatprep.subr.mxu0 %v536
        %1892 = vmatpush1.msra.mxu0 %v535
        %1893 = vmatprep.subr.mxu0 0.0
        %1894 = vmatpush2.msra.mxu0 0.0
        %1895 = vmatprep.subr.mxu0 0.0
        %1896 = vmatpush2.msra.mxu0 0.0
        %1897 = vmatprep.subr.mxu0 0.0
        %1898 = vmatpush2.msra.mxu0 0.0
        %1899 = vmatprep.subr.mxu0 0.0
        %1900 = vmatpush2.msra.mxu0 0.0
        %1901 = vmatprep.subr.mxu0 0.0
        %1902 = vmatpush2.msra.mxu0 0.0
        %1903 = vmatprep.subr.mxu0 0.0
        %1904 = vmatpush2.msra.mxu0 0.0
        %1905 = vmatprep.subr.mxu0 0.0
        %1906 = vmatpush2.msra.mxu0 0.0
        %1907 = vmatprep.subr.mxu0 0.0
        %1908 = vmatpush2.msra.mxu0 0.0
        %1909 = vmatprep.subr.mxu0 0.0
        %1910 = vmatpush2.msra.mxu0 0.0
        %1911 = vmatprep.subr.mxu0 0.0
        %1912 = vmatpush2.msra.mxu0 0.0
        %1913 = vmatprep.subr.mxu0 0.0
        %1914 = vmatpush2.msra.mxu0 0.0
        %1915 = vmatprep.subr.mxu0 0.0
        %1916 = vmatpush2.msra.mxu0 0.0
        %1917 = vmatprep.subr.mxu0 0.0
        %1918 = vmatpush2.msra.mxu0 0.0
        %1919 = vmatprep.subr.mxu0 0.0
        %1920 = vmatpush2.msra.mxu0 0.0
        %1921 = vmatprep.subr.mxu0 0.0
        %1922 = vmatpush2.msra.mxu0 0.0
        %1923 = vmatprep.subr.mxu0 0.0
        %1924 = vmatpush2.msra.mxu0 0.0
        %1925 = vmatprep.mubr.f32.mxu0 0.0
        %1926 = vmatmul.mubr.f32.gmra.mxu0 %v681
        %v1927 = vpop.f32.mrf.mxu0
        %v1928 = vadd.f32 %v672, %v1927
        %v1929 = vpop.f32.mrf.mxu0
        %v1930 = vadd.f32 %v672, %v1929
        %1931 = vmatprep.mubr.f32.mxu0 0.0
        %1932 = vmatmul.mubr.f32.gmra.mxu0 %v684
        %v1933 = vpop.f32.mrf.mxu0
        %v1934 = vadd.f32 %v677, %v1933
        %v1935 = vpop.f32.mrf.mxu0
        %v1936 = vadd.f32 %v677, %v1935
        %1937 = vdwg.mxu0
        %1938 = vmatprep.subr.mxu0 0.0
        %1939 = vmatpush1.msra.mxu0 0.0
        %1940 = vmatprep.subr.mxu0 0.0
        %1941 = vmatpush1.msra.mxu0 0.0
        %1942 = vmatprep.subr.mxu0 0.0
        %1943 = vmatpush1.msra.mxu0 0.0
        %1944 = vmatprep.subr.mxu0 0.0
        %1945 = vmatpush1.msra.mxu0 0.0
        %1946 = vmatprep.subr.mxu0 0.0
        %1947 = vmatpush1.msra.mxu0 0.0
        %1948 = vmatprep.subr.mxu0 0.0
        %1949 = vmatpush1.msra.mxu0 0.0
        %1950 = vmatprep.subr.mxu0 0.0
        %1951 = vmatpush1.msra.mxu0 0.0
        %1952 = vmatprep.subr.mxu0 0.0
        %1953 = vmatpush1.msra.mxu0 0.0
        %1954 = vmatprep.subr.mxu0 0.0
        %1955 = vmatpush1.msra.mxu0 0.0
        %1956 = vmatprep.subr.mxu0 0.0
        %1957 = vmatpush1.msra.mxu0 0.0
        %1958 = vmatprep.subr.mxu0 0.0
        %1959 = vmatpush1.msra.mxu0 0.0
        %1960 = vmatprep.subr.mxu0 %v781
        %1961 = vmatpush1.msra.mxu0 %v778
        %1962 = vmatprep.subr.mxu0 %v634
        %1963 = vmatpush1.msra.mxu0 %v633
        %1964 = vmatprep.subr.mxu0 %v602
        %1965 = vmatpush1.msra.mxu0 %v601
        %1966 = vmatprep.subr.mxu0 %v570
        %1967 = vmatpush1.msra.mxu0 %v569
        %1968 = vmatprep.subr.mxu0 %v538
        %1969 = vmatpush1.msra.mxu0 %v537
        %1970 = vmatprep.subr.mxu0 0.0
        %1971 = vmatpush2.msra.mxu0 0.0
        %1972 = vmatprep.subr.mxu0 0.0
        %1973 = vmatpush2.msra.mxu0 0.0
        %1974 = vmatprep.subr.mxu0 0.0
        %1975 = vmatpush2.msra.mxu0 0.0
        %1976 = vmatprep.subr.mxu0 0.0
        %1977 = vmatpush2.msra.mxu0 0.0
        %1978 = vmatprep.subr.mxu0 0.0
        %1979 = vmatpush2.msra.mxu0 0.0
        %1980 = vmatprep.subr.mxu0 0.0
        %1981 = vmatpush2.msra.mxu0 0.0
        %1982 = vmatprep.subr.mxu0 0.0
        %1983 = vmatpush2.msra.mxu0 0.0
        %1984 = vmatprep.subr.mxu0 0.0
        %1985 = vmatpush2.msra.mxu0 0.0
        %1986 = vmatprep.subr.mxu0 0.0
        %1987 = vmatpush2.msra.mxu0 0.0
        %1988 = vmatprep.subr.mxu0 0.0
        %1989 = vmatpush2.msra.mxu0 0.0
        %1990 = vmatprep.subr.mxu0 0.0
        %1991 = vmatpush2.msra.mxu0 0.0
        %1992 = vmatprep.subr.mxu0 0.0
        %1993 = vmatpush2.msra.mxu0 0.0
        %1994 = vmatprep.subr.mxu0 0.0
        %1995 = vmatpush2.msra.mxu0 0.0
        %1996 = vmatprep.subr.mxu0 0.0
        %1997 = vmatpush2.msra.mxu0 0.0
        %1998 = vmatprep.subr.mxu0 0.0
        %1999 = vmatpush2.msra.mxu0 0.0
        %2000 = vmatprep.subr.mxu0 0.0
        %2001 = vmatpush2.msra.mxu0 0.0
        %2002 = vmatprep.mubr.f32.mxu0 0.0
        %2003 = vmatmul.mubr.f32.gmra.mxu0 %v681
        %v2004 = vpop.f32.mrf.mxu0
        %v2005 = vadd.f32 %v672, %v2004
        %v2006 = vpop.f32.mrf.mxu0
        %v2007 = vadd.f32 %v672, %v2006
        %2008 = vmatprep.mubr.f32.mxu0 0.0
        %2009 = vmatmul.mubr.f32.gmra.mxu0 %v684
        %v2010 = vpop.f32.mrf.mxu0
        %v2011 = vadd.f32 %v677, %v2010
        %v2012 = vpop.f32.mrf.mxu0
        %v2013 = vadd.f32 %v677, %v2012
        %2014 = vdwg.mxu0
        %v2015 = vxor.u32 %v850, 2147483648
        %v2016 = vxor.u32 %v852, 2147483648
        %v2017 = vxor.u32 %v927, 2147483648
        %v2018 = vxor.u32 %v929, 2147483648
        %v2019 = vxor.u32 %v1004, 2147483648
        %v2020 = vxor.u32 %v1006, 2147483648
        %v2021 = vxor.u32 %v1081, 2147483648
        %v2022 = vxor.u32 %v1083, 2147483648
        %v2023 = vxor.u32 %v1158, 2147483648
        %v2024 = vxor.u32 %v1160, 2147483648
        %v2025 = vxor.u32 %v1235, 2147483648
        %v2026 = vxor.u32 %v1237, 2147483648
        %v2027 = vxor.u32 %v1312, 2147483648
        %v2028 = vxor.u32 %v1314, 2147483648
        %v2029 = vxor.u32 %v1389, 2147483648
        %v2030 = vxor.u32 %v1391, 2147483648
        %v2031 = vxor.u32 %v1466, 2147483648
        %v2032 = vxor.u32 %v1468, 2147483648
        %v2033 = vxor.u32 %v1543, 2147483648
        %v2034 = vxor.u32 %v1545, 2147483648
        %v2035 = vxor.u32 %v1620, 2147483648
        %v2036 = vxor.u32 %v1622, 2147483648
        %v2037 = vxor.u32 %v1697, 2147483648
        %v2038 = vxor.u32 %v1699, 2147483648
        %v2039 = vxor.u32 %v1774, 2147483648
        %v2040 = vxor.u32 %v1776, 2147483648
        %v2041 = vxor.u32 %v1851, 2147483648
        %v2042 = vxor.u32 %v1853, 2147483648
        %v2043 = vxor.u32 %v1928, 2147483648
        %v2044 = vxor.u32 %v1930, 2147483648
        %v2045 = vxor.u32 %v2005, 2147483648
        %v2046 = vxor.u32 %v2007, 2147483648
        %v2047 = vxor.u32 %v856, 2147483648
        %v2048 = vxor.u32 %v858, 2147483648
        %v2049 = vxor.u32 %v933, 2147483648
        %v2050 = vxor.u32 %v935, 2147483648
        %v2051 = vxor.u32 %v1010, 2147483648
        %v2052 = vxor.u32 %v1012, 2147483648
        %v2053 = vxor.u32 %v1087, 2147483648
        %v2054 = vxor.u32 %v1089, 2147483648
        %v2055 = vxor.u32 %v1164, 2147483648
        %v2056 = vxor.u32 %v1166, 2147483648
        %v2057 = vxor.u32 %v1241, 2147483648
        %v2058 = vxor.u32 %v1243, 2147483648
        %v2059 = vxor.u32 %v1318, 2147483648
        %v2060 = vxor.u32 %v1320, 2147483648
        %v2061 = vxor.u32 %v1395, 2147483648
        %v2062 = vxor.u32 %v1397, 2147483648
        %v2063 = vxor.u32 %v1472, 2147483648
        %v2064 = vxor.u32 %v1474, 2147483648
        %v2065 = vxor.u32 %v1549, 2147483648
        %v2066 = vxor.u32 %v1551, 2147483648
        %v2067 = vxor.u32 %v1626, 2147483648
        %v2068 = vxor.u32 %v1628, 2147483648
        %v2069 = vxor.u32 %v1703, 2147483648
        %v2070 = vxor.u32 %v1705, 2147483648
        %v2071 = vxor.u32 %v1780, 2147483648
        %v2072 = vxor.u32 %v1782, 2147483648
        %v2073 = vxor.u32 %v1857, 2147483648
        %v2074 = vxor.u32 %v1859, 2147483648
        %v2075 = vxor.u32 %v1934, 2147483648
        %v2076 = vxor.u32 %v1936, 2147483648
        %v2077 = vxor.u32 %v2011, 2147483648
        %v2078 = vxor.u32 %v2013, 2147483648
        %v2079 = vmul.f32 %v2015, 1.442695
        %v2080 = vpow.pop %v2079
        %v2081 = vmul.f32 %v2016, 1.442695
        %v2082 = vpow.pop %v2081
        %v2083 = vmul.f32 %v2017, 1.442695
        %v2084 = vpow.pop %v2083
        %v2085 = vmul.f32 %v2018, 1.442695
        %v2086 = vpow.pop %v2085
        %v2087 = vmul.f32 %v2019, 1.442695
        %v2088 = vpow.pop %v2087
        %v2089 = vmul.f32 %v2020, 1.442695
        %v2090 = vpow.pop %v2089
        %v2091 = vmul.f32 %v2021, 1.442695
        %v2092 = vpow.pop %v2091
        %v2093 = vmul.f32 %v2022, 1.442695
        %v2094 = vpow.pop %v2093
        %v2095 = vmul.f32 %v2023, 1.442695
        %v2096 = vpow.pop %v2095
        %v2097 = vmul.f32 %v2024, 1.442695
        %v2098 = vpow.pop %v2097
        %v2099 = vmul.f32 %v2025, 1.442695
        %v2100 = vpow.pop %v2099
        %v2101 = vmul.f32 %v2026, 1.442695
        %v2102 = vpow.pop %v2101
        %v2103 = vmul.f32 %v2027, 1.442695
        %v2104 = vpow.pop %v2103
        %v2105 = vmul.f32 %v2028, 1.442695
        %v2106 = vpow.pop %v2105
        %v2107 = vmul.f32 %v2029, 1.442695
        %v2108 = vpow.pop %v2107
        %v2109 = vmul.f32 %v2030, 1.442695
        %v2110 = vpow.pop %v2109
        %v2111 = vmul.f32 %v2031, 1.442695
        %v2112 = vpow.pop %v2111
        %v2113 = vmul.f32 %v2032, 1.442695
        %v2114 = vpow.pop %v2113
        %v2115 = vmul.f32 %v2033, 1.442695
        %v2116 = vpow.pop %v2115
        %v2117 = vmul.f32 %v2034, 1.442695
        %v2118 = vpow.pop %v2117
        %v2119 = vmul.f32 %v2035, 1.442695
        %v2120 = vpow.pop %v2119
        %v2121 = vmul.f32 %v2036, 1.442695
        %v2122 = vpow.pop %v2121
        %v2123 = vmul.f32 %v2037, 1.442695
        %v2124 = vpow.pop %v2123
        %v2125 = vmul.f32 %v2038, 1.442695
        %v2126 = vpow.pop %v2125
        %v2127 = vmul.f32 %v2039, 1.442695
        %v2128 = vpow.pop %v2127
        %v2129 = vmul.f32 %v2040, 1.442695
        %v2130 = vpow.pop %v2129
        %v2131 = vmul.f32 %v2041, 1.442695
        %v2132 = vpow.pop %v2131
        %v2133 = vmul.f32 %v2042, 1.442695
        %v2134 = vpow.pop %v2133
        %v2135 = vmul.f32 %v2043, 1.442695
        %v2136 = vpow.pop %v2135
        %v2137 = vmul.f32 %v2044, 1.442695
        %v2138 = vpow.pop %v2137
        %v2139 = vmul.f32 %v2045, 1.442695
        %v2140 = vpow.pop %v2139
        %v2141 = vmul.f32 %v2046, 1.442695
        %v2142 = vpow.pop %v2141
        %v2143 = vmul.f32 %v2047, 1.442695
        %v2144 = vpow.pop %v2143
        %v2145 = vmul.f32 %v2048, 1.442695
        %v2146 = vpow.pop %v2145
        %v2147 = vmul.f32 %v2049, 1.442695
        %v2148 = vpow.pop %v2147
        %v2149 = vmul.f32 %v2050, 1.442695
        %v2150 = vpow.pop %v2149
        %v2151 = vmul.f32 %v2051, 1.442695
        %v2152 = vpow.pop %v2151
        %v2153 = vmul.f32 %v2052, 1.442695
        %v2154 = vpow.pop %v2153
        %v2155 = vmul.f32 %v2053, 1.442695
        %v2156 = vpow.pop %v2155
        %v2157 = vmul.f32 %v2054, 1.442695
        %v2158 = vpow.pop %v2157
        %v2159 = vmul.f32 %v2055, 1.442695
        %v2160 = vpow.pop %v2159
        %v2161 = vmul.f32 %v2056, 1.442695
        %v2162 = vpow.pop %v2161
        %v2163 = vmul.f32 %v2057, 1.442695
        %v2164 = vpow.pop %v2163
        %v2165 = vmul.f32 %v2058, 1.442695
        %v2166 = vpow.pop %v2165
        %v2167 = vmul.f32 %v2059, 1.442695
        %v2168 = vpow.pop %v2167
        %v2169 = vmul.f32 %v2060, 1.442695
        %v2170 = vpow.pop %v2169
        %v2171 = vmul.f32 %v2061, 1.442695
        %v2172 = vpow.pop %v2171
        %v2173 = vmul.f32 %v2062, 1.442695
        %v2174 = vpow.pop %v2173
        %v2175 = vmul.f32 %v2063, 1.442695
        %v2176 = vpow.pop %v2175
        %v2177 = vmul.f32 %v2064, 1.442695
        %v2178 = vpow.pop %v2177
        %v2179 = vmul.f32 %v2065, 1.442695
        %v2180 = vpow.pop %v2179
        %v2181 = vmul.f32 %v2066, 1.442695
        %v2182 = vpow.pop %v2181
        %v2183 = vmul.f32 %v2067, 1.442695
        %v2184 = vpow.pop %v2183
        %v2185 = vmul.f32 %v2068, 1.442695
        %v2186 = vpow.pop %v2185
        %v2187 = vmul.f32 %v2069, 1.442695
        %v2188 = vpow.pop %v2187
        %v2189 = vmul.f32 %v2070, 1.442695
        %v2190 = vpow.pop %v2189
        %v2191 = vmul.f32 %v2071, 1.442695
        %v2192 = vpow.pop %v2191
        %v2193 = vmul.f32 %v2072, 1.442695
        %v2194 = vpow.pop %v2193
        %v2195 = vmul.f32 %v2073, 1.442695
        %v2196 = vpow.pop %v2195
        %v2197 = vmul.f32 %v2074, 1.442695
        %v2198 = vpow.pop %v2197
        %v2199 = vmul.f32 %v2075, 1.442695
        %v2200 = vpow.pop %v2199
        %v2201 = vmul.f32 %v2076, 1.442695
        %v2202 = vpow.pop %v2201
        %v2203 = vmul.f32 %v2077, 1.442695
        %v2204 = vpow.pop %v2203
        %v2205 = vmul.f32 %v2078, 1.442695
        %v2206 = vpow.pop %v2205
        %v2207 = vadd.f32 %v2080, 1.0
        %v2208 = vadd.f32 %v2082, 1.0
        %v2209 = vadd.f32 %v2084, 1.0
        %v2210 = vadd.f32 %v2086, 1.0
        %v2211 = vadd.f32 %v2088, 1.0
        %v2212 = vadd.f32 %v2090, 1.0
        %v2213 = vadd.f32 %v2092, 1.0
        %v2214 = vadd.f32 %v2094, 1.0
        %v2215 = vadd.f32 %v2096, 1.0
        %v2216 = vadd.f32 %v2098, 1.0
        %v2217 = vadd.f32 %v2100, 1.0
        %v2218 = vadd.f32 %v2102, 1.0
        %v2219 = vadd.f32 %v2104, 1.0
        %v2220 = vadd.f32 %v2106, 1.0
        %v2221 = vadd.f32 %v2108, 1.0
        %v2222 = vadd.f32 %v2110, 1.0
        %v2223 = vadd.f32 %v2112, 1.0
        %v2224 = vadd.f32 %v2114, 1.0
        %v2225 = vadd.f32 %v2116, 1.0
        %v2226 = vadd.f32 %v2118, 1.0
        %v2227 = vadd.f32 %v2120, 1.0
        %v2228 = vadd.f32 %v2122, 1.0
        %v2229 = vadd.f32 %v2124, 1.0
        %v2230 = vadd.f32 %v2126, 1.0
        %v2231 = vadd.f32 %v2128, 1.0
        %v2232 = vadd.f32 %v2130, 1.0
        %v2233 = vadd.f32 %v2132, 1.0
        %v2234 = vadd.f32 %v2134, 1.0
        %v2235 = vadd.f32 %v2136, 1.0
        %v2236 = vadd.f32 %v2138, 1.0
        %v2237 = vadd.f32 %v2140, 1.0
        %v2238 = vadd.f32 %v2142, 1.0
        %v2239 = vadd.f32 %v2144, 1.0
        %v2240 = vadd.f32 %v2146, 1.0
        %v2241 = vadd.f32 %v2148, 1.0
        %v2242 = vadd.f32 %v2150, 1.0
        %v2243 = vadd.f32 %v2152, 1.0
        %v2244 = vadd.f32 %v2154, 1.0
        %v2245 = vadd.f32 %v2156, 1.0
        %v2246 = vadd.f32 %v2158, 1.0
        %v2247 = vadd.f32 %v2160, 1.0
        %v2248 = vadd.f32 %v2162, 1.0
        %v2249 = vadd.f32 %v2164, 1.0
        %v2250 = vadd.f32 %v2166, 1.0
        %v2251 = vadd.f32 %v2168, 1.0
        %v2252 = vadd.f32 %v2170, 1.0
        %v2253 = vadd.f32 %v2172, 1.0
        %v2254 = vadd.f32 %v2174, 1.0
        %v2255 = vadd.f32 %v2176, 1.0
        %v2256 = vadd.f32 %v2178, 1.0
        %v2257 = vadd.f32 %v2180, 1.0
        %v2258 = vadd.f32 %v2182, 1.0
        %v2259 = vadd.f32 %v2184, 1.0
        %v2260 = vadd.f32 %v2186, 1.0
        %v2261 = vadd.f32 %v2188, 1.0
        %v2262 = vadd.f32 %v2190, 1.0
        %v2263 = vadd.f32 %v2192, 1.0
        %v2264 = vadd.f32 %v2194, 1.0
        %v2265 = vadd.f32 %v2196, 1.0
        %v2266 = vadd.f32 %v2198, 1.0
        %v2267 = vadd.f32 %v2200, 1.0
        %v2268 = vadd.f32 %v2202, 1.0
        %v2269 = vadd.f32 %v2204, 1.0
        %v2270 = vadd.f32 %v2206, 1.0
        %v2271 = vrcp.pop %v2207
        %v2272 = vmul.f32 1.0, %v2271
        %v2273 = vrcp.pop %v2208
        %v2274 = vmul.f32 1.0, %v2273
        %v2275 = vrcp.pop %v2209
        %v2276 = vmul.f32 1.0, %v2275
        %v2277 = vrcp.pop %v2210
        %v2278 = vmul.f32 1.0, %v2277
        %v2279 = vrcp.pop %v2211
        %v2280 = vmul.f32 1.0, %v2279
        %v2281 = vrcp.pop %v2212
        %v2282 = vmul.f32 1.0, %v2281
        %v2283 = vrcp.pop %v2213
        %v2284 = vmul.f32 1.0, %v2283
        %v2285 = vrcp.pop %v2214
        %v2286 = vmul.f32 1.0, %v2285
        %v2287 = vrcp.pop %v2215
        %v2288 = vmul.f32 1.0, %v2287
        %v2289 = vrcp.pop %v2216
        %v2290 = vmul.f32 1.0, %v2289
        %v2291 = vrcp.pop %v2217
        %v2292 = vmul.f32 1.0, %v2291
        %v2293 = vrcp.pop %v2218
        %v2294 = vmul.f32 1.0, %v2293
        %v2295 = vrcp.pop %v2219
        %v2296 = vmul.f32 1.0, %v2295
        %v2297 = vrcp.pop %v2220
        %v2298 = vmul.f32 1.0, %v2297
        %v2299 = vrcp.pop %v2221
        %v2300 = vmul.f32 1.0, %v2299
        %v2301 = vrcp.pop %v2222
        %v2302 = vmul.f32 1.0, %v2301
        %v2303 = vrcp.pop %v2223
        %v2304 = vmul.f32 1.0, %v2303
        %v2305 = vrcp.pop %v2224
        %v2306 = vmul.f32 1.0, %v2305
        %v2307 = vrcp.pop %v2225
        %v2308 = vmul.f32 1.0, %v2307
        %v2309 = vrcp.pop %v2226
        %v2310 = vmul.f32 1.0, %v2309
        %v2311 = vrcp.pop %v2227
        %v2312 = vmul.f32 1.0, %v2311
        %v2313 = vrcp.pop %v2228
        %v2314 = vmul.f32 1.0, %v2313
        %v2315 = vrcp.pop %v2229
        %v2316 = vmul.f32 1.0, %v2315
        %v2317 = vrcp.pop %v2230
        %v2318 = vmul.f32 1.0, %v2317
        %v2319 = vrcp.pop %v2231
        %v2320 = vmul.f32 1.0, %v2319
        %v2321 = vrcp.pop %v2232
        %v2322 = vmul.f32 1.0, %v2321
        %v2323 = vrcp.pop %v2233
        %v2324 = vmul.f32 1.0, %v2323
        %v2325 = vrcp.pop %v2234
        %v2326 = vmul.f32 1.0, %v2325
        %v2327 = vrcp.pop %v2235
        %v2328 = vmul.f32 1.0, %v2327
        %v2329 = vrcp.pop %v2236
        %v2330 = vmul.f32 1.0, %v2329
        %v2331 = vrcp.pop %v2237
        %v2332 = vmul.f32 1.0, %v2331
        %v2333 = vrcp.pop %v2238
        %v2334 = vmul.f32 1.0, %v2333
        %v2335 = vrcp.pop %v2239
        %v2336 = vmul.f32 1.0, %v2335
        %v2337 = vrcp.pop %v2240
        %v2338 = vmul.f32 1.0, %v2337
        %v2339 = vrcp.pop %v2241
        %v2340 = vmul.f32 1.0, %v2339
        %v2341 = vrcp.pop %v2242
        %v2342 = vmul.f32 1.0, %v2341
        %v2343 = vrcp.pop %v2243
        %v2344 = vmul.f32 1.0, %v2343
        %v2345 = vrcp.pop %v2244
        %v2346 = vmul.f32 1.0, %v2345
        %v2347 = vrcp.pop %v2245
        %v2348 = vmul.f32 1.0, %v2347
        %v2349 = vrcp.pop %v2246
        %v2350 = vmul.f32 1.0, %v2349
        %v2351 = vrcp.pop %v2247
        %v2352 = vmul.f32 1.0, %v2351
        %v2353 = vrcp.pop %v2248
        %v2354 = vmul.f32 1.0, %v2353
        %v2355 = vrcp.pop %v2249
        %v2356 = vmul.f32 1.0, %v2355
        %v2357 = vrcp.pop %v2250
        %v2358 = vmul.f32 1.0, %v2357
        %v2359 = vrcp.pop %v2251
        %v2360 = vmul.f32 1.0, %v2359
        %v2361 = vrcp.pop %v2252
        %v2362 = vmul.f32 1.0, %v2361
        %v2363 = vrcp.pop %v2253
        %v2364 = vmul.f32 1.0, %v2363
        %v2365 = vrcp.pop %v2254
        %v2366 = vmul.f32 1.0, %v2365
        %v2367 = vrcp.pop %v2255
        %v2368 = vmul.f32 1.0, %v2367
        %v2369 = vrcp.pop %v2256
        %v2370 = vmul.f32 1.0, %v2369
        %v2371 = vrcp.pop %v2257
        %v2372 = vmul.f32 1.0, %v2371
        %v2373 = vrcp.pop %v2258
        %v2374 = vmul.f32 1.0, %v2373
        %v2375 = vrcp.pop %v2259
        %v2376 = vmul.f32 1.0, %v2375
        %v2377 = vrcp.pop %v2260
        %v2378 = vmul.f32 1.0, %v2377
        %v2379 = vrcp.pop %v2261
        %v2380 = vmul.f32 1.0, %v2379
        %v2381 = vrcp.pop %v2262
        %v2382 = vmul.f32 1.0, %v2381
        %v2383 = vrcp.pop %v2263
        %v2384 = vmul.f32 1.0, %v2383
        %v2385 = vrcp.pop %v2264
        %v2386 = vmul.f32 1.0, %v2385
        %v2387 = vrcp.pop %v2265
        %v2388 = vmul.f32 1.0, %v2387
        %v2389 = vrcp.pop %v2266
        %v2390 = vmul.f32 1.0, %v2389
        %v2391 = vrcp.pop %v2267
        %v2392 = vmul.f32 1.0, %v2391
        %v2393 = vrcp.pop %v2268
        %v2394 = vmul.f32 1.0, %v2393
        %v2395 = vrcp.pop %v2269
        %v2396 = vmul.f32 1.0, %v2395
        %v2397 = vrcp.pop %v2270
        %v2398 = vmul.f32 1.0, %v2397
        %2399 = vst [vmem:[%s502] sm:$0xff] %v2272
        %2400 = vst [vmem:[%s502 + $0x8] sm:$0xff] %v2274
        %2401 = vst [vmem:[%s502 + $0x10] sm:$0xff] %v2276
        %2402 = vst [vmem:[%s502 + $0x18] sm:$0xff] %v2278
        %2403 = vst [vmem:[%s502 + $0x20] sm:$0xff] %v2280
        %2404 = vst [vmem:[%s502 + $0x28] sm:$0xff] %v2282
        %2405 = vst [vmem:[%s502 + $0x30] sm:$0xff] %v2284
        %2406 = vst [vmem:[%s502 + $0x38] sm:$0xff] %v2286
        %2407 = vst [vmem:[%s502 + $0x40] sm:$0xff] %v2288
        %2408 = vst [vmem:[%s502 + $0x48] sm:$0xff] %v2290
        %2409 = vst [vmem:[%s502 + $0x50] sm:$0xff] %v2292
        %2410 = vst [vmem:[%s502 + $0x58] sm:$0xff] %v2294
        %2411 = vst [vmem:[%s502 + $0x60] sm:$0xff] %v2296
        %2412 = vst [vmem:[%s502 + $0x68] sm:$0xff] %v2298
        %2413 = vst [vmem:[%s502 + $0x70] sm:$0xff] %v2300
        %2414 = vst [vmem:[%s502 + $0x78] sm:$0xff] %v2302
        %2415 = vst [vmem:[%s502 + $0x80] sm:$0xff] %v2304
        %2416 = vst [vmem:[%s502 + $0x88] sm:$0xff] %v2306
        %2417 = vst [vmem:[%s502 + $0x90] sm:$0xff] %v2308
        %2418 = vst [vmem:[%s502 + $0x98] sm:$0xff] %v2310
        %2419 = vst [vmem:[%s502 + $0xa0] sm:$0xff] %v2312
        %2420 = vst [vmem:[%s502 + $0xa8] sm:$0xff] %v2314
        %2421 = vst [vmem:[%s502 + $0xb0] sm:$0xff] %v2316
        %2422 = vst [vmem:[%s502 + $0xb8] sm:$0xff] %v2318
        %2423 = vst [vmem:[%s502 + $0xc0] sm:$0xff] %v2320
        %2424 = vst [vmem:[%s502 + $0xc8] sm:$0xff] %v2322
        %2425 = vst [vmem:[%s502 + $0xd0] sm:$0xff] %v2324
        %2426 = vst [vmem:[%s502 + $0xd8] sm:$0xff] %v2326
        %2427 = vst [vmem:[%s502 + $0xe0] sm:$0xff] %v2328
        %2428 = vst [vmem:[%s502 + $0xe8] sm:$0xff] %v2330
        %2429 = vst [vmem:[%s502 + $0xf0] sm:$0xff] %v2332
        %2430 = vst [vmem:[%s502 + $0xf8] sm:$0xff] %v2334
        %2431 = vst [vmem:[%s502 + $0x100] sm:$0xf] %v2336
        %2432 = vst [vmem:[%s502 + $0x108] sm:$0xf] %v2338
        %2433 = vst [vmem:[%s502 + $0x110] sm:$0xf] %v2340
        %2434 = vst [vmem:[%s502 + $0x118] sm:$0xf] %v2342
        %2435 = vst [vmem:[%s502 + $0x120] sm:$0xf] %v2344
        %2436 = vst [vmem:[%s502 + $0x128] sm:$0xf] %v2346
        %2437 = vst [vmem:[%s502 + $0x130] sm:$0xf] %v2348
        %2438 = vst [vmem:[%s502 + $0x138] sm:$0xf] %v2350
        %2439 = vst [vmem:[%s502 + $0x140] sm:$0xf] %v2352
        %2440 = vst [vmem:[%s502 + $0x148] sm:$0xf] %v2354
        %2441 = vst [vmem:[%s502 + $0x150] sm:$0xf] %v2356
        %2442 = vst [vmem:[%s502 + $0x158] sm:$0xf] %v2358
        %2443 = vst [vmem:[%s502 + $0x160] sm:$0xf] %v2360
        %2444 = vst [vmem:[%s502 + $0x168] sm:$0xf] %v2362
        %2445 = vst [vmem:[%s502 + $0x170] sm:$0xf] %v2364
        %2446 = vst [vmem:[%s502 + $0x178] sm:$0xf] %v2366
        %2447 = vst [vmem:[%s502 + $0x180] sm:$0xf] %v2368
        %2448 = vst [vmem:[%s502 + $0x188] sm:$0xf] %v2370
        %2449 = vst [vmem:[%s502 + $0x190] sm:$0xf] %v2372
        %2450 = vst [vmem:[%s502 + $0x198] sm:$0xf] %v2374
        %2451 = vst [vmem:[%s502 + $0x1a0] sm:$0xf] %v2376
        %2452 = vst [vmem:[%s502 + $0x1a8] sm:$0xf] %v2378
        %2453 = vst [vmem:[%s502 + $0x1b0] sm:$0xf] %v2380
        %2454 = vst [vmem:[%s502 + $0x1b8] sm:$0xf] %v2382
        %2455 = vst [vmem:[%s502 + $0x1c0] sm:$0xf] %v2384
        %2456 = vst [vmem:[%s502 + $0x1c8] sm:$0xf] %v2386
        %2457 = vst [vmem:[%s502 + $0x1d0] sm:$0xf] %v2388
        %2458 = vst [vmem:[%s502 + $0x1d8] sm:$0xf] %v2390
        %2459 = vst [vmem:[%s502 + $0x1e0] sm:$0xf] %v2392
        %2460 = vst [vmem:[%s502 + $0x1e8] sm:$0xf] %v2394
        %2461 = vst [vmem:[%s502 + $0x1f0] sm:$0xf] %v2396
        %2462 = vst [vmem:[%s502 + $0x1f8] sm:$0xf] %v2398
        %s2463 = sand.u32 %s90, 1
        %s2464 = sand.u32 %s90, 1
        %s2465 = smul.addr %s2464, 512
        %s2466 = scalar_lea.vmem [#allocation3], %s2465
        // Predicated region
        $region56: #{decoder_forward.9} parent=50 // pred_check
          %p2467 = pneg %p100
        $region57: #{decoder_forward.9} parent=50 // pred_check_branch
          %2469 = sbr.rel (%p2467) target = $region59
        $region58: #{decoder_forward.9} parent=50 // pred_region
          %s2470 = smul.u32 32, %s14
          %s2471 = smul.addr %s2470, 8
          %s2472 = scalar_lea.vmem %s3, %s2471
          // Predicated region
          $region60: #{decoder_forward.9} parent=58 // pred_check
            _
          $region61: #{decoder_forward.9} parent=58 // pred_check_branch
            %2474 = sbr.rel (0) target = $region63
          $region62: #{decoder_forward.9} parent=58 // pred_region
            // Predicated region
            $region64: #{decoder_forward.9} parent=62 // pred_check
              _
            $region65: #{decoder_forward.9} parent=62 // pred_check_branch
              %2476 = sbr.rel (0) target = $region67
            $region66: #{decoder_forward.9} parent=62 // pred_region
              loop: start=0, step=1, limit=1
              $region68: #{decoder_forward.9} parent=66 // loop_pre_header
                _
              $region69: #{decoder_forward.9} parent=66 // loop_header
                %s2478 = sphi 0, %s2482
                %p2479 = scmp.ge.s32.totalorder %s2478, 1
                %s2483 = sphi %s2466, %s2466
                %s2484 = sphi %s2472, %s2472
              $region70: #{decoder_forward.9} parent=66 // loop_header_branch
                %2481 = sbr.rel (%p2479) target = $region74
              $region71: #{decoder_forward.9} parent=66 // loop_body
                %v2485 = vld [vmem:[%s2483] sm:$0xff]
                %2486 = vst [vmem:[%s2484] sm:$0xff] %v2485
                %v2487 = vld [vmem:[%s2483 + $0x8] sm:$0xff]
                %2488 = vst [vmem:[%s2484 + $0x8] sm:$0xff] %v2487
                %v2489 = vld [vmem:[%s2483 + $0x10] sm:$0xff]
                %2490 = vst [vmem:[%s2484 + $0x10] sm:$0xff] %v2489
                %v2491 = vld [vmem:[%s2483 + $0x18] sm:$0xff]
                %2492 = vst [vmem:[%s2484 + $0x18] sm:$0xff] %v2491
                %v2493 = vld [vmem:[%s2483 + $0x20] sm:$0xff]
                %2494 = vst [vmem:[%s2484 + $0x20] sm:$0xff] %v2493
                %v2495 = vld [vmem:[%s2483 + $0x28] sm:$0xff]
                %2496 = vst [vmem:[%s2484 + $0x28] sm:$0xff] %v2495
                %v2497 = vld [vmem:[%s2483 + $0x30] sm:$0xff]
                %2498 = vst [vmem:[%s2484 + $0x30] sm:$0xff] %v2497
                %v2499 = vld [vmem:[%s2483 + $0x38] sm:$0xff]
                %2500 = vst [vmem:[%s2484 + $0x38] sm:$0xff] %v2499
                %v2501 = vld [vmem:[%s2483 + $0x40] sm:$0xff]
                %2502 = vst [vmem:[%s2484 + $0x40] sm:$0xff] %v2501
                %v2503 = vld [vmem:[%s2483 + $0x48] sm:$0xff]
                %2504 = vst [vmem:[%s2484 + $0x48] sm:$0xff] %v2503
                %v2505 = vld [vmem:[%s2483 + $0x50] sm:$0xff]
                %2506 = vst [vmem:[%s2484 + $0x50] sm:$0xff] %v2505
                %v2507 = vld [vmem:[%s2483 + $0x58] sm:$0xff]
                %2508 = vst [vmem:[%s2484 + $0x58] sm:$0xff] %v2507
                %v2509 = vld [vmem:[%s2483 + $0x60] sm:$0xff]
                %2510 = vst [vmem:[%s2484 + $0x60] sm:$0xff] %v2509
                %v2511 = vld [vmem:[%s2483 + $0x68] sm:$0xff]
                %2512 = vst [vmem:[%s2484 + $0x68] sm:$0xff] %v2511
                %v2513 = vld [vmem:[%s2483 + $0x70] sm:$0xff]
                %2514 = vst [vmem:[%s2484 + $0x70] sm:$0xff] %v2513
                %v2515 = vld [vmem:[%s2483 + $0x78] sm:$0xff]
                %2516 = vst [vmem:[%s2484 + $0x78] sm:$0xff] %v2515
                %v2517 = vld [vmem:[%s2483 + $0x80] sm:$0xff]
                %2518 = vst [vmem:[%s2484 + $0x80] sm:$0xff] %v2517
                %v2519 = vld [vmem:[%s2483 + $0x88] sm:$0xff]
                %2520 = vst [vmem:[%s2484 + $0x88] sm:$0xff] %v2519
                %v2521 = vld [vmem:[%s2483 + $0x90] sm:$0xff]
                %2522 = vst [vmem:[%s2484 + $0x90] sm:$0xff] %v2521
                %v2523 = vld [vmem:[%s2483 + $0x98] sm:$0xff]
                %2524 = vst [vmem:[%s2484 + $0x98] sm:$0xff] %v2523
                %v2525 = vld [vmem:[%s2483 + $0xa0] sm:$0xff]
                %2526 = vst [vmem:[%s2484 + $0xa0] sm:$0xff] %v2525
                %v2527 = vld [vmem:[%s2483 + $0xa8] sm:$0xff]
                %2528 = vst [vmem:[%s2484 + $0xa8] sm:$0xff] %v2527
                %v2529 = vld [vmem:[%s2483 + $0xb0] sm:$0xff]
                %2530 = vst [vmem:[%s2484 + $0xb0] sm:$0xff] %v2529
                %v2531 = vld [vmem:[%s2483 + $0xb8] sm:$0xff]
                %2532 = vst [vmem:[%s2484 + $0xb8] sm:$0xff] %v2531
                %v2533 = vld [vmem:[%s2483 + $0xc0] sm:$0xff]
                %2534 = vst [vmem:[%s2484 + $0xc0] sm:$0xff] %v2533
                %v2535 = vld [vmem:[%s2483 + $0xc8] sm:$0xff]
                %2536 = vst [vmem:[%s2484 + $0xc8] sm:$0xff] %v2535
                %v2537 = vld [vmem:[%s2483 + $0xd0] sm:$0xff]
                %2538 = vst [vmem:[%s2484 + $0xd0] sm:$0xff] %v2537
                %v2539 = vld [vmem:[%s2483 + $0xd8] sm:$0xff]
                %2540 = vst [vmem:[%s2484 + $0xd8] sm:$0xff] %v2539
                %v2541 = vld [vmem:[%s2483 + $0xe0] sm:$0xff]
                %2542 = vst [vmem:[%s2484 + $0xe0] sm:$0xff] %v2541
                %v2543 = vld [vmem:[%s2483 + $0xe8] sm:$0xff]
                %2544 = vst [vmem:[%s2484 + $0xe8] sm:$0xff] %v2543
                %v2545 = vld [vmem:[%s2483 + $0xf0] sm:$0xff]
                %2546 = vst [vmem:[%s2484 + $0xf0] sm:$0xff] %v2545
                %v2547 = vld [vmem:[%s2483 + $0xf8] sm:$0xff]
                %2548 = vst [vmem:[%s2484 + $0xf8] sm:$0xff] %v2547
                %v2549 = vld [vmem:[%s2483 + $0x100] sm:$0xff]
                %2550 = vst [vmem:[%s2484 + $0x200] sm:$0xff] %v2549
                %v2551 = vld [vmem:[%s2483 + $0x108] sm:$0xff]
                %2552 = vst [vmem:[%s2484 + $0x208] sm:$0xff] %v2551
                %v2553 = vld [vmem:[%s2483 + $0x110] sm:$0xff]
                %2554 = vst [vmem:[%s2484 + $0x210] sm:$0xff] %v2553
                %v2555 = vld [vmem:[%s2483 + $0x118] sm:$0xff]
                %2556 = vst [vmem:[%s2484 + $0x218] sm:$0xff] %v2555
                %v2557 = vld [vmem:[%s2483 + $0x120] sm:$0xff]
                %2558 = vst [vmem:[%s2484 + $0x220] sm:$0xff] %v2557
                %v2559 = vld [vmem:[%s2483 + $0x128] sm:$0xff]
                %2560 = vst [vmem:[%s2484 + $0x228] sm:$0xff] %v2559
                %v2561 = vld [vmem:[%s2483 + $0x130] sm:$0xff]
                %2562 = vst [vmem:[%s2484 + $0x230] sm:$0xff] %v2561
                %v2563 = vld [vmem:[%s2483 + $0x138] sm:$0xff]
                %2564 = vst [vmem:[%s2484 + $0x238] sm:$0xff] %v2563
                %v2565 = vld [vmem:[%s2483 + $0x140] sm:$0xff]
                %2566 = vst [vmem:[%s2484 + $0x240] sm:$0xff] %v2565
                %v2567 = vld [vmem:[%s2483 + $0x148] sm:$0xff]
                %2568 = vst [vmem:[%s2484 + $0x248] sm:$0xff] %v2567
                %v2569 = vld [vmem:[%s2483 + $0x150] sm:$0xff]
                %2570 = vst [vmem:[%s2484 + $0x250] sm:$0xff] %v2569
                %v2571 = vld [vmem:[%s2483 + $0x158] sm:$0xff]
                %2572 = vst [vmem:[%s2484 + $0x258] sm:$0xff] %v2571
                %v2573 = vld [vmem:[%s2483 + $0x160] sm:$0xff]
                %2574 = vst [vmem:[%s2484 + $0x260] sm:$0xff] %v2573
                %v2575 = vld [vmem:[%s2483 + $0x168] sm:$0xff]
                %2576 = vst [vmem:[%s2484 + $0x268] sm:$0xff] %v2575
                %v2577 = vld [vmem:[%s2483 + $0x170] sm:$0xff]
                %2578 = vst [vmem:[%s2484 + $0x270] sm:$0xff] %v2577
                %v2579 = vld [vmem:[%s2483 + $0x178] sm:$0xff]
                %2580 = vst [vmem:[%s2484 + $0x278] sm:$0xff] %v2579
                %v2581 = vld [vmem:[%s2483 + $0x180] sm:$0xff]
                %2582 = vst [vmem:[%s2484 + $0x280] sm:$0xff] %v2581
                %v2583 = vld [vmem:[%s2483 + $0x188] sm:$0xff]
                %2584 = vst [vmem:[%s2484 + $0x288] sm:$0xff] %v2583
                %v2585 = vld [vmem:[%s2483 + $0x190] sm:$0xff]
                %2586 = vst [vmem:[%s2484 + $0x290] sm:$0xff] %v2585
                %v2587 = vld [vmem:[%s2483 + $0x198] sm:$0xff]
                %2588 = vst [vmem:[%s2484 + $0x298] sm:$0xff] %v2587
                %v2589 = vld [vmem:[%s2483 + $0x1a0] sm:$0xff]
                %2590 = vst [vmem:[%s2484 + $0x2a0] sm:$0xff] %v2589
                %v2591 = vld [vmem:[%s2483 + $0x1a8] sm:$0xff]
                %2592 = vst [vmem:[%s2484 + $0x2a8] sm:$0xff] %v2591
                %v2593 = vld [vmem:[%s2483 + $0x1b0] sm:$0xff]
                %2594 = vst [vmem:[%s2484 + $0x2b0] sm:$0xff] %v2593
                %v2595 = vld [vmem:[%s2483 + $0x1b8] sm:$0xff]
                %2596 = vst [vmem:[%s2484 + $0x2b8] sm:$0xff] %v2595
                %v2597 = vld [vmem:[%s2483 + $0x1c0] sm:$0xff]
                %2598 = vst [vmem:[%s2484 + $0x2c0] sm:$0xff] %v2597
                %v2599 = vld [vmem:[%s2483 + $0x1c8] sm:$0xff]
                %2600 = vst [vmem:[%s2484 + $0x2c8] sm:$0xff] %v2599
                %v2601 = vld [vmem:[%s2483 + $0x1d0] sm:$0xff]
                %2602 = vst [vmem:[%s2484 + $0x2d0] sm:$0xff] %v2601
                %v2603 = vld [vmem:[%s2483 + $0x1d8] sm:$0xff]
                %2604 = vst [vmem:[%s2484 + $0x2d8] sm:$0xff] %v2603
                %v2605 = vld [vmem:[%s2483 + $0x1e0] sm:$0xff]
                %2606 = vst [vmem:[%s2484 + $0x2e0] sm:$0xff] %v2605
                %v2607 = vld [vmem:[%s2483 + $0x1e8] sm:$0xff]
                %2608 = vst [vmem:[%s2484 + $0x2e8] sm:$0xff] %v2607
                %v2609 = vld [vmem:[%s2483 + $0x1f0] sm:$0xff]
                %2610 = vst [vmem:[%s2484 + $0x2f0] sm:$0xff] %v2609
                %v2611 = vld [vmem:[%s2483 + $0x1f8] sm:$0xff]
                %2612 = vst [vmem:[%s2484 + $0x2f8] sm:$0xff] %v2611
              $region72: #{decoder_forward.9} parent=66 // loop_footer
                %s2482 = sadd.s32 1, %s2478
              $region73: #{decoder_forward.9} parent=66 // loop_footer_branch
                %2477 = sbr.rel target = $region69
              $region74: #{decoder_forward.9} parent=66 // loop_exit
                _
            $region67: #{decoder_forward.9} parent=62 // pred_fallthru
              _
            // Predicated region
            $region75: #{decoder_forward.9} parent=62 // pred_check
              _
            $region76: #{decoder_forward.9} parent=62 // pred_check_branch
              %2614 = sbr.rel target = $region78
            $region77: #{decoder_forward.9} parent=62 // pred_region
              _
            $region78: #{decoder_forward.9} parent=62 // pred_fallthru
              _
          $region63: #{decoder_forward.9} parent=58 // pred_fallthru
            _
          %2615 = vnop
        $region59: #{decoder_forward.9} parent=50 // pred_fallthru
          _
      $region51: #{decoder_forward.9} parent=5 // pred_fallthru
        _
      %p2616 = scmp.le.s32.totalorder 2, %s9
      // Predicated region
      $region79: #{decoder_forward.9} parent=5 // pred_check
        %p2617 = pneg %p2616
      $region80: #{decoder_forward.9} parent=5 // pred_check_branch
        %2619 = sbr.rel (%p2617) target = $region82
      $region81: #{decoder_forward.9} parent=5 // pred_region
        %s2620 = ssub.s32 %s9, 2
        // Predicated region
        $region83: #{decoder_forward.9} parent=81 // pred_check
          %p2621 = pneg %p106
        $region84: #{decoder_forward.9} parent=81 // pred_check_branch
          %2623 = sbr.rel (%p2621) target = $region86
        $region85: #{decoder_forward.9} parent=81 // pred_region
          %s2624 = sand.u32 %s91, 1
          %s2625 = sand.u32 %s91, 1
          %s2626 = smul.addr %s2625, 512
          %s2627 = scalar_lea.vmem [#allocation3], %s2626
        $region86: #{decoder_forward.9} parent=81 // pred_fallthru
          _
      $region82: #{decoder_forward.9} parent=5 // pred_fallthru
        _
    $region6: #{decoder_forward.9} parent=1 // loop_footer
      %s13 = sadd.s32 1, %s9
    $region7: #{decoder_forward.9} parent=1 // loop_footer_branch
      %8 = sbr.rel target = $region3
    $region8: #{decoder_forward.9} parent=1 // loop_exit
      _

</llo_original>
